<compile_context>
chip_gen: v5e
topology: v5e:2x2
jax: 0.10.0
libtpu: 0.0.40
codegen_flags: <defaults>
</compile_context>

<pallas_src>
import jax
import jax.numpy as jnp
from jax.experimental import pallas as pl
from jax.experimental.pallas import tpu as pltpu

EPS = 1e-4                     # BatchNorm eps used by the module (eps=0.0001)
H0, W0 = 8, 7                  # input spatial size implied by the conv stack
ROWS_PER_SAMPLE = H0 * W0      # 56 rows per sample (multiple of 8)
SHIFT_PAD = 16                 # max conv tap shift = (3-1)*7 + (3-1)
OUT_LANES = 128                # lane-dense padded class dimension
NEG_BIG = -1e30                # pad-logit bias (exp underflows to 0)


# ------------------------------ Pallas kernel -------------------------------

def _prelu(y, alpha):
    return jnp.where(y >= 0.0, y, alpha * y)


def _target_net_kernel(x_ref, inp_ref,
                       w1_ref, p1_ref, w2_ref, p2_ref,
                       wsp_ref, psp_ref, w3_ref, p3_ref,
                       wfc1_ref, pfc1_ref, wfc2_ref, pfc2_ref,
                       wout_ref, bout_ref,
                       o_ref,
                       act0, act1, act2, act3):
    """Whole TargetNetwork forward for one batch tile; all intermediates in VMEM."""
    rows = x_ref.shape[0]                      # tile_n * 56
    n = o_ref.shape[0]                         # tile_n

    # Zero the shift-overread pad rows; they are only read for invalid spatial
    # slots but we keep them deterministic/finite.
    for ref in (act0, act1, act2, act3):
        ref[pl.ds(rows, SHIFT_PAD), :] = jnp.zeros(
            (SHIFT_PAD, ref.shape[1]), jnp.float32)

    # Input BatchNorm (folded to affine) + PReLU; target|source stacked on lanes.
    xv = x_ref[...]                                        # (rows, 12)
    x2 = jnp.concatenate([xv, xv], axis=-1)                # (rows, 24)
    act0[pl.ds(0, rows), :] = _prelu(x2 * inp_ref[0:1, :] + inp_ref[1:2, :],
                                     inp_ref[2:3, :])

    def conv_stage(src_ref, kh, kw, wt_ref, pp_ref):
        """Conv as kh*kw shifted full-slab matmuls (no im2col, no scatter)."""
        cin = src_ref.shape[1]
        acc = None
        for dh in range(kh):
            for dw in range(kw):
                tap = dh * kw + dw
                xs = src_ref[pl.ds(dh * W0 + dw, rows), :]         # (rows, cin)
                ws = wt_ref[pl.ds(tap * cin, cin), :]              # (cin, cout)
                d = jnp.dot(xs, ws, preferred_element_type=jnp.float32)
                acc = d if acc is None else acc + d
        return _prelu(acc + pp_ref[0:1, :], pp_ref[1:2, :])

    # first_parallel conv1 (4 target + 4 source branches, block-diagonal).
    act1[pl.ds(0, rows), :] = conv_stage(act0, 3, 3, w1_ref, p1_ref)   # 6x5, 64ch
    # first_parallel conv2 (ScaleLayer merge folded into w2).
    act2[pl.ds(0, rows), :] = conv_stage(act1, 3, 3, w2_ref, p2_ref)   # 4x3, 96ch
    # second_parallel conv (branch/scale merges folded into wsp).
    act3[pl.ds(0, rows), :] = conv_stage(act2, 3, 2, wsp_ref, psp_ref)  # 2x2, 96ch

    # conv3 (2x2 -> 1x1): strided gather of the 4 valid taps per sample gives a
    # compact (n, 96) activation directly.
    cin3 = act3.shape[1]
    y4 = None
    for dh in range(2):
        for dw in range(2):
            tap = dh * 2 + dw
            xs = act3[pl.ds(dh * W0 + dw, n, stride=ROWS_PER_SAMPLE), :]
            ws = w3_ref[pl.ds(tap * cin3, cin3), :]
            d = jnp.dot(xs, ws, preferred_element_type=jnp.float32)
            y4 = d if y4 is None else y4 + d
    y4 = _prelu(y4 + p3_ref[0:1, :], p3_ref[1:2, :])                   # (n, 96)

    # Fully-connected stack; all source-path merges folded into the weights.
    # The source half of each packed fc uses PReLU alpha == 1 (identity).
    yfc1 = _prelu(jnp.dot(y4, wfc1_ref[...], preferred_element_type=jnp.float32)
                  + pfc1_ref[0:1, :], pfc1_ref[1:2, :])                # (n, 200)
    yfc2 = _prelu(jnp.dot(yfc1, wfc2_ref[...], preferred_element_type=jnp.float32)
                  + pfc2_ref[0:1, :], pfc2_ref[1:2, :])                # (n, 200)
    logits = (jnp.dot(yfc2, wout_ref[...], preferred_element_type=jnp.float32)
              + bout_ref[...])                                         # (n, 128)

    z = logits - jnp.max(logits, axis=-1, keepdims=True)
    o_ref[...] = z - jnp.log(jnp.sum(jnp.exp(z), axis=-1, keepdims=True))


def target_network_forward(x_nchw, packed, tile_n=None):
    """PyTorch-layout input (N, 12, 8, 7) -> (N, num_class) log-probs."""
    N = x_nchw.shape[0]
    if tile_n is None:
        tile_n = min(64, 8 * ((N + 7) // 8))        # batch tile (mult of 8)
    n_pad = tile_n * ((N + tile_n - 1) // tile_n)

    x = jnp.transpose(x_nchw, (0, 2, 3, 1)).astype(jnp.float32)   # (N, 8, 7, 12)
    x = x.reshape(N, ROWS_PER_SAMPLE, 12)
    if n_pad != N:
        x = jnp.concatenate(
            [x, jnp.zeros((n_pad - N, ROWS_PER_SAMPLE, 12), jnp.float32)], axis=0)
    x2 = x.reshape(n_pad * ROWS_PER_SAMPLE, 12)

    rows = tile_n * ROWS_PER_SAMPLE
    grid = (n_pad // tile_n,)

    def resident(arr):                      # full-array block, constant index_map
        return pl.BlockSpec(arr.shape, lambda i: (0, 0))

    weights = (packed['inp'],
               packed['w1'], packed['p1'], packed['w2'], packed['p2'],
               packed['wsp'], packed['psp'], packed['w3'], packed['p3'],
               packed['wfc1'], packed['pfc1'], packed['wfc2'], packed['pfc2'],
               packed['wout'], packed['bout'])

    out = pl.pallas_call(
        _target_net_kernel,
        out_shape=jax.ShapeDtypeStruct((n_pad, OUT_LANES), jnp.float32),
        grid=grid,
        in_specs=[pl.BlockSpec((rows, 12), lambda i: (i, 0))]
                 + [resident(w) for w in weights],
        out_specs=pl.BlockSpec((tile_n, OUT_LANES), lambda i: (i, 0)),
        scratch_shapes=[
            pltpu.VMEM((rows + SHIFT_PAD, 24), jnp.float32),   # act0: bn/prelu input
            pltpu.VMEM((rows + SHIFT_PAD, 64), jnp.float32),   # act1: conv1 out
            pltpu.VMEM((rows + SHIFT_PAD, 96), jnp.float32),   # act2: conv2 out
            pltpu.VMEM((rows + SHIFT_PAD, 96), jnp.float32),   # act3: 2nd-part out
        ],
        compiler_params=pltpu.CompilerParams(
            dimension_semantics=("parallel",),
            vmem_limit_bytes=32 * 1024 * 1024),
    )(x2, *weights)

    return out[:N, :packed['num_class']]


# --------------------------- raw parameters (torch-like) --------------------

class KeyGen:
    def __init__(self, key):
        self.key = key

    def __call__(self):
        self.key, k = jax.random.split(self.key)
        return k


def conv_param(kg, cout, cin, kh, kw):
    w = jax.random.normal(kg(), (cout, cin, kh, kw), jnp.float32) * \
        (2.0 / (cin * kh * kw)) ** 0.5
    return (w, jnp.zeros((cout,), jnp.float32))          # torch init zeroes bias


def linear_param(kg, cout, cin):                          # torch layout (out, in)
    w = jax.random.normal(kg(), (cout, cin), jnp.float32) * (2.0 / cin) ** 0.5
    return (w, jnp.zeros((cout,), jnp.float32))


def bn_param(kg, c):
    gamma = 1.0 + 0.1 * jax.random.normal(kg(), (c,), jnp.float32)
    beta = 0.1 * jax.random.normal(kg(), (c,), jnp.float32)
    mean = 0.1 * jax.random.normal(kg(), (c,), jnp.float32)
    var = jax.random.uniform(kg(), (c,), jnp.float32, 0.5, 1.5)
    return (gamma, beta, mean, var)


def prelu_param(c):
    return jnp.full((c,), 0.25, jnp.float32)             # torch PReLU default


def scale_param(kg, c):
    return jax.random.uniform(kg(), (c,), jnp.float32, 0.5, 1.5)


def make_params(num_class=7, seed=1):
    kg = KeyGen(jax.random.PRNGKey(seed))
    P = {}
    P['t_in_bn'], P['t_in_alpha'] = bn_param(kg, 12), prelu_param(12)
    P['s_in_bn'], P['s_in_alpha'] = bn_param(kg, 12), prelu_param(12)
    for pre in ('t', 's'):
        P[pre + '_conv1'] = [conv_param(kg, 8, 3, 3, 3) for _ in range(4)]
        P[pre + '_bn1'] = [bn_param(kg, 8) for _ in range(4)]
        P[pre + '_a1'] = [prelu_param(8) for _ in range(4)]
        P[pre + '_conv2'] = [conv_param(kg, 12, 8, 3, 3) for _ in range(4)]
        P[pre + '_bn2'] = [bn_param(kg, 12) for _ in range(4)]
        P[pre + '_a2'] = [prelu_param(12) for _ in range(4)]
    P['t_scale_learn'] = [scale_param(kg, 8) for _ in range(4)]
    for pre in ('t', 's'):
        P[pre + '_conv_sp'] = [conv_param(kg, 24, 12, 3, 2) for _ in range(2)]
        P[pre + '_bn_sp'] = [bn_param(kg, 24) for _ in range(2)]
        P[pre + '_a_sp'] = [prelu_param(24) for _ in range(2)]
    P['scale_merge_1'] = scale_param(kg, 12)
    P['scale_merge_2'] = scale_param(kg, 12)
    P['scale_merge_3'] = scale_param(kg, 24)
    P['scale_merge_4'] = scale_param(kg, 48)
    P['scale_merge_5'] = scale_param(kg, 100)
    P['scale_merge_6'] = scale_param(kg, 100)
    for pre in ('t', 's'):
        P[pre + '_conv3'] = conv_param(kg, 48, 24, 2, 2)
        P[pre + '_bn3'] = bn_param(kg, 48)
        P[pre + '_a3'] = prelu_param(48)
    P['t_fc1'] = linear_param(kg, 100, 48)
    P['t_bn_fc1'], P['t_a_fc1'] = bn_param(kg, 100), prelu_param(100)
    P['t_fc2'] = linear_param(kg, 100, 100)
    P['t_bn_fc2'], P['t_a_fc2'] = bn_param(kg, 100), prelu_param(100)
    P['s_fc1'] = linear_param(kg, 100, 48)   # source fc path: Linear + dropout only
    P['s_fc2'] = linear_param(kg, 100, 100)
    P['t_out'] = linear_param(kg, num_class, 100)
    return P


# ----------------- host-side folding / block-diagonal packing ---------------

def _fold_conv(conv, bn):
    w, b = conv
    gamma, beta, mean, var = bn
    s = gamma * jax.lax.rsqrt(var + EPS)
    return w * s[:, None, None, None], (b - mean) * s + beta


def _fold_linear(lin, bn):
    w, b = lin                                    # torch layout (out, in)
    gamma, beta, mean, var = bn
    s = gamma * jax.lax.rsqrt(var + EPS)
    return (w * s[:, None]).T, (b - mean) * s + beta       # -> (in, out)


def _conv_block(entries, cin_total, cout_total, kh, kw):
    """Block-diagonal packed conv weight: rows = (tap, cin_total), cols = cout."""
    k = kh * kw
    wp = jnp.zeros((k, cin_total, cout_total), jnp.float32)
    for w, cin_off, cout_off in entries:
        cout, cin = w.shape[0], w.shape[1]
        w3 = jnp.transpose(w, (2, 3, 1, 0)).reshape(k, cin, cout)
        wp = wp.at[:, cin_off:cin_off + cin, cout_off:cout_off + cout].set(w3)
    return wp.reshape(k * cin_total, cout_total)


def _fold_mix_into_conv(mix, w_packed, kh, kw):
    """patches(y @ mix) @ w_packed == patches(y) @ result  (mix: (Cprev, Cnext))."""
    k = kh * kw
    cnext, cout = mix.shape[1], w_packed.shape[1]
    w3 = w_packed.reshape(k, cnext, cout)
    return jnp.einsum('pq,kqo->kpo', mix, w3,
                      precision='highest').reshape(k * mix.shape[0], cout)


def _blocks(rows):
    return jnp.concatenate([jnp.concatenate(r, axis=1) for r in rows], axis=0)


def _mix_scale_pass(c, scale):
    """[t | s] -> [t + scale*s | s]   (shape (2c, 2c))."""
    eye = jnp.eye(c, dtype=jnp.float32)
    zero = jnp.zeros((c, c), jnp.float32)
    return _blocks([[eye, zero], [jnp.diag(scale), eye]])


def pack_params(P, num_class):
    # ---- input BN + PReLU as per-channel affine (target | source) ----
    def in_affine(bn, alpha):
        g, b, m, v = bn
        s = g * jax.lax.rsqrt(v + EPS)
        return s, b - m * s, alpha
    st, sht, at = in_affine(P['t_in_bn'], P['t_in_alpha'])
    ss, shs, asrc = in_affine(P['s_in_bn'], P['s_in_alpha'])
    inp = jnp.stack([jnp.concatenate([st, ss]),
                     jnp.concatenate([sht, shs]),
                     jnp.concatenate([at, asrc])])                  # (3, 24)

    # ---- first_parallel conv1: 4 target + 4 source branches ----
    ents, bs, al = [], [], []
    for i in range(4):
        wf, bf = _fold_conv(P['t_conv1'][i], P['t_bn1'][i])
        ents.append((wf, 3 * i, 8 * i)); bs.append(bf); al.append(P['t_a1'][i])
    for i in range(4):
        wf, bf = _fold_conv(P['s_conv1'][i], P['s_bn1'][i])
        ents.append((wf, 12 + 3 * i, 32 + 8 * i)); bs.append(bf); al.append(P['s_a1'][i])
    w1 = _conv_block(ents, 24, 64, 3, 3)                            # (216, 64)
    p1 = jnp.stack([jnp.concatenate(bs), jnp.concatenate(al)])      # (2, 64)

    # ---- first_parallel conv2; ScaleLayer merge (t + sl*s) folded in ----
    ents, bs, al = [], [], []
    for i in range(4):
        wf, bf = _fold_conv(P['t_conv2'][i], P['t_bn2'][i])
        ents.append((wf, 8 * i, 12 * i)); bs.append(bf); al.append(P['t_a2'][i])
    for i in range(4):
        wf, bf = _fold_conv(P['s_conv2'][i], P['s_bn2'][i])
        ents.append((wf, 32 + 8 * i, 48 + 12 * i)); bs.append(bf); al.append(P['s_a2'][i])
    w2p = _conv_block(ents, 64, 96, 3, 3)                           # (576, 96)
    m1 = _mix_scale_pass(32, jnp.concatenate(P['t_scale_learn']))   # (64, 64)
    w2 = _fold_mix_into_conv(m1, w2p, 3, 3)                         # (576, 96)
    p2 = jnp.stack([jnp.concatenate(bs), jnp.concatenate(al)])

    # ---- second_parallel; first-merge sums & ScaleLayers folded in ----
    ents, bs, al = [], [], []
    for j in range(2):
        wf, bf = _fold_conv(P['t_conv_sp'][j], P['t_bn_sp'][j])
        ents.append((wf, 12 * j, 24 * j)); bs.append(bf); al.append(P['t_a_sp'][j])
    for j in range(2):
        wf, bf = _fold_conv(P['s_conv_sp'][j], P['s_bn_sp'][j])
        ents.append((wf, 24 + 12 * j, 48 + 24 * j)); bs.append(bf); al.append(P['s_a_sp'][j])
    wspp = _conv_block(ents, 48, 96, 3, 2)                          # (288, 96)
    i12 = jnp.eye(12, dtype=jnp.float32)
    z12 = jnp.zeros((12, 12), jnp.float32)
    d1 = jnp.diag(P['scale_merge_1'])
    d2 = jnp.diag(P['scale_merge_2'])
    # rows: [t2_b0..b3 | s2_b0..b3]; cols: [fm_1 | fm_2 | fm_s1 | fm_s2]
    m2 = _blocks([[i12, z12, z12, z12],
                  [i12, z12, z12, z12],
                  [z12, i12, z12, z12],
                  [z12, i12, z12, z12],
                  [d1,  z12, i12, z12],
                  [d1,  z12, i12, z12],
                  [z12, d2,  z12, i12],
                  [z12, d2,  z12, i12]])                            # (96, 48)
    wsp = _fold_mix_into_conv(m2, wspp, 3, 2)                       # (576, 96)
    psp = jnp.stack([jnp.concatenate(bs), jnp.concatenate(al)])

    # ---- conv3; second-merge sums & ScaleLayer folded in ----
    wt3, bt3 = _fold_conv(P['t_conv3'], P['t_bn3'])
    ws3, bs3 = _fold_conv(P['s_conv3'], P['s_bn3'])
    w3p = _conv_block([(wt3, 0, 0), (ws3, 24, 48)], 48, 96, 2, 2)   # (192, 96)
    i24 = jnp.eye(24, dtype=jnp.float32)
    z24 = jnp.zeros((24, 24), jnp.float32)
    # rows: [tb0 | tb1 | sb0 | sb1]; cols: [second_merge | second_merge_source]
    m3 = _blocks([[i24, z24],
                  [i24, z24],
                  [i24, i24],
                  [jnp.diag(P['scale_merge_3']), i24]])             # (96, 48)
    w3 = _fold_mix_into_conv(m3, w3p, 2, 2)                         # (384, 96)
    p3 = jnp.stack([jnp.concatenate([bt3, bs3]),
                    jnp.concatenate([P['t_a3'], P['s_a3']])])

    # ---- fc1: target Linear+BN+PReLU, source Linear only; merge_4 folded ----
    wfc1_t, bfc1_t = _fold_linear(P['t_fc1'], P['t_bn_fc1'])        # (48, 100)
    wfc1_s, bfc1_s = P['s_fc1'][0].T, P['s_fc1'][1]
    wfc1_p = jnp.zeros((96, 200), jnp.float32)
    wfc1_p = wfc1_p.at[0:48, 0:100].set(wfc1_t).at[48:96, 100:200].set(wfc1_s)
    m4 = _mix_scale_pass(48, P['scale_merge_4'])                    # (96, 96)
    wfc1 = jnp.matmul(m4, wfc1_p, precision='highest')
    pfc1 = jnp.stack([jnp.concatenate([bfc1_t, bfc1_s]),
                      jnp.concatenate([P['t_a_fc1'],
                                       jnp.ones((100,), jnp.float32)])])

    # ---- fc2; merge_5 folded ----
    wfc2_t, bfc2_t = _fold_linear(P['t_fc2'], P['t_bn_fc2'])        # (100, 100)
    wfc2_s, bfc2_s = P['s_fc2'][0].T, P['s_fc2'][1]
    wfc2_p = jnp.zeros((200, 200), jnp.float32)
    wfc2_p = wfc2_p.at[0:100, 0:100].set(wfc2_t).at[100:200, 100:200].set(wfc2_s)
    m5 = _mix_scale_pass(100, P['scale_merge_5'])                   # (200, 200)
    wfc2 = jnp.matmul(m5, wfc2_p, precision='highest')
    pfc2 = jnp.stack([jnp.concatenate([bfc2_t, bfc2_s]),
                      jnp.concatenate([P['t_a_fc2'],
                                       jnp.ones((100,), jnp.float32)])])

    # ---- output layer; merge_6 folded; class dim padded lane-dense to 128 ----
    m6 = jnp.concatenate([jnp.eye(100, dtype=jnp.float32),
                          jnp.diag(P['scale_merge_6'])], axis=0)    # (200, 100)
    wout_core = jnp.matmul(m6, P['t_out'][0].T, precision='highest')  # (200, NC)
    wout = jnp.zeros((200, OUT_LANES), jnp.float32).at[:, :num_class].set(wout_core)
    bout = jnp.full((1, OUT_LANES), NEG_BIG, jnp.float32).at[0, :num_class].set(
        P['t_out'][1])

    return dict(inp=inp, w1=w1, p1=p1, w2=w2, p2=p2, wsp=wsp, psp=psp,
                w3=w3, p3=p3, wfc1=wfc1, pfc1=pfc1, wfc2=wfc2, pfc2=pfc2,
                wout=wout, bout=bout, num_class=num_class)


# ------------------- pure-JAX reference (module semantics) ------------------

def _ref_conv_bn_prelu(x, conv, bn, alpha):
    w, b = conv
    cout, cin, kh, kw = w.shape
    N, H, W, _ = x.shape
    Ho, Wo = H - kh + 1, W - kw + 1
    cols = [x[:, dh:dh + Ho, dw:dw + Wo, :] for dh in range(kh) for dw in range(kw)]
    patches = jnp.concatenate(cols, axis=-1).reshape(N * Ho * Wo, kh * kw * cin)
    w2d = jnp.transpose(w, (2, 3, 1, 0)).reshape(kh * kw * cin, cout)
    y = patches @ w2d + b
    g, be, m, v = bn
    y = (y - m) * (g * jax.lax.rsqrt(v + EPS)) + be
    y = jnp.where(y >= 0.0, y, alpha * y)
    return y.reshape(N, Ho, Wo, cout)


def reference_forward(x_nchw, P):
    x = jnp.transpose(x_nchw, (0, 2, 3, 1)).astype(jnp.float32)

    def bn_prelu(v, bn, alpha):
        g, b, m, var = bn
        y = (v - m) * (g * jax.lax.rsqrt(var + EPS)) + b
        return jnp.where(y >= 0.0, y, alpha * y)

    xt = bn_prelu(x, P['t_in_bn'], P['t_in_alpha'])
    xs = bn_prelu(x, P['s_in_bn'], P['s_in_alpha'])

    t2s, s2s = [], []
    for i in range(4):
        t1 = _ref_conv_bn_prelu(xt[..., 3 * i:3 * i + 3], P['t_conv1'][i],
                                P['t_bn1'][i], P['t_a1'][i])
        s1 = _ref_conv_bn_prelu(xs[..., 3 * i:3 * i + 3], P['s_conv1'][i],
                                P['s_bn1'][i], P['s_a1'][i])
        concat = t1 + P['t_scale_learn'][i] * s1
        t2s.append(_ref_conv_bn_prelu(concat, P['t_conv2'][i],
                                      P['t_bn2'][i], P['t_a2'][i]))
        s2s.append(_ref_conv_bn_prelu(s1, P['s_conv2'][i],
                                      P['s_bn2'][i], P['s_a2'][i]))

    fm_s1 = s2s[0] + s2s[1]
    fm_s2 = s2s[2] + s2s[3]
    fm_1 = t2s[0] + t2s[1] + P['scale_merge_1'] * fm_s1
    fm_2 = t2s[2] + t2s[3] + P['scale_merge_2'] * fm_s2

    tb0 = _ref_conv_bn_prelu(fm_1, P['t_conv_sp'][0], P['t_bn_sp'][0], P['t_a_sp'][0])
    tb1 = _ref_conv_bn_prelu(fm_2, P['t_conv_sp'][1], P['t_bn_sp'][1], P['t_a_sp'][1])
    sb0 = _ref_conv_bn_prelu(fm_s1, P['s_conv_sp'][0], P['s_bn_sp'][0], P['s_a_sp'][0])
    sb1 = _ref_conv_bn_prelu(fm_s2, P['s_conv_sp'][1], P['s_bn_sp'][1], P['s_a_sp'][1])

    second_merge = tb0 + tb1 + sb0 + P['scale_merge_3'] * sb1
    second_merge_s = sb0 + sb1
    after_conv = _ref_conv_bn_prelu(second_merge, P['t_conv3'], P['t_bn3'], P['t_a3'])
    after_conv_s = _ref_conv_bn_prelu(second_merge_s, P['s_conv3'], P['s_bn3'], P['s_a3'])
    conv_finished = after_conv + P['scale_merge_4'] * after_conv_s

    flat = conv_finished.reshape(-1, 48)
    flat_s = after_conv_s.reshape(-1, 48)

    def lin(p, v):
        return v @ p[0].T + p[1]

    def bn1d_prelu(v, bn, alpha):
        g, b, m, var = bn
        y = (v - m) * (g * jax.lax.rsqrt(var + EPS)) + b
        return jnp.where(y >= 0.0, y, alpha * y)

    fc1 = bn1d_prelu(lin(P['t_fc1'], flat), P['t_bn_fc1'], P['t_a_fc1'])
    fc1_s = lin(P['s_fc1'], flat_s)
    fc1_added = fc1 + P['scale_merge_5'] * fc1_s
    fc2 = bn1d_prelu(lin(P['t_fc2'], fc1_added), P['t_bn_fc2'], P['t_a_fc2'])
    fc2_s = lin(P['s_fc2'], fc1_s)
    fc2_added = fc2 + P['scale_merge_6'] * fc2_s
    logits = lin(P['t_out'], fc2_added)
    return jax.nn.log_softmax(logits, axis=-1)


# ---------------------------------- main -------------------------------------

if __name__ == "__main__":
    NUM_CLASS = 7
    P = make_params(num_class=NUM_CLASS, seed=1)
    packed = pack_params(P, NUM_CLASS)       # one-time host-side fold & pack

    # Input consistent with the module: (N, 12, 8, 7) so the conv stack ends at 1x1.
    x = jax.random.normal(jax.random.PRNGKey(0), (2, 12, 8, 7), jnp.float32)

    fwd = jax.jit(lambda inp: target_network_forward(inp, packed))
    out = jax.block_until_ready(fwd(x))

    assert out.shape == (2, NUM_CLASS), out.shape
    assert bool(jnp.all(jnp.isfinite(out)))
    # log_softmax rows exponentiate-sum to 1
    assert bool(jnp.allclose(jnp.sum(jnp.exp(out), axis=-1), 1.0, atol=1e-4))

    # Cross-check fused/folded kernel against a plain-JAX reference of the module.
    ref = jax.block_until_ready(jax.jit(lambda inp: reference_forward(inp, P))(x))
    err = float(jnp.max(jnp.abs(out - ref)))
    tol = 5e-2 * max(1.0, float(jnp.max(jnp.abs(ref))))
    assert err <= tol, (err, tol)

    print("KERNEL_OK")
</pallas_src>

<mosaic_0001>
module attributes {stable_mosaic.version = 11 : i64} {
  func.func @_target_net_kernel(%arg0: i32, %arg1: memref<448x12xf32, #tpu.memory_space<vmem>>, %arg2: memref<3x24xf32, #tpu.memory_space<vmem>>, %arg3: memref<216x64xf32, #tpu.memory_space<vmem>>, %arg4: memref<2x64xf32, #tpu.memory_space<vmem>>, %arg5: memref<576x96xf32, #tpu.memory_space<vmem>>, %arg6: memref<2x96xf32, #tpu.memory_space<vmem>>, %arg7: memref<576x96xf32, #tpu.memory_space<vmem>>, %arg8: memref<2x96xf32, #tpu.memory_space<vmem>>, %arg9: memref<384x96xf32, #tpu.memory_space<vmem>>, %arg10: memref<2x96xf32, #tpu.memory_space<vmem>>, %arg11: memref<96x200xf32, #tpu.memory_space<vmem>>, %arg12: memref<2x200xf32, #tpu.memory_space<vmem>>, %arg13: memref<200x200xf32, #tpu.memory_space<vmem>>, %arg14: memref<2x200xf32, #tpu.memory_space<vmem>>, %arg15: memref<200x128xf32, #tpu.memory_space<vmem>>, %arg16: memref<1x128xf32, #tpu.memory_space<vmem>>, %arg17: memref<8x128xf32, #tpu.memory_space<vmem>>, %arg18: memref<464x24xf32, #tpu.memory_space<vmem>>, %arg19: memref<464x64xf32, #tpu.memory_space<vmem>>, %arg20: memref<464x96xf32, #tpu.memory_space<vmem>>, %arg21: memref<464x96xf32, #tpu.memory_space<vmem>>) attributes {dimension_semantics = [#tpu.dimension_semantics<parallel>], iteration_bounds = array<i64: 1>, scalar_prefetch = 0 : i64, scratch_operands = 4 : i64, tpu.core_type = #tpu.core_type<tc>, window_params = [{transform_indices = @transform_0, window_bounds = array<i64: 448, 12>}, {pipeline_mode = #tpu.pipeline_mode<synchronous>, transform_indices = @transform_1, window_bounds = array<i64: 3, 24>}, {pipeline_mode = #tpu.pipeline_mode<synchronous>, transform_indices = @transform_2, window_bounds = array<i64: 216, 64>}, {pipeline_mode = #tpu.pipeline_mode<synchronous>, transform_indices = @transform_3, window_bounds = array<i64: 2, 64>}, {pipeline_mode = #tpu.pipeline_mode<synchronous>, transform_indices = @transform_4, window_bounds = array<i64: 576, 96>}, {pipeline_mode = #tpu.pipeline_mode<synchronous>, transform_indices = @transform_5, window_bounds = array<i64: 2, 96>}, {pipeline_mode = #tpu.pipeline_mode<synchronous>, transform_indices = @transform_6, window_bounds = array<i64: 576, 96>}, {pipeline_mode = #tpu.pipeline_mode<synchronous>, transform_indices = @transform_7, window_bounds = array<i64: 2, 96>}, {pipeline_mode = #tpu.pipeline_mode<synchronous>, transform_indices = @transform_8, window_bounds = array<i64: 384, 96>}, {pipeline_mode = #tpu.pipeline_mode<synchronous>, transform_indices = @transform_9, window_bounds = array<i64: 2, 96>}, {pipeline_mode = #tpu.pipeline_mode<synchronous>, transform_indices = @transform_10, window_bounds = array<i64: 96, 200>}, {pipeline_mode = #tpu.pipeline_mode<synchronous>, transform_indices = @transform_11, window_bounds = array<i64: 2, 200>}, {pipeline_mode = #tpu.pipeline_mode<synchronous>, transform_indices = @transform_12, window_bounds = array<i64: 200, 200>}, {pipeline_mode = #tpu.pipeline_mode<synchronous>, transform_indices = @transform_13, window_bounds = array<i64: 2, 200>}, {pipeline_mode = #tpu.pipeline_mode<synchronous>, transform_indices = @transform_14, window_bounds = array<i64: 200, 128>}, {pipeline_mode = #tpu.pipeline_mode<synchronous>, transform_indices = @transform_15, window_bounds = array<i64: 1, 128>}, {transform_indices = @transform_16, window_bounds = array<i64: 8, 128>}]} {
    %cst = arith.constant 0.000000e+00 : f32
    %0 = vector.broadcast %cst : f32 to vector<16x24xf32>
    %c448 = arith.constant 448 : index
    %c0 = arith.constant 0 : index
    %1 = vector.load %arg18[%c448, %c0] : memref<464x24xf32, #tpu.memory_space<vmem>>, vector<16x24xf32>
    tpu.vector_store %arg18[%c448, %c0], %0 {strides = array<i32>} : memref<464x24xf32, #tpu.memory_space<vmem>>, vector<16x24xf32>,
    %cst_0 = arith.constant 0.000000e+00 : f32
    %2 = vector.broadcast %cst_0 : f32 to vector<16x64xf32>
    %c448_1 = arith.constant 448 : index
    %c0_2 = arith.constant 0 : index
    %3 = vector.load %arg19[%c448_1, %c0_2] : memref<464x64xf32, #tpu.memory_space<vmem>>, vector<16x64xf32>
    tpu.vector_store %arg19[%c448_1, %c0_2], %2 {strides = array<i32>} : memref<464x64xf32, #tpu.memory_space<vmem>>, vector<16x64xf32>,
    %cst_3 = arith.constant 0.000000e+00 : f32
    %4 = vector.broadcast %cst_3 : f32 to vector<16x96xf32>
    %c448_4 = arith.constant 448 : index
    %c0_5 = arith.constant 0 : index
    %5 = vector.load %arg20[%c448_4, %c0_5] : memref<464x96xf32, #tpu.memory_space<vmem>>, vector<16x96xf32>
    tpu.vector_store %arg20[%c448_4, %c0_5], %4 {strides = array<i32>} : memref<464x96xf32, #tpu.memory_space<vmem>>, vector<16x96xf32>,
    %cst_6 = arith.constant 0.000000e+00 : f32
    %6 = vector.broadcast %cst_6 : f32 to vector<16x96xf32>
    %c448_7 = arith.constant 448 : index
    %c0_8 = arith.constant 0 : index
    %7 = vector.load %arg21[%c448_7, %c0_8] : memref<464x96xf32, #tpu.memory_space<vmem>>, vector<16x96xf32>
    tpu.vector_store %arg21[%c448_7, %c0_8], %6 {strides = array<i32>} : memref<464x96xf32, #tpu.memory_space<vmem>>, vector<16x96xf32>,
    %c0_9 = arith.constant 0 : index
    %c0_10 = arith.constant 0 : index
    %8 = vector.load %arg1[%c0_9, %c0_10] : memref<448x12xf32, #tpu.memory_space<vmem>>, vector<448x12xf32>
    %9 = tpu.concatenate %8, %8 in 1 : vector<448x12xf32>, vector<448x12xf32> -> vector<448x24xf32>
    %c0_11 = arith.constant 0 : index
    %c0_12 = arith.constant 0 : index
    %10 = vector.load %arg2[%c0_11, %c0_12] : memref<3x24xf32, #tpu.memory_space<vmem>>, vector<1x24xf32>
    %11 = vector.broadcast %10 : vector<1x24xf32> to vector<448x24xf32>
    %12 = arith.mulf %9, %11 : vector<448x24xf32>
    %c1 = arith.constant 1 : index
    %c0_13 = arith.constant 0 : index
    %13 = vector.load %arg2[%c1, %c0_13] : memref<3x24xf32, #tpu.memory_space<vmem>>, vector<1x24xf32>
    %14 = vector.broadcast %13 : vector<1x24xf32> to vector<448x24xf32>
    %15 = arith.addf %12, %14 : vector<448x24xf32>
    %c2 = arith.constant 2 : index
    %c0_14 = arith.constant 0 : index
    %16 = vector.load %arg2[%c2, %c0_14] : memref<3x24xf32, #tpu.memory_space<vmem>>, vector<1x24xf32>
    %cst_15 = arith.constant 0.000000e+00 : f32
    %17 = vector.broadcast %cst_15 : f32 to vector<448x24xf32>
    %18 = arith.cmpf oge, %15, %17 : vector<448x24xf32>
    %19 = vector.broadcast %16 : vector<1x24xf32> to vector<448x24xf32>
    %20 = arith.mulf %19, %15 : vector<448x24xf32>
    %21 = arith.select %18, %15, %20 : vector<448x24xi1>, vector<448x24xf32>
    %c0_16 = arith.constant 0 : index
    %c0_17 = arith.constant 0 : index
    %22 = vector.load %arg18[%c0_16, %c0_17] : memref<464x24xf32, #tpu.memory_space<vmem>>, vector<448x24xf32>
    tpu.vector_store %arg18[%c0_16, %c0_17], %21 {strides = array<i32>} : memref<464x24xf32, #tpu.memory_space<vmem>>, vector<448x24xf32>,
    %c0_18 = arith.constant 0 : index
    %c0_19 = arith.constant 0 : index
    %23 = vector.load %arg18[%c0_18, %c0_19] : memref<464x24xf32, #tpu.memory_space<vmem>>, vector<448x24xf32>
    %c0_20 = arith.constant 0 : index
    %c0_21 = arith.constant 0 : index
    %24 = vector.load %arg3[%c0_20, %c0_21] : memref<216x64xf32, #tpu.memory_space<vmem>>, vector<24x64xf32>
    %cst_22 = arith.constant dense<0.000000e+00> : vector<448x64xf32>
    %25 = tpu.matmul %23, %24, %cst_22 {dimension_numbers = #tpu.dot_dimension_numbers<[1], [0], [0], [1], [0, 0, 1, 1], [], []>} : vector<448x24xf32>, vector<24x64xf32>, vector<448x64xf32> -> vector<448x64xf32>
    %c1_23 = arith.constant 1 : index
    %c0_24 = arith.constant 0 : index
    %26 = vector.load %arg18[%c1_23, %c0_24] : memref<464x24xf32, #tpu.memory_space<vmem>>, vector<448x24xf32>
    %c24 = arith.constant 24 : index
    %c0_25 = arith.constant 0 : index
    %27 = vector.load %arg3[%c24, %c0_25] : memref<216x64xf32, #tpu.memory_space<vmem>>, vector<24x64xf32>
    %cst_26 = arith.constant dense<0.000000e+00> : vector<448x64xf32>
    %28 = tpu.matmul %26, %27, %cst_26 {dimension_numbers = #tpu.dot_dimension_numbers<[1], [0], [0], [1], [0, 0, 1, 1], [], []>} : vector<448x24xf32>, vector<24x64xf32>, vector<448x64xf32> -> vector<448x64xf32>
    %29 = arith.addf %25, %28 : vector<448x64xf32>
    %c2_27 = arith.constant 2 : index
    %c0_28 = arith.constant 0 : index
    %30 = vector.load %arg18[%c2_27, %c0_28] : memref<464x24xf32, #tpu.memory_space<vmem>>, vector<448x24xf32>
    %c48 = arith.constant 48 : index
    %c0_29 = arith.constant 0 : index
    %31 = vector.load %arg3[%c48, %c0_29] : memref<216x64xf32, #tpu.memory_space<vmem>>, vector<24x64xf32>
    %cst_30 = arith.constant dense<0.000000e+00> : vector<448x64xf32>
    %32 = tpu.matmul %30, %31, %cst_30 {dimension_numbers = #tpu.dot_dimension_numbers<[1], [0], [0], [1], [0, 0, 1, 1], [], []>} : vector<448x24xf32>, vector<24x64xf32>, vector<448x64xf32> -> vector<448x64xf32>
    %33 = arith.addf %29, %32 : vector<448x64xf32>
    %c7 = arith.constant 7 : index
    %c0_31 = arith.constant 0 : index
    %34 = vector.load %arg18[%c7, %c0_31] : memref<464x24xf32, #tpu.memory_space<vmem>>, vector<448x24xf32>
    %c72 = arith.constant 72 : index
    %c0_32 = arith.constant 0 : index
    %35 = vector.load %arg3[%c72, %c0_32] : memref<216x64xf32, #tpu.memory_space<vmem>>, vector<24x64xf32>
    %cst_33 = arith.constant dense<0.000000e+00> : vector<448x64xf32>
    %36 = tpu.matmul %34, %35, %cst_33 {dimension_numbers = #tpu.dot_dimension_numbers<[1], [0], [0], [1], [0, 0, 1, 1], [], []>} : vector<448x24xf32>, vector<24x64xf32>, vector<448x64xf32> -> vector<448x64xf32>
    %37 = arith.addf %33, %36 : vector<448x64xf32>
    %c8 = arith.constant 8 : index
    %c0_34 = arith.constant 0 : index
    %38 = vector.load %arg18[%c8, %c0_34] : memref<464x24xf32, #tpu.memory_space<vmem>>, vector<448x24xf32>
    %c96 = arith.constant 96 : index
    %c0_35 = arith.constant 0 : index
    %39 = vector.load %arg3[%c96, %c0_35] : memref<216x64xf32, #tpu.memory_space<vmem>>, vector<24x64xf32>
    %cst_36 = arith.constant dense<0.000000e+00> : vector<448x64xf32>
    %40 = tpu.matmul %38, %39, %cst_36 {dimension_numbers = #tpu.dot_dimension_numbers<[1], [0], [0], [1], [0, 0, 1, 1], [], []>} : vector<448x24xf32>, vector<24x64xf32>, vector<448x64xf32> -> vector<448x64xf32>
    %41 = arith.addf %37, %40 : vector<448x64xf32>
    %c9 = arith.constant 9 : index
    %c0_37 = arith.constant 0 : index
    %42 = vector.load %arg18[%c9, %c0_37] : memref<464x24xf32, #tpu.memory_space<vmem>>, vector<448x24xf32>
    %c120 = arith.constant 120 : index
    %c0_38 = arith.constant 0 : index
    %43 = vector.load %arg3[%c120, %c0_38] : memref<216x64xf32, #tpu.memory_space<vmem>>, vector<24x64xf32>
    %cst_39 = arith.constant dense<0.000000e+00> : vector<448x64xf32>
    %44 = tpu.matmul %42, %43, %cst_39 {dimension_numbers = #tpu.dot_dimension_numbers<[1], [0], [0], [1], [0, 0, 1, 1], [], []>} : vector<448x24xf32>, vector<24x64xf32>, vector<448x64xf32> -> vector<448x64xf32>
    %45 = arith.addf %41, %44 : vector<448x64xf32>
    %c14 = arith.constant 14 : index
    %c0_40 = arith.constant 0 : index
    %46 = vector.load %arg18[%c14, %c0_40] : memref<464x24xf32, #tpu.memory_space<vmem>>, vector<448x24xf32>
    %c144 = arith.constant 144 : index
    %c0_41 = arith.constant 0 : index
    %47 = vector.load %arg3[%c144, %c0_41] : memref<216x64xf32, #tpu.memory_space<vmem>>, vector<24x64xf32>
    %cst_42 = arith.constant dense<0.000000e+00> : vector<448x64xf32>
    %48 = tpu.matmul %46, %47, %cst_42 {dimension_numbers = #tpu.dot_dimension_numbers<[1], [0], [0], [1], [0, 0, 1, 1], [], []>} : vector<448x24xf32>, vector<24x64xf32>, vector<448x64xf32> -> vector<448x64xf32>
    %49 = arith.addf %45, %48 : vector<448x64xf32>
    %c15 = arith.constant 15 : index
    %c0_43 = arith.constant 0 : index
    %50 = vector.load %arg18[%c15, %c0_43] : memref<464x24xf32, #tpu.memory_space<vmem>>, vector<448x24xf32>
    %c168 = arith.constant 168 : index
    %c0_44 = arith.constant 0 : index
    %51 = vector.load %arg3[%c168, %c0_44] : memref<216x64xf32, #tpu.memory_space<vmem>>, vector<24x64xf32>
    %cst_45 = arith.constant dense<0.000000e+00> : vector<448x64xf32>
    %52 = tpu.matmul %50, %51, %cst_45 {dimension_numbers = #tpu.dot_dimension_numbers<[1], [0], [0], [1], [0, 0, 1, 1], [], []>} : vector<448x24xf32>, vector<24x64xf32>, vector<448x64xf32> -> vector<448x64xf32>
    %53 = arith.addf %49, %52 : vector<448x64xf32>
    %c16 = arith.constant 16 : index
    %c0_46 = arith.constant 0 : index
    %54 = vector.load %arg18[%c16, %c0_46] : memref<464x24xf32, #tpu.memory_space<vmem>>, vector<448x24xf32>
    %c192 = arith.constant 192 : index
    %c0_47 = arith.constant 0 : index
    %55 = vector.load %arg3[%c192, %c0_47] : memref<216x64xf32, #tpu.memory_space<vmem>>, vector<24x64xf32>
    %cst_48 = arith.constant dense<0.000000e+00> : vector<448x64xf32>
    %56 = tpu.matmul %54, %55, %cst_48 {dimension_numbers = #tpu.dot_dimension_numbers<[1], [0], [0], [1], [0, 0, 1, 1], [], []>} : vector<448x24xf32>, vector<24x64xf32>, vector<448x64xf32> -> vector<448x64xf32>
    %57 = arith.addf %53, %56 : vector<448x64xf32>
    %c0_49 = arith.constant 0 : index
    %c0_50 = arith.constant 0 : index
    %58 = vector.load %arg4[%c0_49, %c0_50] : memref<2x64xf32, #tpu.memory_space<vmem>>, vector<1x64xf32>
    %59 = vector.broadcast %58 : vector<1x64xf32> to vector<448x64xf32>
    %60 = arith.addf %57, %59 : vector<448x64xf32>
    %c1_51 = arith.constant 1 : index
    %c0_52 = arith.constant 0 : index
    %61 = vector.load %arg4[%c1_51, %c0_52] : memref<2x64xf32, #tpu.memory_space<vmem>>, vector<1x64xf32>
    %cst_53 = arith.constant 0.000000e+00 : f32
    %62 = vector.broadcast %cst_53 : f32 to vector<448x64xf32>
    %63 = arith.cmpf oge, %60, %62 : vector<448x64xf32>
    %64 = vector.broadcast %61 : vector<1x64xf32> to vector<448x64xf32>
    %65 = arith.mulf %64, %60 : vector<448x64xf32>
    %66 = arith.select %63, %60, %65 : vector<448x64xi1>, vector<448x64xf32>
    %c0_54 = arith.constant 0 : index
    %c0_55 = arith.constant 0 : index
    %67 = vector.load %arg19[%c0_54, %c0_55] : memref<464x64xf32, #tpu.memory_space<vmem>>, vector<448x64xf32>
    tpu.vector_store %arg19[%c0_54, %c0_55], %66 {strides = array<i32>} : memref<464x64xf32, #tpu.memory_space<vmem>>, vector<448x64xf32>,
    %c0_56 = arith.constant 0 : index
    %c0_57 = arith.constant 0 : index
    %68 = vector.load %arg19[%c0_56, %c0_57] : memref<464x64xf32, #tpu.memory_space<vmem>>, vector<448x64xf32>
    %c0_58 = arith.constant 0 : index
    %c0_59 = arith.constant 0 : index
    %69 = vector.load %arg5[%c0_58, %c0_59] : memref<576x96xf32, #tpu.memory_space<vmem>>, vector<64x96xf32>
    %cst_60 = arith.constant dense<0.000000e+00> : vector<448x96xf32>
    %70 = tpu.matmul %68, %69, %cst_60 {dimension_numbers = #tpu.dot_dimension_numbers<[1], [0], [0], [1], [0, 0, 1, 1], [], []>} : vector<448x64xf32>, vector<64x96xf32>, vector<448x96xf32> -> vector<448x96xf32>
    %c1_61 = arith.constant 1 : index
    %c0_62 = arith.constant 0 : index
    %71 = vector.load %arg19[%c1_61, %c0_62] : memref<464x64xf32, #tpu.memory_space<vmem>>, vector<448x64xf32>
    %c64 = arith.constant 64 : index
    %c0_63 = arith.constant 0 : index
    %72 = vector.load %arg5[%c64, %c0_63] : memref<576x96xf32, #tpu.memory_space<vmem>>, vector<64x96xf32>
    %cst_64 = arith.constant dense<0.000000e+00> : vector<448x96xf32>
    %73 = tpu.matmul %71, %72, %cst_64 {dimension_numbers = #tpu.dot_dimension_numbers<[1], [0], [0], [1], [0, 0, 1, 1], [], []>} : vector<448x64xf32>, vector<64x96xf32>, vector<448x96xf32> -> vector<448x96xf32>
    %74 = arith.addf %70, %73 : vector<448x96xf32>
    %c2_65 = arith.constant 2 : index
    %c0_66 = arith.constant 0 : index
    %75 = vector.load %arg19[%c2_65, %c0_66] : memref<464x64xf32, #tpu.memory_space<vmem>>, vector<448x64xf32>
    %c128 = arith.constant 128 : index
    %c0_67 = arith.constant 0 : index
    %76 = vector.load %arg5[%c128, %c0_67] : memref<576x96xf32, #tpu.memory_space<vmem>>, vector<64x96xf32>
    %cst_68 = arith.constant dense<0.000000e+00> : vector<448x96xf32>
    %77 = tpu.matmul %75, %76, %cst_68 {dimension_numbers = #tpu.dot_dimension_numbers<[1], [0], [0], [1], [0, 0, 1, 1], [], []>} : vector<448x64xf32>, vector<64x96xf32>, vector<448x96xf32> -> vector<448x96xf32>
    %78 = arith.addf %74, %77 : vector<448x96xf32>
    %c7_69 = arith.constant 7 : index
    %c0_70 = arith.constant 0 : index
    %79 = vector.load %arg19[%c7_69, %c0_70] : memref<464x64xf32, #tpu.memory_space<vmem>>, vector<448x64xf32>
    %c192_71 = arith.constant 192 : index
    %c0_72 = arith.constant 0 : index
    %80 = vector.load %arg5[%c192_71, %c0_72] : memref<576x96xf32, #tpu.memory_space<vmem>>, vector<64x96xf32>
    %cst_73 = arith.constant dense<0.000000e+00> : vector<448x96xf32>
    %81 = tpu.matmul %79, %80, %cst_73 {dimension_numbers = #tpu.dot_dimension_numbers<[1], [0], [0], [1], [0, 0, 1, 1], [], []>} : vector<448x64xf32>, vector<64x96xf32>, vector<448x96xf32> -> vector<448x96xf32>
    %82 = arith.addf %78, %81 : vector<448x96xf32>
    %c8_74 = arith.constant 8 : index
    %c0_75 = arith.constant 0 : index
    %83 = vector.load %arg19[%c8_74, %c0_75] : memref<464x64xf32, #tpu.memory_space<vmem>>, vector<448x64xf32>
    %c256 = arith.constant 256 : index
    %c0_76 = arith.constant 0 : index
    %84 = vector.load %arg5[%c256, %c0_76] : memref<576x96xf32, #tpu.memory_space<vmem>>, vector<64x96xf32>
    %cst_77 = arith.constant dense<0.000000e+00> : vector<448x96xf32>
    %85 = tpu.matmul %83, %84, %cst_77 {dimension_numbers = #tpu.dot_dimension_numbers<[1], [0], [0], [1], [0, 0, 1, 1], [], []>} : vector<448x64xf32>, vector<64x96xf32>, vector<448x96xf32> -> vector<448x96xf32>
    %86 = arith.addf %82, %85 : vector<448x96xf32>
    %c9_78 = arith.constant 9 : index
    %c0_79 = arith.constant 0 : index
    %87 = vector.load %arg19[%c9_78, %c0_79] : memref<464x64xf32, #tpu.memory_space<vmem>>, vector<448x64xf32>
    %c320 = arith.constant 320 : index
    %c0_80 = arith.constant 0 : index
    %88 = vector.load %arg5[%c320, %c0_80] : memref<576x96xf32, #tpu.memory_space<vmem>>, vector<64x96xf32>
    %cst_81 = arith.constant dense<0.000000e+00> : vector<448x96xf32>
    %89 = tpu.matmul %87, %88, %cst_81 {dimension_numbers = #tpu.dot_dimension_numbers<[1], [0], [0], [1], [0, 0, 1, 1], [], []>} : vector<448x64xf32>, vector<64x96xf32>, vector<448x96xf32> -> vector<448x96xf32>
    %90 = arith.addf %86, %89 : vector<448x96xf32>
    %c14_82 = arith.constant 14 : index
    %c0_83 = arith.constant 0 : index
    %91 = vector.load %arg19[%c14_82, %c0_83] : memref<464x64xf32, #tpu.memory_space<vmem>>, vector<448x64xf32>
    %c384 = arith.constant 384 : index
    %c0_84 = arith.constant 0 : index
    %92 = vector.load %arg5[%c384, %c0_84] : memref<576x96xf32, #tpu.memory_space<vmem>>, vector<64x96xf32>
    %cst_85 = arith.constant dense<0.000000e+00> : vector<448x96xf32>
    %93 = tpu.matmul %91, %92, %cst_85 {dimension_numbers = #tpu.dot_dimension_numbers<[1], [0], [0], [1], [0, 0, 1, 1], [], []>} : vector<448x64xf32>, vector<64x96xf32>, vector<448x96xf32> -> vector<448x96xf32>
    %94 = arith.addf %90, %93 : vector<448x96xf32>
    %c15_86 = arith.constant 15 : index
    %c0_87 = arith.constant 0 : index
    %95 = vector.load %arg19[%c15_86, %c0_87] : memref<464x64xf32, #tpu.memory_space<vmem>>, vector<448x64xf32>
    %c448_88 = arith.constant 448 : index
    %c0_89 = arith.constant 0 : index
    %96 = vector.load %arg5[%c448_88, %c0_89] : memref<576x96xf32, #tpu.memory_space<vmem>>, vector<64x96xf32>
    %cst_90 = arith.constant dense<0.000000e+00> : vector<448x96xf32>
    %97 = tpu.matmul %95, %96, %cst_90 {dimension_numbers = #tpu.dot_dimension_numbers<[1], [0], [0], [1], [0, 0, 1, 1], [], []>} : vector<448x64xf32>, vector<64x96xf32>, vector<448x96xf32> -> vector<448x96xf32>
    %98 = arith.addf %94, %97 : vector<448x96xf32>
    %c16_91 = arith.constant 16 : index
    %c0_92 = arith.constant 0 : index
    %99 = vector.load %arg19[%c16_91, %c0_92] : memref<464x64xf32, #tpu.memory_space<vmem>>, vector<448x64xf32>
    %c512 = arith.constant 512 : index
    %c0_93 = arith.constant 0 : index
    %100 = vector.load %arg5[%c512, %c0_93] : memref<576x96xf32, #tpu.memory_space<vmem>>, vector<64x96xf32>
    %cst_94 = arith.constant dense<0.000000e+00> : vector<448x96xf32>
    %101 = tpu.matmul %99, %100, %cst_94 {dimension_numbers = #tpu.dot_dimension_numbers<[1], [0], [0], [1], [0, 0, 1, 1], [], []>} : vector<448x64xf32>, vector<64x96xf32>, vector<448x96xf32> -> vector<448x96xf32>
    %102 = arith.addf %98, %101 : vector<448x96xf32>
    %c0_95 = arith.constant 0 : index
    %c0_96 = arith.constant 0 : index
    %103 = vector.load %arg6[%c0_95, %c0_96] : memref<2x96xf32, #tpu.memory_space<vmem>>, vector<1x96xf32>
    %104 = vector.broadcast %103 : vector<1x96xf32> to vector<448x96xf32>
    %105 = arith.addf %102, %104 : vector<448x96xf32>
    %c1_97 = arith.constant 1 : index
    %c0_98 = arith.constant 0 : index
    %106 = vector.load %arg6[%c1_97, %c0_98] : memref<2x96xf32, #tpu.memory_space<vmem>>, vector<1x96xf32>
    %cst_99 = arith.constant 0.000000e+00 : f32
    %107 = vector.broadcast %cst_99 : f32 to vector<448x96xf32>
    %108 = arith.cmpf oge, %105, %107 : vector<448x96xf32>
    %109 = vector.broadcast %106 : vector<1x96xf32> to vector<448x96xf32>
    %110 = arith.mulf %109, %105 : vector<448x96xf32>
    %111 = arith.select %108, %105, %110 : vector<448x96xi1>, vector<448x96xf32>
    %c0_100 = arith.constant 0 : index
    %c0_101 = arith.constant 0 : index
    %112 = vector.load %arg20[%c0_100, %c0_101] : memref<464x96xf32, #tpu.memory_space<vmem>>, vector<448x96xf32>
    tpu.vector_store %arg20[%c0_100, %c0_101], %111 {strides = array<i32>} : memref<464x96xf32, #tpu.memory_space<vmem>>, vector<448x96xf32>,
    %c0_102 = arith.constant 0 : index
    %c0_103 = arith.constant 0 : index
    %113 = vector.load %arg20[%c0_102, %c0_103] : memref<464x96xf32, #tpu.memory_space<vmem>>, vector<448x96xf32>
    %c0_104 = arith.constant 0 : index
    %c0_105 = arith.constant 0 : index
    %114 = vector.load %arg7[%c0_104, %c0_105] : memref<576x96xf32, #tpu.memory_space<vmem>>, vector<96x96xf32>
    %cst_106 = arith.constant dense<0.000000e+00> : vector<448x96xf32>
    %115 = tpu.matmul %113, %114, %cst_106 {dimension_numbers = #tpu.dot_dimension_numbers<[1], [0], [0], [1], [0, 0, 1, 1], [], []>} : vector<448x96xf32>, vector<96x96xf32>, vector<448x96xf32> -> vector<448x96xf32>
    %c1_107 = arith.constant 1 : index
    %c0_108 = arith.constant 0 : index
    %116 = vector.load %arg20[%c1_107, %c0_108] : memref<464x96xf32, #tpu.memory_space<vmem>>, vector<448x96xf32>
    %c96_109 = arith.constant 96 : index
    %c0_110 = arith.constant 0 : index
    %117 = vector.load %arg7[%c96_109, %c0_110] : memref<576x96xf32, #tpu.memory_space<vmem>>, vector<96x96xf32>
    %cst_111 = arith.constant dense<0.000000e+00> : vector<448x96xf32>
    %118 = tpu.matmul %116, %117, %cst_111 {dimension_numbers = #tpu.dot_dimension_numbers<[1], [0], [0], [1], [0, 0, 1, 1], [], []>} : vector<448x96xf32>, vector<96x96xf32>, vector<448x96xf32> -> vector<448x96xf32>
    %119 = arith.addf %115, %118 : vector<448x96xf32>
    %c7_112 = arith.constant 7 : index
    %c0_113 = arith.constant 0 : index
    %120 = vector.load %arg20[%c7_112, %c0_113] : memref<464x96xf32, #tpu.memory_space<vmem>>, vector<448x96xf32>
    %c192_114 = arith.constant 192 : index
    %c0_115 = arith.constant 0 : index
    %121 = vector.load %arg7[%c192_114, %c0_115] : memref<576x96xf32, #tpu.memory_space<vmem>>, vector<96x96xf32>
    %cst_116 = arith.constant dense<0.000000e+00> : vector<448x96xf32>
    %122 = tpu.matmul %120, %121, %cst_116 {dimension_numbers = #tpu.dot_dimension_numbers<[1], [0], [0], [1], [0, 0, 1, 1], [], []>} : vector<448x96xf32>, vector<96x96xf32>, vector<448x96xf32> -> vector<448x96xf32>
    %123 = arith.addf %119, %122 : vector<448x96xf32>
    %c8_117 = arith.constant 8 : index
    %c0_118 = arith.constant 0 : index
    %124 = vector.load %arg20[%c8_117, %c0_118] : memref<464x96xf32, #tpu.memory_space<vmem>>, vector<448x96xf32>
    %c288 = arith.constant 288 : index
    %c0_119 = arith.constant 0 : index
    %125 = vector.load %arg7[%c288, %c0_119] : memref<576x96xf32, #tpu.memory_space<vmem>>, vector<96x96xf32>
    %cst_120 = arith.constant dense<0.000000e+00> : vector<448x96xf32>
    %126 = tpu.matmul %124, %125, %cst_120 {dimension_numbers = #tpu.dot_dimension_numbers<[1], [0], [0], [1], [0, 0, 1, 1], [], []>} : vector<448x96xf32>, vector<96x96xf32>, vector<448x96xf32> -> vector<448x96xf32>
    %127 = arith.addf %123, %126 : vector<448x96xf32>
    %c14_121 = arith.constant 14 : index
    %c0_122 = arith.constant 0 : index
    %128 = vector.load %arg20[%c14_121, %c0_122] : memref<464x96xf32, #tpu.memory_space<vmem>>, vector<448x96xf32>
    %c384_123 = arith.constant 384 : index
    %c0_124 = arith.constant 0 : index
    %129 = vector.load %arg7[%c384_123, %c0_124] : memref<576x96xf32, #tpu.memory_space<vmem>>, vector<96x96xf32>
    %cst_125 = arith.constant dense<0.000000e+00> : vector<448x96xf32>
    %130 = tpu.matmul %128, %129, %cst_125 {dimension_numbers = #tpu.dot_dimension_numbers<[1], [0], [0], [1], [0, 0, 1, 1], [], []>} : vector<448x96xf32>, vector<96x96xf32>, vector<448x96xf32> -> vector<448x96xf32>
    %131 = arith.addf %127, %130 : vector<448x96xf32>
    %c15_126 = arith.constant 15 : index
    %c0_127 = arith.constant 0 : index
    %132 = vector.load %arg20[%c15_126, %c0_127] : memref<464x96xf32, #tpu.memory_space<vmem>>, vector<448x96xf32>
    %c480 = arith.constant 480 : index
    %c0_128 = arith.constant 0 : index
    %133 = vector.load %arg7[%c480, %c0_128] : memref<576x96xf32, #tpu.memory_space<vmem>>, vector<96x96xf32>
    %cst_129 = arith.constant dense<0.000000e+00> : vector<448x96xf32>
    %134 = tpu.matmul %132, %133, %cst_129 {dimension_numbers = #tpu.dot_dimension_numbers<[1], [0], [0], [1], [0, 0, 1, 1], [], []>} : vector<448x96xf32>, vector<96x96xf32>, vector<448x96xf32> -> vector<448x96xf32>
    %135 = arith.addf %131, %134 : vector<448x96xf32>
    %c0_130 = arith.constant 0 : index
    %c0_131 = arith.constant 0 : index
    %136 = vector.load %arg8[%c0_130, %c0_131] : memref<2x96xf32, #tpu.memory_space<vmem>>, vector<1x96xf32>
    %137 = vector.broadcast %136 : vector<1x96xf32> to vector<448x96xf32>
    %138 = arith.addf %135, %137 : vector<448x96xf32>
    %c1_132 = arith.constant 1 : index
    %c0_133 = arith.constant 0 : index
    %139 = vector.load %arg8[%c1_132, %c0_133] : memref<2x96xf32, #tpu.memory_space<vmem>>, vector<1x96xf32>
    %cst_134 = arith.constant 0.000000e+00 : f32
    %140 = vector.broadcast %cst_134 : f32 to vector<448x96xf32>
    %141 = arith.cmpf oge, %138, %140 : vector<448x96xf32>
    %142 = vector.broadcast %139 : vector<1x96xf32> to vector<448x96xf32>
    %143 = arith.mulf %142, %138 : vector<448x96xf32>
    %144 = arith.select %141, %138, %143 : vector<448x96xi1>, vector<448x96xf32>
    %c0_135 = arith.constant 0 : index
    %c0_136 = arith.constant 0 : index
    %145 = vector.load %arg21[%c0_135, %c0_136] : memref<464x96xf32, #tpu.memory_space<vmem>>, vector<448x96xf32>
    tpu.vector_store %arg21[%c0_135, %c0_136], %144 {strides = array<i32>} : memref<464x96xf32, #tpu.memory_space<vmem>>, vector<448x96xf32>,
    %c0_137 = arith.constant 0 : index
    %c0_138 = arith.constant 0 : index
    %146 = tpu.strided_load %arg21[%c0_137, %c0_138] {strides = array<i32: 56, 1>} : memref<464x96xf32, #tpu.memory_space<vmem>>, vector<8x96xf32>
    %c0_139 = arith.constant 0 : index
    %c0_140 = arith.constant 0 : index
    %147 = vector.load %arg9[%c0_139, %c0_140] : memref<384x96xf32, #tpu.memory_space<vmem>>, vector<96x96xf32>
    %cst_141 = arith.constant dense<0.000000e+00> : vector<8x96xf32>
    %148 = tpu.matmul %146, %147, %cst_141 {dimension_numbers = #tpu.dot_dimension_numbers<[1], [0], [0], [1], [0, 0, 1, 1], [], []>} : vector<8x96xf32>, vector<96x96xf32>, vector<8x96xf32> -> vector<8x96xf32>
    %c1_142 = arith.constant 1 : index
    %c0_143 = arith.constant 0 : index
    %149 = tpu.strided_load %arg21[%c1_142, %c0_143] {strides = array<i32: 56, 1>} : memref<464x96xf32, #tpu.memory_space<vmem>>, vector<8x96xf32>
    %c96_144 = arith.constant 96 : index
    %c0_145 = arith.constant 0 : index
    %150 = vector.load %arg9[%c96_144, %c0_145] : memref<384x96xf32, #tpu.memory_space<vmem>>, vector<96x96xf32>
    %cst_146 = arith.constant dense<0.000000e+00> : vector<8x96xf32>
    %151 = tpu.matmul %149, %150, %cst_146 {dimension_numbers = #tpu.dot_dimension_numbers<[1], [0], [0], [1], [0, 0, 1, 1], [], []>} : vector<8x96xf32>, vector<96x96xf32>, vector<8x96xf32> -> vector<8x96xf32>
    %152 = arith.addf %148, %151 : vector<8x96xf32>
    %c7_147 = arith.constant 7 : index
    %c0_148 = arith.constant 0 : index
    %153 = tpu.strided_load %arg21[%c7_147, %c0_148] {strides = array<i32: 56, 1>} : memref<464x96xf32, #tpu.memory_space<vmem>>, vector<8x96xf32>
    %c192_149 = arith.constant 192 : index
    %c0_150 = arith.constant 0 : index
    %154 = vector.load %arg9[%c192_149, %c0_150] : memref<384x96xf32, #tpu.memory_space<vmem>>, vector<96x96xf32>
    %cst_151 = arith.constant dense<0.000000e+00> : vector<8x96xf32>
    %155 = tpu.matmul %153, %154, %cst_151 {dimension_numbers = #tpu.dot_dimension_numbers<[1], [0], [0], [1], [0, 0, 1, 1], [], []>} : vector<8x96xf32>, vector<96x96xf32>, vector<8x96xf32> -> vector<8x96xf32>
    %156 = arith.addf %152, %155 : vector<8x96xf32>
    %c8_152 = arith.constant 8 : index
    %c0_153 = arith.constant 0 : index
    %157 = tpu.strided_load %arg21[%c8_152, %c0_153] {strides = array<i32: 56, 1>} : memref<464x96xf32, #tpu.memory_space<vmem>>, vector<8x96xf32>
    %c288_154 = arith.constant 288 : index
    %c0_155 = arith.constant 0 : index
    %158 = vector.load %arg9[%c288_154, %c0_155] : memref<384x96xf32, #tpu.memory_space<vmem>>, vector<96x96xf32>
    %cst_156 = arith.constant dense<0.000000e+00> : vector<8x96xf32>
    %159 = tpu.matmul %157, %158, %cst_156 {dimension_numbers = #tpu.dot_dimension_numbers<[1], [0], [0], [1], [0, 0, 1, 1], [], []>} : vector<8x96xf32>, vector<96x96xf32>, vector<8x96xf32> -> vector<8x96xf32>
    %160 = arith.addf %156, %159 : vector<8x96xf32>
    %c0_157 = arith.constant 0 : index
    %c0_158 = arith.constant 0 : index
    %161 = vector.load %arg10[%c0_157, %c0_158] : memref<2x96xf32, #tpu.memory_space<vmem>>, vector<1x96xf32>
    %162 = vector.broadcast %161 : vector<1x96xf32> to vector<8x96xf32>
    %163 = arith.addf %160, %162 : vector<8x96xf32>
    %c1_159 = arith.constant 1 : index
    %c0_160 = arith.constant 0 : index
    %164 = vector.load %arg10[%c1_159, %c0_160] : memref<2x96xf32, #tpu.memory_space<vmem>>, vector<1x96xf32>
    %cst_161 = arith.constant 0.000000e+00 : f32
    %165 = vector.broadcast %cst_161 : f32 to vector<8x96xf32>
    %166 = arith.cmpf oge, %163, %165 : vector<8x96xf32>
    %167 = vector.broadcast %164 : vector<1x96xf32> to vector<8x96xf32>
    %168 = arith.mulf %167, %163 : vector<8x96xf32>
    %169 = arith.select %166, %163, %168 : vector<8x96xi1>, vector<8x96xf32>
    %c0_162 = arith.constant 0 : index
    %c0_163 = arith.constant 0 : index
    %170 = vector.load %arg11[%c0_162, %c0_163] : memref<96x200xf32, #tpu.memory_space<vmem>>, vector<96x200xf32>
    %cst_164 = arith.constant dense<0.000000e+00> : vector<8x200xf32>
    %171 = tpu.matmul %169, %170, %cst_164 {dimension_numbers = #tpu.dot_dimension_numbers<[1], [0], [0], [1], [0, 0, 1, 1], [], []>} : vector<8x96xf32>, vector<96x200xf32>, vector<8x200xf32> -> vector<8x200xf32>
    %c0_165 = arith.constant 0 : index
    %c0_166 = arith.constant 0 : index
    %172 = vector.load %arg12[%c0_165, %c0_166] : memref<2x200xf32, #tpu.memory_space<vmem>>, vector<1x200xf32>
    %173 = vector.broadcast %172 : vector<1x200xf32> to vector<8x200xf32>
    %174 = arith.addf %171, %173 : vector<8x200xf32>
    %c1_167 = arith.constant 1 : index
    %c0_168 = arith.constant 0 : index
    %175 = vector.load %arg12[%c1_167, %c0_168] : memref<2x200xf32, #tpu.memory_space<vmem>>, vector<1x200xf32>
    %cst_169 = arith.constant 0.000000e+00 : f32
    %176 = vector.broadcast %cst_169 : f32 to vector<8x200xf32>
    %177 = arith.cmpf oge, %174, %176 : vector<8x200xf32>
    %178 = vector.broadcast %175 : vector<1x200xf32> to vector<8x200xf32>
    %179 = arith.mulf %178, %174 : vector<8x200xf32>
    %180 = arith.select %177, %174, %179 : vector<8x200xi1>, vector<8x200xf32>
    %c0_170 = arith.constant 0 : index
    %c0_171 = arith.constant 0 : index
    %181 = vector.load %arg13[%c0_170, %c0_171] : memref<200x200xf32, #tpu.memory_space<vmem>>, vector<200x200xf32>
    %cst_172 = arith.constant dense<0.000000e+00> : vector<8x200xf32>
    %182 = tpu.matmul %180, %181, %cst_172 {dimension_numbers = #tpu.dot_dimension_numbers<[1], [0], [0], [1], [0, 0, 1, 1], [], []>} : vector<8x200xf32>, vector<200x200xf32>, vector<8x200xf32> -> vector<8x200xf32>
    %c0_173 = arith.constant 0 : index
    %c0_174 = arith.constant 0 : index
    %183 = vector.load %arg14[%c0_173, %c0_174] : memref<2x200xf32, #tpu.memory_space<vmem>>, vector<1x200xf32>
    %184 = vector.broadcast %183 : vector<1x200xf32> to vector<8x200xf32>
    %185 = arith.addf %182, %184 : vector<8x200xf32>
    %c1_175 = arith.constant 1 : index
    %c0_176 = arith.constant 0 : index
    %186 = vector.load %arg14[%c1_175, %c0_176] : memref<2x200xf32, #tpu.memory_space<vmem>>, vector<1x200xf32>
    %cst_177 = arith.constant 0.000000e+00 : f32
    %187 = vector.broadcast %cst_177 : f32 to vector<8x200xf32>
    %188 = arith.cmpf oge, %185, %187 : vector<8x200xf32>
    %189 = vector.broadcast %186 : vector<1x200xf32> to vector<8x200xf32>
    %190 = arith.mulf %189, %185 : vector<8x200xf32>
    %191 = arith.select %188, %185, %190 : vector<8x200xi1>, vector<8x200xf32>
    %c0_178 = arith.constant 0 : index
    %c0_179 = arith.constant 0 : index
    %192 = vector.load %arg15[%c0_178, %c0_179] : memref<200x128xf32, #tpu.memory_space<vmem>>, vector<200x128xf32>
    %cst_180 = arith.constant dense<0.000000e+00> : vector<8x128xf32>
    %193 = tpu.matmul %191, %192, %cst_180 {dimension_numbers = #tpu.dot_dimension_numbers<[1], [0], [0], [1], [0, 0, 1, 1], [], []>} : vector<8x200xf32>, vector<200x128xf32>, vector<8x128xf32> -> vector<8x128xf32>
    %c0_181 = arith.constant 0 : index
    %c0_182 = arith.constant 0 : index
    %194 = vector.load %arg16[%c0_181, %c0_182] : memref<1x128xf32, #tpu.memory_space<vmem>>, vector<1x128xf32>
    %195 = vector.broadcast %194 : vector<1x128xf32> to vector<8x128xf32>
    %196 = arith.addf %193, %195 : vector<8x128xf32>
    %cst_183 = arith.constant dense<0xFF800000> : vector<8xf32>
    %197 = vector.multi_reduction <maximumf>, %196, %cst_183 [1] : vector<8x128xf32> to vector<8xf32>
    %198 = vector.shape_cast %197 : vector<8xf32> to vector<8x1xf32>
    %199 = vector.broadcast %198 : vector<8x1xf32> to vector<8x128xf32>
    %200 = arith.subf %196, %199 : vector<8x128xf32>
    %201 = math.exp %200 : vector<8x128xf32>
    %cst_184 = arith.constant dense<0.000000e+00> : vector<8xf32>
    %202 = vector.multi_reduction <add>, %201, %cst_184 [1] : vector<8x128xf32> to vector<8xf32>
    %203 = vector.shape_cast %202 : vector<8xf32> to vector<8x1xf32>
    %204 = math.log %203 : vector<8x1xf32>
    %205 = vector.broadcast %204 : vector<8x1xf32> to vector<8x128xf32>
    %206 = arith.subf %200, %205 : vector<8x128xf32>
    %c0_185 = arith.constant 0 : index
    %c0_186 = arith.constant 0 : index
    %207 = vector.load %arg17[%c0_185, %c0_186] : memref<8x128xf32, #tpu.memory_space<vmem>>, vector<8x128xf32>
    tpu.vector_store %arg17[%c0_185, %c0_186], %206 {strides = array<i32>} : memref<8x128xf32, #tpu.memory_space<vmem>>, vector<8x128xf32>,
    return
  }
  func.func @transform_0(%arg0: i32) -> (i32, i32) {
    %c0_i32 = arith.constant 0 : i32
    %c0_i32_0 = arith.constant 0 : i32
    return %arg0, %c0_i32 : i32, i32
  }
  func.func @transform_1(%arg0: i32) -> (i32, i32) {
    %c0_i32 = arith.constant 0 : i32
    %c0_i32_0 = arith.constant 0 : i32
    %c0_i32_1 = arith.constant 0 : i32
    return %c0_i32, %c0_i32_0 : i32, i32
  }
  func.func @transform_2(%arg0: i32) -> (i32, i32) {
    %c0_i32 = arith.constant 0 : i32
    %c0_i32_0 = arith.constant 0 : i32
    %c0_i32_1 = arith.constant 0 : i32
    return %c0_i32, %c0_i32_0 : i32, i32
  }
  func.func @transform_3(%arg0: i32) -> (i32, i32) {
    %c0_i32 = arith.constant 0 : i32
    %c0_i32_0 = arith.constant 0 : i32
    %c0_i32_1 = arith.constant 0 : i32
    return %c0_i32, %c0_i32_0 : i32, i32
  }
  func.func @transform_4(%arg0: i32) -> (i32, i32) {
    %c0_i32 = arith.constant 0 : i32
    %c0_i32_0 = arith.constant 0 : i32
    %c0_i32_1 = arith.constant 0 : i32
    return %c0_i32, %c0_i32_0 : i32, i32
  }
  func.func @transform_5(%arg0: i32) -> (i32, i32) {
    %c0_i32 = arith.constant 0 : i32
    %c0_i32_0 = arith.constant 0 : i32
    %c0_i32_1 = arith.constant 0 : i32
    return %c0_i32, %c0_i32_0 : i32, i32
  }
  func.func @transform_6(%arg0: i32) -> (i32, i32) {
    %c0_i32 = arith.constant 0 : i32
    %c0_i32_0 = arith.constant 0 : i32
    %c0_i32_1 = arith.constant 0 : i32
    return %c0_i32, %c0_i32_0 : i32, i32
  }
  func.func @transform_7(%arg0: i32) -> (i32, i32) {
    %c0_i32 = arith.constant 0 : i32
    %c0_i32_0 = arith.constant 0 : i32
    %c0_i32_1 = arith.constant 0 : i32
    return %c0_i32, %c0_i32_0 : i32, i32
  }
  func.func @transform_8(%arg0: i32) -> (i32, i32) {
    %c0_i32 = arith.constant 0 : i32
    %c0_i32_0 = arith.constant 0 : i32
    %c0_i32_1 = arith.constant 0 : i32
    return %c0_i32, %c0_i32_0 : i32, i32
  }
  func.func @transform_9(%arg0: i32) -> (i32, i32) {
    %c0_i32 = arith.constant 0 : i32
    %c0_i32_0 = arith.constant 0 : i32
    %c0_i32_1 = arith.constant 0 : i32
    return %c0_i32, %c0_i32_0 : i32, i32
  }
  func.func @transform_10(%arg0: i32) -> (i32, i32) {
    %c0_i32 = arith.constant 0 : i32
    %c0_i32_0 = arith.constant 0 : i32
    %c0_i32_1 = arith.constant 0 : i32
    return %c0_i32, %c0_i32_0 : i32, i32
  }
  func.func @transform_11(%arg0: i32) -> (i32, i32) {
    %c0_i32 = arith.constant 0 : i32
    %c0_i32_0 = arith.constant 0 : i32
    %c0_i32_1 = arith.constant 0 : i32
    return %c0_i32, %c0_i32_0 : i32, i32
  }
  func.func @transform_12(%arg0: i32) -> (i32, i32) {
    %c0_i32 = arith.constant 0 : i32
    %c0_i32_0 = arith.constant 0 : i32
    %c0_i32_1 = arith.constant 0 : i32
    return %c0_i32, %c0_i32_0 : i32, i32
  }
  func.func @transform_13(%arg0: i32) -> (i32, i32) {
    %c0_i32 = arith.constant 0 : i32
    %c0_i32_0 = arith.constant 0 : i32
    %c0_i32_1 = arith.constant 0 : i32
    return %c0_i32, %c0_i32_0 : i32, i32
  }
  func.func @transform_14(%arg0: i32) -> (i32, i32) {
    %c0_i32 = arith.constant 0 : i32
    %c0_i32_0 = arith.constant 0 : i32
    %c0_i32_1 = arith.constant 0 : i32
    return %c0_i32, %c0_i32_0 : i32, i32
  }
  func.func @transform_15(%arg0: i32) -> (i32, i32) {
    %c0_i32 = arith.constant 0 : i32
    %c0_i32_0 = arith.constant 0 : i32
    %c0_i32_1 = arith.constant 0 : i32
    return %c0_i32, %c0_i32_0 : i32, i32
  }
  func.func @transform_16(%arg0: i32) -> (i32, i32) {
    %c0_i32 = arith.constant 0 : i32
    %c0_i32_0 = arith.constant 0 : i32
    return %arg0, %c0_i32 : i32, i32
  }
}

</mosaic_0001>

<llo_original>
// kernel: _lambda_.1
$region0: #{_lambda_.1}
  #allocation0 [shape = 'u32[]', space=smem, size = 0x4, offset = 0x4, fixed_abs, tag = 'smem constant byte address 0x4 - core index']
  #allocation1 [shape = 'u32[72,128]{1,0:T(1,128)}', space=vmem, size = 0x9000, scoped, tag = 'internal scratch']
  #allocation2 [shape = 'f32[464,24]{1,0:T(8,128)}', space=vmem, size = 0x3a000, scoped, tag = 'scratch operand']
  #allocation3 [shape = 'f32[464,64]{1,0:T(8,128)}', space=vmem, size = 0x3a000, scoped, tag = 'scratch operand']
  #allocation4 [shape = 'f32[464,96]{1,0:T(8,128)}', space=vmem, size = 0x3a000, scoped, tag = 'scratch operand']
  #allocation5 [shape = 'f32[464,96]{1,0:T(8,128)}', space=vmem, size = 0x3a000, scoped, tag = 'scratch operand']
  %s0 = inlined_call_operand.vmem [shape: f32[448,12], index: 0, kind: input, shape index: {}]
  %s1 = inlined_call_operand.vmem [shape: f32[3,24], index: 1, kind: input, shape index: {}]
  %s2 = inlined_call_operand.hbm [shape: f32[216,64], index: 2, kind: input, shape index: {}]
  %s3 = inlined_call_operand.vmem [shape: f32[2,64], index: 3, kind: input, shape index: {}]
  %s4 = inlined_call_operand.hbm [shape: f32[576,96], index: 4, kind: input, shape index: {}]
  %s5 = inlined_call_operand.vmem [shape: f32[2,96], index: 5, kind: input, shape index: {}]
  %s6 = inlined_call_operand.vmem [shape: f32[576,96], index: 6, kind: input, shape index: {}]
  %s7 = inlined_call_operand.vmem [shape: f32[2,96], index: 7, kind: input, shape index: {}]
  %s8 = inlined_call_operand.hbm [shape: f32[384,96], index: 8, kind: input, shape index: {}]
  %s9 = inlined_call_operand.vmem [shape: f32[2,96], index: 9, kind: input, shape index: {}]
  %s10 = inlined_call_operand.hbm [shape: f32[96,200], index: 10, kind: input, shape index: {}]
  %s11 = inlined_call_operand.vmem [shape: f32[2,200], index: 11, kind: input, shape index: {}]
  %s12 = inlined_call_operand.vmem [shape: f32[200,200], index: 12, kind: input, shape index: {}]
  %s13 = inlined_call_operand.vmem [shape: f32[2,200], index: 13, kind: input, shape index: {}]
  %s14 = inlined_call_operand.hbm [shape: f32[200,128], index: 14, kind: input, shape index: {}]
  %s15 = inlined_call_operand.vmem [shape: f32[1,128], index: 15, kind: input, shape index: {}]
  %s16 = inlined_call_operand.vmem [shape: f32[8,128], index: 16, kind: output, shape index: {}]
  %s17 = sld [smem:[#allocation0]]
  $region94: #{_lambda_.1} parent=0
    _
  %s19 = ssub.s32 1, %s17
  %s20 = scalar_select 0, %s19, %s17
  $region1: #{_lambda_.1} parent=0
    #allocation6 [shape = 'u8[110592]{0}', space=vmem, size = 0x1b000, scoped, tag = 'input window, operand 2, single buffered']
    #allocation7 [shape = 's32[1]{0}', space=sflag, size = 0x4, scoped, tag = 'scoped memory for _lambda_.1']
    #allocation8 [shape = 'u8[294912]{0}', space=vmem, size = 0x48000, scoped, tag = 'input window, operand 4, single buffered']
    #allocation9 [shape = 's32[1]{0}', space=sflag, size = 0x4, scoped, tag = 'scoped memory for _lambda_.1']
    #allocation10 [shape = 'u8[196608]{0}', space=vmem, size = 0x30000, scoped, tag = 'input window, operand 8, single buffered']
    #allocation11 [shape = 'u8[98304]{0}', space=vmem, size = 0x18000, scoped, tag = 'input window, operand 10, single buffered']
    #allocation12 [shape = 's32[1]{0}', space=sflag, size = 0x4, scoped, tag = 'scoped memory for _lambda_.1']
    #allocation13 [shape = 'u8[102400]{0}', space=vmem, size = 0x19000, scoped, tag = 'input window, operand 14, single buffered']
    %21 = vsyncpa [#allocation7], 0
    %22 = vsyncpa [#allocation9], 0
    %23 = vsyncpa [#allocation12], 0
    // Predicated region
    $region2: #{_lambda_.1} parent=1 // pred_check
      _
    $region3: #{_lambda_.1} parent=1 // pred_check_branch
      %25 = sbr.rel (0) target = $region5
    $region4: #{_lambda_.1} parent=1 // pred_region
      _
    $region5: #{_lambda_.1} parent=1 // pred_fallthru
      _
    // Predicated region
    $region6: #{_lambda_.1} parent=1 // pred_check
      _
    $region7: #{_lambda_.1} parent=1 // pred_check_branch
      %27 = sbr.rel (0) target = $region9
    $region8: #{_lambda_.1} parent=1 // pred_region
      _
    $region9: #{_lambda_.1} parent=1 // pred_fallthru
      _
    // Predicated region
    $region10: #{_lambda_.1} parent=1 // pred_check
      _
    $region11: #{_lambda_.1} parent=1 // pred_check_branch
      %29 = sbr.rel (0) target = $region13
    $region12: #{_lambda_.1} parent=1 // pred_region
      %31 = vsyncadd [#allocation7], 0
      %s32 = sshll.u32 %s2, 4
      %s33 = int_to_ptr.hbm [resolvable:$true] %s32
      %s34 = sshll.u32 [#allocation6], 4
      %s35 = int_to_ptr.vmem [resolvable:$true] %s34
      %40 = dma.hbm_to_vmem [thread:$0]  %s33, 3456, %s35, [#allocation7], 128, 128, 8
    $region13: #{_lambda_.1} parent=1 // pred_fallthru
      _
    // Predicated region
    $region14: #{_lambda_.1} parent=1 // pred_check
      _
    $region15: #{_lambda_.1} parent=1 // pred_check_branch
      %42 = sbr.rel (0) target = $region17
    $region16: #{_lambda_.1} parent=1 // pred_region
      _
    $region17: #{_lambda_.1} parent=1 // pred_fallthru
      _
    // Predicated region
    $region18: #{_lambda_.1} parent=1 // pred_check
      _
    $region19: #{_lambda_.1} parent=1 // pred_check_branch
      %44 = sbr.rel (0) target = $region21
    $region20: #{_lambda_.1} parent=1 // pred_region
      %46 = vsyncadd [#allocation9], 0
      %s47 = sshll.u32 %s4, 4
      %s48 = int_to_ptr.hbm [resolvable:$true] %s47
      %s49 = sshll.u32 [#allocation8], 4
      %s50 = int_to_ptr.vmem [resolvable:$true] %s49
      %55 = dma.hbm_to_vmem [thread:$0]  %s48, 9216, %s50, [#allocation9], 128, 128, 8
    $region21: #{_lambda_.1} parent=1 // pred_fallthru
      _
    // Predicated region
    $region22: #{_lambda_.1} parent=1 // pred_check
      _
    $region23: #{_lambda_.1} parent=1 // pred_check_branch
      %57 = sbr.rel (0) target = $region25
    $region24: #{_lambda_.1} parent=1 // pred_region
      _
    $region25: #{_lambda_.1} parent=1 // pred_fallthru
      _
    // Predicated region
    $region26: #{_lambda_.1} parent=1 // pred_check
      _
    $region27: #{_lambda_.1} parent=1 // pred_check_branch
      %59 = sbr.rel (0) target = $region29
    $region28: #{_lambda_.1} parent=1 // pred_region
      _
    $region29: #{_lambda_.1} parent=1 // pred_fallthru
      _
    // Predicated region
    $region30: #{_lambda_.1} parent=1 // pred_check
      _
    $region31: #{_lambda_.1} parent=1 // pred_check_branch
      %61 = sbr.rel (0) target = $region33
    $region32: #{_lambda_.1} parent=1 // pred_region
      _
    $region33: #{_lambda_.1} parent=1 // pred_fallthru
      _
    // Predicated region
    $region34: #{_lambda_.1} parent=1 // pred_check
      _
    $region35: #{_lambda_.1} parent=1 // pred_check_branch
      %63 = sbr.rel (0) target = $region37
    $region36: #{_lambda_.1} parent=1 // pred_region
      %65 = vsyncadd [#allocation9], 0
      %s66 = sshll.u32 %s8, 4
      %s67 = int_to_ptr.hbm [resolvable:$true] %s66
      %s68 = sshll.u32 [#allocation10], 4
      %s69 = int_to_ptr.vmem [resolvable:$true] %s68
      %74 = dma.hbm_to_vmem [thread:$0]  %s67, 6144, %s69, [#allocation9], 128, 128, 8
    $region37: #{_lambda_.1} parent=1 // pred_fallthru
      _
    // Predicated region
    $region38: #{_lambda_.1} parent=1 // pred_check
      _
    $region39: #{_lambda_.1} parent=1 // pred_check_branch
      %76 = sbr.rel (0) target = $region41
    $region40: #{_lambda_.1} parent=1 // pred_region
      _
    $region41: #{_lambda_.1} parent=1 // pred_fallthru
      _
    // Predicated region
    $region42: #{_lambda_.1} parent=1 // pred_check
      _
    $region43: #{_lambda_.1} parent=1 // pred_check_branch
      %78 = sbr.rel (0) target = $region45
    $region44: #{_lambda_.1} parent=1 // pred_region
      %80 = vsyncadd [#allocation12], 0
      %s81 = sshll.u32 %s10, 4
      %s82 = int_to_ptr.hbm [resolvable:$true] %s81
      %s83 = sshll.u32 [#allocation11], 4
      %s84 = int_to_ptr.vmem [resolvable:$true] %s83
      %89 = dma.hbm_to_vmem [thread:$0]  %s82, 3072, %s84, [#allocation12], 256, 256, 16
    $region45: #{_lambda_.1} parent=1 // pred_fallthru
      _
    // Predicated region
    $region46: #{_lambda_.1} parent=1 // pred_check
      _
    $region47: #{_lambda_.1} parent=1 // pred_check_branch
      %91 = sbr.rel (0) target = $region49
    $region48: #{_lambda_.1} parent=1 // pred_region
      _
    $region49: #{_lambda_.1} parent=1 // pred_fallthru
      _
    // Predicated region
    $region50: #{_lambda_.1} parent=1 // pred_check
      _
    $region51: #{_lambda_.1} parent=1 // pred_check_branch
      %93 = sbr.rel (0) target = $region53
    $region52: #{_lambda_.1} parent=1 // pred_region
      _
    $region53: #{_lambda_.1} parent=1 // pred_fallthru
      _
    // Predicated region
    $region54: #{_lambda_.1} parent=1 // pred_check
      _
    $region55: #{_lambda_.1} parent=1 // pred_check_branch
      %95 = sbr.rel (0) target = $region57
    $region56: #{_lambda_.1} parent=1 // pred_region
      _
    $region57: #{_lambda_.1} parent=1 // pred_fallthru
      _
    // Predicated region
    $region58: #{_lambda_.1} parent=1 // pred_check
      _
    $region59: #{_lambda_.1} parent=1 // pred_check_branch
      %97 = sbr.rel (0) target = $region61
    $region60: #{_lambda_.1} parent=1 // pred_region
      %99 = vsyncadd [#allocation12], 0
      %s100 = sshll.u32 %s14, 4
      %s101 = int_to_ptr.hbm [resolvable:$true] %s100
      %s102 = sshll.u32 [#allocation13], 4
      %s103 = int_to_ptr.vmem [resolvable:$true] %s102
      %108 = dma.hbm_to_vmem [thread:$0]  %s101, 3200, %s103, [#allocation12], 128, 128, 8
    $region61: #{_lambda_.1} parent=1 // pred_fallthru
      _
    // Predicated region
    $region62: #{_lambda_.1} parent=1 // pred_check
      _
    $region63: #{_lambda_.1} parent=1 // pred_check_branch
      %110 = sbr.rel (0) target = $region65
    $region64: #{_lambda_.1} parent=1 // pred_region
      _
    $region65: #{_lambda_.1} parent=1 // pred_fallthru
      _
    // Predicated region
    $region66: #{_lambda_.1} parent=1 // pred_check
      _
    $region67: #{_lambda_.1} parent=1 // pred_check_branch
      %112 = sbr.rel (0) target = $region69
    $region68: #{_lambda_.1} parent=1 // pred_region
      %114 = dma.done [#allocation7], 3456
    $region69: #{_lambda_.1} parent=1 // pred_fallthru
      _
    // Predicated region
    $region70: #{_lambda_.1} parent=1 // pred_check
      _
    $region71: #{_lambda_.1} parent=1 // pred_check_branch
      %116 = sbr.rel (0) target = $region73
    $region72: #{_lambda_.1} parent=1 // pred_region
      %118 = dma.done [#allocation9], 9216
    $region73: #{_lambda_.1} parent=1 // pred_fallthru
      _
    // Predicated region
    $region74: #{_lambda_.1} parent=1 // pred_check
      _
    $region75: #{_lambda_.1} parent=1 // pred_check_branch
      %120 = sbr.rel (0) target = $region77
    $region76: #{_lambda_.1} parent=1 // pred_region
      %122 = dma.done [#allocation9], 6144
    $region77: #{_lambda_.1} parent=1 // pred_fallthru
      _
    // Predicated region
    $region78: #{_lambda_.1} parent=1 // pred_check
      _
    $region79: #{_lambda_.1} parent=1 // pred_check_branch
      %124 = sbr.rel (0) target = $region81
    $region80: #{_lambda_.1} parent=1 // pred_region
      %126 = dma.done [#allocation12], 3072
    $region81: #{_lambda_.1} parent=1 // pred_fallthru
      _
    // Predicated region
    $region82: #{_lambda_.1} parent=1 // pred_check
      _
    $region83: #{_lambda_.1} parent=1 // pred_check_branch
      %128 = sbr.rel (0) target = $region85
    $region84: #{_lambda_.1} parent=1 // pred_region
      %130 = dma.done [#allocation12], 3200
    $region85: #{_lambda_.1} parent=1 // pred_fallthru
      _
    %vm131 = vcmask 195584
    %132 = vst.msk [vmem:[#allocation2 + $0x1c0] sm:$0xff] %vm131, 0.0
    %133 = vst.msk [vmem:[#allocation2 + $0x1c8] sm:$0xff] %vm131, 0.0
    %vm134 = vcmask 523264
    %135 = vst.msk [vmem:[#allocation3 + $0x1c0] sm:$0xff] %vm134, 0.0
    %136 = vst.msk [vmem:[#allocation3 + $0x1c8] sm:$0xff] %vm134, 0.0
    %vm137 = vcmask 785408
    %138 = vst.msk [vmem:[#allocation4 + $0x1c0] sm:$0xff] %vm137, 0.0
    %139 = vst.msk [vmem:[#allocation4 + $0x1c8] sm:$0xff] %vm137, 0.0
    %140 = vst.msk [vmem:[#allocation5 + $0x1c0] sm:$0xff] %vm137, 0.0
    %141 = vst.msk [vmem:[#allocation5 + $0x1c8] sm:$0xff] %vm137, 0.0
    %v142 = vld [vmem:[%s0] sm:$0xff]
    %v143 = vld [vmem:[%s0 + $0x8] sm:$0xff]
    %v144 = vld [vmem:[%s0 + $0x10] sm:$0xff]
    %v145 = vld [vmem:[%s0 + $0x18] sm:$0xff]
    %v146 = vld [vmem:[%s0 + $0x20] sm:$0xff]
    %v147 = vld [vmem:[%s0 + $0x28] sm:$0xff]
    %v148 = vld [vmem:[%s0 + $0x30] sm:$0xff]
    %v149 = vld [vmem:[%s0 + $0x38] sm:$0xff]
    %v150 = vld [vmem:[%s0 + $0x40] sm:$0xff]
    %v151 = vld [vmem:[%s0 + $0x48] sm:$0xff]
    %v152 = vld [vmem:[%s0 + $0x50] sm:$0xff]
    %v153 = vld [vmem:[%s0 + $0x58] sm:$0xff]
    %v154 = vld [vmem:[%s0 + $0x60] sm:$0xff]
    %v155 = vld [vmem:[%s0 + $0x68] sm:$0xff]
    %v156 = vld [vmem:[%s0 + $0x70] sm:$0xff]
    %v157 = vld [vmem:[%s0 + $0x78] sm:$0xff]
    %v158 = vld [vmem:[%s0 + $0x80] sm:$0xff]
    %v159 = vld [vmem:[%s0 + $0x88] sm:$0xff]
    %v160 = vld [vmem:[%s0 + $0x90] sm:$0xff]
    %v161 = vld [vmem:[%s0 + $0x98] sm:$0xff]
    %v162 = vld [vmem:[%s0 + $0xa0] sm:$0xff]
    %v163 = vld [vmem:[%s0 + $0xa8] sm:$0xff]
    %v164 = vld [vmem:[%s0 + $0xb0] sm:$0xff]
    %v165 = vld [vmem:[%s0 + $0xb8] sm:$0xff]
    %v166 = vld [vmem:[%s0 + $0xc0] sm:$0xff]
    %v167 = vld [vmem:[%s0 + $0xc8] sm:$0xff]
    %v168 = vld [vmem:[%s0 + $0xd0] sm:$0xff]
    %v169 = vld [vmem:[%s0 + $0xd8] sm:$0xff]
    %v170 = vld [vmem:[%s0 + $0xe0] sm:$0xff]
    %v171 = vld [vmem:[%s0 + $0xe8] sm:$0xff]
    %v172 = vld [vmem:[%s0 + $0xf0] sm:$0xff]
    %v173 = vld [vmem:[%s0 + $0xf8] sm:$0xff]
    %v174 = vld [vmem:[%s0 + $0x100] sm:$0xff]
    %v175 = vld [vmem:[%s0 + $0x108] sm:$0xff]
    %v176 = vld [vmem:[%s0 + $0x110] sm:$0xff]
    %v177 = vld [vmem:[%s0 + $0x118] sm:$0xff]
    %v178 = vld [vmem:[%s0 + $0x120] sm:$0xff]
    %v179 = vld [vmem:[%s0 + $0x128] sm:$0xff]
    %v180 = vld [vmem:[%s0 + $0x130] sm:$0xff]
    %v181 = vld [vmem:[%s0 + $0x138] sm:$0xff]
    %v182 = vld [vmem:[%s0 + $0x140] sm:$0xff]
    %v183 = vld [vmem:[%s0 + $0x148] sm:$0xff]
    %v184 = vld [vmem:[%s0 + $0x150] sm:$0xff]
    %v185 = vld [vmem:[%s0 + $0x158] sm:$0xff]
    %v186 = vld [vmem:[%s0 + $0x160] sm:$0xff]
    %v187 = vld [vmem:[%s0 + $0x168] sm:$0xff]
    %v188 = vld [vmem:[%s0 + $0x170] sm:$0xff]
    %v189 = vld [vmem:[%s0 + $0x178] sm:$0xff]
    %v190 = vld [vmem:[%s0 + $0x180] sm:$0xff]
    %v191 = vld [vmem:[%s0 + $0x188] sm:$0xff]
    %v192 = vld [vmem:[%s0 + $0x190] sm:$0xff]
    %v193 = vld [vmem:[%s0 + $0x198] sm:$0xff]
    %v194 = vld [vmem:[%s0 + $0x1a0] sm:$0xff]
    %v195 = vld [vmem:[%s0 + $0x1a8] sm:$0xff]
    %v196 = vld [vmem:[%s0 + $0x1b0] sm:$0xff]
    %v197 = vld [vmem:[%s0 + $0x1b8] sm:$0xff]
    %254 = vrot.lane.b32.xlu0 %v142, 12
    %v255 = vpop.permute.xlu0 %254
    %256 = vrot.lane.b32.xlu0 %v143, 12
    %v257 = vpop.permute.xlu0 %256
    %258 = vrot.lane.b32.xlu0 %v144, 12
    %v259 = vpop.permute.xlu0 %258
    %260 = vrot.lane.b32.xlu0 %v145, 12
    %v261 = vpop.permute.xlu0 %260
    %262 = vrot.lane.b32.xlu0 %v146, 12
    %v263 = vpop.permute.xlu0 %262
    %264 = vrot.lane.b32.xlu0 %v147, 12
    %v265 = vpop.permute.xlu0 %264
    %266 = vrot.lane.b32.xlu0 %v148, 12
    %v267 = vpop.permute.xlu0 %266
    %268 = vrot.lane.b32.xlu0 %v149, 12
    %v269 = vpop.permute.xlu0 %268
    %270 = vrot.lane.b32.xlu0 %v150, 12
    %v271 = vpop.permute.xlu0 %270
    %272 = vrot.lane.b32.xlu0 %v151, 12
    %v273 = vpop.permute.xlu0 %272
    %274 = vrot.lane.b32.xlu0 %v152, 12
    %v275 = vpop.permute.xlu0 %274
    %276 = vrot.lane.b32.xlu0 %v153, 12
    %v277 = vpop.permute.xlu0 %276
    %278 = vrot.lane.b32.xlu0 %v154, 12
    %v279 = vpop.permute.xlu0 %278
    %280 = vrot.lane.b32.xlu0 %v155, 12
    %v281 = vpop.permute.xlu0 %280
    %282 = vrot.lane.b32.xlu0 %v156, 12
    %v283 = vpop.permute.xlu0 %282
    %284 = vrot.lane.b32.xlu0 %v157, 12
    %v285 = vpop.permute.xlu0 %284
    %286 = vrot.lane.b32.xlu0 %v158, 12
    %v287 = vpop.permute.xlu0 %286
    %288 = vrot.lane.b32.xlu0 %v159, 12
    %v289 = vpop.permute.xlu0 %288
    %290 = vrot.lane.b32.xlu0 %v160, 12
    %v291 = vpop.permute.xlu0 %290
    %292 = vrot.lane.b32.xlu0 %v161, 12
    %v293 = vpop.permute.xlu0 %292
    %294 = vrot.lane.b32.xlu0 %v162, 12
    %v295 = vpop.permute.xlu0 %294
    %296 = vrot.lane.b32.xlu0 %v163, 12
    %v297 = vpop.permute.xlu0 %296
    %298 = vrot.lane.b32.xlu0 %v164, 12
    %v299 = vpop.permute.xlu0 %298
    %300 = vrot.lane.b32.xlu0 %v165, 12
    %v301 = vpop.permute.xlu0 %300
    %302 = vrot.lane.b32.xlu0 %v166, 12
    %v303 = vpop.permute.xlu0 %302
    %304 = vrot.lane.b32.xlu0 %v167, 12
    %v305 = vpop.permute.xlu0 %304
    %306 = vrot.lane.b32.xlu0 %v168, 12
    %v307 = vpop.permute.xlu0 %306
    %308 = vrot.lane.b32.xlu0 %v169, 12
    %v309 = vpop.permute.xlu0 %308
    %310 = vrot.lane.b32.xlu0 %v170, 12
    %v311 = vpop.permute.xlu0 %310
    %312 = vrot.lane.b32.xlu0 %v171, 12
    %v313 = vpop.permute.xlu0 %312
    %314 = vrot.lane.b32.xlu0 %v172, 12
    %v315 = vpop.permute.xlu0 %314
    %316 = vrot.lane.b32.xlu0 %v173, 12
    %v317 = vpop.permute.xlu0 %316
    %318 = vrot.lane.b32.xlu0 %v174, 12
    %v319 = vpop.permute.xlu0 %318
    %320 = vrot.lane.b32.xlu0 %v175, 12
    %v321 = vpop.permute.xlu0 %320
    %322 = vrot.lane.b32.xlu0 %v176, 12
    %v323 = vpop.permute.xlu0 %322
    %324 = vrot.lane.b32.xlu0 %v177, 12
    %v325 = vpop.permute.xlu0 %324
    %326 = vrot.lane.b32.xlu0 %v178, 12
    %v327 = vpop.permute.xlu0 %326
    %328 = vrot.lane.b32.xlu0 %v179, 12
    %v329 = vpop.permute.xlu0 %328
    %330 = vrot.lane.b32.xlu0 %v180, 12
    %v331 = vpop.permute.xlu0 %330
    %332 = vrot.lane.b32.xlu0 %v181, 12
    %v333 = vpop.permute.xlu0 %332
    %334 = vrot.lane.b32.xlu0 %v182, 12
    %v335 = vpop.permute.xlu0 %334
    %336 = vrot.lane.b32.xlu0 %v183, 12
    %v337 = vpop.permute.xlu0 %336
    %338 = vrot.lane.b32.xlu0 %v184, 12
    %v339 = vpop.permute.xlu0 %338
    %340 = vrot.lane.b32.xlu0 %v185, 12
    %v341 = vpop.permute.xlu0 %340
    %342 = vrot.lane.b32.xlu0 %v186, 12
    %v343 = vpop.permute.xlu0 %342
    %344 = vrot.lane.b32.xlu0 %v187, 12
    %v345 = vpop.permute.xlu0 %344
    %346 = vrot.lane.b32.xlu0 %v188, 12
    %v347 = vpop.permute.xlu0 %346
    %348 = vrot.lane.b32.xlu0 %v189, 12
    %v349 = vpop.permute.xlu0 %348
    %350 = vrot.lane.b32.xlu0 %v190, 12
    %v351 = vpop.permute.xlu0 %350
    %352 = vrot.lane.b32.xlu0 %v191, 12
    %v353 = vpop.permute.xlu0 %352
    %354 = vrot.lane.b32.xlu0 %v192, 12
    %v355 = vpop.permute.xlu0 %354
    %356 = vrot.lane.b32.xlu0 %v193, 12
    %v357 = vpop.permute.xlu0 %356
    %358 = vrot.lane.b32.xlu0 %v194, 12
    %v359 = vpop.permute.xlu0 %358
    %360 = vrot.lane.b32.xlu0 %v195, 12
    %v361 = vpop.permute.xlu0 %360
    %362 = vrot.lane.b32.xlu0 %v196, 12
    %v363 = vpop.permute.xlu0 %362
    %364 = vrot.lane.b32.xlu0 %v197, 12
    %v365 = vpop.permute.xlu0 %364
    %vm422 = vcmask 97280
    %v423 = vsel %vm422, %v142, %v255
    %v424 = vsel %vm422, %v143, %v257
    %v425 = vsel %vm422, %v144, %v259
    %v426 = vsel %vm422, %v145, %v261
    %v427 = vsel %vm422, %v146, %v263
    %v428 = vsel %vm422, %v147, %v265
    %v429 = vsel %vm422, %v148, %v267
    %v430 = vsel %vm422, %v149, %v269
    %v431 = vsel %vm422, %v150, %v271
    %v432 = vsel %vm422, %v151, %v273
    %v433 = vsel %vm422, %v152, %v275
    %v434 = vsel %vm422, %v153, %v277
    %v435 = vsel %vm422, %v154, %v279
    %v436 = vsel %vm422, %v155, %v281
    %v437 = vsel %vm422, %v156, %v283
    %v438 = vsel %vm422, %v157, %v285
    %v439 = vsel %vm422, %v158, %v287
    %v440 = vsel %vm422, %v159, %v289
    %v441 = vsel %vm422, %v160, %v291
    %v442 = vsel %vm422, %v161, %v293
    %v443 = vsel %vm422, %v162, %v295
    %v444 = vsel %vm422, %v163, %v297
    %v445 = vsel %vm422, %v164, %v299
    %v446 = vsel %vm422, %v165, %v301
    %v447 = vsel %vm422, %v166, %v303
    %v448 = vsel %vm422, %v167, %v305
    %v449 = vsel %vm422, %v168, %v307
    %v450 = vsel %vm422, %v169, %v309
    %v451 = vsel %vm422, %v170, %v311
    %v452 = vsel %vm422, %v171, %v313
    %v453 = vsel %vm422, %v172, %v315
    %v454 = vsel %vm422, %v173, %v317
    %v455 = vsel %vm422, %v174, %v319
    %v456 = vsel %vm422, %v175, %v321
    %v457 = vsel %vm422, %v176, %v323
    %v458 = vsel %vm422, %v177, %v325
    %v459 = vsel %vm422, %v178, %v327
    %v460 = vsel %vm422, %v179, %v329
    %v461 = vsel %vm422, %v180, %v331
    %v462 = vsel %vm422, %v181, %v333
    %v463 = vsel %vm422, %v182, %v335
    %v464 = vsel %vm422, %v183, %v337
    %v465 = vsel %vm422, %v184, %v339
    %v466 = vsel %vm422, %v185, %v341
    %v467 = vsel %vm422, %v186, %v343
    %v468 = vsel %vm422, %v187, %v345
    %v469 = vsel %vm422, %v188, %v347
    %v470 = vsel %vm422, %v189, %v349
    %v471 = vsel %vm422, %v190, %v351
    %v472 = vsel %vm422, %v191, %v353
    %v473 = vsel %vm422, %v192, %v355
    %v474 = vsel %vm422, %v193, %v357
    %v475 = vsel %vm422, %v194, %v359
    %v476 = vsel %vm422, %v195, %v361
    %v477 = vsel %vm422, %v196, %v363
    %v478 = vsel %vm422, %v197, %v365
    %v479 = vld [vmem:[%s1] sm:$0x1]
    %v480 = vperm.slane %v479, 0
    %v481 = vmul.f32 %v423, %v480
    %v482 = vmul.f32 %v424, %v480
    %v483 = vmul.f32 %v425, %v480
    %v484 = vmul.f32 %v426, %v480
    %v485 = vmul.f32 %v427, %v480
    %v486 = vmul.f32 %v428, %v480
    %v487 = vmul.f32 %v429, %v480
    %v488 = vmul.f32 %v430, %v480
    %v489 = vmul.f32 %v431, %v480
    %v490 = vmul.f32 %v432, %v480
    %v491 = vmul.f32 %v433, %v480
    %v492 = vmul.f32 %v434, %v480
    %v493 = vmul.f32 %v435, %v480
    %v494 = vmul.f32 %v436, %v480
    %v495 = vmul.f32 %v437, %v480
    %v496 = vmul.f32 %v438, %v480
    %v497 = vmul.f32 %v439, %v480
    %v498 = vmul.f32 %v440, %v480
    %v499 = vmul.f32 %v441, %v480
    %v500 = vmul.f32 %v442, %v480
    %v501 = vmul.f32 %v443, %v480
    %v502 = vmul.f32 %v444, %v480
    %v503 = vmul.f32 %v445, %v480
    %v504 = vmul.f32 %v446, %v480
    %v505 = vmul.f32 %v447, %v480
    %v506 = vmul.f32 %v448, %v480
    %v507 = vmul.f32 %v449, %v480
    %v508 = vmul.f32 %v450, %v480
    %v509 = vmul.f32 %v451, %v480
    %v510 = vmul.f32 %v452, %v480
    %v511 = vmul.f32 %v453, %v480
    %v512 = vmul.f32 %v454, %v480
    %v513 = vmul.f32 %v455, %v480
    %v514 = vmul.f32 %v456, %v480
    %v515 = vmul.f32 %v457, %v480
    %v516 = vmul.f32 %v458, %v480
    %v517 = vmul.f32 %v459, %v480
    %v518 = vmul.f32 %v460, %v480
    %v519 = vmul.f32 %v461, %v480
    %v520 = vmul.f32 %v462, %v480
    %v521 = vmul.f32 %v463, %v480
    %v522 = vmul.f32 %v464, %v480
    %v523 = vmul.f32 %v465, %v480
    %v524 = vmul.f32 %v466, %v480
    %v525 = vmul.f32 %v467, %v480
    %v526 = vmul.f32 %v468, %v480
    %v527 = vmul.f32 %v469, %v480
    %v528 = vmul.f32 %v470, %v480
    %v529 = vmul.f32 %v471, %v480
    %v530 = vmul.f32 %v472, %v480
    %v531 = vmul.f32 %v473, %v480
    %v532 = vmul.f32 %v474, %v480
    %v533 = vmul.f32 %v475, %v480
    %v534 = vmul.f32 %v476, %v480
    %v535 = vmul.f32 %v477, %v480
    %v536 = vmul.f32 %v478, %v480
    %v537 = vld [vmem:[%s1 + $0x1] sm:$0x1]
    %v538 = vperm.slane %v537, 0
    %v539 = vadd.f32 %v481, %v538
    %v540 = vadd.f32 %v482, %v538
    %v541 = vadd.f32 %v483, %v538
    %v542 = vadd.f32 %v484, %v538
    %v543 = vadd.f32 %v485, %v538
    %v544 = vadd.f32 %v486, %v538
    %v545 = vadd.f32 %v487, %v538
    %v546 = vadd.f32 %v488, %v538
    %v547 = vadd.f32 %v489, %v538
    %v548 = vadd.f32 %v490, %v538
    %v549 = vadd.f32 %v491, %v538
    %v550 = vadd.f32 %v492, %v538
    %v551 = vadd.f32 %v493, %v538
    %v552 = vadd.f32 %v494, %v538
    %v553 = vadd.f32 %v495, %v538
    %v554 = vadd.f32 %v496, %v538
    %v555 = vadd.f32 %v497, %v538
    %v556 = vadd.f32 %v498, %v538
    %v557 = vadd.f32 %v499, %v538
    %v558 = vadd.f32 %v500, %v538
    %v559 = vadd.f32 %v501, %v538
    %v560 = vadd.f32 %v502, %v538
    %v561 = vadd.f32 %v503, %v538
    %v562 = vadd.f32 %v504, %v538
    %v563 = vadd.f32 %v505, %v538
    %v564 = vadd.f32 %v506, %v538
    %v565 = vadd.f32 %v507, %v538
    %v566 = vadd.f32 %v508, %v538
    %v567 = vadd.f32 %v509, %v538
    %v568 = vadd.f32 %v510, %v538
    %v569 = vadd.f32 %v511, %v538
    %v570 = vadd.f32 %v512, %v538
    %v571 = vadd.f32 %v513, %v538
    %v572 = vadd.f32 %v514, %v538
    %v573 = vadd.f32 %v515, %v538
    %v574 = vadd.f32 %v516, %v538
    %v575 = vadd.f32 %v517, %v538
    %v576 = vadd.f32 %v518, %v538
    %v577 = vadd.f32 %v519, %v538
    %v578 = vadd.f32 %v520, %v538
    %v579 = vadd.f32 %v521, %v538
    %v580 = vadd.f32 %v522, %v538
    %v581 = vadd.f32 %v523, %v538
    %v582 = vadd.f32 %v524, %v538
    %v583 = vadd.f32 %v525, %v538
    %v584 = vadd.f32 %v526, %v538
    %v585 = vadd.f32 %v527, %v538
    %v586 = vadd.f32 %v528, %v538
    %v587 = vadd.f32 %v529, %v538
    %v588 = vadd.f32 %v530, %v538
    %v589 = vadd.f32 %v531, %v538
    %v590 = vadd.f32 %v532, %v538
    %v591 = vadd.f32 %v533, %v538
    %v592 = vadd.f32 %v534, %v538
    %v593 = vadd.f32 %v535, %v538
    %v594 = vadd.f32 %v536, %v538
    %v595 = vld [vmem:[%s1 + $0x2] sm:$0x1]
    %vm596 = vcmp.ge.f32.partialorder %v539, 0.0
    %vm597 = vcmp.ge.f32.partialorder %v540, 0.0
    %vm598 = vcmp.ge.f32.partialorder %v541, 0.0
    %vm599 = vcmp.ge.f32.partialorder %v542, 0.0
    %vm600 = vcmp.ge.f32.partialorder %v543, 0.0
    %vm601 = vcmp.ge.f32.partialorder %v544, 0.0
    %vm602 = vcmp.ge.f32.partialorder %v545, 0.0
    %vm603 = vcmp.ge.f32.partialorder %v546, 0.0
    %vm604 = vcmp.ge.f32.partialorder %v547, 0.0
    %vm605 = vcmp.ge.f32.partialorder %v548, 0.0
    %vm606 = vcmp.ge.f32.partialorder %v549, 0.0
    %vm607 = vcmp.ge.f32.partialorder %v550, 0.0
    %vm608 = vcmp.ge.f32.partialorder %v551, 0.0
    %vm609 = vcmp.ge.f32.partialorder %v552, 0.0
    %vm610 = vcmp.ge.f32.partialorder %v553, 0.0
    %vm611 = vcmp.ge.f32.partialorder %v554, 0.0
    %vm612 = vcmp.ge.f32.partialorder %v555, 0.0
    %vm613 = vcmp.ge.f32.partialorder %v556, 0.0
    %vm614 = vcmp.ge.f32.partialorder %v557, 0.0
    %vm615 = vcmp.ge.f32.partialorder %v558, 0.0
    %vm616 = vcmp.ge.f32.partialorder %v559, 0.0
    %vm617 = vcmp.ge.f32.partialorder %v560, 0.0
    %vm618 = vcmp.ge.f32.partialorder %v561, 0.0
    %vm619 = vcmp.ge.f32.partialorder %v562, 0.0
    %vm620 = vcmp.ge.f32.partialorder %v563, 0.0
    %vm621 = vcmp.ge.f32.partialorder %v564, 0.0
    %vm622 = vcmp.ge.f32.partialorder %v565, 0.0
    %vm623 = vcmp.ge.f32.partialorder %v566, 0.0
    %vm624 = vcmp.ge.f32.partialorder %v567, 0.0
    %vm625 = vcmp.ge.f32.partialorder %v568, 0.0
    %vm626 = vcmp.ge.f32.partialorder %v569, 0.0
    %vm627 = vcmp.ge.f32.partialorder %v570, 0.0
    %vm628 = vcmp.ge.f32.partialorder %v571, 0.0
    %vm629 = vcmp.ge.f32.partialorder %v572, 0.0
    %vm630 = vcmp.ge.f32.partialorder %v573, 0.0
    %vm631 = vcmp.ge.f32.partialorder %v574, 0.0
    %vm632 = vcmp.ge.f32.partialorder %v575, 0.0
    %vm633 = vcmp.ge.f32.partialorder %v576, 0.0
    %vm634 = vcmp.ge.f32.partialorder %v577, 0.0
    %vm635 = vcmp.ge.f32.partialorder %v578, 0.0
    %vm636 = vcmp.ge.f32.partialorder %v579, 0.0
    %vm637 = vcmp.ge.f32.partialorder %v580, 0.0
    %vm638 = vcmp.ge.f32.partialorder %v581, 0.0
    %vm639 = vcmp.ge.f32.partialorder %v582, 0.0
    %vm640 = vcmp.ge.f32.partialorder %v583, 0.0
    %vm641 = vcmp.ge.f32.partialorder %v584, 0.0
    %vm642 = vcmp.ge.f32.partialorder %v585, 0.0
    %vm643 = vcmp.ge.f32.partialorder %v586, 0.0
    %vm644 = vcmp.ge.f32.partialorder %v587, 0.0
    %vm645 = vcmp.ge.f32.partialorder %v588, 0.0
    %vm646 = vcmp.ge.f32.partialorder %v589, 0.0
    %vm647 = vcmp.ge.f32.partialorder %v590, 0.0
    %vm648 = vcmp.ge.f32.partialorder %v591, 0.0
    %vm649 = vcmp.ge.f32.partialorder %v592, 0.0
    %vm650 = vcmp.ge.f32.partialorder %v593, 0.0
    %vm651 = vcmp.ge.f32.partialorder %v594, 0.0
    %v652 = vperm.slane %v595, 0
    %v653 = vmul.f32 %v652, %v539
    %v654 = vmul.f32 %v652, %v540
    %v655 = vmul.f32 %v652, %v541
    %v656 = vmul.f32 %v652, %v542
    %v657 = vmul.f32 %v652, %v543
    %v658 = vmul.f32 %v652, %v544
    %v659 = vmul.f32 %v652, %v545
    %v660 = vmul.f32 %v652, %v546
    %v661 = vmul.f32 %v652, %v547
    %v662 = vmul.f32 %v652, %v548
    %v663 = vmul.f32 %v652, %v549
    %v664 = vmul.f32 %v652, %v550
    %v665 = vmul.f32 %v652, %v551
    %v666 = vmul.f32 %v652, %v552
    %v667 = vmul.f32 %v652, %v553
    %v668 = vmul.f32 %v652, %v554
    %v669 = vmul.f32 %v652, %v555
    %v670 = vmul.f32 %v652, %v556
    %v671 = vmul.f32 %v652, %v557
    %v672 = vmul.f32 %v652, %v558
    %v673 = vmul.f32 %v652, %v559
    %v674 = vmul.f32 %v652, %v560
    %v675 = vmul.f32 %v652, %v561
    %v676 = vmul.f32 %v652, %v562
    %v677 = vmul.f32 %v652, %v563
    %v678 = vmul.f32 %v652, %v564
    %v679 = vmul.f32 %v652, %v565
    %v680 = vmul.f32 %v652, %v566
    %v681 = vmul.f32 %v652, %v567
    %v682 = vmul.f32 %v652, %v568
    %v683 = vmul.f32 %v652, %v569
    %v684 = vmul.f32 %v652, %v570
    %v685 = vmul.f32 %v652, %v571
    %v686 = vmul.f32 %v652, %v572
    %v687 = vmul.f32 %v652, %v573
    %v688 = vmul.f32 %v652, %v574
    %v689 = vmul.f32 %v652, %v575
    %v690 = vmul.f32 %v652, %v576
    %v691 = vmul.f32 %v652, %v577
    %v692 = vmul.f32 %v652, %v578
    %v693 = vmul.f32 %v652, %v579
    %v694 = vmul.f32 %v652, %v580
    %v695 = vmul.f32 %v652, %v581
    %v696 = vmul.f32 %v652, %v582
    %v697 = vmul.f32 %v652, %v583
    %v698 = vmul.f32 %v652, %v584
    %v699 = vmul.f32 %v652, %v585
    %v700 = vmul.f32 %v652, %v586
    %v701 = vmul.f32 %v652, %v587
    %v702 = vmul.f32 %v652, %v588
    %v703 = vmul.f32 %v652, %v589
    %v704 = vmul.f32 %v652, %v590
    %v705 = vmul.f32 %v652, %v591
    %v706 = vmul.f32 %v652, %v592
    %v707 = vmul.f32 %v652, %v593
    %v708 = vmul.f32 %v652, %v594
    %v709 = vsel %vm596, %v539, %v653
    %v710 = vsel %vm597, %v540, %v654
    %v711 = vsel %vm598, %v541, %v655
    %v712 = vsel %vm599, %v542, %v656
    %v713 = vsel %vm600, %v543, %v657
    %v714 = vsel %vm601, %v544, %v658
    %v715 = vsel %vm602, %v545, %v659
    %v716 = vsel %vm603, %v546, %v660
    %v717 = vsel %vm604, %v547, %v661
    %v718 = vsel %vm605, %v548, %v662
    %v719 = vsel %vm606, %v549, %v663
    %v720 = vsel %vm607, %v550, %v664
    %v721 = vsel %vm608, %v551, %v665
    %v722 = vsel %vm609, %v552, %v666
    %v723 = vsel %vm610, %v553, %v667
    %v724 = vsel %vm611, %v554, %v668
    %v725 = vsel %vm612, %v555, %v669
    %v726 = vsel %vm613, %v556, %v670
    %v727 = vsel %vm614, %v557, %v671
    %v728 = vsel %vm615, %v558, %v672
    %v729 = vsel %vm616, %v559, %v673
    %v730 = vsel %vm617, %v560, %v674
    %v731 = vsel %vm618, %v561, %v675
    %v732 = vsel %vm619, %v562, %v676
    %v733 = vsel %vm620, %v563, %v677
    %v734 = vsel %vm621, %v564, %v678
    %v735 = vsel %vm622, %v565, %v679
    %v736 = vsel %vm623, %v566, %v680
    %v737 = vsel %vm624, %v567, %v681
    %v738 = vsel %vm625, %v568, %v682
    %v739 = vsel %vm626, %v569, %v683
    %v740 = vsel %vm627, %v570, %v684
    %v741 = vsel %vm628, %v571, %v685
    %v742 = vsel %vm629, %v572, %v686
    %v743 = vsel %vm630, %v573, %v687
    %v744 = vsel %vm631, %v574, %v688
    %v745 = vsel %vm632, %v575, %v689
    %v746 = vsel %vm633, %v576, %v690
    %v747 = vsel %vm634, %v577, %v691
    %v748 = vsel %vm635, %v578, %v692
    %v749 = vsel %vm636, %v579, %v693
    %v750 = vsel %vm637, %v580, %v694
    %v751 = vsel %vm638, %v581, %v695
    %v752 = vsel %vm639, %v582, %v696
    %v753 = vsel %vm640, %v583, %v697
    %v754 = vsel %vm641, %v584, %v698
    %v755 = vsel %vm642, %v585, %v699
    %v756 = vsel %vm643, %v586, %v700
    %v757 = vsel %vm644, %v587, %v701
    %v758 = vsel %vm645, %v588, %v702
    %v759 = vsel %vm646, %v589, %v703
    %v760 = vsel %vm647, %v590, %v704
    %v761 = vsel %vm648, %v591, %v705
    %v762 = vsel %vm649, %v592, %v706
    %v763 = vsel %vm650, %v593, %v707
    %v764 = vsel %vm651, %v594, %v708
    %765 = vst.msk [vmem:[#allocation2] sm:$0xff] %vm131, %v709
    %766 = vst.msk [vmem:[#allocation2 + $0x8] sm:$0xff] %vm131, %v710
    %767 = vst.msk [vmem:[#allocation2 + $0x10] sm:$0xff] %vm131, %v711
    %768 = vst.msk [vmem:[#allocation2 + $0x18] sm:$0xff] %vm131, %v712
    %769 = vst.msk [vmem:[#allocation2 + $0x20] sm:$0xff] %vm131, %v713
    %770 = vst.msk [vmem:[#allocation2 + $0x28] sm:$0xff] %vm131, %v714
    %771 = vst.msk [vmem:[#allocation2 + $0x30] sm:$0xff] %vm131, %v715
    %772 = vst.msk [vmem:[#allocation2 + $0x38] sm:$0xff] %vm131, %v716
    %773 = vst.msk [vmem:[#allocation2 + $0x40] sm:$0xff] %vm131, %v717
    %774 = vst.msk [vmem:[#allocation2 + $0x48] sm:$0xff] %vm131, %v718
    %775 = vst.msk [vmem:[#allocation2 + $0x50] sm:$0xff] %vm131, %v719
    %776 = vst.msk [vmem:[#allocation2 + $0x58] sm:$0xff] %vm131, %v720
    %777 = vst.msk [vmem:[#allocation2 + $0x60] sm:$0xff] %vm131, %v721
    %778 = vst.msk [vmem:[#allocation2 + $0x68] sm:$0xff] %vm131, %v722
    %779 = vst.msk [vmem:[#allocation2 + $0x70] sm:$0xff] %vm131, %v723
    %780 = vst.msk [vmem:[#allocation2 + $0x78] sm:$0xff] %vm131, %v724
    %781 = vst.msk [vmem:[#allocation2 + $0x80] sm:$0xff] %vm131, %v725
    %782 = vst.msk [vmem:[#allocation2 + $0x88] sm:$0xff] %vm131, %v726
    %783 = vst.msk [vmem:[#allocation2 + $0x90] sm:$0xff] %vm131, %v727
    %784 = vst.msk [vmem:[#allocation2 + $0x98] sm:$0xff] %vm131, %v728
    %785 = vst.msk [vmem:[#allocation2 + $0xa0] sm:$0xff] %vm131, %v729
    %786 = vst.msk [vmem:[#allocation2 + $0xa8] sm:$0xff] %vm131, %v730
    %787 = vst.msk [vmem:[#allocation2 + $0xb0] sm:$0xff] %vm131, %v731
    %788 = vst.msk [vmem:[#allocation2 + $0xb8] sm:$0xff] %vm131, %v732
    %789 = vst.msk [vmem:[#allocation2 + $0xc0] sm:$0xff] %vm131, %v733
    %790 = vst.msk [vmem:[#allocation2 + $0xc8] sm:$0xff] %vm131, %v734
    %791 = vst.msk [vmem:[#allocation2 + $0xd0] sm:$0xff] %vm131, %v735
    %792 = vst.msk [vmem:[#allocation2 + $0xd8] sm:$0xff] %vm131, %v736
    %793 = vst.msk [vmem:[#allocation2 + $0xe0] sm:$0xff] %vm131, %v737
    %794 = vst.msk [vmem:[#allocation2 + $0xe8] sm:$0xff] %vm131, %v738
    %795 = vst.msk [vmem:[#allocation2 + $0xf0] sm:$0xff] %vm131, %v739
    %796 = vst.msk [vmem:[#allocation2 + $0xf8] sm:$0xff] %vm131, %v740
    %797 = vst.msk [vmem:[#allocation2 + $0x100] sm:$0xff] %vm131, %v741
    %798 = vst.msk [vmem:[#allocation2 + $0x108] sm:$0xff] %vm131, %v742
    %799 = vst.msk [vmem:[#allocation2 + $0x110] sm:$0xff] %vm131, %v743
    %800 = vst.msk [vmem:[#allocation2 + $0x118] sm:$0xff] %vm131, %v744
    %801 = vst.msk [vmem:[#allocation2 + $0x120] sm:$0xff] %vm131, %v745
    %802 = vst.msk [vmem:[#allocation2 + $0x128] sm:$0xff] %vm131, %v746
    %803 = vst.msk [vmem:[#allocation2 + $0x130] sm:$0xff] %vm131, %v747
    %804 = vst.msk [vmem:[#allocation2 + $0x138] sm:$0xff] %vm131, %v748
    %805 = vst.msk [vmem:[#allocation2 + $0x140] sm:$0xff] %vm131, %v749
    %806 = vst.msk [vmem:[#allocation2 + $0x148] sm:$0xff] %vm131, %v750
    %807 = vst.msk [vmem:[#allocation2 + $0x150] sm:$0xff] %vm131, %v751
    %808 = vst.msk [vmem:[#allocation2 + $0x158] sm:$0xff] %vm131, %v752
    %809 = vst.msk [vmem:[#allocation2 + $0x160] sm:$0xff] %vm131, %v753
    %810 = vst.msk [vmem:[#allocation2 + $0x168] sm:$0xff] %vm131, %v754
    %811 = vst.msk [vmem:[#allocation2 + $0x170] sm:$0xff] %vm131, %v755
    %812 = vst.msk [vmem:[#allocation2 + $0x178] sm:$0xff] %vm131, %v756
    %813 = vst.msk [vmem:[#allocation2 + $0x180] sm:$0xff] %vm131, %v757
    %814 = vst.msk [vmem:[#allocation2 + $0x188] sm:$0xff] %vm131, %v758
    %815 = vst.msk [vmem:[#allocation2 + $0x190] sm:$0xff] %vm131, %v759
    %816 = vst.msk [vmem:[#allocation2 + $0x198] sm:$0xff] %vm131, %v760
    %817 = vst.msk [vmem:[#allocation2 + $0x1a0] sm:$0xff] %vm131, %v761
    %818 = vst.msk [vmem:[#allocation2 + $0x1a8] sm:$0xff] %vm131, %v762
    %819 = vst.msk [vmem:[#allocation2 + $0x1b0] sm:$0xff] %vm131, %v763
    %820 = vst.msk [vmem:[#allocation2 + $0x1b8] sm:$0xff] %vm131, %v764
    %v821 = vld [vmem:[#allocation2] sm:$0xff]
    %v822 = vld [vmem:[#allocation2 + $0x8] sm:$0xff]
    %v823 = vld [vmem:[#allocation2 + $0x10] sm:$0xff]
    %v824 = vld [vmem:[#allocation2 + $0x18] sm:$0xff]
    %v825 = vld [vmem:[#allocation2 + $0x20] sm:$0xff]
    %v826 = vld [vmem:[#allocation2 + $0x28] sm:$0xff]
    %v827 = vld [vmem:[#allocation2 + $0x30] sm:$0xff]
    %v828 = vld [vmem:[#allocation2 + $0x38] sm:$0xff]
    %v829 = vld [vmem:[#allocation2 + $0x40] sm:$0xff]
    %v830 = vld [vmem:[#allocation2 + $0x48] sm:$0xff]
    %v831 = vld [vmem:[#allocation2 + $0x50] sm:$0xff]
    %v832 = vld [vmem:[#allocation2 + $0x58] sm:$0xff]
    %v833 = vld [vmem:[#allocation2 + $0x60] sm:$0xff]
    %v834 = vld [vmem:[#allocation2 + $0x68] sm:$0xff]
    %v835 = vld [vmem:[#allocation2 + $0x70] sm:$0xff]
    %v836 = vld [vmem:[#allocation2 + $0x78] sm:$0xff]
    %v837 = vld [vmem:[#allocation2 + $0x80] sm:$0xff]
    %v838 = vld [vmem:[#allocation2 + $0x88] sm:$0xff]
    %v839 = vld [vmem:[#allocation2 + $0x90] sm:$0xff]
    %v840 = vld [vmem:[#allocation2 + $0x98] sm:$0xff]
    %v841 = vld [vmem:[#allocation2 + $0xa0] sm:$0xff]
    %v842 = vld [vmem:[#allocation2 + $0xa8] sm:$0xff]
    %v843 = vld [vmem:[#allocation2 + $0xb0] sm:$0xff]
    %v844 = vld [vmem:[#allocation2 + $0xb8] sm:$0xff]
    %v845 = vld [vmem:[#allocation2 + $0xc0] sm:$0xff]
    %v846 = vld [vmem:[#allocation2 + $0xc8] sm:$0xff]
    %v847 = vld [vmem:[#allocation2 + $0xd0] sm:$0xff]
    %v848 = vld [vmem:[#allocation2 + $0xd8] sm:$0xff]
    %v849 = vld [vmem:[#allocation2 + $0xe0] sm:$0xff]
    %v850 = vld [vmem:[#allocation2 + $0xe8] sm:$0xff]
    %v851 = vld [vmem:[#allocation2 + $0xf0] sm:$0xff]
    %v852 = vld [vmem:[#allocation2 + $0xf8] sm:$0xff]
    %v853 = vld [vmem:[#allocation2 + $0x100] sm:$0xff]
    %v854 = vld [vmem:[#allocation2 + $0x108] sm:$0xff]
    %v855 = vld [vmem:[#allocation2 + $0x110] sm:$0xff]
    %v856 = vld [vmem:[#allocation2 + $0x118] sm:$0xff]
    %v857 = vld [vmem:[#allocation2 + $0x120] sm:$0xff]
    %v858 = vld [vmem:[#allocation2 + $0x128] sm:$0xff]
    %v859 = vld [vmem:[#allocation2 + $0x130] sm:$0xff]
    %v860 = vld [vmem:[#allocation2 + $0x138] sm:$0xff]
    %v861 = vld [vmem:[#allocation2 + $0x140] sm:$0xff]
    %v862 = vld [vmem:[#allocation2 + $0x148] sm:$0xff]
    %v863 = vld [vmem:[#allocation2 + $0x150] sm:$0xff]
    %v864 = vld [vmem:[#allocation2 + $0x158] sm:$0xff]
    %v865 = vld [vmem:[#allocation2 + $0x160] sm:$0xff]
    %v866 = vld [vmem:[#allocation2 + $0x168] sm:$0xff]
    %v867 = vld [vmem:[#allocation2 + $0x170] sm:$0xff]
    %v868 = vld [vmem:[#allocation2 + $0x178] sm:$0xff]
    %v869 = vld [vmem:[#allocation2 + $0x180] sm:$0xff]
    %v870 = vld [vmem:[#allocation2 + $0x188] sm:$0xff]
    %v871 = vld [vmem:[#allocation2 + $0x190] sm:$0xff]
    %v872 = vld [vmem:[#allocation2 + $0x198] sm:$0xff]
    %v873 = vld [vmem:[#allocation2 + $0x1a0] sm:$0xff]
    %v874 = vld [vmem:[#allocation2 + $0x1a8] sm:$0xff]
    %v875 = vld [vmem:[#allocation2 + $0x1b0] sm:$0xff]
    %v876 = vld [vmem:[#allocation2 + $0x1b8] sm:$0xff]
    %v877 = vld [vmem:[#allocation6] sm:$0xff]
    %v878 = vld [vmem:[#allocation6 + $0x8] sm:$0xff]
    %v879 = vld [vmem:[#allocation6 + $0x10] sm:$0xff]
    %v880 = vld [vmem:[#allocation2 + $0x1] sm:$0xff]
    %v881 = vld [vmem:[#allocation2 + $0x9] sm:$0xff]
    %v882 = vld [vmem:[#allocation2 + $0x11] sm:$0xff]
    %v883 = vld [vmem:[#allocation2 + $0x19] sm:$0xff]
    %v884 = vld [vmem:[#allocation2 + $0x21] sm:$0xff]
    %v885 = vld [vmem:[#allocation2 + $0x29] sm:$0xff]
    %v886 = vld [vmem:[#allocation2 + $0x31] sm:$0xff]
    %v887 = vld [vmem:[#allocation2 + $0x39] sm:$0xff]
    %v888 = vld [vmem:[#allocation2 + $0x41] sm:$0xff]
    %v889 = vld [vmem:[#allocation2 + $0x49] sm:$0xff]
    %v890 = vld [vmem:[#allocation2 + $0x51] sm:$0xff]
    %v891 = vld [vmem:[#allocation2 + $0x59] sm:$0xff]
    %v892 = vld [vmem:[#allocation2 + $0x61] sm:$0xff]
    %v893 = vld [vmem:[#allocation2 + $0x69] sm:$0xff]
    %v894 = vld [vmem:[#allocation2 + $0x71] sm:$0xff]
    %v895 = vld [vmem:[#allocation2 + $0x79] sm:$0xff]
    %v896 = vld [vmem:[#allocation2 + $0x81] sm:$0xff]
    %v897 = vld [vmem:[#allocation2 + $0x89] sm:$0xff]
    %v898 = vld [vmem:[#allocation2 + $0x91] sm:$0xff]
    %v899 = vld [vmem:[#allocation2 + $0x99] sm:$0xff]
    %v900 = vld [vmem:[#allocation2 + $0xa1] sm:$0xff]
    %v901 = vld [vmem:[#allocation2 + $0xa9] sm:$0xff]
    %v902 = vld [vmem:[#allocation2 + $0xb1] sm:$0xff]
    %v903 = vld [vmem:[#allocation2 + $0xb9] sm:$0xff]
    %v904 = vld [vmem:[#allocation2 + $0xc1] sm:$0xff]
    %v905 = vld [vmem:[#allocation2 + $0xc9] sm:$0xff]
    %v906 = vld [vmem:[#allocation2 + $0xd1] sm:$0xff]
    %v907 = vld [vmem:[#allocation2 + $0xd9] sm:$0xff]
    %v908 = vld [vmem:[#allocation2 + $0xe1] sm:$0xff]
    %v909 = vld [vmem:[#allocation2 + $0xe9] sm:$0xff]
    %v910 = vld [vmem:[#allocation2 + $0xf1] sm:$0xff]
    %v911 = vld [vmem:[#allocation2 + $0xf9] sm:$0xff]
    %v912 = vld [vmem:[#allocation2 + $0x101] sm:$0xff]
    %v913 = vld [vmem:[#allocation2 + $0x109] sm:$0xff]
    %v914 = vld [vmem:[#allocation2 + $0x111] sm:$0xff]
    %v915 = vld [vmem:[#allocation2 + $0x119] sm:$0xff]
    %v916 = vld [vmem:[#allocation2 + $0x121] sm:$0xff]
    %v917 = vld [vmem:[#allocation2 + $0x129] sm:$0xff]
    %v918 = vld [vmem:[#allocation2 + $0x131] sm:$0xff]
    %v919 = vld [vmem:[#allocation2 + $0x139] sm:$0xff]
    %v920 = vld [vmem:[#allocation2 + $0x141] sm:$0xff]
    %v921 = vld [vmem:[#allocation2 + $0x149] sm:$0xff]
    %v922 = vld [vmem:[#allocation2 + $0x151] sm:$0xff]
    %v923 = vld [vmem:[#allocation2 + $0x159] sm:$0xff]
    %v924 = vld [vmem:[#allocation2 + $0x161] sm:$0xff]
    %v925 = vld [vmem:[#allocation2 + $0x169] sm:$0xff]
    %v926 = vld [vmem:[#allocation2 + $0x171] sm:$0xff]
    %v927 = vld [vmem:[#allocation2 + $0x179] sm:$0xff]
    %v928 = vld [vmem:[#allocation2 + $0x181] sm:$0xff]
    %v929 = vld [vmem:[#allocation2 + $0x189] sm:$0xff]
    %v930 = vld [vmem:[#allocation2 + $0x191] sm:$0xff]
    %v931 = vld [vmem:[#allocation2 + $0x199] sm:$0xff]
    %v932 = vld [vmem:[#allocation2 + $0x1a1] sm:$0xff]
    %v933 = vld [vmem:[#allocation2 + $0x1a9] sm:$0xff]
    %v934 = vld [vmem:[#allocation2 + $0x1b1] sm:$0xff]
    %v935 = vld [vmem:[#allocation2 + $0x1b9] sm:$0xff]
    %v936 = vld [vmem:[#allocation6 + $0x18] sm:$0xff]
    %v937 = vld [vmem:[#allocation6 + $0x20] sm:$0xff]
    %v938 = vld [vmem:[#allocation6 + $0x28] sm:$0xff]
    %v940 = vsel %vm131, %v880, 0
    %v943 = vsel %vm131, %v881, 0
    %v946 = vsel %vm131, %v882, 0
    %v949 = vsel %vm131, %v883, 0
    %v952 = vsel %vm131, %v884, 0
    %v955 = vsel %vm131, %v885, 0
    %v958 = vsel %vm131, %v886, 0
    %v961 = vsel %vm131, %v887, 0
    %v964 = vsel %vm131, %v888, 0
    %v967 = vsel %vm131, %v889, 0
    %v970 = vsel %vm131, %v890, 0
    %v973 = vsel %vm131, %v891, 0
    %v976 = vsel %vm131, %v892, 0
    %v979 = vsel %vm131, %v893, 0
    %v982 = vsel %vm131, %v894, 0
    %v985 = vsel %vm131, %v895, 0
    %v988 = vsel %vm131, %v896, 0
    %v991 = vsel %vm131, %v897, 0
    %v994 = vsel %vm131, %v898, 0
    %v997 = vsel %vm131, %v899, 0
    %v1000 = vsel %vm131, %v900, 0
    %v1003 = vsel %vm131, %v901, 0
    %v1006 = vsel %vm131, %v902, 0
    %v1009 = vsel %vm131, %v903, 0
    %v1012 = vsel %vm131, %v904, 0
    %v1015 = vsel %vm131, %v905, 0
    %v1018 = vsel %vm131, %v906, 0
    %v1021 = vsel %vm131, %v907, 0
    %v1024 = vsel %vm131, %v908, 0
    %v1027 = vsel %vm131, %v909, 0
    %v1030 = vsel %vm131, %v910, 0
    %v1033 = vsel %vm131, %v911, 0
    %v1036 = vsel %vm131, %v912, 0
    %v1039 = vsel %vm131, %v913, 0
    %v1042 = vsel %vm131, %v914, 0
    %v1045 = vsel %vm131, %v915, 0
    %v1048 = vsel %vm131, %v916, 0
    %v1051 = vsel %vm131, %v917, 0
    %v1054 = vsel %vm131, %v918, 0
    %v1057 = vsel %vm131, %v919, 0
    %v1060 = vsel %vm131, %v920, 0
    %v1063 = vsel %vm131, %v921, 0
    %v1066 = vsel %vm131, %v922, 0
    %v1069 = vsel %vm131, %v923, 0
    %v1072 = vsel %vm131, %v924, 0
    %v1075 = vsel %vm131, %v925, 0
    %v1078 = vsel %vm131, %v926, 0
    %v1081 = vsel %vm131, %v927, 0
    %v1084 = vsel %vm131, %v928, 0
    %v1087 = vsel %vm131, %v929, 0
    %v1090 = vsel %vm131, %v930, 0
    %v1093 = vsel %vm131, %v931, 0
    %v1096 = vsel %vm131, %v932, 0
    %v1099 = vsel %vm131, %v933, 0
    %v1102 = vsel %vm131, %v934, 0
    %v1105 = vsel %vm131, %v935, 0
    %1107 = vmatpush.msra.mxu0 0.0
    %1108 = vmatpush.msra.mxu0 0.0
    %1109 = vmatpush.msra.mxu0 0.0
    %1110 = vmatpush.msra.mxu0 0.0
    %1111 = vmatpush.msra.mxu0 0.0
    %1112 = vmatpush.msra.mxu0 0.0
    %1113 = vmatpush.msra.mxu0 0.0
    %1114 = vmatpush.msra.mxu0 0.0
    %1115 = vmatpush.msra.mxu0 0.0
    %1116 = vmatpush.msra.mxu0 0.0
    %1117 = vmatpush.msra.mxu0 0.0
    %1118 = vmatpush.msra.mxu0 0.0
    %1119 = vmatpush.msra.mxu0 0.0
    %1120 = vmatpush.msra.mxu0 %v938
    %1121 = vmatpush.msra.mxu0 %v937
    %1122 = vmatpush.msra.mxu0 %v936
    %1123 = vmatmul.f32.gmra.mxu0 %v940
    %v1124 = vpop.f32.mrf.mxu0
    %v1125 = vadd.f32 0.0, %v1124
    %1126 = vmatmul.f32.gmra.mxu0 %v943
    %v1127 = vpop.f32.mrf.mxu0
    %v1128 = vadd.f32 0.0, %v1127
    %1129 = vmatmul.f32.gmra.mxu0 %v946
    %v1130 = vpop.f32.mrf.mxu0
    %v1131 = vadd.f32 0.0, %v1130
    %1132 = vmatmul.f32.gmra.mxu0 %v949
    %v1133 = vpop.f32.mrf.mxu0
    %v1134 = vadd.f32 0.0, %v1133
    %1135 = vmatmul.f32.gmra.mxu0 %v952
    %v1136 = vpop.f32.mrf.mxu0
    %v1137 = vadd.f32 0.0, %v1136
    %1138 = vmatmul.f32.gmra.mxu0 %v955
    %v1139 = vpop.f32.mrf.mxu0
    %v1140 = vadd.f32 0.0, %v1139
    %1141 = vmatmul.f32.gmra.mxu0 %v958
    %v1142 = vpop.f32.mrf.mxu0
    %v1143 = vadd.f32 0.0, %v1142
    %1144 = vmatmul.f32.gmra.mxu0 %v961
    %v1145 = vpop.f32.mrf.mxu0
    %v1146 = vadd.f32 0.0, %v1145
    %1147 = vmatmul.f32.gmra.mxu0 %v964
    %v1148 = vpop.f32.mrf.mxu0
    %v1149 = vadd.f32 0.0, %v1148
    %1150 = vmatmul.f32.gmra.mxu0 %v967
    %v1151 = vpop.f32.mrf.mxu0
    %v1152 = vadd.f32 0.0, %v1151
    %1153 = vmatmul.f32.gmra.mxu0 %v970
    %v1154 = vpop.f32.mrf.mxu0
    %v1155 = vadd.f32 0.0, %v1154
    %1156 = vmatmul.f32.gmra.mxu0 %v973
    %v1157 = vpop.f32.mrf.mxu0
    %v1158 = vadd.f32 0.0, %v1157
    %1159 = vmatmul.f32.gmra.mxu0 %v976
    %v1160 = vpop.f32.mrf.mxu0
    %v1161 = vadd.f32 0.0, %v1160
    %1162 = vmatmul.f32.gmra.mxu0 %v979
    %v1163 = vpop.f32.mrf.mxu0
    %v1164 = vadd.f32 0.0, %v1163
    %1165 = vmatmul.f32.gmra.mxu0 %v982
    %v1166 = vpop.f32.mrf.mxu0
    %v1167 = vadd.f32 0.0, %v1166
    %1168 = vmatmul.f32.gmra.mxu0 %v985
    %v1169 = vpop.f32.mrf.mxu0
    %v1170 = vadd.f32 0.0, %v1169
    %1171 = vmatmul.f32.gmra.mxu0 %v988
    %v1172 = vpop.f32.mrf.mxu0
    %v1173 = vadd.f32 0.0, %v1172
    %1174 = vmatmul.f32.gmra.mxu0 %v991
    %v1175 = vpop.f32.mrf.mxu0
    %v1176 = vadd.f32 0.0, %v1175
    %1177 = vmatmul.f32.gmra.mxu0 %v994
    %v1178 = vpop.f32.mrf.mxu0
    %v1179 = vadd.f32 0.0, %v1178
    %1180 = vmatmul.f32.gmra.mxu0 %v997
    %v1181 = vpop.f32.mrf.mxu0
    %v1182 = vadd.f32 0.0, %v1181
    %1183 = vmatmul.f32.gmra.mxu0 %v1000
    %v1184 = vpop.f32.mrf.mxu0
    %v1185 = vadd.f32 0.0, %v1184
    %1186 = vmatmul.f32.gmra.mxu0 %v1003
    %v1187 = vpop.f32.mrf.mxu0
    %v1188 = vadd.f32 0.0, %v1187
    %1189 = vmatmul.f32.gmra.mxu0 %v1006
    %v1190 = vpop.f32.mrf.mxu0
    %v1191 = vadd.f32 0.0, %v1190
    %1192 = vmatmul.f32.gmra.mxu0 %v1009
    %v1193 = vpop.f32.mrf.mxu0
    %v1194 = vadd.f32 0.0, %v1193
    %1195 = vmatmul.f32.gmra.mxu0 %v1012
    %v1196 = vpop.f32.mrf.mxu0
    %v1197 = vadd.f32 0.0, %v1196
    %1198 = vmatmul.f32.gmra.mxu0 %v1015
    %v1199 = vpop.f32.mrf.mxu0
    %v1200 = vadd.f32 0.0, %v1199
    %1201 = vmatmul.f32.gmra.mxu0 %v1018
    %v1202 = vpop.f32.mrf.mxu0
    %v1203 = vadd.f32 0.0, %v1202
    %1204 = vmatmul.f32.gmra.mxu0 %v1021
    %v1205 = vpop.f32.mrf.mxu0
    %v1206 = vadd.f32 0.0, %v1205
    %1207 = vmatmul.f32.gmra.mxu0 %v1024
    %v1208 = vpop.f32.mrf.mxu0
    %v1209 = vadd.f32 0.0, %v1208
    %1210 = vmatmul.f32.gmra.mxu0 %v1027
    %v1211 = vpop.f32.mrf.mxu0
    %v1212 = vadd.f32 0.0, %v1211
    %1213 = vmatmul.f32.gmra.mxu0 %v1030
    %v1214 = vpop.f32.mrf.mxu0
    %v1215 = vadd.f32 0.0, %v1214
    %1216 = vmatmul.f32.gmra.mxu0 %v1033
    %v1217 = vpop.f32.mrf.mxu0
    %v1218 = vadd.f32 0.0, %v1217
    %1219 = vmatmul.f32.gmra.mxu0 %v1036
    %v1220 = vpop.f32.mrf.mxu0
    %v1221 = vadd.f32 0.0, %v1220
    %1222 = vmatmul.f32.gmra.mxu0 %v1039
    %v1223 = vpop.f32.mrf.mxu0
    %v1224 = vadd.f32 0.0, %v1223
    %1225 = vmatmul.f32.gmra.mxu0 %v1042
    %v1226 = vpop.f32.mrf.mxu0
    %v1227 = vadd.f32 0.0, %v1226
    %1228 = vmatmul.f32.gmra.mxu0 %v1045
    %v1229 = vpop.f32.mrf.mxu0
    %v1230 = vadd.f32 0.0, %v1229
    %1231 = vmatmul.f32.gmra.mxu0 %v1048
    %v1232 = vpop.f32.mrf.mxu0
    %v1233 = vadd.f32 0.0, %v1232
    %1234 = vmatmul.f32.gmra.mxu0 %v1051
    %v1235 = vpop.f32.mrf.mxu0
    %v1236 = vadd.f32 0.0, %v1235
    %1237 = vmatmul.f32.gmra.mxu0 %v1054
    %v1238 = vpop.f32.mrf.mxu0
    %v1239 = vadd.f32 0.0, %v1238
    %1240 = vmatmul.f32.gmra.mxu0 %v1057
    %v1241 = vpop.f32.mrf.mxu0
    %v1242 = vadd.f32 0.0, %v1241
    %1243 = vmatmul.f32.gmra.mxu0 %v1060
    %v1244 = vpop.f32.mrf.mxu0
    %v1245 = vadd.f32 0.0, %v1244
    %1246 = vmatmul.f32.gmra.mxu0 %v1063
    %v1247 = vpop.f32.mrf.mxu0
    %v1248 = vadd.f32 0.0, %v1247
    %1249 = vmatmul.f32.gmra.mxu0 %v1066
    %v1250 = vpop.f32.mrf.mxu0
    %v1251 = vadd.f32 0.0, %v1250
    %1252 = vmatmul.f32.gmra.mxu0 %v1069
    %v1253 = vpop.f32.mrf.mxu0
    %v1254 = vadd.f32 0.0, %v1253
    %1255 = vmatmul.f32.gmra.mxu0 %v1072
    %v1256 = vpop.f32.mrf.mxu0
    %v1257 = vadd.f32 0.0, %v1256
    %1258 = vmatmul.f32.gmra.mxu0 %v1075
    %v1259 = vpop.f32.mrf.mxu0
    %v1260 = vadd.f32 0.0, %v1259
    %1261 = vmatmul.f32.gmra.mxu0 %v1078
    %v1262 = vpop.f32.mrf.mxu0
    %v1263 = vadd.f32 0.0, %v1262
    %1264 = vmatmul.f32.gmra.mxu0 %v1081
    %v1265 = vpop.f32.mrf.mxu0
    %v1266 = vadd.f32 0.0, %v1265
    %1267 = vmatmul.f32.gmra.mxu0 %v1084
    %v1268 = vpop.f32.mrf.mxu0
    %v1269 = vadd.f32 0.0, %v1268
    %1270 = vmatmul.f32.gmra.mxu0 %v1087
    %v1271 = vpop.f32.mrf.mxu0
    %v1272 = vadd.f32 0.0, %v1271
    %1273 = vmatmul.f32.gmra.mxu0 %v1090
    %v1274 = vpop.f32.mrf.mxu0
    %v1275 = vadd.f32 0.0, %v1274
    %1276 = vmatmul.f32.gmra.mxu0 %v1093
    %v1277 = vpop.f32.mrf.mxu0
    %v1278 = vadd.f32 0.0, %v1277
    %1279 = vmatmul.f32.gmra.mxu0 %v1096
    %v1280 = vpop.f32.mrf.mxu0
    %v1281 = vadd.f32 0.0, %v1280
    %1282 = vmatmul.f32.gmra.mxu0 %v1099
    %v1283 = vpop.f32.mrf.mxu0
    %v1284 = vadd.f32 0.0, %v1283
    %1285 = vmatmul.f32.gmra.mxu0 %v1102
    %v1286 = vpop.f32.mrf.mxu0
    %v1287 = vadd.f32 0.0, %v1286
    %1288 = vmatmul.f32.gmra.mxu0 %v1105
    %v1289 = vpop.f32.mrf.mxu0
    %v1290 = vadd.f32 0.0, %v1289
    %1291 = vdwg.mxu0
    %v1293 = vsel %vm131, %v821, 0
    %v1296 = vsel %vm131, %v822, 0
    %v1299 = vsel %vm131, %v823, 0
    %v1302 = vsel %vm131, %v824, 0
    %v1305 = vsel %vm131, %v825, 0
    %v1308 = vsel %vm131, %v826, 0
    %v1311 = vsel %vm131, %v827, 0
    %v1314 = vsel %vm131, %v828, 0
    %v1317 = vsel %vm131, %v829, 0
    %v1320 = vsel %vm131, %v830, 0
    %v1323 = vsel %vm131, %v831, 0
    %v1326 = vsel %vm131, %v832, 0
    %v1329 = vsel %vm131, %v833, 0
    %v1332 = vsel %vm131, %v834, 0
    %v1335 = vsel %vm131, %v835, 0
    %v1338 = vsel %vm131, %v836, 0
    %v1341 = vsel %vm131, %v837, 0
    %v1344 = vsel %vm131, %v838, 0
    %v1347 = vsel %vm131, %v839, 0
    %v1350 = vsel %vm131, %v840, 0
    %v1353 = vsel %vm131, %v841, 0
    %v1356 = vsel %vm131, %v842, 0
    %v1359 = vsel %vm131, %v843, 0
    %v1362 = vsel %vm131, %v844, 0
    %v1365 = vsel %vm131, %v845, 0
    %v1368 = vsel %vm131, %v846, 0
    %v1371 = vsel %vm131, %v847, 0
    %v1374 = vsel %vm131, %v848, 0
    %v1377 = vsel %vm131, %v849, 0
    %v1380 = vsel %vm131, %v850, 0
    %v1383 = vsel %vm131, %v851, 0
    %v1386 = vsel %vm131, %v852, 0
    %v1389 = vsel %vm131, %v853, 0
    %v1392 = vsel %vm131, %v854, 0
    %v1395 = vsel %vm131, %v855, 0
    %v1398 = vsel %vm131, %v856, 0
    %v1401 = vsel %vm131, %v857, 0
    %v1404 = vsel %vm131, %v858, 0
    %v1407 = vsel %vm131, %v859, 0
    %v1410 = vsel %vm131, %v860, 0
    %v1413 = vsel %vm131, %v861, 0
    %v1416 = vsel %vm131, %v862, 0
    %v1419 = vsel %vm131, %v863, 0
    %v1422 = vsel %vm131, %v864, 0
    %v1425 = vsel %vm131, %v865, 0
    %v1428 = vsel %vm131, %v866, 0
    %v1431 = vsel %vm131, %v867, 0
    %v1434 = vsel %vm131, %v868, 0
    %v1437 = vsel %vm131, %v869, 0
    %v1440 = vsel %vm131, %v870, 0
    %v1443 = vsel %vm131, %v871, 0
    %v1446 = vsel %vm131, %v872, 0
    %v1449 = vsel %vm131, %v873, 0
    %v1452 = vsel %vm131, %v874, 0
    %v1455 = vsel %vm131, %v875, 0
    %v1458 = vsel %vm131, %v876, 0
    %1460 = vmatpush.msra.mxu0 0.0
    %1461 = vmatpush.msra.mxu0 0.0
    %1462 = vmatpush.msra.mxu0 0.0
    %1463 = vmatpush.msra.mxu0 0.0
    %1464 = vmatpush.msra.mxu0 0.0
    %1465 = vmatpush.msra.mxu0 0.0
    %1466 = vmatpush.msra.mxu0 0.0
    %1467 = vmatpush.msra.mxu0 0.0
    %1468 = vmatpush.msra.mxu0 0.0
    %1469 = vmatpush.msra.mxu0 0.0
    %1470 = vmatpush.msra.mxu0 0.0
    %1471 = vmatpush.msra.mxu0 0.0
    %1472 = vmatpush.msra.mxu0 0.0
    %1473 = vmatpush.msra.mxu0 %v879
    %1474 = vmatpush.msra.mxu0 %v878
    %1475 = vmatpush.msra.mxu0 %v877
    %1476 = vmatmul.f32.gmra.mxu0 %v1293
    %v1477 = vpop.f32.mrf.mxu0
    %v1478 = vadd.f32 %v1125, %v1477
    %1479 = vmatmul.f32.gmra.mxu0 %v1296
    %v1480 = vpop.f32.mrf.mxu0
    %v1481 = vadd.f32 %v1128, %v1480
    %1482 = vmatmul.f32.gmra.mxu0 %v1299
    %v1483 = vpop.f32.mrf.mxu0
    %v1484 = vadd.f32 %v1131, %v1483
    %1485 = vmatmul.f32.gmra.mxu0 %v1302
    %v1486 = vpop.f32.mrf.mxu0
    %v1487 = vadd.f32 %v1134, %v1486
    %1488 = vmatmul.f32.gmra.mxu0 %v1305
    %v1489 = vpop.f32.mrf.mxu0
    %v1490 = vadd.f32 %v1137, %v1489
    %1491 = vmatmul.f32.gmra.mxu0 %v1308
    %v1492 = vpop.f32.mrf.mxu0
    %v1493 = vadd.f32 %v1140, %v1492
    %1494 = vmatmul.f32.gmra.mxu0 %v1311
    %v1495 = vpop.f32.mrf.mxu0
    %v1496 = vadd.f32 %v1143, %v1495
    %1497 = vmatmul.f32.gmra.mxu0 %v1314
    %v1498 = vpop.f32.mrf.mxu0
    %v1499 = vadd.f32 %v1146, %v1498
    %1500 = vmatmul.f32.gmra.mxu0 %v1317
    %v1501 = vpop.f32.mrf.mxu0
    %v1502 = vadd.f32 %v1149, %v1501
    %1503 = vmatmul.f32.gmra.mxu0 %v1320
    %v1504 = vpop.f32.mrf.mxu0
    %v1505 = vadd.f32 %v1152, %v1504
    %1506 = vmatmul.f32.gmra.mxu0 %v1323
    %v1507 = vpop.f32.mrf.mxu0
    %v1508 = vadd.f32 %v1155, %v1507
    %1509 = vmatmul.f32.gmra.mxu0 %v1326
    %v1510 = vpop.f32.mrf.mxu0
    %v1511 = vadd.f32 %v1158, %v1510
    %1512 = vmatmul.f32.gmra.mxu0 %v1329
    %v1513 = vpop.f32.mrf.mxu0
    %v1514 = vadd.f32 %v1161, %v1513
    %1515 = vmatmul.f32.gmra.mxu0 %v1332
    %v1516 = vpop.f32.mrf.mxu0
    %v1517 = vadd.f32 %v1164, %v1516
    %1518 = vmatmul.f32.gmra.mxu0 %v1335
    %v1519 = vpop.f32.mrf.mxu0
    %v1520 = vadd.f32 %v1167, %v1519
    %1521 = vmatmul.f32.gmra.mxu0 %v1338
    %v1522 = vpop.f32.mrf.mxu0
    %v1523 = vadd.f32 %v1170, %v1522
    %1524 = vmatmul.f32.gmra.mxu0 %v1341
    %v1525 = vpop.f32.mrf.mxu0
    %v1526 = vadd.f32 %v1173, %v1525
    %1527 = vmatmul.f32.gmra.mxu0 %v1344
    %v1528 = vpop.f32.mrf.mxu0
    %v1529 = vadd.f32 %v1176, %v1528
    %1530 = vmatmul.f32.gmra.mxu0 %v1347
    %v1531 = vpop.f32.mrf.mxu0
    %v1532 = vadd.f32 %v1179, %v1531
    %1533 = vmatmul.f32.gmra.mxu0 %v1350
    %v1534 = vpop.f32.mrf.mxu0
    %v1535 = vadd.f32 %v1182, %v1534
    %1536 = vmatmul.f32.gmra.mxu0 %v1353
    %v1537 = vpop.f32.mrf.mxu0
    %v1538 = vadd.f32 %v1185, %v1537
    %1539 = vmatmul.f32.gmra.mxu0 %v1356
    %v1540 = vpop.f32.mrf.mxu0
    %v1541 = vadd.f32 %v1188, %v1540
    %1542 = vmatmul.f32.gmra.mxu0 %v1359
    %v1543 = vpop.f32.mrf.mxu0
    %v1544 = vadd.f32 %v1191, %v1543
    %1545 = vmatmul.f32.gmra.mxu0 %v1362
    %v1546 = vpop.f32.mrf.mxu0
    %v1547 = vadd.f32 %v1194, %v1546
    %1548 = vmatmul.f32.gmra.mxu0 %v1365
    %v1549 = vpop.f32.mrf.mxu0
    %v1550 = vadd.f32 %v1197, %v1549
    %1551 = vmatmul.f32.gmra.mxu0 %v1368
    %v1552 = vpop.f32.mrf.mxu0
    %v1553 = vadd.f32 %v1200, %v1552
    %1554 = vmatmul.f32.gmra.mxu0 %v1371
    %v1555 = vpop.f32.mrf.mxu0
    %v1556 = vadd.f32 %v1203, %v1555
    %1557 = vmatmul.f32.gmra.mxu0 %v1374
    %v1558 = vpop.f32.mrf.mxu0
    %v1559 = vadd.f32 %v1206, %v1558
    %1560 = vmatmul.f32.gmra.mxu0 %v1377
    %v1561 = vpop.f32.mrf.mxu0
    %v1562 = vadd.f32 %v1209, %v1561
    %1563 = vmatmul.f32.gmra.mxu0 %v1380
    %v1564 = vpop.f32.mrf.mxu0
    %v1565 = vadd.f32 %v1212, %v1564
    %1566 = vmatmul.f32.gmra.mxu0 %v1383
    %v1567 = vpop.f32.mrf.mxu0
    %v1568 = vadd.f32 %v1215, %v1567
    %1569 = vmatmul.f32.gmra.mxu0 %v1386
    %v1570 = vpop.f32.mrf.mxu0
    %v1571 = vadd.f32 %v1218, %v1570
    %1572 = vmatmul.f32.gmra.mxu0 %v1389
    %v1573 = vpop.f32.mrf.mxu0
    %v1574 = vadd.f32 %v1221, %v1573
    %1575 = vmatmul.f32.gmra.mxu0 %v1392
    %v1576 = vpop.f32.mrf.mxu0
    %v1577 = vadd.f32 %v1224, %v1576
    %1578 = vmatmul.f32.gmra.mxu0 %v1395
    %v1579 = vpop.f32.mrf.mxu0
    %v1580 = vadd.f32 %v1227, %v1579
    %1581 = vmatmul.f32.gmra.mxu0 %v1398
    %v1582 = vpop.f32.mrf.mxu0
    %v1583 = vadd.f32 %v1230, %v1582
    %1584 = vmatmul.f32.gmra.mxu0 %v1401
    %v1585 = vpop.f32.mrf.mxu0
    %v1586 = vadd.f32 %v1233, %v1585
    %1587 = vmatmul.f32.gmra.mxu0 %v1404
    %v1588 = vpop.f32.mrf.mxu0
    %v1589 = vadd.f32 %v1236, %v1588
    %1590 = vmatmul.f32.gmra.mxu0 %v1407
    %v1591 = vpop.f32.mrf.mxu0
    %v1592 = vadd.f32 %v1239, %v1591
    %1593 = vmatmul.f32.gmra.mxu0 %v1410
    %v1594 = vpop.f32.mrf.mxu0
    %v1595 = vadd.f32 %v1242, %v1594
    %1596 = vmatmul.f32.gmra.mxu0 %v1413
    %v1597 = vpop.f32.mrf.mxu0
    %v1598 = vadd.f32 %v1245, %v1597
    %1599 = vmatmul.f32.gmra.mxu0 %v1416
    %v1600 = vpop.f32.mrf.mxu0
    %v1601 = vadd.f32 %v1248, %v1600
    %1602 = vmatmul.f32.gmra.mxu0 %v1419
    %v1603 = vpop.f32.mrf.mxu0
    %v1604 = vadd.f32 %v1251, %v1603
    %1605 = vmatmul.f32.gmra.mxu0 %v1422
    %v1606 = vpop.f32.mrf.mxu0
    %v1607 = vadd.f32 %v1254, %v1606
    %1608 = vmatmul.f32.gmra.mxu0 %v1425
    %v1609 = vpop.f32.mrf.mxu0
    %v1610 = vadd.f32 %v1257, %v1609
    %1611 = vmatmul.f32.gmra.mxu0 %v1428
    %v1612 = vpop.f32.mrf.mxu0
    %v1613 = vadd.f32 %v1260, %v1612
    %1614 = vmatmul.f32.gmra.mxu0 %v1431
    %v1615 = vpop.f32.mrf.mxu0
    %v1616 = vadd.f32 %v1263, %v1615
    %1617 = vmatmul.f32.gmra.mxu0 %v1434
    %v1618 = vpop.f32.mrf.mxu0
    %v1619 = vadd.f32 %v1266, %v1618
    %1620 = vmatmul.f32.gmra.mxu0 %v1437
    %v1621 = vpop.f32.mrf.mxu0
    %v1622 = vadd.f32 %v1269, %v1621
    %1623 = vmatmul.f32.gmra.mxu0 %v1440
    %v1624 = vpop.f32.mrf.mxu0
    %v1625 = vadd.f32 %v1272, %v1624
    %1626 = vmatmul.f32.gmra.mxu0 %v1443
    %v1627 = vpop.f32.mrf.mxu0
    %v1628 = vadd.f32 %v1275, %v1627
    %1629 = vmatmul.f32.gmra.mxu0 %v1446
    %v1630 = vpop.f32.mrf.mxu0
    %v1631 = vadd.f32 %v1278, %v1630
    %1632 = vmatmul.f32.gmra.mxu0 %v1449
    %v1633 = vpop.f32.mrf.mxu0
    %v1634 = vadd.f32 %v1281, %v1633
    %1635 = vmatmul.f32.gmra.mxu0 %v1452
    %v1636 = vpop.f32.mrf.mxu0
    %v1637 = vadd.f32 %v1284, %v1636
    %1638 = vmatmul.f32.gmra.mxu0 %v1455
    %v1639 = vpop.f32.mrf.mxu0
    %v1640 = vadd.f32 %v1287, %v1639
    %1641 = vmatmul.f32.gmra.mxu0 %v1458
    %v1642 = vpop.f32.mrf.mxu0
    %v1643 = vadd.f32 %v1290, %v1642
    %1644 = vdwg.mxu0
    %v1645 = vld [vmem:[#allocation2 + $0x2] sm:$0xff]
    %v1646 = vld [vmem:[#allocation2 + $0xa] sm:$0xff]
    %v1647 = vld [vmem:[#allocation2 + $0x12] sm:$0xff]
    %v1648 = vld [vmem:[#allocation2 + $0x1a] sm:$0xff]
    %v1649 = vld [vmem:[#allocation2 + $0x22] sm:$0xff]
    %v1650 = vld [vmem:[#allocation2 + $0x2a] sm:$0xff]
    %v1651 = vld [vmem:[#allocation2 + $0x32] sm:$0xff]
    %v1652 = vld [vmem:[#allocation2 + $0x3a] sm:$0xff]
    %v1653 = vld [vmem:[#allocation2 + $0x42] sm:$0xff]
    %v1654 = vld [vmem:[#allocation2 + $0x4a] sm:$0xff]
    %v1655 = vld [vmem:[#allocation2 + $0x52] sm:$0xff]
    %v1656 = vld [vmem:[#allocation2 + $0x5a] sm:$0xff]
    %v1657 = vld [vmem:[#allocation2 + $0x62] sm:$0xff]
    %v1658 = vld [vmem:[#allocation2 + $0x6a] sm:$0xff]
    %v1659 = vld [vmem:[#allocation2 + $0x72] sm:$0xff]
    %v1660 = vld [vmem:[#allocation2 + $0x7a] sm:$0xff]
    %v1661 = vld [vmem:[#allocation2 + $0x82] sm:$0xff]
    %v1662 = vld [vmem:[#allocation2 + $0x8a] sm:$0xff]
    %v1663 = vld [vmem:[#allocation2 + $0x92] sm:$0xff]
    %v1664 = vld [vmem:[#allocation2 + $0x9a] sm:$0xff]
    %v1665 = vld [vmem:[#allocation2 + $0xa2] sm:$0xff]
    %v1666 = vld [vmem:[#allocation2 + $0xaa] sm:$0xff]
    %v1667 = vld [vmem:[#allocation2 + $0xb2] sm:$0xff]
    %v1668 = vld [vmem:[#allocation2 + $0xba] sm:$0xff]
    %v1669 = vld [vmem:[#allocation2 + $0xc2] sm:$0xff]
    %v1670 = vld [vmem:[#allocation2 + $0xca] sm:$0xff]
    %v1671 = vld [vmem:[#allocation2 + $0xd2] sm:$0xff]
    %v1672 = vld [vmem:[#allocation2 + $0xda] sm:$0xff]
    %v1673 = vld [vmem:[#allocation2 + $0xe2] sm:$0xff]
    %v1674 = vld [vmem:[#allocation2 + $0xea] sm:$0xff]
    %v1675 = vld [vmem:[#allocation2 + $0xf2] sm:$0xff]
    %v1676 = vld [vmem:[#allocation2 + $0xfa] sm:$0xff]
    %v1677 = vld [vmem:[#allocation2 + $0x102] sm:$0xff]
    %v1678 = vld [vmem:[#allocation2 + $0x10a] sm:$0xff]
    %v1679 = vld [vmem:[#allocation2 + $0x112] sm:$0xff]
    %v1680 = vld [vmem:[#allocation2 + $0x11a] sm:$0xff]
    %v1681 = vld [vmem:[#allocation2 + $0x122] sm:$0xff]
    %v1682 = vld [vmem:[#allocation2 + $0x12a] sm:$0xff]
    %v1683 = vld [vmem:[#allocation2 + $0x132] sm:$0xff]
    %v1684 = vld [vmem:[#allocation2 + $0x13a] sm:$0xff]
    %v1685 = vld [vmem:[#allocation2 + $0x142] sm:$0xff]
    %v1686 = vld [vmem:[#allocation2 + $0x14a] sm:$0xff]
    %v1687 = vld [vmem:[#allocation2 + $0x152] sm:$0xff]
    %v1688 = vld [vmem:[#allocation2 + $0x15a] sm:$0xff]
    %v1689 = vld [vmem:[#allocation2 + $0x162] sm:$0xff]
    %v1690 = vld [vmem:[#allocation2 + $0x16a] sm:$0xff]
    %v1691 = vld [vmem:[#allocation2 + $0x172] sm:$0xff]
    %v1692 = vld [vmem:[#allocation2 + $0x17a] sm:$0xff]
    %v1693 = vld [vmem:[#allocation2 + $0x182] sm:$0xff]
    %v1694 = vld [vmem:[#allocation2 + $0x18a] sm:$0xff]
    %v1695 = vld [vmem:[#allocation2 + $0x192] sm:$0xff]
    %v1696 = vld [vmem:[#allocation2 + $0x19a] sm:$0xff]
    %v1697 = vld [vmem:[#allocation2 + $0x1a2] sm:$0xff]
    %v1698 = vld [vmem:[#allocation2 + $0x1aa] sm:$0xff]
    %v1699 = vld [vmem:[#allocation2 + $0x1b2] sm:$0xff]
    %v1700 = vld [vmem:[#allocation2 + $0x1ba] sm:$0xff]
    %v1701 = vld [vmem:[#allocation6 + $0x30] sm:$0xff]
    %v1702 = vld [vmem:[#allocation6 + $0x38] sm:$0xff]
    %v1703 = vld [vmem:[#allocation6 + $0x40] sm:$0xff]
    %v1705 = vsel %vm131, %v1645, 0
    %v1708 = vsel %vm131, %v1646, 0
    %v1711 = vsel %vm131, %v1647, 0
    %v1714 = vsel %vm131, %v1648, 0
    %v1717 = vsel %vm131, %v1649, 0
    %v1720 = vsel %vm131, %v1650, 0
    %v1723 = vsel %vm131, %v1651, 0
    %v1726 = vsel %vm131, %v1652, 0
    %v1729 = vsel %vm131, %v1653, 0
    %v1732 = vsel %vm131, %v1654, 0
    %v1735 = vsel %vm131, %v1655, 0
    %v1738 = vsel %vm131, %v1656, 0
    %v1741 = vsel %vm131, %v1657, 0
    %v1744 = vsel %vm131, %v1658, 0
    %v1747 = vsel %vm131, %v1659, 0
    %v1750 = vsel %vm131, %v1660, 0
    %v1753 = vsel %vm131, %v1661, 0
    %v1756 = vsel %vm131, %v1662, 0
    %v1759 = vsel %vm131, %v1663, 0
    %v1762 = vsel %vm131, %v1664, 0
    %v1765 = vsel %vm131, %v1665, 0
    %v1768 = vsel %vm131, %v1666, 0
    %v1771 = vsel %vm131, %v1667, 0
    %v1774 = vsel %vm131, %v1668, 0
    %v1777 = vsel %vm131, %v1669, 0
    %v1780 = vsel %vm131, %v1670, 0
    %v1783 = vsel %vm131, %v1671, 0
    %v1786 = vsel %vm131, %v1672, 0
    %v1789 = vsel %vm131, %v1673, 0
    %v1792 = vsel %vm131, %v1674, 0
    %v1795 = vsel %vm131, %v1675, 0
    %v1798 = vsel %vm131, %v1676, 0
    %v1801 = vsel %vm131, %v1677, 0
    %v1804 = vsel %vm131, %v1678, 0
    %v1807 = vsel %vm131, %v1679, 0
    %v1810 = vsel %vm131, %v1680, 0
    %v1813 = vsel %vm131, %v1681, 0
    %v1816 = vsel %vm131, %v1682, 0
    %v1819 = vsel %vm131, %v1683, 0
    %v1822 = vsel %vm131, %v1684, 0
    %v1825 = vsel %vm131, %v1685, 0
    %v1828 = vsel %vm131, %v1686, 0
    %v1831 = vsel %vm131, %v1687, 0
    %v1834 = vsel %vm131, %v1688, 0
    %v1837 = vsel %vm131, %v1689, 0
    %v1840 = vsel %vm131, %v1690, 0
    %v1843 = vsel %vm131, %v1691, 0
    %v1846 = vsel %vm131, %v1692, 0
    %v1849 = vsel %vm131, %v1693, 0
    %v1852 = vsel %vm131, %v1694, 0
    %v1855 = vsel %vm131, %v1695, 0
    %v1858 = vsel %vm131, %v1696, 0
    %v1861 = vsel %vm131, %v1697, 0
    %v1864 = vsel %vm131, %v1698, 0
    %v1867 = vsel %vm131, %v1699, 0
    %v1870 = vsel %vm131, %v1700, 0
    %1872 = vmatpush.msra.mxu0 0.0
    %1873 = vmatpush.msra.mxu0 0.0
    %1874 = vmatpush.msra.mxu0 0.0
    %1875 = vmatpush.msra.mxu0 0.0
    %1876 = vmatpush.msra.mxu0 0.0
    %1877 = vmatpush.msra.mxu0 0.0
    %1878 = vmatpush.msra.mxu0 0.0
    %1879 = vmatpush.msra.mxu0 0.0
    %1880 = vmatpush.msra.mxu0 0.0
    %1881 = vmatpush.msra.mxu0 0.0
    %1882 = vmatpush.msra.mxu0 0.0
    %1883 = vmatpush.msra.mxu0 0.0
    %1884 = vmatpush.msra.mxu0 0.0
    %1885 = vmatpush.msra.mxu0 %v1703
    %1886 = vmatpush.msra.mxu0 %v1702
    %1887 = vmatpush.msra.mxu0 %v1701
    %1888 = vmatmul.f32.gmra.mxu0 %v1705
    %v1889 = vpop.f32.mrf.mxu0
    %v1890 = vadd.f32 0.0, %v1889
    %1891 = vmatmul.f32.gmra.mxu0 %v1708
    %v1892 = vpop.f32.mrf.mxu0
    %v1893 = vadd.f32 0.0, %v1892
    %1894 = vmatmul.f32.gmra.mxu0 %v1711
    %v1895 = vpop.f32.mrf.mxu0
    %v1896 = vadd.f32 0.0, %v1895
    %1897 = vmatmul.f32.gmra.mxu0 %v1714
    %v1898 = vpop.f32.mrf.mxu0
    %v1899 = vadd.f32 0.0, %v1898
    %1900 = vmatmul.f32.gmra.mxu0 %v1717
    %v1901 = vpop.f32.mrf.mxu0
    %v1902 = vadd.f32 0.0, %v1901
    %1903 = vmatmul.f32.gmra.mxu0 %v1720
    %v1904 = vpop.f32.mrf.mxu0
    %v1905 = vadd.f32 0.0, %v1904
    %1906 = vmatmul.f32.gmra.mxu0 %v1723
    %v1907 = vpop.f32.mrf.mxu0
    %v1908 = vadd.f32 0.0, %v1907
    %1909 = vmatmul.f32.gmra.mxu0 %v1726
    %v1910 = vpop.f32.mrf.mxu0
    %v1911 = vadd.f32 0.0, %v1910
    %1912 = vmatmul.f32.gmra.mxu0 %v1729
    %v1913 = vpop.f32.mrf.mxu0
    %v1914 = vadd.f32 0.0, %v1913
    %1915 = vmatmul.f32.gmra.mxu0 %v1732
    %v1916 = vpop.f32.mrf.mxu0
    %v1917 = vadd.f32 0.0, %v1916
    %1918 = vmatmul.f32.gmra.mxu0 %v1735
    %v1919 = vpop.f32.mrf.mxu0
    %v1920 = vadd.f32 0.0, %v1919
    %1921 = vmatmul.f32.gmra.mxu0 %v1738
    %v1922 = vpop.f32.mrf.mxu0
    %v1923 = vadd.f32 0.0, %v1922
    %1924 = vmatmul.f32.gmra.mxu0 %v1741
    %v1925 = vpop.f32.mrf.mxu0
    %v1926 = vadd.f32 0.0, %v1925
    %1927 = vmatmul.f32.gmra.mxu0 %v1744
    %v1928 = vpop.f32.mrf.mxu0
    %v1929 = vadd.f32 0.0, %v1928
    %1930 = vmatmul.f32.gmra.mxu0 %v1747
    %v1931 = vpop.f32.mrf.mxu0
    %v1932 = vadd.f32 0.0, %v1931
    %1933 = vmatmul.f32.gmra.mxu0 %v1750
    %v1934 = vpop.f32.mrf.mxu0
    %v1935 = vadd.f32 0.0, %v1934
    %1936 = vmatmul.f32.gmra.mxu0 %v1753
    %v1937 = vpop.f32.mrf.mxu0
    %v1938 = vadd.f32 0.0, %v1937
    %1939 = vmatmul.f32.gmra.mxu0 %v1756
    %v1940 = vpop.f32.mrf.mxu0
    %v1941 = vadd.f32 0.0, %v1940
    %1942 = vmatmul.f32.gmra.mxu0 %v1759
    %v1943 = vpop.f32.mrf.mxu0
    %v1944 = vadd.f32 0.0, %v1943
    %1945 = vmatmul.f32.gmra.mxu0 %v1762
    %v1946 = vpop.f32.mrf.mxu0
    %v1947 = vadd.f32 0.0, %v1946
    %1948 = vmatmul.f32.gmra.mxu0 %v1765
    %v1949 = vpop.f32.mrf.mxu0
    %v1950 = vadd.f32 0.0, %v1949
    %1951 = vmatmul.f32.gmra.mxu0 %v1768
    %v1952 = vpop.f32.mrf.mxu0
    %v1953 = vadd.f32 0.0, %v1952
    %1954 = vmatmul.f32.gmra.mxu0 %v1771
    %v1955 = vpop.f32.mrf.mxu0
    %v1956 = vadd.f32 0.0, %v1955
    %1957 = vmatmul.f32.gmra.mxu0 %v1774
    %v1958 = vpop.f32.mrf.mxu0
    %v1959 = vadd.f32 0.0, %v1958
    %1960 = vmatmul.f32.gmra.mxu0 %v1777
    %v1961 = vpop.f32.mrf.mxu0
    %v1962 = vadd.f32 0.0, %v1961
    %1963 = vmatmul.f32.gmra.mxu0 %v1780
    %v1964 = vpop.f32.mrf.mxu0
    %v1965 = vadd.f32 0.0, %v1964
    %1966 = vmatmul.f32.gmra.mxu0 %v1783
    %v1967 = vpop.f32.mrf.mxu0
    %v1968 = vadd.f32 0.0, %v1967
    %1969 = vmatmul.f32.gmra.mxu0 %v1786
    %v1970 = vpop.f32.mrf.mxu0
    %v1971 = vadd.f32 0.0, %v1970
    %1972 = vmatmul.f32.gmra.mxu0 %v1789
    %v1973 = vpop.f32.mrf.mxu0
    %v1974 = vadd.f32 0.0, %v1973
    %1975 = vmatmul.f32.gmra.mxu0 %v1792
    %v1976 = vpop.f32.mrf.mxu0
    %v1977 = vadd.f32 0.0, %v1976
    %1978 = vmatmul.f32.gmra.mxu0 %v1795
    %v1979 = vpop.f32.mrf.mxu0
    %v1980 = vadd.f32 0.0, %v1979
    %1981 = vmatmul.f32.gmra.mxu0 %v1798
    %v1982 = vpop.f32.mrf.mxu0
    %v1983 = vadd.f32 0.0, %v1982
    %1984 = vmatmul.f32.gmra.mxu0 %v1801
    %v1985 = vpop.f32.mrf.mxu0
    %v1986 = vadd.f32 0.0, %v1985
    %1987 = vmatmul.f32.gmra.mxu0 %v1804
    %v1988 = vpop.f32.mrf.mxu0
    %v1989 = vadd.f32 0.0, %v1988
    %1990 = vmatmul.f32.gmra.mxu0 %v1807
    %v1991 = vpop.f32.mrf.mxu0
    %v1992 = vadd.f32 0.0, %v1991
    %1993 = vmatmul.f32.gmra.mxu0 %v1810
    %v1994 = vpop.f32.mrf.mxu0
    %v1995 = vadd.f32 0.0, %v1994
    %1996 = vmatmul.f32.gmra.mxu0 %v1813
    %v1997 = vpop.f32.mrf.mxu0
    %v1998 = vadd.f32 0.0, %v1997
    %1999 = vmatmul.f32.gmra.mxu0 %v1816
    %v2000 = vpop.f32.mrf.mxu0
    %v2001 = vadd.f32 0.0, %v2000
    %2002 = vmatmul.f32.gmra.mxu0 %v1819
    %v2003 = vpop.f32.mrf.mxu0
    %v2004 = vadd.f32 0.0, %v2003
    %2005 = vmatmul.f32.gmra.mxu0 %v1822
    %v2006 = vpop.f32.mrf.mxu0
    %v2007 = vadd.f32 0.0, %v2006
    %2008 = vmatmul.f32.gmra.mxu0 %v1825
    %v2009 = vpop.f32.mrf.mxu0
    %v2010 = vadd.f32 0.0, %v2009
    %2011 = vmatmul.f32.gmra.mxu0 %v1828
    %v2012 = vpop.f32.mrf.mxu0
    %v2013 = vadd.f32 0.0, %v2012
    %2014 = vmatmul.f32.gmra.mxu0 %v1831
    %v2015 = vpop.f32.mrf.mxu0
    %v2016 = vadd.f32 0.0, %v2015
    %2017 = vmatmul.f32.gmra.mxu0 %v1834
    %v2018 = vpop.f32.mrf.mxu0
    %v2019 = vadd.f32 0.0, %v2018
    %2020 = vmatmul.f32.gmra.mxu0 %v1837
    %v2021 = vpop.f32.mrf.mxu0
    %v2022 = vadd.f32 0.0, %v2021
    %2023 = vmatmul.f32.gmra.mxu0 %v1840
    %v2024 = vpop.f32.mrf.mxu0
    %v2025 = vadd.f32 0.0, %v2024
    %2026 = vmatmul.f32.gmra.mxu0 %v1843
    %v2027 = vpop.f32.mrf.mxu0
    %v2028 = vadd.f32 0.0, %v2027
    %2029 = vmatmul.f32.gmra.mxu0 %v1846
    %v2030 = vpop.f32.mrf.mxu0
    %v2031 = vadd.f32 0.0, %v2030
    %2032 = vmatmul.f32.gmra.mxu0 %v1849
    %v2033 = vpop.f32.mrf.mxu0
    %v2034 = vadd.f32 0.0, %v2033
    %2035 = vmatmul.f32.gmra.mxu0 %v1852
    %v2036 = vpop.f32.mrf.mxu0
    %v2037 = vadd.f32 0.0, %v2036
    %2038 = vmatmul.f32.gmra.mxu0 %v1855
    %v2039 = vpop.f32.mrf.mxu0
    %v2040 = vadd.f32 0.0, %v2039
    %2041 = vmatmul.f32.gmra.mxu0 %v1858
    %v2042 = vpop.f32.mrf.mxu0
    %v2043 = vadd.f32 0.0, %v2042
    %2044 = vmatmul.f32.gmra.mxu0 %v1861
    %v2045 = vpop.f32.mrf.mxu0
    %v2046 = vadd.f32 0.0, %v2045
    %2047 = vmatmul.f32.gmra.mxu0 %v1864
    %v2048 = vpop.f32.mrf.mxu0
    %v2049 = vadd.f32 0.0, %v2048
    %2050 = vmatmul.f32.gmra.mxu0 %v1867
    %v2051 = vpop.f32.mrf.mxu0
    %v2052 = vadd.f32 0.0, %v2051
    %2053 = vmatmul.f32.gmra.mxu0 %v1870
    %v2054 = vpop.f32.mrf.mxu0
    %v2055 = vadd.f32 0.0, %v2054
    %2056 = vdwg.mxu0
    %v2057 = vadd.f32 %v1478, %v1890
    %v2058 = vadd.f32 %v1481, %v1893
    %v2059 = vadd.f32 %v1484, %v1896
    %v2060 = vadd.f32 %v1487, %v1899
    %v2061 = vadd.f32 %v1490, %v1902
    %v2062 = vadd.f32 %v1493, %v1905
    %v2063 = vadd.f32 %v1496, %v1908
    %v2064 = vadd.f32 %v1499, %v1911
    %v2065 = vadd.f32 %v1502, %v1914
    %v2066 = vadd.f32 %v1505, %v1917
    %v2067 = vadd.f32 %v1508, %v1920
    %v2068 = vadd.f32 %v1511, %v1923
    %v2069 = vadd.f32 %v1514, %v1926
    %v2070 = vadd.f32 %v1517, %v1929
    %v2071 = vadd.f32 %v1520, %v1932
    %v2072 = vadd.f32 %v1523, %v1935
    %v2073 = vadd.f32 %v1526, %v1938
    %v2074 = vadd.f32 %v1529, %v1941
    %v2075 = vadd.f32 %v1532, %v1944
    %v2076 = vadd.f32 %v1535, %v1947
    %v2077 = vadd.f32 %v1538, %v1950
    %v2078 = vadd.f32 %v1541, %v1953
    %v2079 = vadd.f32 %v1544, %v1956
    %v2080 = vadd.f32 %v1547, %v1959
    %v2081 = vadd.f32 %v1550, %v1962
    %v2082 = vadd.f32 %v1553, %v1965
    %v2083 = vadd.f32 %v1556, %v1968
    %v2084 = vadd.f32 %v1559, %v1971
    %v2085 = vadd.f32 %v1562, %v1974
    %v2086 = vadd.f32 %v1565, %v1977
    %v2087 = vadd.f32 %v1568, %v1980
    %v2088 = vadd.f32 %v1571, %v1983
    %v2089 = vadd.f32 %v1574, %v1986
    %v2090 = vadd.f32 %v1577, %v1989
    %v2091 = vadd.f32 %v1580, %v1992
    %v2092 = vadd.f32 %v1583, %v1995
    %v2093 = vadd.f32 %v1586, %v1998
    %v2094 = vadd.f32 %v1589, %v2001
    %v2095 = vadd.f32 %v1592, %v2004
    %v2096 = vadd.f32 %v1595, %v2007
    %v2097 = vadd.f32 %v1598, %v2010
    %v2098 = vadd.f32 %v1601, %v2013
    %v2099 = vadd.f32 %v1604, %v2016
    %v2100 = vadd.f32 %v1607, %v2019
    %v2101 = vadd.f32 %v1610, %v2022
    %v2102 = vadd.f32 %v1613, %v2025
    %v2103 = vadd.f32 %v1616, %v2028
    %v2104 = vadd.f32 %v1619, %v2031
    %v2105 = vadd.f32 %v1622, %v2034
    %v2106 = vadd.f32 %v1625, %v2037
    %v2107 = vadd.f32 %v1628, %v2040
    %v2108 = vadd.f32 %v1631, %v2043
    %v2109 = vadd.f32 %v1634, %v2046
    %v2110 = vadd.f32 %v1637, %v2049
    %v2111 = vadd.f32 %v1640, %v2052
    %v2112 = vadd.f32 %v1643, %v2055
    %v2113 = vld [vmem:[#allocation2 + $0x7] sm:$0xff]
    %v2114 = vld [vmem:[#allocation2 + $0xf] sm:$0xff]
    %v2115 = vld [vmem:[#allocation2 + $0x17] sm:$0xff]
    %v2116 = vld [vmem:[#allocation2 + $0x1f] sm:$0xff]
    %v2117 = vld [vmem:[#allocation2 + $0x27] sm:$0xff]
    %v2118 = vld [vmem:[#allocation2 + $0x2f] sm:$0xff]
    %v2119 = vld [vmem:[#allocation2 + $0x37] sm:$0xff]
    %v2120 = vld [vmem:[#allocation2 + $0x3f] sm:$0xff]
    %v2121 = vld [vmem:[#allocation2 + $0x47] sm:$0xff]
    %v2122 = vld [vmem:[#allocation2 + $0x4f] sm:$0xff]
    %v2123 = vld [vmem:[#allocation2 + $0x57] sm:$0xff]
    %v2124 = vld [vmem:[#allocation2 + $0x5f] sm:$0xff]
    %v2125 = vld [vmem:[#allocation2 + $0x67] sm:$0xff]
    %v2126 = vld [vmem:[#allocation2 + $0x6f] sm:$0xff]
    %v2127 = vld [vmem:[#allocation2 + $0x77] sm:$0xff]
    %v2128 = vld [vmem:[#allocation2 + $0x7f] sm:$0xff]
    %v2129 = vld [vmem:[#allocation2 + $0x87] sm:$0xff]
    %v2130 = vld [vmem:[#allocation2 + $0x8f] sm:$0xff]
    %v2131 = vld [vmem:[#allocation2 + $0x97] sm:$0xff]
    %v2132 = vld [vmem:[#allocation2 + $0x9f] sm:$0xff]
    %v2133 = vld [vmem:[#allocation2 + $0xa7] sm:$0xff]
    %v2134 = vld [vmem:[#allocation2 + $0xaf] sm:$0xff]
    %v2135 = vld [vmem:[#allocation2 + $0xb7] sm:$0xff]
    %v2136 = vld [vmem:[#allocation2 + $0xbf] sm:$0xff]
    %v2137 = vld [vmem:[#allocation2 + $0xc7] sm:$0xff]
    %v2138 = vld [vmem:[#allocation2 + $0xcf] sm:$0xff]
    %v2139 = vld [vmem:[#allocation2 + $0xd7] sm:$0xff]
    %v2140 = vld [vmem:[#allocation2 + $0xdf] sm:$0xff]
    %v2141 = vld [vmem:[#allocation2 + $0xe7] sm:$0xff]
    %v2142 = vld [vmem:[#allocation2 + $0xef] sm:$0xff]
    %v2143 = vld [vmem:[#allocation2 + $0xf7] sm:$0xff]
    %v2144 = vld [vmem:[#allocation2 + $0xff] sm:$0xff]
    %v2145 = vld [vmem:[#allocation2 + $0x107] sm:$0xff]
    %v2146 = vld [vmem:[#allocation2 + $0x10f] sm:$0xff]
    %v2147 = vld [vmem:[#allocation2 + $0x117] sm:$0xff]
    %v2148 = vld [vmem:[#allocation2 + $0x11f] sm:$0xff]
    %v2149 = vld [vmem:[#allocation2 + $0x127] sm:$0xff]
    %v2150 = vld [vmem:[#allocation2 + $0x12f] sm:$0xff]
    %v2151 = vld [vmem:[#allocation2 + $0x137] sm:$0xff]
    %v2152 = vld [vmem:[#allocation2 + $0x13f] sm:$0xff]
    %v2153 = vld [vmem:[#allocation2 + $0x147] sm:$0xff]
    %v2154 = vld [vmem:[#allocation2 + $0x14f] sm:$0xff]
    %v2155 = vld [vmem:[#allocation2 + $0x157] sm:$0xff]
    %v2156 = vld [vmem:[#allocation2 + $0x15f] sm:$0xff]
    %v2157 = vld [vmem:[#allocation2 + $0x167] sm:$0xff]
    %v2158 = vld [vmem:[#allocation2 + $0x16f] sm:$0xff]
    %v2159 = vld [vmem:[#allocation2 + $0x177] sm:$0xff]
    %v2160 = vld [vmem:[#allocation2 + $0x17f] sm:$0xff]
    %v2161 = vld [vmem:[#allocation2 + $0x187] sm:$0xff]
    %v2162 = vld [vmem:[#allocation2 + $0x18f] sm:$0xff]
    %v2163 = vld [vmem:[#allocation2 + $0x197] sm:$0xff]
    %v2164 = vld [vmem:[#allocation2 + $0x19f] sm:$0xff]
    %v2165 = vld [vmem:[#allocation2 + $0x1a7] sm:$0xff]
    %v2166 = vld [vmem:[#allocation2 + $0x1af] sm:$0xff]
    %v2167 = vld [vmem:[#allocation2 + $0x1b7] sm:$0xff]
    %v2168 = vld [vmem:[#allocation2 + $0x1bf] sm:$0xff]
    %v2169 = vld [vmem:[#allocation6 + $0x48] sm:$0xff]
    %v2170 = vld [vmem:[#allocation6 + $0x50] sm:$0xff]
    %v2171 = vld [vmem:[#allocation6 + $0x58] sm:$0xff]
    %v2173 = vsel %vm131, %v2113, 0
    %v2176 = vsel %vm131, %v2114, 0
    %v2179 = vsel %vm131, %v2115, 0
    %v2182 = vsel %vm131, %v2116, 0
    %v2185 = vsel %vm131, %v2117, 0
    %v2188 = vsel %vm131, %v2118, 0
    %v2191 = vsel %vm131, %v2119, 0
    %v2194 = vsel %vm131, %v2120, 0
    %v2197 = vsel %vm131, %v2121, 0
    %v2200 = vsel %vm131, %v2122, 0
    %v2203 = vsel %vm131, %v2123, 0
    %v2206 = vsel %vm131, %v2124, 0
    %v2209 = vsel %vm131, %v2125, 0
    %v2212 = vsel %vm131, %v2126, 0
    %v2215 = vsel %vm131, %v2127, 0
    %v2218 = vsel %vm131, %v2128, 0
    %v2221 = vsel %vm131, %v2129, 0
    %v2224 = vsel %vm131, %v2130, 0
    %v2227 = vsel %vm131, %v2131, 0
    %v2230 = vsel %vm131, %v2132, 0
    %v2233 = vsel %vm131, %v2133, 0
    %v2236 = vsel %vm131, %v2134, 0
    %v2239 = vsel %vm131, %v2135, 0
    %v2242 = vsel %vm131, %v2136, 0
    %v2245 = vsel %vm131, %v2137, 0
    %v2248 = vsel %vm131, %v2138, 0
    %v2251 = vsel %vm131, %v2139, 0
    %v2254 = vsel %vm131, %v2140, 0
    %v2257 = vsel %vm131, %v2141, 0
    %v2260 = vsel %vm131, %v2142, 0
    %v2263 = vsel %vm131, %v2143, 0
    %v2266 = vsel %vm131, %v2144, 0
    %v2269 = vsel %vm131, %v2145, 0
    %v2272 = vsel %vm131, %v2146, 0
    %v2275 = vsel %vm131, %v2147, 0
    %v2278 = vsel %vm131, %v2148, 0
    %v2281 = vsel %vm131, %v2149, 0
    %v2284 = vsel %vm131, %v2150, 0
    %v2287 = vsel %vm131, %v2151, 0
    %v2290 = vsel %vm131, %v2152, 0
    %v2293 = vsel %vm131, %v2153, 0
    %v2296 = vsel %vm131, %v2154, 0
    %v2299 = vsel %vm131, %v2155, 0
    %v2302 = vsel %vm131, %v2156, 0
    %v2305 = vsel %vm131, %v2157, 0
    %v2308 = vsel %vm131, %v2158, 0
    %v2311 = vsel %vm131, %v2159, 0
    %v2314 = vsel %vm131, %v2160, 0
    %v2317 = vsel %vm131, %v2161, 0
    %v2320 = vsel %vm131, %v2162, 0
    %v2323 = vsel %vm131, %v2163, 0
    %v2326 = vsel %vm131, %v2164, 0
    %v2329 = vsel %vm131, %v2165, 0
    %v2332 = vsel %vm131, %v2166, 0
    %v2335 = vsel %vm131, %v2167, 0
    %v2338 = vsel %vm131, %v2168, 0
    %2340 = vmatpush.msra.mxu0 0.0
    %2341 = vmatpush.msra.mxu0 0.0
    %2342 = vmatpush.msra.mxu0 0.0
    %2343 = vmatpush.msra.mxu0 0.0
    %2344 = vmatpush.msra.mxu0 0.0
    %2345 = vmatpush.msra.mxu0 0.0
    %2346 = vmatpush.msra.mxu0 0.0
    %2347 = vmatpush.msra.mxu0 0.0
    %2348 = vmatpush.msra.mxu0 0.0
    %2349 = vmatpush.msra.mxu0 0.0
    %2350 = vmatpush.msra.mxu0 0.0
    %2351 = vmatpush.msra.mxu0 0.0
    %2352 = vmatpush.msra.mxu0 0.0
    %2353 = vmatpush.msra.mxu0 %v2171
    %2354 = vmatpush.msra.mxu0 %v2170
    %2355 = vmatpush.msra.mxu0 %v2169
    %2356 = vmatmul.f32.gmra.mxu0 %v2173
    %v2357 = vpop.f32.mrf.mxu0
    %v2358 = vadd.f32 0.0, %v2357
    %2359 = vmatmul.f32.gmra.mxu0 %v2176
    %v2360 = vpop.f32.mrf.mxu0
    %v2361 = vadd.f32 0.0, %v2360
    %2362 = vmatmul.f32.gmra.mxu0 %v2179
    %v2363 = vpop.f32.mrf.mxu0
    %v2364 = vadd.f32 0.0, %v2363
    %2365 = vmatmul.f32.gmra.mxu0 %v2182
    %v2366 = vpop.f32.mrf.mxu0
    %v2367 = vadd.f32 0.0, %v2366
    %2368 = vmatmul.f32.gmra.mxu0 %v2185
    %v2369 = vpop.f32.mrf.mxu0
    %v2370 = vadd.f32 0.0, %v2369
    %2371 = vmatmul.f32.gmra.mxu0 %v2188
    %v2372 = vpop.f32.mrf.mxu0
    %v2373 = vadd.f32 0.0, %v2372
    %2374 = vmatmul.f32.gmra.mxu0 %v2191
    %v2375 = vpop.f32.mrf.mxu0
    %v2376 = vadd.f32 0.0, %v2375
    %2377 = vmatmul.f32.gmra.mxu0 %v2194
    %v2378 = vpop.f32.mrf.mxu0
    %v2379 = vadd.f32 0.0, %v2378
    %2380 = vmatmul.f32.gmra.mxu0 %v2197
    %v2381 = vpop.f32.mrf.mxu0
    %v2382 = vadd.f32 0.0, %v2381
    %2383 = vmatmul.f32.gmra.mxu0 %v2200
    %v2384 = vpop.f32.mrf.mxu0
    %v2385 = vadd.f32 0.0, %v2384
    %2386 = vmatmul.f32.gmra.mxu0 %v2203
    %v2387 = vpop.f32.mrf.mxu0
    %v2388 = vadd.f32 0.0, %v2387
    %2389 = vmatmul.f32.gmra.mxu0 %v2206
    %v2390 = vpop.f32.mrf.mxu0
    %v2391 = vadd.f32 0.0, %v2390
    %2392 = vmatmul.f32.gmra.mxu0 %v2209
    %v2393 = vpop.f32.mrf.mxu0
    %v2394 = vadd.f32 0.0, %v2393
    %2395 = vmatmul.f32.gmra.mxu0 %v2212
    %v2396 = vpop.f32.mrf.mxu0
    %v2397 = vadd.f32 0.0, %v2396
    %2398 = vmatmul.f32.gmra.mxu0 %v2215
    %v2399 = vpop.f32.mrf.mxu0
    %v2400 = vadd.f32 0.0, %v2399
    %2401 = vmatmul.f32.gmra.mxu0 %v2218
    %v2402 = vpop.f32.mrf.mxu0
    %v2403 = vadd.f32 0.0, %v2402
    %2404 = vmatmul.f32.gmra.mxu0 %v2221
    %v2405 = vpop.f32.mrf.mxu0
    %v2406 = vadd.f32 0.0, %v2405
    %2407 = vmatmul.f32.gmra.mxu0 %v2224
    %v2408 = vpop.f32.mrf.mxu0
    %v2409 = vadd.f32 0.0, %v2408
    %2410 = vmatmul.f32.gmra.mxu0 %v2227
    %v2411 = vpop.f32.mrf.mxu0
    %v2412 = vadd.f32 0.0, %v2411
    %2413 = vmatmul.f32.gmra.mxu0 %v2230
    %v2414 = vpop.f32.mrf.mxu0
    %v2415 = vadd.f32 0.0, %v2414
    %2416 = vmatmul.f32.gmra.mxu0 %v2233
    %v2417 = vpop.f32.mrf.mxu0
    %v2418 = vadd.f32 0.0, %v2417
    %2419 = vmatmul.f32.gmra.mxu0 %v2236
    %v2420 = vpop.f32.mrf.mxu0
    %v2421 = vadd.f32 0.0, %v2420
    %2422 = vmatmul.f32.gmra.mxu0 %v2239
    %v2423 = vpop.f32.mrf.mxu0
    %v2424 = vadd.f32 0.0, %v2423
    %2425 = vmatmul.f32.gmra.mxu0 %v2242
    %v2426 = vpop.f32.mrf.mxu0
    %v2427 = vadd.f32 0.0, %v2426
    %2428 = vmatmul.f32.gmra.mxu0 %v2245
    %v2429 = vpop.f32.mrf.mxu0
    %v2430 = vadd.f32 0.0, %v2429
    %2431 = vmatmul.f32.gmra.mxu0 %v2248
    %v2432 = vpop.f32.mrf.mxu0
    %v2433 = vadd.f32 0.0, %v2432
    %2434 = vmatmul.f32.gmra.mxu0 %v2251
    %v2435 = vpop.f32.mrf.mxu0
    %v2436 = vadd.f32 0.0, %v2435
    %2437 = vmatmul.f32.gmra.mxu0 %v2254
    %v2438 = vpop.f32.mrf.mxu0
    %v2439 = vadd.f32 0.0, %v2438
    %2440 = vmatmul.f32.gmra.mxu0 %v2257
    %v2441 = vpop.f32.mrf.mxu0
    %v2442 = vadd.f32 0.0, %v2441
    %2443 = vmatmul.f32.gmra.mxu0 %v2260
    %v2444 = vpop.f32.mrf.mxu0
    %v2445 = vadd.f32 0.0, %v2444
    %2446 = vmatmul.f32.gmra.mxu0 %v2263
    %v2447 = vpop.f32.mrf.mxu0
    %v2448 = vadd.f32 0.0, %v2447
    %2449 = vmatmul.f32.gmra.mxu0 %v2266
    %v2450 = vpop.f32.mrf.mxu0
    %v2451 = vadd.f32 0.0, %v2450
    %2452 = vmatmul.f32.gmra.mxu0 %v2269
    %v2453 = vpop.f32.mrf.mxu0
    %v2454 = vadd.f32 0.0, %v2453
    %2455 = vmatmul.f32.gmra.mxu0 %v2272
    %v2456 = vpop.f32.mrf.mxu0
    %v2457 = vadd.f32 0.0, %v2456
    %2458 = vmatmul.f32.gmra.mxu0 %v2275
    %v2459 = vpop.f32.mrf.mxu0
    %v2460 = vadd.f32 0.0, %v2459
    %2461 = vmatmul.f32.gmra.mxu0 %v2278
    %v2462 = vpop.f32.mrf.mxu0
    %v2463 = vadd.f32 0.0, %v2462
    %2464 = vmatmul.f32.gmra.mxu0 %v2281
    %v2465 = vpop.f32.mrf.mxu0
    %v2466 = vadd.f32 0.0, %v2465
    %2467 = vmatmul.f32.gmra.mxu0 %v2284
    %v2468 = vpop.f32.mrf.mxu0
    %v2469 = vadd.f32 0.0, %v2468
    %2470 = vmatmul.f32.gmra.mxu0 %v2287
    %v2471 = vpop.f32.mrf.mxu0
    %v2472 = vadd.f32 0.0, %v2471
    %2473 = vmatmul.f32.gmra.mxu0 %v2290
    %v2474 = vpop.f32.mrf.mxu0
    %v2475 = vadd.f32 0.0, %v2474
    %2476 = vmatmul.f32.gmra.mxu0 %v2293
    %v2477 = vpop.f32.mrf.mxu0
    %v2478 = vadd.f32 0.0, %v2477
    %2479 = vmatmul.f32.gmra.mxu0 %v2296
    %v2480 = vpop.f32.mrf.mxu0
    %v2481 = vadd.f32 0.0, %v2480
    %2482 = vmatmul.f32.gmra.mxu0 %v2299
    %v2483 = vpop.f32.mrf.mxu0
    %v2484 = vadd.f32 0.0, %v2483
    %2485 = vmatmul.f32.gmra.mxu0 %v2302
    %v2486 = vpop.f32.mrf.mxu0
    %v2487 = vadd.f32 0.0, %v2486
    %2488 = vmatmul.f32.gmra.mxu0 %v2305
    %v2489 = vpop.f32.mrf.mxu0
    %v2490 = vadd.f32 0.0, %v2489
    %2491 = vmatmul.f32.gmra.mxu0 %v2308
    %v2492 = vpop.f32.mrf.mxu0
    %v2493 = vadd.f32 0.0, %v2492
    %2494 = vmatmul.f32.gmra.mxu0 %v2311
    %v2495 = vpop.f32.mrf.mxu0
    %v2496 = vadd.f32 0.0, %v2495
    %2497 = vmatmul.f32.gmra.mxu0 %v2314
    %v2498 = vpop.f32.mrf.mxu0
    %v2499 = vadd.f32 0.0, %v2498
    %2500 = vmatmul.f32.gmra.mxu0 %v2317
    %v2501 = vpop.f32.mrf.mxu0
    %v2502 = vadd.f32 0.0, %v2501
    %2503 = vmatmul.f32.gmra.mxu0 %v2320
    %v2504 = vpop.f32.mrf.mxu0
    %v2505 = vadd.f32 0.0, %v2504
    %2506 = vmatmul.f32.gmra.mxu0 %v2323
    %v2507 = vpop.f32.mrf.mxu0
    %v2508 = vadd.f32 0.0, %v2507
    %2509 = vmatmul.f32.gmra.mxu0 %v2326
    %v2510 = vpop.f32.mrf.mxu0
    %v2511 = vadd.f32 0.0, %v2510
    %2512 = vmatmul.f32.gmra.mxu0 %v2329
    %v2513 = vpop.f32.mrf.mxu0
    %v2514 = vadd.f32 0.0, %v2513
    %2515 = vmatmul.f32.gmra.mxu0 %v2332
    %v2516 = vpop.f32.mrf.mxu0
    %v2517 = vadd.f32 0.0, %v2516
    %2518 = vmatmul.f32.gmra.mxu0 %v2335
    %v2519 = vpop.f32.mrf.mxu0
    %v2520 = vadd.f32 0.0, %v2519
    %2521 = vmatmul.f32.gmra.mxu0 %v2338
    %v2522 = vpop.f32.mrf.mxu0
    %v2523 = vadd.f32 0.0, %v2522
    %2524 = vdwg.mxu0
    %v2525 = vadd.f32 %v2057, %v2358
    %v2526 = vadd.f32 %v2058, %v2361
    %v2527 = vadd.f32 %v2059, %v2364
    %v2528 = vadd.f32 %v2060, %v2367
    %v2529 = vadd.f32 %v2061, %v2370
    %v2530 = vadd.f32 %v2062, %v2373
    %v2531 = vadd.f32 %v2063, %v2376
    %v2532 = vadd.f32 %v2064, %v2379
    %v2533 = vadd.f32 %v2065, %v2382
    %v2534 = vadd.f32 %v2066, %v2385
    %v2535 = vadd.f32 %v2067, %v2388
    %v2536 = vadd.f32 %v2068, %v2391
    %v2537 = vadd.f32 %v2069, %v2394
    %v2538 = vadd.f32 %v2070, %v2397
    %v2539 = vadd.f32 %v2071, %v2400
    %v2540 = vadd.f32 %v2072, %v2403
    %v2541 = vadd.f32 %v2073, %v2406
    %v2542 = vadd.f32 %v2074, %v2409
    %v2543 = vadd.f32 %v2075, %v2412
    %v2544 = vadd.f32 %v2076, %v2415
    %v2545 = vadd.f32 %v2077, %v2418
    %v2546 = vadd.f32 %v2078, %v2421
    %v2547 = vadd.f32 %v2079, %v2424
    %v2548 = vadd.f32 %v2080, %v2427
    %v2549 = vadd.f32 %v2081, %v2430
    %v2550 = vadd.f32 %v2082, %v2433
    %v2551 = vadd.f32 %v2083, %v2436
    %v2552 = vadd.f32 %v2084, %v2439
    %v2553 = vadd.f32 %v2085, %v2442
    %v2554 = vadd.f32 %v2086, %v2445
    %v2555 = vadd.f32 %v2087, %v2448
    %v2556 = vadd.f32 %v2088, %v2451
    %v2557 = vadd.f32 %v2089, %v2454
    %v2558 = vadd.f32 %v2090, %v2457
    %v2559 = vadd.f32 %v2091, %v2460
    %v2560 = vadd.f32 %v2092, %v2463
    %v2561 = vadd.f32 %v2093, %v2466
    %v2562 = vadd.f32 %v2094, %v2469
    %v2563 = vadd.f32 %v2095, %v2472
    %v2564 = vadd.f32 %v2096, %v2475
    %v2565 = vadd.f32 %v2097, %v2478
    %v2566 = vadd.f32 %v2098, %v2481
    %v2567 = vadd.f32 %v2099, %v2484
    %v2568 = vadd.f32 %v2100, %v2487
    %v2569 = vadd.f32 %v2101, %v2490
    %v2570 = vadd.f32 %v2102, %v2493
    %v2571 = vadd.f32 %v2103, %v2496
    %v2572 = vadd.f32 %v2104, %v2499
    %v2573 = vadd.f32 %v2105, %v2502
    %v2574 = vadd.f32 %v2106, %v2505
    %v2575 = vadd.f32 %v2107, %v2508
    %v2576 = vadd.f32 %v2108, %v2511
    %v2577 = vadd.f32 %v2109, %v2514
    %v2578 = vadd.f32 %v2110, %v2517
    %v2579 = vadd.f32 %v2111, %v2520
    %v2580 = vadd.f32 %v2112, %v2523
    %v2581 = vld [vmem:[#allocation2 + $0x8] sm:$0xff]
    %v2582 = vld [vmem:[#allocation2 + $0x10] sm:$0xff]
    %v2583 = vld [vmem:[#allocation2 + $0x18] sm:$0xff]
    %v2584 = vld [vmem:[#allocation2 + $0x20] sm:$0xff]
    %v2585 = vld [vmem:[#allocation2 + $0x28] sm:$0xff]
    %v2586 = vld [vmem:[#allocation2 + $0x30] sm:$0xff]
    %v2587 = vld [vmem:[#allocation2 + $0x38] sm:$0xff]
    %v2588 = vld [vmem:[#allocation2 + $0x40] sm:$0xff]
    %v2589 = vld [vmem:[#allocation2 + $0x48] sm:$0xff]
    %v2590 = vld [vmem:[#allocation2 + $0x50] sm:$0xff]
    %v2591 = vld [vmem:[#allocation2 + $0x58] sm:$0xff]
    %v2592 = vld [vmem:[#allocation2 + $0x60] sm:$0xff]
    %v2593 = vld [vmem:[#allocation2 + $0x68] sm:$0xff]
    %v2594 = vld [vmem:[#allocation2 + $0x70] sm:$0xff]
    %v2595 = vld [vmem:[#allocation2 + $0x78] sm:$0xff]
    %v2596 = vld [vmem:[#allocation2 + $0x80] sm:$0xff]
    %v2597 = vld [vmem:[#allocation2 + $0x88] sm:$0xff]
    %v2598 = vld [vmem:[#allocation2 + $0x90] sm:$0xff]
    %v2599 = vld [vmem:[#allocation2 + $0x98] sm:$0xff]
    %v2600 = vld [vmem:[#allocation2 + $0xa0] sm:$0xff]
    %v2601 = vld [vmem:[#allocation2 + $0xa8] sm:$0xff]
    %v2602 = vld [vmem:[#allocation2 + $0xb0] sm:$0xff]
    %v2603 = vld [vmem:[#allocation2 + $0xb8] sm:$0xff]
    %v2604 = vld [vmem:[#allocation2 + $0xc0] sm:$0xff]
    %v2605 = vld [vmem:[#allocation2 + $0xc8] sm:$0xff]
    %v2606 = vld [vmem:[#allocation2 + $0xd0] sm:$0xff]
    %v2607 = vld [vmem:[#allocation2 + $0xd8] sm:$0xff]
    %v2608 = vld [vmem:[#allocation2 + $0xe0] sm:$0xff]
    %v2609 = vld [vmem:[#allocation2 + $0xe8] sm:$0xff]
    %v2610 = vld [vmem:[#allocation2 + $0xf0] sm:$0xff]
    %v2611 = vld [vmem:[#allocation2 + $0xf8] sm:$0xff]
    %v2612 = vld [vmem:[#allocation2 + $0x100] sm:$0xff]
    %v2613 = vld [vmem:[#allocation2 + $0x108] sm:$0xff]
    %v2614 = vld [vmem:[#allocation2 + $0x110] sm:$0xff]
    %v2615 = vld [vmem:[#allocation2 + $0x118] sm:$0xff]
    %v2616 = vld [vmem:[#allocation2 + $0x120] sm:$0xff]
    %v2617 = vld [vmem:[#allocation2 + $0x128] sm:$0xff]
    %v2618 = vld [vmem:[#allocation2 + $0x130] sm:$0xff]
    %v2619 = vld [vmem:[#allocation2 + $0x138] sm:$0xff]
    %v2620 = vld [vmem:[#allocation2 + $0x140] sm:$0xff]
    %v2621 = vld [vmem:[#allocation2 + $0x148] sm:$0xff]
    %v2622 = vld [vmem:[#allocation2 + $0x150] sm:$0xff]
    %v2623 = vld [vmem:[#allocation2 + $0x158] sm:$0xff]
    %v2624 = vld [vmem:[#allocation2 + $0x160] sm:$0xff]
    %v2625 = vld [vmem:[#allocation2 + $0x168] sm:$0xff]
    %v2626 = vld [vmem:[#allocation2 + $0x170] sm:$0xff]
    %v2627 = vld [vmem:[#allocation2 + $0x178] sm:$0xff]
    %v2628 = vld [vmem:[#allocation2 + $0x180] sm:$0xff]
    %v2629 = vld [vmem:[#allocation2 + $0x188] sm:$0xff]
    %v2630 = vld [vmem:[#allocation2 + $0x190] sm:$0xff]
    %v2631 = vld [vmem:[#allocation2 + $0x198] sm:$0xff]
    %v2632 = vld [vmem:[#allocation2 + $0x1a0] sm:$0xff]
    %v2633 = vld [vmem:[#allocation2 + $0x1a8] sm:$0xff]
    %v2634 = vld [vmem:[#allocation2 + $0x1b0] sm:$0xff]
    %v2635 = vld [vmem:[#allocation2 + $0x1b8] sm:$0xff]
    %v2636 = vld [vmem:[#allocation2 + $0x1c0] sm:$0xff]
    %v2637 = vld [vmem:[#allocation6 + $0x60] sm:$0xff]
    %v2638 = vld [vmem:[#allocation6 + $0x68] sm:$0xff]
    %v2639 = vld [vmem:[#allocation6 + $0x70] sm:$0xff]
    %v2641 = vsel %vm131, %v2581, 0
    %v2644 = vsel %vm131, %v2582, 0
    %v2647 = vsel %vm131, %v2583, 0
    %v2650 = vsel %vm131, %v2584, 0
    %v2653 = vsel %vm131, %v2585, 0
    %v2656 = vsel %vm131, %v2586, 0
    %v2659 = vsel %vm131, %v2587, 0
    %v2662 = vsel %vm131, %v2588, 0
    %v2665 = vsel %vm131, %v2589, 0
    %v2668 = vsel %vm131, %v2590, 0
    %v2671 = vsel %vm131, %v2591, 0
    %v2674 = vsel %vm131, %v2592, 0
    %v2677 = vsel %vm131, %v2593, 0
    %v2680 = vsel %vm131, %v2594, 0
    %v2683 = vsel %vm131, %v2595, 0
    %v2686 = vsel %vm131, %v2596, 0
    %v2689 = vsel %vm131, %v2597, 0
    %v2692 = vsel %vm131, %v2598, 0
    %v2695 = vsel %vm131, %v2599, 0
    %v2698 = vsel %vm131, %v2600, 0
    %v2701 = vsel %vm131, %v2601, 0
    %v2704 = vsel %vm131, %v2602, 0
    %v2707 = vsel %vm131, %v2603, 0
    %v2710 = vsel %vm131, %v2604, 0
    %v2713 = vsel %vm131, %v2605, 0
    %v2716 = vsel %vm131, %v2606, 0
    %v2719 = vsel %vm131, %v2607, 0
    %v2722 = vsel %vm131, %v2608, 0
    %v2725 = vsel %vm131, %v2609, 0
    %v2728 = vsel %vm131, %v2610, 0
    %v2731 = vsel %vm131, %v2611, 0
    %v2734 = vsel %vm131, %v2612, 0
    %v2737 = vsel %vm131, %v2613, 0
    %v2740 = vsel %vm131, %v2614, 0
    %v2743 = vsel %vm131, %v2615, 0
    %v2746 = vsel %vm131, %v2616, 0
    %v2749 = vsel %vm131, %v2617, 0
    %v2752 = vsel %vm131, %v2618, 0
    %v2755 = vsel %vm131, %v2619, 0
    %v2758 = vsel %vm131, %v2620, 0
    %v2761 = vsel %vm131, %v2621, 0
    %v2764 = vsel %vm131, %v2622, 0
    %v2767 = vsel %vm131, %v2623, 0
    %v2770 = vsel %vm131, %v2624, 0
    %v2773 = vsel %vm131, %v2625, 0
    %v2776 = vsel %vm131, %v2626, 0
    %v2779 = vsel %vm131, %v2627, 0
    %v2782 = vsel %vm131, %v2628, 0
    %v2785 = vsel %vm131, %v2629, 0
    %v2788 = vsel %vm131, %v2630, 0
    %v2791 = vsel %vm131, %v2631, 0
    %v2794 = vsel %vm131, %v2632, 0
    %v2797 = vsel %vm131, %v2633, 0
    %v2800 = vsel %vm131, %v2634, 0
    %v2803 = vsel %vm131, %v2635, 0
    %v2806 = vsel %vm131, %v2636, 0
    %2808 = vmatpush.msra.mxu0 0.0
    %2809 = vmatpush.msra.mxu0 0.0
    %2810 = vmatpush.msra.mxu0 0.0
    %2811 = vmatpush.msra.mxu0 0.0
    %2812 = vmatpush.msra.mxu0 0.0
    %2813 = vmatpush.msra.mxu0 0.0
    %2814 = vmatpush.msra.mxu0 0.0
    %2815 = vmatpush.msra.mxu0 0.0
    %2816 = vmatpush.msra.mxu0 0.0
    %2817 = vmatpush.msra.mxu0 0.0
    %2818 = vmatpush.msra.mxu0 0.0
    %2819 = vmatpush.msra.mxu0 0.0
    %2820 = vmatpush.msra.mxu0 0.0
    %2821 = vmatpush.msra.mxu0 %v2639
    %2822 = vmatpush.msra.mxu0 %v2638
    %2823 = vmatpush.msra.mxu0 %v2637
    %2824 = vmatmul.f32.gmra.mxu0 %v2641
    %v2825 = vpop.f32.mrf.mxu0
    %v2826 = vadd.f32 0.0, %v2825
    %2827 = vmatmul.f32.gmra.mxu0 %v2644
    %v2828 = vpop.f32.mrf.mxu0
    %v2829 = vadd.f32 0.0, %v2828
    %2830 = vmatmul.f32.gmra.mxu0 %v2647
    %v2831 = vpop.f32.mrf.mxu0
    %v2832 = vadd.f32 0.0, %v2831
    %2833 = vmatmul.f32.gmra.mxu0 %v2650
    %v2834 = vpop.f32.mrf.mxu0
    %v2835 = vadd.f32 0.0, %v2834
    %2836 = vmatmul.f32.gmra.mxu0 %v2653
    %v2837 = vpop.f32.mrf.mxu0
    %v2838 = vadd.f32 0.0, %v2837
    %2839 = vmatmul.f32.gmra.mxu0 %v2656
    %v2840 = vpop.f32.mrf.mxu0
    %v2841 = vadd.f32 0.0, %v2840
    %2842 = vmatmul.f32.gmra.mxu0 %v2659
    %v2843 = vpop.f32.mrf.mxu0
    %v2844 = vadd.f32 0.0, %v2843
    %2845 = vmatmul.f32.gmra.mxu0 %v2662
    %v2846 = vpop.f32.mrf.mxu0
    %v2847 = vadd.f32 0.0, %v2846
    %2848 = vmatmul.f32.gmra.mxu0 %v2665
    %v2849 = vpop.f32.mrf.mxu0
    %v2850 = vadd.f32 0.0, %v2849
    %2851 = vmatmul.f32.gmra.mxu0 %v2668
    %v2852 = vpop.f32.mrf.mxu0
    %v2853 = vadd.f32 0.0, %v2852
    %2854 = vmatmul.f32.gmra.mxu0 %v2671
    %v2855 = vpop.f32.mrf.mxu0
    %v2856 = vadd.f32 0.0, %v2855
    %2857 = vmatmul.f32.gmra.mxu0 %v2674
    %v2858 = vpop.f32.mrf.mxu0
    %v2859 = vadd.f32 0.0, %v2858
    %2860 = vmatmul.f32.gmra.mxu0 %v2677
    %v2861 = vpop.f32.mrf.mxu0
    %v2862 = vadd.f32 0.0, %v2861
    %2863 = vmatmul.f32.gmra.mxu0 %v2680
    %v2864 = vpop.f32.mrf.mxu0
    %v2865 = vadd.f32 0.0, %v2864
    %2866 = vmatmul.f32.gmra.mxu0 %v2683
    %v2867 = vpop.f32.mrf.mxu0
    %v2868 = vadd.f32 0.0, %v2867
    %2869 = vmatmul.f32.gmra.mxu0 %v2686
    %v2870 = vpop.f32.mrf.mxu0
    %v2871 = vadd.f32 0.0, %v2870
    %2872 = vmatmul.f32.gmra.mxu0 %v2689
    %v2873 = vpop.f32.mrf.mxu0
    %v2874 = vadd.f32 0.0, %v2873
    %2875 = vmatmul.f32.gmra.mxu0 %v2692
    %v2876 = vpop.f32.mrf.mxu0
    %v2877 = vadd.f32 0.0, %v2876
    %2878 = vmatmul.f32.gmra.mxu0 %v2695
    %v2879 = vpop.f32.mrf.mxu0
    %v2880 = vadd.f32 0.0, %v2879
    %2881 = vmatmul.f32.gmra.mxu0 %v2698
    %v2882 = vpop.f32.mrf.mxu0
    %v2883 = vadd.f32 0.0, %v2882
    %2884 = vmatmul.f32.gmra.mxu0 %v2701
    %v2885 = vpop.f32.mrf.mxu0
    %v2886 = vadd.f32 0.0, %v2885
    %2887 = vmatmul.f32.gmra.mxu0 %v2704
    %v2888 = vpop.f32.mrf.mxu0
    %v2889 = vadd.f32 0.0, %v2888
    %2890 = vmatmul.f32.gmra.mxu0 %v2707
    %v2891 = vpop.f32.mrf.mxu0
    %v2892 = vadd.f32 0.0, %v2891
    %2893 = vmatmul.f32.gmra.mxu0 %v2710
    %v2894 = vpop.f32.mrf.mxu0
    %v2895 = vadd.f32 0.0, %v2894
    %2896 = vmatmul.f32.gmra.mxu0 %v2713
    %v2897 = vpop.f32.mrf.mxu0
    %v2898 = vadd.f32 0.0, %v2897
    %2899 = vmatmul.f32.gmra.mxu0 %v2716
    %v2900 = vpop.f32.mrf.mxu0
    %v2901 = vadd.f32 0.0, %v2900
    %2902 = vmatmul.f32.gmra.mxu0 %v2719
    %v2903 = vpop.f32.mrf.mxu0
    %v2904 = vadd.f32 0.0, %v2903
    %2905 = vmatmul.f32.gmra.mxu0 %v2722
    %v2906 = vpop.f32.mrf.mxu0
    %v2907 = vadd.f32 0.0, %v2906
    %2908 = vmatmul.f32.gmra.mxu0 %v2725
    %v2909 = vpop.f32.mrf.mxu0
    %v2910 = vadd.f32 0.0, %v2909
    %2911 = vmatmul.f32.gmra.mxu0 %v2728
    %v2912 = vpop.f32.mrf.mxu0
    %v2913 = vadd.f32 0.0, %v2912
    %2914 = vmatmul.f32.gmra.mxu0 %v2731
    %v2915 = vpop.f32.mrf.mxu0
    %v2916 = vadd.f32 0.0, %v2915
    %2917 = vmatmul.f32.gmra.mxu0 %v2734
    %v2918 = vpop.f32.mrf.mxu0
    %v2919 = vadd.f32 0.0, %v2918
    %2920 = vmatmul.f32.gmra.mxu0 %v2737
    %v2921 = vpop.f32.mrf.mxu0
    %v2922 = vadd.f32 0.0, %v2921
    %2923 = vmatmul.f32.gmra.mxu0 %v2740
    %v2924 = vpop.f32.mrf.mxu0
    %v2925 = vadd.f32 0.0, %v2924
    %2926 = vmatmul.f32.gmra.mxu0 %v2743
    %v2927 = vpop.f32.mrf.mxu0
    %v2928 = vadd.f32 0.0, %v2927
    %2929 = vmatmul.f32.gmra.mxu0 %v2746
    %v2930 = vpop.f32.mrf.mxu0
    %v2931 = vadd.f32 0.0, %v2930
    %2932 = vmatmul.f32.gmra.mxu0 %v2749
    %v2933 = vpop.f32.mrf.mxu0
    %v2934 = vadd.f32 0.0, %v2933
    %2935 = vmatmul.f32.gmra.mxu0 %v2752
    %v2936 = vpop.f32.mrf.mxu0
    %v2937 = vadd.f32 0.0, %v2936
    %2938 = vmatmul.f32.gmra.mxu0 %v2755
    %v2939 = vpop.f32.mrf.mxu0
    %v2940 = vadd.f32 0.0, %v2939
    %2941 = vmatmul.f32.gmra.mxu0 %v2758
    %v2942 = vpop.f32.mrf.mxu0
    %v2943 = vadd.f32 0.0, %v2942
    %2944 = vmatmul.f32.gmra.mxu0 %v2761
    %v2945 = vpop.f32.mrf.mxu0
    %v2946 = vadd.f32 0.0, %v2945
    %2947 = vmatmul.f32.gmra.mxu0 %v2764
    %v2948 = vpop.f32.mrf.mxu0
    %v2949 = vadd.f32 0.0, %v2948
    %2950 = vmatmul.f32.gmra.mxu0 %v2767
    %v2951 = vpop.f32.mrf.mxu0
    %v2952 = vadd.f32 0.0, %v2951
    %2953 = vmatmul.f32.gmra.mxu0 %v2770
    %v2954 = vpop.f32.mrf.mxu0
    %v2955 = vadd.f32 0.0, %v2954
    %2956 = vmatmul.f32.gmra.mxu0 %v2773
    %v2957 = vpop.f32.mrf.mxu0
    %v2958 = vadd.f32 0.0, %v2957
    %2959 = vmatmul.f32.gmra.mxu0 %v2776
    %v2960 = vpop.f32.mrf.mxu0
    %v2961 = vadd.f32 0.0, %v2960
    %2962 = vmatmul.f32.gmra.mxu0 %v2779
    %v2963 = vpop.f32.mrf.mxu0
    %v2964 = vadd.f32 0.0, %v2963
    %2965 = vmatmul.f32.gmra.mxu0 %v2782
    %v2966 = vpop.f32.mrf.mxu0
    %v2967 = vadd.f32 0.0, %v2966
    %2968 = vmatmul.f32.gmra.mxu0 %v2785
    %v2969 = vpop.f32.mrf.mxu0
    %v2970 = vadd.f32 0.0, %v2969
    %2971 = vmatmul.f32.gmra.mxu0 %v2788
    %v2972 = vpop.f32.mrf.mxu0
    %v2973 = vadd.f32 0.0, %v2972
    %2974 = vmatmul.f32.gmra.mxu0 %v2791
    %v2975 = vpop.f32.mrf.mxu0
    %v2976 = vadd.f32 0.0, %v2975
    %2977 = vmatmul.f32.gmra.mxu0 %v2794
    %v2978 = vpop.f32.mrf.mxu0
    %v2979 = vadd.f32 0.0, %v2978
    %2980 = vmatmul.f32.gmra.mxu0 %v2797
    %v2981 = vpop.f32.mrf.mxu0
    %v2982 = vadd.f32 0.0, %v2981
    %2983 = vmatmul.f32.gmra.mxu0 %v2800
    %v2984 = vpop.f32.mrf.mxu0
    %v2985 = vadd.f32 0.0, %v2984
    %2986 = vmatmul.f32.gmra.mxu0 %v2803
    %v2987 = vpop.f32.mrf.mxu0
    %v2988 = vadd.f32 0.0, %v2987
    %2989 = vmatmul.f32.gmra.mxu0 %v2806
    %v2990 = vpop.f32.mrf.mxu0
    %v2991 = vadd.f32 0.0, %v2990
    %2992 = vdwg.mxu0
    %v2993 = vadd.f32 %v2525, %v2826
    %v2994 = vadd.f32 %v2526, %v2829
    %v2995 = vadd.f32 %v2527, %v2832
    %v2996 = vadd.f32 %v2528, %v2835
    %v2997 = vadd.f32 %v2529, %v2838
    %v2998 = vadd.f32 %v2530, %v2841
    %v2999 = vadd.f32 %v2531, %v2844
    %v3000 = vadd.f32 %v2532, %v2847
    %v3001 = vadd.f32 %v2533, %v2850
    %v3002 = vadd.f32 %v2534, %v2853
    %v3003 = vadd.f32 %v2535, %v2856
    %v3004 = vadd.f32 %v2536, %v2859
    %v3005 = vadd.f32 %v2537, %v2862
    %v3006 = vadd.f32 %v2538, %v2865
    %v3007 = vadd.f32 %v2539, %v2868
    %v3008 = vadd.f32 %v2540, %v2871
    %v3009 = vadd.f32 %v2541, %v2874
    %v3010 = vadd.f32 %v2542, %v2877
    %v3011 = vadd.f32 %v2543, %v2880
    %v3012 = vadd.f32 %v2544, %v2883
    %v3013 = vadd.f32 %v2545, %v2886
    %v3014 = vadd.f32 %v2546, %v2889
    %v3015 = vadd.f32 %v2547, %v2892
    %v3016 = vadd.f32 %v2548, %v2895
    %v3017 = vadd.f32 %v2549, %v2898
    %v3018 = vadd.f32 %v2550, %v2901
    %v3019 = vadd.f32 %v2551, %v2904
    %v3020 = vadd.f32 %v2552, %v2907
    %v3021 = vadd.f32 %v2553, %v2910
    %v3022 = vadd.f32 %v2554, %v2913
    %v3023 = vadd.f32 %v2555, %v2916
    %v3024 = vadd.f32 %v2556, %v2919
    %v3025 = vadd.f32 %v2557, %v2922
    %v3026 = vadd.f32 %v2558, %v2925
    %v3027 = vadd.f32 %v2559, %v2928
    %v3028 = vadd.f32 %v2560, %v2931
    %v3029 = vadd.f32 %v2561, %v2934
    %v3030 = vadd.f32 %v2562, %v2937
    %v3031 = vadd.f32 %v2563, %v2940
    %v3032 = vadd.f32 %v2564, %v2943
    %v3033 = vadd.f32 %v2565, %v2946
    %v3034 = vadd.f32 %v2566, %v2949
    %v3035 = vadd.f32 %v2567, %v2952
    %v3036 = vadd.f32 %v2568, %v2955
    %v3037 = vadd.f32 %v2569, %v2958
    %v3038 = vadd.f32 %v2570, %v2961
    %v3039 = vadd.f32 %v2571, %v2964
    %v3040 = vadd.f32 %v2572, %v2967
    %v3041 = vadd.f32 %v2573, %v2970
    %v3042 = vadd.f32 %v2574, %v2973
    %v3043 = vadd.f32 %v2575, %v2976
    %v3044 = vadd.f32 %v2576, %v2979
    %v3045 = vadd.f32 %v2577, %v2982
    %v3046 = vadd.f32 %v2578, %v2985
    %v3047 = vadd.f32 %v2579, %v2988
    %v3048 = vadd.f32 %v2580, %v2991
    %v3049 = vld [vmem:[#allocation2 + $0x9] sm:$0xff]
    %v3050 = vld [vmem:[#allocation2 + $0x11] sm:$0xff]
    %v3051 = vld [vmem:[#allocation2 + $0x19] sm:$0xff]
    %v3052 = vld [vmem:[#allocation2 + $0x21] sm:$0xff]
    %v3053 = vld [vmem:[#allocation2 + $0x29] sm:$0xff]
    %v3054 = vld [vmem:[#allocation2 + $0x31] sm:$0xff]
    %v3055 = vld [vmem:[#allocation2 + $0x39] sm:$0xff]
    %v3056 = vld [vmem:[#allocation2 + $0x41] sm:$0xff]
    %v3057 = vld [vmem:[#allocation2 + $0x49] sm:$0xff]
    %v3058 = vld [vmem:[#allocation2 + $0x51] sm:$0xff]
    %v3059 = vld [vmem:[#allocation2 + $0x59] sm:$0xff]
    %v3060 = vld [vmem:[#allocation2 + $0x61] sm:$0xff]
    %v3061 = vld [vmem:[#allocation2 + $0x69] sm:$0xff]
    %v3062 = vld [vmem:[#allocation2 + $0x71] sm:$0xff]
    %v3063 = vld [vmem:[#allocation2 + $0x79] sm:$0xff]
    %v3064 = vld [vmem:[#allocation2 + $0x81] sm:$0xff]
    %v3065 = vld [vmem:[#allocation2 + $0x89] sm:$0xff]
    %v3066 = vld [vmem:[#allocation2 + $0x91] sm:$0xff]
    %v3067 = vld [vmem:[#allocation2 + $0x99] sm:$0xff]
    %v3068 = vld [vmem:[#allocation2 + $0xa1] sm:$0xff]
    %v3069 = vld [vmem:[#allocation2 + $0xa9] sm:$0xff]
    %v3070 = vld [vmem:[#allocation2 + $0xb1] sm:$0xff]
    %v3071 = vld [vmem:[#allocation2 + $0xb9] sm:$0xff]
    %v3072 = vld [vmem:[#allocation2 + $0xc1] sm:$0xff]
    %v3073 = vld [vmem:[#allocation2 + $0xc9] sm:$0xff]
    %v3074 = vld [vmem:[#allocation2 + $0xd1] sm:$0xff]
    %v3075 = vld [vmem:[#allocation2 + $0xd9] sm:$0xff]
    %v3076 = vld [vmem:[#allocation2 + $0xe1] sm:$0xff]
    %v3077 = vld [vmem:[#allocation2 + $0xe9] sm:$0xff]
    %v3078 = vld [vmem:[#allocation2 + $0xf1] sm:$0xff]
    %v3079 = vld [vmem:[#allocation2 + $0xf9] sm:$0xff]
    %v3080 = vld [vmem:[#allocation2 + $0x101] sm:$0xff]
    %v3081 = vld [vmem:[#allocation2 + $0x109] sm:$0xff]
    %v3082 = vld [vmem:[#allocation2 + $0x111] sm:$0xff]
    %v3083 = vld [vmem:[#allocation2 + $0x119] sm:$0xff]
    %v3084 = vld [vmem:[#allocation2 + $0x121] sm:$0xff]
    %v3085 = vld [vmem:[#allocation2 + $0x129] sm:$0xff]
    %v3086 = vld [vmem:[#allocation2 + $0x131] sm:$0xff]
    %v3087 = vld [vmem:[#allocation2 + $0x139] sm:$0xff]
    %v3088 = vld [vmem:[#allocation2 + $0x141] sm:$0xff]
    %v3089 = vld [vmem:[#allocation2 + $0x149] sm:$0xff]
    %v3090 = vld [vmem:[#allocation2 + $0x151] sm:$0xff]
    %v3091 = vld [vmem:[#allocation2 + $0x159] sm:$0xff]
    %v3092 = vld [vmem:[#allocation2 + $0x161] sm:$0xff]
    %v3093 = vld [vmem:[#allocation2 + $0x169] sm:$0xff]
    %v3094 = vld [vmem:[#allocation2 + $0x171] sm:$0xff]
    %v3095 = vld [vmem:[#allocation2 + $0x179] sm:$0xff]
    %v3096 = vld [vmem:[#allocation2 + $0x181] sm:$0xff]
    %v3097 = vld [vmem:[#allocation2 + $0x189] sm:$0xff]
    %v3098 = vld [vmem:[#allocation2 + $0x191] sm:$0xff]
    %v3099 = vld [vmem:[#allocation2 + $0x199] sm:$0xff]
    %v3100 = vld [vmem:[#allocation2 + $0x1a1] sm:$0xff]
    %v3101 = vld [vmem:[#allocation2 + $0x1a9] sm:$0xff]
    %v3102 = vld [vmem:[#allocation2 + $0x1b1] sm:$0xff]
    %v3103 = vld [vmem:[#allocation2 + $0x1b9] sm:$0xff]
    %v3104 = vld [vmem:[#allocation2 + $0x1c1] sm:$0xff]
    %v3105 = vld [vmem:[#allocation6 + $0x78] sm:$0xff]
    %v3106 = vld [vmem:[#allocation6 + $0x80] sm:$0xff]
    %v3107 = vld [vmem:[#allocation6 + $0x88] sm:$0xff]
    %v3109 = vsel %vm131, %v3049, 0
    %v3112 = vsel %vm131, %v3050, 0
    %v3115 = vsel %vm131, %v3051, 0
    %v3118 = vsel %vm131, %v3052, 0
    %v3121 = vsel %vm131, %v3053, 0
    %v3124 = vsel %vm131, %v3054, 0
    %v3127 = vsel %vm131, %v3055, 0
    %v3130 = vsel %vm131, %v3056, 0
    %v3133 = vsel %vm131, %v3057, 0
    %v3136 = vsel %vm131, %v3058, 0
    %v3139 = vsel %vm131, %v3059, 0
    %v3142 = vsel %vm131, %v3060, 0
    %v3145 = vsel %vm131, %v3061, 0
    %v3148 = vsel %vm131, %v3062, 0
    %v3151 = vsel %vm131, %v3063, 0
    %v3154 = vsel %vm131, %v3064, 0
    %v3157 = vsel %vm131, %v3065, 0
    %v3160 = vsel %vm131, %v3066, 0
    %v3163 = vsel %vm131, %v3067, 0
    %v3166 = vsel %vm131, %v3068, 0
    %v3169 = vsel %vm131, %v3069, 0
    %v3172 = vsel %vm131, %v3070, 0
    %v3175 = vsel %vm131, %v3071, 0
    %v3178 = vsel %vm131, %v3072, 0
    %v3181 = vsel %vm131, %v3073, 0
    %v3184 = vsel %vm131, %v3074, 0
    %v3187 = vsel %vm131, %v3075, 0
    %v3190 = vsel %vm131, %v3076, 0
    %v3193 = vsel %vm131, %v3077, 0
    %v3196 = vsel %vm131, %v3078, 0
    %v3199 = vsel %vm131, %v3079, 0
    %v3202 = vsel %vm131, %v3080, 0
    %v3205 = vsel %vm131, %v3081, 0
    %v3208 = vsel %vm131, %v3082, 0
    %v3211 = vsel %vm131, %v3083, 0
    %v3214 = vsel %vm131, %v3084, 0
    %v3217 = vsel %vm131, %v3085, 0
    %v3220 = vsel %vm131, %v3086, 0
    %v3223 = vsel %vm131, %v3087, 0
    %v3226 = vsel %vm131, %v3088, 0
    %v3229 = vsel %vm131, %v3089, 0
    %v3232 = vsel %vm131, %v3090, 0
    %v3235 = vsel %vm131, %v3091, 0
    %v3238 = vsel %vm131, %v3092, 0
    %v3241 = vsel %vm131, %v3093, 0
    %v3244 = vsel %vm131, %v3094, 0
    %v3247 = vsel %vm131, %v3095, 0
    %v3250 = vsel %vm131, %v3096, 0
    %v3253 = vsel %vm131, %v3097, 0
    %v3256 = vsel %vm131, %v3098, 0
    %v3259 = vsel %vm131, %v3099, 0
    %v3262 = vsel %vm131, %v3100, 0
    %v3265 = vsel %vm131, %v3101, 0
    %v3268 = vsel %vm131, %v3102, 0
    %v3271 = vsel %vm131, %v3103, 0
    %v3274 = vsel %vm131, %v3104, 0
    %3276 = vmatpush.msra.mxu0 0.0
    %3277 = vmatpush.msra.mxu0 0.0
    %3278 = vmatpush.msra.mxu0 0.0
    %3279 = vmatpush.msra.mxu0 0.0
    %3280 = vmatpush.msra.mxu0 0.0
    %3281 = vmatpush.msra.mxu0 0.0
    %3282 = vmatpush.msra.mxu0 0.0
    %3283 = vmatpush.msra.mxu0 0.0
    %3284 = vmatpush.msra.mxu0 0.0
    %3285 = vmatpush.msra.mxu0 0.0
    %3286 = vmatpush.msra.mxu0 0.0
    %3287 = vmatpush.msra.mxu0 0.0
    %3288 = vmatpush.msra.mxu0 0.0
    %3289 = vmatpush.msra.mxu0 %v3107
    %3290 = vmatpush.msra.mxu0 %v3106
    %3291 = vmatpush.msra.mxu0 %v3105
    %3292 = vmatmul.f32.gmra.mxu0 %v3109
    %v3293 = vpop.f32.mrf.mxu0
    %v3294 = vadd.f32 0.0, %v3293
    %3295 = vmatmul.f32.gmra.mxu0 %v3112
    %v3296 = vpop.f32.mrf.mxu0
    %v3297 = vadd.f32 0.0, %v3296
    %3298 = vmatmul.f32.gmra.mxu0 %v3115
    %v3299 = vpop.f32.mrf.mxu0
    %v3300 = vadd.f32 0.0, %v3299
    %3301 = vmatmul.f32.gmra.mxu0 %v3118
    %v3302 = vpop.f32.mrf.mxu0
    %v3303 = vadd.f32 0.0, %v3302
    %3304 = vmatmul.f32.gmra.mxu0 %v3121
    %v3305 = vpop.f32.mrf.mxu0
    %v3306 = vadd.f32 0.0, %v3305
    %3307 = vmatmul.f32.gmra.mxu0 %v3124
    %v3308 = vpop.f32.mrf.mxu0
    %v3309 = vadd.f32 0.0, %v3308
    %3310 = vmatmul.f32.gmra.mxu0 %v3127
    %v3311 = vpop.f32.mrf.mxu0
    %v3312 = vadd.f32 0.0, %v3311
    %3313 = vmatmul.f32.gmra.mxu0 %v3130
    %v3314 = vpop.f32.mrf.mxu0
    %v3315 = vadd.f32 0.0, %v3314
    %3316 = vmatmul.f32.gmra.mxu0 %v3133
    %v3317 = vpop.f32.mrf.mxu0
    %v3318 = vadd.f32 0.0, %v3317
    %3319 = vmatmul.f32.gmra.mxu0 %v3136
    %v3320 = vpop.f32.mrf.mxu0
    %v3321 = vadd.f32 0.0, %v3320
    %3322 = vmatmul.f32.gmra.mxu0 %v3139
    %v3323 = vpop.f32.mrf.mxu0
    %v3324 = vadd.f32 0.0, %v3323
    %3325 = vmatmul.f32.gmra.mxu0 %v3142
    %v3326 = vpop.f32.mrf.mxu0
    %v3327 = vadd.f32 0.0, %v3326
    %3328 = vmatmul.f32.gmra.mxu0 %v3145
    %v3329 = vpop.f32.mrf.mxu0
    %v3330 = vadd.f32 0.0, %v3329
    %3331 = vmatmul.f32.gmra.mxu0 %v3148
    %v3332 = vpop.f32.mrf.mxu0
    %v3333 = vadd.f32 0.0, %v3332
    %3334 = vmatmul.f32.gmra.mxu0 %v3151
    %v3335 = vpop.f32.mrf.mxu0
    %v3336 = vadd.f32 0.0, %v3335
    %3337 = vmatmul.f32.gmra.mxu0 %v3154
    %v3338 = vpop.f32.mrf.mxu0
    %v3339 = vadd.f32 0.0, %v3338
    %3340 = vmatmul.f32.gmra.mxu0 %v3157
    %v3341 = vpop.f32.mrf.mxu0
    %v3342 = vadd.f32 0.0, %v3341
    %3343 = vmatmul.f32.gmra.mxu0 %v3160
    %v3344 = vpop.f32.mrf.mxu0
    %v3345 = vadd.f32 0.0, %v3344
    %3346 = vmatmul.f32.gmra.mxu0 %v3163
    %v3347 = vpop.f32.mrf.mxu0
    %v3348 = vadd.f32 0.0, %v3347
    %3349 = vmatmul.f32.gmra.mxu0 %v3166
    %v3350 = vpop.f32.mrf.mxu0
    %v3351 = vadd.f32 0.0, %v3350
    %3352 = vmatmul.f32.gmra.mxu0 %v3169
    %v3353 = vpop.f32.mrf.mxu0
    %v3354 = vadd.f32 0.0, %v3353
    %3355 = vmatmul.f32.gmra.mxu0 %v3172
    %v3356 = vpop.f32.mrf.mxu0
    %v3357 = vadd.f32 0.0, %v3356
    %3358 = vmatmul.f32.gmra.mxu0 %v3175
    %v3359 = vpop.f32.mrf.mxu0
    %v3360 = vadd.f32 0.0, %v3359
    %3361 = vmatmul.f32.gmra.mxu0 %v3178
    %v3362 = vpop.f32.mrf.mxu0
    %v3363 = vadd.f32 0.0, %v3362
    %3364 = vmatmul.f32.gmra.mxu0 %v3181
    %v3365 = vpop.f32.mrf.mxu0
    %v3366 = vadd.f32 0.0, %v3365
    %3367 = vmatmul.f32.gmra.mxu0 %v3184
    %v3368 = vpop.f32.mrf.mxu0
    %v3369 = vadd.f32 0.0, %v3368
    %3370 = vmatmul.f32.gmra.mxu0 %v3187
    %v3371 = vpop.f32.mrf.mxu0
    %v3372 = vadd.f32 0.0, %v3371
    %3373 = vmatmul.f32.gmra.mxu0 %v3190
    %v3374 = vpop.f32.mrf.mxu0
    %v3375 = vadd.f32 0.0, %v3374
    %3376 = vmatmul.f32.gmra.mxu0 %v3193
    %v3377 = vpop.f32.mrf.mxu0
    %v3378 = vadd.f32 0.0, %v3377
    %3379 = vmatmul.f32.gmra.mxu0 %v3196
    %v3380 = vpop.f32.mrf.mxu0
    %v3381 = vadd.f32 0.0, %v3380
    %3382 = vmatmul.f32.gmra.mxu0 %v3199
    %v3383 = vpop.f32.mrf.mxu0
    %v3384 = vadd.f32 0.0, %v3383
    %3385 = vmatmul.f32.gmra.mxu0 %v3202
    %v3386 = vpop.f32.mrf.mxu0
    %v3387 = vadd.f32 0.0, %v3386
    %3388 = vmatmul.f32.gmra.mxu0 %v3205
    %v3389 = vpop.f32.mrf.mxu0
    %v3390 = vadd.f32 0.0, %v3389
    %3391 = vmatmul.f32.gmra.mxu0 %v3208
    %v3392 = vpop.f32.mrf.mxu0
    %v3393 = vadd.f32 0.0, %v3392
    %3394 = vmatmul.f32.gmra.mxu0 %v3211
    %v3395 = vpop.f32.mrf.mxu0
    %v3396 = vadd.f32 0.0, %v3395
    %3397 = vmatmul.f32.gmra.mxu0 %v3214
    %v3398 = vpop.f32.mrf.mxu0
    %v3399 = vadd.f32 0.0, %v3398
    %3400 = vmatmul.f32.gmra.mxu0 %v3217
    %v3401 = vpop.f32.mrf.mxu0
    %v3402 = vadd.f32 0.0, %v3401
    %3403 = vmatmul.f32.gmra.mxu0 %v3220
    %v3404 = vpop.f32.mrf.mxu0
    %v3405 = vadd.f32 0.0, %v3404
    %3406 = vmatmul.f32.gmra.mxu0 %v3223
    %v3407 = vpop.f32.mrf.mxu0
    %v3408 = vadd.f32 0.0, %v3407
    %3409 = vmatmul.f32.gmra.mxu0 %v3226
    %v3410 = vpop.f32.mrf.mxu0
    %v3411 = vadd.f32 0.0, %v3410
    %3412 = vmatmul.f32.gmra.mxu0 %v3229
    %v3413 = vpop.f32.mrf.mxu0
    %v3414 = vadd.f32 0.0, %v3413
    %3415 = vmatmul.f32.gmra.mxu0 %v3232
    %v3416 = vpop.f32.mrf.mxu0
    %v3417 = vadd.f32 0.0, %v3416
    %3418 = vmatmul.f32.gmra.mxu0 %v3235
    %v3419 = vpop.f32.mrf.mxu0
    %v3420 = vadd.f32 0.0, %v3419
    %3421 = vmatmul.f32.gmra.mxu0 %v3238
    %v3422 = vpop.f32.mrf.mxu0
    %v3423 = vadd.f32 0.0, %v3422
    %3424 = vmatmul.f32.gmra.mxu0 %v3241
    %v3425 = vpop.f32.mrf.mxu0
    %v3426 = vadd.f32 0.0, %v3425
    %3427 = vmatmul.f32.gmra.mxu0 %v3244
    %v3428 = vpop.f32.mrf.mxu0
    %v3429 = vadd.f32 0.0, %v3428
    %3430 = vmatmul.f32.gmra.mxu0 %v3247
    %v3431 = vpop.f32.mrf.mxu0
    %v3432 = vadd.f32 0.0, %v3431
    %3433 = vmatmul.f32.gmra.mxu0 %v3250
    %v3434 = vpop.f32.mrf.mxu0
    %v3435 = vadd.f32 0.0, %v3434
    %3436 = vmatmul.f32.gmra.mxu0 %v3253
    %v3437 = vpop.f32.mrf.mxu0
    %v3438 = vadd.f32 0.0, %v3437
    %3439 = vmatmul.f32.gmra.mxu0 %v3256
    %v3440 = vpop.f32.mrf.mxu0
    %v3441 = vadd.f32 0.0, %v3440
    %3442 = vmatmul.f32.gmra.mxu0 %v3259
    %v3443 = vpop.f32.mrf.mxu0
    %v3444 = vadd.f32 0.0, %v3443
    %3445 = vmatmul.f32.gmra.mxu0 %v3262
    %v3446 = vpop.f32.mrf.mxu0
    %v3447 = vadd.f32 0.0, %v3446
    %3448 = vmatmul.f32.gmra.mxu0 %v3265
    %v3449 = vpop.f32.mrf.mxu0
    %v3450 = vadd.f32 0.0, %v3449
    %3451 = vmatmul.f32.gmra.mxu0 %v3268
    %v3452 = vpop.f32.mrf.mxu0
    %v3453 = vadd.f32 0.0, %v3452
    %3454 = vmatmul.f32.gmra.mxu0 %v3271
    %v3455 = vpop.f32.mrf.mxu0
    %v3456 = vadd.f32 0.0, %v3455
    %3457 = vmatmul.f32.gmra.mxu0 %v3274
    %v3458 = vpop.f32.mrf.mxu0
    %v3459 = vadd.f32 0.0, %v3458
    %3460 = vdwg.mxu0
    %v3461 = vadd.f32 %v2993, %v3294
    %v3462 = vadd.f32 %v2994, %v3297
    %v3463 = vadd.f32 %v2995, %v3300
    %v3464 = vadd.f32 %v2996, %v3303
    %v3465 = vadd.f32 %v2997, %v3306
    %v3466 = vadd.f32 %v2998, %v3309
    %v3467 = vadd.f32 %v2999, %v3312
    %v3468 = vadd.f32 %v3000, %v3315
    %v3469 = vadd.f32 %v3001, %v3318
    %v3470 = vadd.f32 %v3002, %v3321
    %v3471 = vadd.f32 %v3003, %v3324
    %v3472 = vadd.f32 %v3004, %v3327
    %v3473 = vadd.f32 %v3005, %v3330
    %v3474 = vadd.f32 %v3006, %v3333
    %v3475 = vadd.f32 %v3007, %v3336
    %v3476 = vadd.f32 %v3008, %v3339
    %v3477 = vadd.f32 %v3009, %v3342
    %v3478 = vadd.f32 %v3010, %v3345
    %v3479 = vadd.f32 %v3011, %v3348
    %v3480 = vadd.f32 %v3012, %v3351
    %v3481 = vadd.f32 %v3013, %v3354
    %v3482 = vadd.f32 %v3014, %v3357
    %v3483 = vadd.f32 %v3015, %v3360
    %v3484 = vadd.f32 %v3016, %v3363
    %v3485 = vadd.f32 %v3017, %v3366
    %v3486 = vadd.f32 %v3018, %v3369
    %v3487 = vadd.f32 %v3019, %v3372
    %v3488 = vadd.f32 %v3020, %v3375
    %v3489 = vadd.f32 %v3021, %v3378
    %v3490 = vadd.f32 %v3022, %v3381
    %v3491 = vadd.f32 %v3023, %v3384
    %v3492 = vadd.f32 %v3024, %v3387
    %v3493 = vadd.f32 %v3025, %v3390
    %v3494 = vadd.f32 %v3026, %v3393
    %v3495 = vadd.f32 %v3027, %v3396
    %v3496 = vadd.f32 %v3028, %v3399
    %v3497 = vadd.f32 %v3029, %v3402
    %v3498 = vadd.f32 %v3030, %v3405
    %v3499 = vadd.f32 %v3031, %v3408
    %v3500 = vadd.f32 %v3032, %v3411
    %v3501 = vadd.f32 %v3033, %v3414
    %v3502 = vadd.f32 %v3034, %v3417
    %v3503 = vadd.f32 %v3035, %v3420
    %v3504 = vadd.f32 %v3036, %v3423
    %v3505 = vadd.f32 %v3037, %v3426
    %v3506 = vadd.f32 %v3038, %v3429
    %v3507 = vadd.f32 %v3039, %v3432
    %v3508 = vadd.f32 %v3040, %v3435
    %v3509 = vadd.f32 %v3041, %v3438
    %v3510 = vadd.f32 %v3042, %v3441
    %v3511 = vadd.f32 %v3043, %v3444
    %v3512 = vadd.f32 %v3044, %v3447
    %v3513 = vadd.f32 %v3045, %v3450
    %v3514 = vadd.f32 %v3046, %v3453
    %v3515 = vadd.f32 %v3047, %v3456
    %v3516 = vadd.f32 %v3048, %v3459
    %v3517 = vld [vmem:[#allocation2 + $0xe] sm:$0xff]
    %v3518 = vld [vmem:[#allocation2 + $0x16] sm:$0xff]
    %v3519 = vld [vmem:[#allocation2 + $0x1e] sm:$0xff]
    %v3520 = vld [vmem:[#allocation2 + $0x26] sm:$0xff]
    %v3521 = vld [vmem:[#allocation2 + $0x2e] sm:$0xff]
    %v3522 = vld [vmem:[#allocation2 + $0x36] sm:$0xff]
    %v3523 = vld [vmem:[#allocation2 + $0x3e] sm:$0xff]
    %v3524 = vld [vmem:[#allocation2 + $0x46] sm:$0xff]
    %v3525 = vld [vmem:[#allocation2 + $0x4e] sm:$0xff]
    %v3526 = vld [vmem:[#allocation2 + $0x56] sm:$0xff]
    %v3527 = vld [vmem:[#allocation2 + $0x5e] sm:$0xff]
    %v3528 = vld [vmem:[#allocation2 + $0x66] sm:$0xff]
    %v3529 = vld [vmem:[#allocation2 + $0x6e] sm:$0xff]
    %v3530 = vld [vmem:[#allocation2 + $0x76] sm:$0xff]
    %v3531 = vld [vmem:[#allocation2 + $0x7e] sm:$0xff]
    %v3532 = vld [vmem:[#allocation2 + $0x86] sm:$0xff]
    %v3533 = vld [vmem:[#allocation2 + $0x8e] sm:$0xff]
    %v3534 = vld [vmem:[#allocation2 + $0x96] sm:$0xff]
    %v3535 = vld [vmem:[#allocation2 + $0x9e] sm:$0xff]
    %v3536 = vld [vmem:[#allocation2 + $0xa6] sm:$0xff]
    %v3537 = vld [vmem:[#allocation2 + $0xae] sm:$0xff]
    %v3538 = vld [vmem:[#allocation2 + $0xb6] sm:$0xff]
    %v3539 = vld [vmem:[#allocation2 + $0xbe] sm:$0xff]
    %v3540 = vld [vmem:[#allocation2 + $0xc6] sm:$0xff]
    %v3541 = vld [vmem:[#allocation2 + $0xce] sm:$0xff]
    %v3542 = vld [vmem:[#allocation2 + $0xd6] sm:$0xff]
    %v3543 = vld [vmem:[#allocation2 + $0xde] sm:$0xff]
    %v3544 = vld [vmem:[#allocation2 + $0xe6] sm:$0xff]
    %v3545 = vld [vmem:[#allocation2 + $0xee] sm:$0xff]
    %v3546 = vld [vmem:[#allocation2 + $0xf6] sm:$0xff]
    %v3547 = vld [vmem:[#allocation2 + $0xfe] sm:$0xff]
    %v3548 = vld [vmem:[#allocation2 + $0x106] sm:$0xff]
    %v3549 = vld [vmem:[#allocation2 + $0x10e] sm:$0xff]
    %v3550 = vld [vmem:[#allocation2 + $0x116] sm:$0xff]
    %v3551 = vld [vmem:[#allocation2 + $0x11e] sm:$0xff]
    %v3552 = vld [vmem:[#allocation2 + $0x126] sm:$0xff]
    %v3553 = vld [vmem:[#allocation2 + $0x12e] sm:$0xff]
    %v3554 = vld [vmem:[#allocation2 + $0x136] sm:$0xff]
    %v3555 = vld [vmem:[#allocation2 + $0x13e] sm:$0xff]
    %v3556 = vld [vmem:[#allocation2 + $0x146] sm:$0xff]
    %v3557 = vld [vmem:[#allocation2 + $0x14e] sm:$0xff]
    %v3558 = vld [vmem:[#allocation2 + $0x156] sm:$0xff]
    %v3559 = vld [vmem:[#allocation2 + $0x15e] sm:$0xff]
    %v3560 = vld [vmem:[#allocation2 + $0x166] sm:$0xff]
    %v3561 = vld [vmem:[#allocation2 + $0x16e] sm:$0xff]
    %v3562 = vld [vmem:[#allocation2 + $0x176] sm:$0xff]
    %v3563 = vld [vmem:[#allocation2 + $0x17e] sm:$0xff]
    %v3564 = vld [vmem:[#allocation2 + $0x186] sm:$0xff]
    %v3565 = vld [vmem:[#allocation2 + $0x18e] sm:$0xff]
    %v3566 = vld [vmem:[#allocation2 + $0x196] sm:$0xff]
    %v3567 = vld [vmem:[#allocation2 + $0x19e] sm:$0xff]
    %v3568 = vld [vmem:[#allocation2 + $0x1a6] sm:$0xff]
    %v3569 = vld [vmem:[#allocation2 + $0x1ae] sm:$0xff]
    %v3570 = vld [vmem:[#allocation2 + $0x1b6] sm:$0xff]
    %v3571 = vld [vmem:[#allocation2 + $0x1be] sm:$0xff]
    %v3572 = vld [vmem:[#allocation2 + $0x1c6] sm:$0xff]
    %v3573 = vld [vmem:[#allocation6 + $0x90] sm:$0xff]
    %v3574 = vld [vmem:[#allocation6 + $0x98] sm:$0xff]
    %v3575 = vld [vmem:[#allocation6 + $0xa0] sm:$0xff]
    %v3577 = vsel %vm131, %v3517, 0
    %v3580 = vsel %vm131, %v3518, 0
    %v3583 = vsel %vm131, %v3519, 0
    %v3586 = vsel %vm131, %v3520, 0
    %v3589 = vsel %vm131, %v3521, 0
    %v3592 = vsel %vm131, %v3522, 0
    %v3595 = vsel %vm131, %v3523, 0
    %v3598 = vsel %vm131, %v3524, 0
    %v3601 = vsel %vm131, %v3525, 0
    %v3604 = vsel %vm131, %v3526, 0
    %v3607 = vsel %vm131, %v3527, 0
    %v3610 = vsel %vm131, %v3528, 0
    %v3613 = vsel %vm131, %v3529, 0
    %v3616 = vsel %vm131, %v3530, 0
    %v3619 = vsel %vm131, %v3531, 0
    %v3622 = vsel %vm131, %v3532, 0
    %v3625 = vsel %vm131, %v3533, 0
    %v3628 = vsel %vm131, %v3534, 0
    %v3631 = vsel %vm131, %v3535, 0
    %v3634 = vsel %vm131, %v3536, 0
    %v3637 = vsel %vm131, %v3537, 0
    %v3640 = vsel %vm131, %v3538, 0
    %v3643 = vsel %vm131, %v3539, 0
    %v3646 = vsel %vm131, %v3540, 0
    %v3649 = vsel %vm131, %v3541, 0
    %v3652 = vsel %vm131, %v3542, 0
    %v3655 = vsel %vm131, %v3543, 0
    %v3658 = vsel %vm131, %v3544, 0
    %v3661 = vsel %vm131, %v3545, 0
    %v3664 = vsel %vm131, %v3546, 0
    %v3667 = vsel %vm131, %v3547, 0
    %v3670 = vsel %vm131, %v3548, 0
    %v3673 = vsel %vm131, %v3549, 0
    %v3676 = vsel %vm131, %v3550, 0
    %v3679 = vsel %vm131, %v3551, 0
    %v3682 = vsel %vm131, %v3552, 0
    %v3685 = vsel %vm131, %v3553, 0
    %v3688 = vsel %vm131, %v3554, 0
    %v3691 = vsel %vm131, %v3555, 0
    %v3694 = vsel %vm131, %v3556, 0
    %v3697 = vsel %vm131, %v3557, 0
    %v3700 = vsel %vm131, %v3558, 0
    %v3703 = vsel %vm131, %v3559, 0
    %v3706 = vsel %vm131, %v3560, 0
    %v3709 = vsel %vm131, %v3561, 0
    %v3712 = vsel %vm131, %v3562, 0
    %v3715 = vsel %vm131, %v3563, 0
    %v3718 = vsel %vm131, %v3564, 0
    %v3721 = vsel %vm131, %v3565, 0
    %v3724 = vsel %vm131, %v3566, 0
    %v3727 = vsel %vm131, %v3567, 0
    %v3730 = vsel %vm131, %v3568, 0
    %v3733 = vsel %vm131, %v3569, 0
    %v3736 = vsel %vm131, %v3570, 0
    %v3739 = vsel %vm131, %v3571, 0
    %v3742 = vsel %vm131, %v3572, 0
    %3744 = vmatpush.msra.mxu0 0.0
    %3745 = vmatpush.msra.mxu0 0.0
    %3746 = vmatpush.msra.mxu0 0.0
    %3747 = vmatpush.msra.mxu0 0.0
    %3748 = vmatpush.msra.mxu0 0.0
    %3749 = vmatpush.msra.mxu0 0.0
    %3750 = vmatpush.msra.mxu0 0.0
    %3751 = vmatpush.msra.mxu0 0.0
    %3752 = vmatpush.msra.mxu0 0.0
    %3753 = vmatpush.msra.mxu0 0.0
    %3754 = vmatpush.msra.mxu0 0.0
    %3755 = vmatpush.msra.mxu0 0.0
    %3756 = vmatpush.msra.mxu0 0.0
    %3757 = vmatpush.msra.mxu0 %v3575
    %3758 = vmatpush.msra.mxu0 %v3574
    %3759 = vmatpush.msra.mxu0 %v3573
    %3760 = vmatmul.f32.gmra.mxu0 %v3577
    %v3761 = vpop.f32.mrf.mxu0
    %v3762 = vadd.f32 0.0, %v3761
    %3763 = vmatmul.f32.gmra.mxu0 %v3580
    %v3764 = vpop.f32.mrf.mxu0
    %v3765 = vadd.f32 0.0, %v3764
    %3766 = vmatmul.f32.gmra.mxu0 %v3583
    %v3767 = vpop.f32.mrf.mxu0
    %v3768 = vadd.f32 0.0, %v3767
    %3769 = vmatmul.f32.gmra.mxu0 %v3586
    %v3770 = vpop.f32.mrf.mxu0
    %v3771 = vadd.f32 0.0, %v3770
    %3772 = vmatmul.f32.gmra.mxu0 %v3589
    %v3773 = vpop.f32.mrf.mxu0
    %v3774 = vadd.f32 0.0, %v3773
    %3775 = vmatmul.f32.gmra.mxu0 %v3592
    %v3776 = vpop.f32.mrf.mxu0
    %v3777 = vadd.f32 0.0, %v3776
    %3778 = vmatmul.f32.gmra.mxu0 %v3595
    %v3779 = vpop.f32.mrf.mxu0
    %v3780 = vadd.f32 0.0, %v3779
    %3781 = vmatmul.f32.gmra.mxu0 %v3598
    %v3782 = vpop.f32.mrf.mxu0
    %v3783 = vadd.f32 0.0, %v3782
    %3784 = vmatmul.f32.gmra.mxu0 %v3601
    %v3785 = vpop.f32.mrf.mxu0
    %v3786 = vadd.f32 0.0, %v3785
    %3787 = vmatmul.f32.gmra.mxu0 %v3604
    %v3788 = vpop.f32.mrf.mxu0
    %v3789 = vadd.f32 0.0, %v3788
    %3790 = vmatmul.f32.gmra.mxu0 %v3607
    %v3791 = vpop.f32.mrf.mxu0
    %v3792 = vadd.f32 0.0, %v3791
    %3793 = vmatmul.f32.gmra.mxu0 %v3610
    %v3794 = vpop.f32.mrf.mxu0
    %v3795 = vadd.f32 0.0, %v3794
    %3796 = vmatmul.f32.gmra.mxu0 %v3613
    %v3797 = vpop.f32.mrf.mxu0
    %v3798 = vadd.f32 0.0, %v3797
    %3799 = vmatmul.f32.gmra.mxu0 %v3616
    %v3800 = vpop.f32.mrf.mxu0
    %v3801 = vadd.f32 0.0, %v3800
    %3802 = vmatmul.f32.gmra.mxu0 %v3619
    %v3803 = vpop.f32.mrf.mxu0
    %v3804 = vadd.f32 0.0, %v3803
    %3805 = vmatmul.f32.gmra.mxu0 %v3622
    %v3806 = vpop.f32.mrf.mxu0
    %v3807 = vadd.f32 0.0, %v3806
    %3808 = vmatmul.f32.gmra.mxu0 %v3625
    %v3809 = vpop.f32.mrf.mxu0
    %v3810 = vadd.f32 0.0, %v3809
    %3811 = vmatmul.f32.gmra.mxu0 %v3628
    %v3812 = vpop.f32.mrf.mxu0
    %v3813 = vadd.f32 0.0, %v3812
    %3814 = vmatmul.f32.gmra.mxu0 %v3631
    %v3815 = vpop.f32.mrf.mxu0
    %v3816 = vadd.f32 0.0, %v3815
    %3817 = vmatmul.f32.gmra.mxu0 %v3634
    %v3818 = vpop.f32.mrf.mxu0
    %v3819 = vadd.f32 0.0, %v3818
    %3820 = vmatmul.f32.gmra.mxu0 %v3637
    %v3821 = vpop.f32.mrf.mxu0
    %v3822 = vadd.f32 0.0, %v3821
    %3823 = vmatmul.f32.gmra.mxu0 %v3640
    %v3824 = vpop.f32.mrf.mxu0
    %v3825 = vadd.f32 0.0, %v3824
    %3826 = vmatmul.f32.gmra.mxu0 %v3643
    %v3827 = vpop.f32.mrf.mxu0
    %v3828 = vadd.f32 0.0, %v3827
    %3829 = vmatmul.f32.gmra.mxu0 %v3646
    %v3830 = vpop.f32.mrf.mxu0
    %v3831 = vadd.f32 0.0, %v3830
    %3832 = vmatmul.f32.gmra.mxu0 %v3649
    %v3833 = vpop.f32.mrf.mxu0
    %v3834 = vadd.f32 0.0, %v3833
    %3835 = vmatmul.f32.gmra.mxu0 %v3652
    %v3836 = vpop.f32.mrf.mxu0
    %v3837 = vadd.f32 0.0, %v3836
    %3838 = vmatmul.f32.gmra.mxu0 %v3655
    %v3839 = vpop.f32.mrf.mxu0
    %v3840 = vadd.f32 0.0, %v3839
    %3841 = vmatmul.f32.gmra.mxu0 %v3658
    %v3842 = vpop.f32.mrf.mxu0
    %v3843 = vadd.f32 0.0, %v3842
    %3844 = vmatmul.f32.gmra.mxu0 %v3661
    %v3845 = vpop.f32.mrf.mxu0
    %v3846 = vadd.f32 0.0, %v3845
    %3847 = vmatmul.f32.gmra.mxu0 %v3664
    %v3848 = vpop.f32.mrf.mxu0
    %v3849 = vadd.f32 0.0, %v3848
    %3850 = vmatmul.f32.gmra.mxu0 %v3667
    %v3851 = vpop.f32.mrf.mxu0
    %v3852 = vadd.f32 0.0, %v3851
    %3853 = vmatmul.f32.gmra.mxu0 %v3670
    %v3854 = vpop.f32.mrf.mxu0
    %v3855 = vadd.f32 0.0, %v3854
    %3856 = vmatmul.f32.gmra.mxu0 %v3673
    %v3857 = vpop.f32.mrf.mxu0
    %v3858 = vadd.f32 0.0, %v3857
    %3859 = vmatmul.f32.gmra.mxu0 %v3676
    %v3860 = vpop.f32.mrf.mxu0
    %v3861 = vadd.f32 0.0, %v3860
    %3862 = vmatmul.f32.gmra.mxu0 %v3679
    %v3863 = vpop.f32.mrf.mxu0
    %v3864 = vadd.f32 0.0, %v3863
    %3865 = vmatmul.f32.gmra.mxu0 %v3682
    %v3866 = vpop.f32.mrf.mxu0
    %v3867 = vadd.f32 0.0, %v3866
    %3868 = vmatmul.f32.gmra.mxu0 %v3685
    %v3869 = vpop.f32.mrf.mxu0
    %v3870 = vadd.f32 0.0, %v3869
    %3871 = vmatmul.f32.gmra.mxu0 %v3688
    %v3872 = vpop.f32.mrf.mxu0
    %v3873 = vadd.f32 0.0, %v3872
    %3874 = vmatmul.f32.gmra.mxu0 %v3691
    %v3875 = vpop.f32.mrf.mxu0
    %v3876 = vadd.f32 0.0, %v3875
    %3877 = vmatmul.f32.gmra.mxu0 %v3694
    %v3878 = vpop.f32.mrf.mxu0
    %v3879 = vadd.f32 0.0, %v3878
    %3880 = vmatmul.f32.gmra.mxu0 %v3697
    %v3881 = vpop.f32.mrf.mxu0
    %v3882 = vadd.f32 0.0, %v3881
    %3883 = vmatmul.f32.gmra.mxu0 %v3700
    %v3884 = vpop.f32.mrf.mxu0
    %v3885 = vadd.f32 0.0, %v3884
    %3886 = vmatmul.f32.gmra.mxu0 %v3703
    %v3887 = vpop.f32.mrf.mxu0
    %v3888 = vadd.f32 0.0, %v3887
    %3889 = vmatmul.f32.gmra.mxu0 %v3706
    %v3890 = vpop.f32.mrf.mxu0
    %v3891 = vadd.f32 0.0, %v3890
    %3892 = vmatmul.f32.gmra.mxu0 %v3709
    %v3893 = vpop.f32.mrf.mxu0
    %v3894 = vadd.f32 0.0, %v3893
    %3895 = vmatmul.f32.gmra.mxu0 %v3712
    %v3896 = vpop.f32.mrf.mxu0
    %v3897 = vadd.f32 0.0, %v3896
    %3898 = vmatmul.f32.gmra.mxu0 %v3715
    %v3899 = vpop.f32.mrf.mxu0
    %v3900 = vadd.f32 0.0, %v3899
    %3901 = vmatmul.f32.gmra.mxu0 %v3718
    %v3902 = vpop.f32.mrf.mxu0
    %v3903 = vadd.f32 0.0, %v3902
    %3904 = vmatmul.f32.gmra.mxu0 %v3721
    %v3905 = vpop.f32.mrf.mxu0
    %v3906 = vadd.f32 0.0, %v3905
    %3907 = vmatmul.f32.gmra.mxu0 %v3724
    %v3908 = vpop.f32.mrf.mxu0
    %v3909 = vadd.f32 0.0, %v3908
    %3910 = vmatmul.f32.gmra.mxu0 %v3727
    %v3911 = vpop.f32.mrf.mxu0
    %v3912 = vadd.f32 0.0, %v3911
    %3913 = vmatmul.f32.gmra.mxu0 %v3730
    %v3914 = vpop.f32.mrf.mxu0
    %v3915 = vadd.f32 0.0, %v3914
    %3916 = vmatmul.f32.gmra.mxu0 %v3733
    %v3917 = vpop.f32.mrf.mxu0
    %v3918 = vadd.f32 0.0, %v3917
    %3919 = vmatmul.f32.gmra.mxu0 %v3736
    %v3920 = vpop.f32.mrf.mxu0
    %v3921 = vadd.f32 0.0, %v3920
    %3922 = vmatmul.f32.gmra.mxu0 %v3739
    %v3923 = vpop.f32.mrf.mxu0
    %v3924 = vadd.f32 0.0, %v3923
    %3925 = vmatmul.f32.gmra.mxu0 %v3742
    %v3926 = vpop.f32.mrf.mxu0
    %v3927 = vadd.f32 0.0, %v3926
    %3928 = vdwg.mxu0
    %v3929 = vadd.f32 %v3461, %v3762
    %v3930 = vadd.f32 %v3462, %v3765
    %v3931 = vadd.f32 %v3463, %v3768
    %v3932 = vadd.f32 %v3464, %v3771
    %v3933 = vadd.f32 %v3465, %v3774
    %v3934 = vadd.f32 %v3466, %v3777
    %v3935 = vadd.f32 %v3467, %v3780
    %v3936 = vadd.f32 %v3468, %v3783
    %v3937 = vadd.f32 %v3469, %v3786
    %v3938 = vadd.f32 %v3470, %v3789
    %v3939 = vadd.f32 %v3471, %v3792
    %v3940 = vadd.f32 %v3472, %v3795
    %v3941 = vadd.f32 %v3473, %v3798
    %v3942 = vadd.f32 %v3474, %v3801
    %v3943 = vadd.f32 %v3475, %v3804
    %v3944 = vadd.f32 %v3476, %v3807
    %v3945 = vadd.f32 %v3477, %v3810
    %v3946 = vadd.f32 %v3478, %v3813
    %v3947 = vadd.f32 %v3479, %v3816
    %v3948 = vadd.f32 %v3480, %v3819
    %v3949 = vadd.f32 %v3481, %v3822
    %v3950 = vadd.f32 %v3482, %v3825
    %v3951 = vadd.f32 %v3483, %v3828
    %v3952 = vadd.f32 %v3484, %v3831
    %v3953 = vadd.f32 %v3485, %v3834
    %v3954 = vadd.f32 %v3486, %v3837
    %v3955 = vadd.f32 %v3487, %v3840
    %v3956 = vadd.f32 %v3488, %v3843
    %v3957 = vadd.f32 %v3489, %v3846
    %v3958 = vadd.f32 %v3490, %v3849
    %v3959 = vadd.f32 %v3491, %v3852
    %v3960 = vadd.f32 %v3492, %v3855
    %v3961 = vadd.f32 %v3493, %v3858
    %v3962 = vadd.f32 %v3494, %v3861
    %v3963 = vadd.f32 %v3495, %v3864
    %v3964 = vadd.f32 %v3496, %v3867
    %v3965 = vadd.f32 %v3497, %v3870
    %v3966 = vadd.f32 %v3498, %v3873
    %v3967 = vadd.f32 %v3499, %v3876
    %v3968 = vadd.f32 %v3500, %v3879
    %v3969 = vadd.f32 %v3501, %v3882
    %v3970 = vadd.f32 %v3502, %v3885
    %v3971 = vadd.f32 %v3503, %v3888
    %v3972 = vadd.f32 %v3504, %v3891
    %v3973 = vadd.f32 %v3505, %v3894
    %v3974 = vadd.f32 %v3506, %v3897
    %v3975 = vadd.f32 %v3507, %v3900
    %v3976 = vadd.f32 %v3508, %v3903
    %v3977 = vadd.f32 %v3509, %v3906
    %v3978 = vadd.f32 %v3510, %v3909
    %v3979 = vadd.f32 %v3511, %v3912
    %v3980 = vadd.f32 %v3512, %v3915
    %v3981 = vadd.f32 %v3513, %v3918
    %v3982 = vadd.f32 %v3514, %v3921
    %v3983 = vadd.f32 %v3515, %v3924
    %v3984 = vadd.f32 %v3516, %v3927
    %v3985 = vld [vmem:[#allocation2 + $0xf] sm:$0xff]
    %v3986 = vld [vmem:[#allocation2 + $0x17] sm:$0xff]
    %v3987 = vld [vmem:[#allocation2 + $0x1f] sm:$0xff]
    %v3988 = vld [vmem:[#allocation2 + $0x27] sm:$0xff]
    %v3989 = vld [vmem:[#allocation2 + $0x2f] sm:$0xff]
    %v3990 = vld [vmem:[#allocation2 + $0x37] sm:$0xff]
    %v3991 = vld [vmem:[#allocation2 + $0x3f] sm:$0xff]
    %v3992 = vld [vmem:[#allocation2 + $0x47] sm:$0xff]
    %v3993 = vld [vmem:[#allocation2 + $0x4f] sm:$0xff]
    %v3994 = vld [vmem:[#allocation2 + $0x57] sm:$0xff]
    %v3995 = vld [vmem:[#allocation2 + $0x5f] sm:$0xff]
    %v3996 = vld [vmem:[#allocation2 + $0x67] sm:$0xff]
    %v3997 = vld [vmem:[#allocation2 + $0x6f] sm:$0xff]
    %v3998 = vld [vmem:[#allocation2 + $0x77] sm:$0xff]
    %v3999 = vld [vmem:[#allocation2 + $0x7f] sm:$0xff]
    %v4000 = vld [vmem:[#allocation2 + $0x87] sm:$0xff]
    %v4001 = vld [vmem:[#allocation2 + $0x8f] sm:$0xff]
    %v4002 = vld [vmem:[#allocation2 + $0x97] sm:$0xff]
    %v4003 = vld [vmem:[#allocation2 + $0x9f] sm:$0xff]
    %v4004 = vld [vmem:[#allocation2 + $0xa7] sm:$0xff]
    %v4005 = vld [vmem:[#allocation2 + $0xaf] sm:$0xff]
    %v4006 = vld [vmem:[#allocation2 + $0xb7] sm:$0xff]
    %v4007 = vld [vmem:[#allocation2 + $0xbf] sm:$0xff]
    %v4008 = vld [vmem:[#allocation2 + $0xc7] sm:$0xff]
    %v4009 = vld [vmem:[#allocation2 + $0xcf] sm:$0xff]
    %v4010 = vld [vmem:[#allocation2 + $0xd7] sm:$0xff]
    %v4011 = vld [vmem:[#allocation2 + $0xdf] sm:$0xff]
    %v4012 = vld [vmem:[#allocation2 + $0xe7] sm:$0xff]
    %v4013 = vld [vmem:[#allocation2 + $0xef] sm:$0xff]
    %v4014 = vld [vmem:[#allocation2 + $0xf7] sm:$0xff]
    %v4015 = vld [vmem:[#allocation2 + $0xff] sm:$0xff]
    %v4016 = vld [vmem:[#allocation2 + $0x107] sm:$0xff]
    %v4017 = vld [vmem:[#allocation2 + $0x10f] sm:$0xff]
    %v4018 = vld [vmem:[#allocation2 + $0x117] sm:$0xff]
    %v4019 = vld [vmem:[#allocation2 + $0x11f] sm:$0xff]
    %v4020 = vld [vmem:[#allocation2 + $0x127] sm:$0xff]
    %v4021 = vld [vmem:[#allocation2 + $0x12f] sm:$0xff]
    %v4022 = vld [vmem:[#allocation2 + $0x137] sm:$0xff]
    %v4023 = vld [vmem:[#allocation2 + $0x13f] sm:$0xff]
    %v4024 = vld [vmem:[#allocation2 + $0x147] sm:$0xff]
    %v4025 = vld [vmem:[#allocation2 + $0x14f] sm:$0xff]
    %v4026 = vld [vmem:[#allocation2 + $0x157] sm:$0xff]
    %v4027 = vld [vmem:[#allocation2 + $0x15f] sm:$0xff]
    %v4028 = vld [vmem:[#allocation2 + $0x167] sm:$0xff]
    %v4029 = vld [vmem:[#allocation2 + $0x16f] sm:$0xff]
    %v4030 = vld [vmem:[#allocation2 + $0x177] sm:$0xff]
    %v4031 = vld [vmem:[#allocation2 + $0x17f] sm:$0xff]
    %v4032 = vld [vmem:[#allocation2 + $0x187] sm:$0xff]
    %v4033 = vld [vmem:[#allocation2 + $0x18f] sm:$0xff]
    %v4034 = vld [vmem:[#allocation2 + $0x197] sm:$0xff]
    %v4035 = vld [vmem:[#allocation2 + $0x19f] sm:$0xff]
    %v4036 = vld [vmem:[#allocation2 + $0x1a7] sm:$0xff]
    %v4037 = vld [vmem:[#allocation2 + $0x1af] sm:$0xff]
    %v4038 = vld [vmem:[#allocation2 + $0x1b7] sm:$0xff]
    %v4039 = vld [vmem:[#allocation2 + $0x1bf] sm:$0xff]
    %v4040 = vld [vmem:[#allocation2 + $0x1c7] sm:$0xff]
    %v4041 = vld [vmem:[#allocation6 + $0xa8] sm:$0xff]
    %v4042 = vld [vmem:[#allocation6 + $0xb0] sm:$0xff]
    %v4043 = vld [vmem:[#allocation6 + $0xb8] sm:$0xff]
    %v4045 = vsel %vm131, %v3985, 0
    %v4048 = vsel %vm131, %v3986, 0
    %v4051 = vsel %vm131, %v3987, 0
    %v4054 = vsel %vm131, %v3988, 0
    %v4057 = vsel %vm131, %v3989, 0
    %v4060 = vsel %vm131, %v3990, 0
    %v4063 = vsel %vm131, %v3991, 0
    %v4066 = vsel %vm131, %v3992, 0
    %v4069 = vsel %vm131, %v3993, 0
    %v4072 = vsel %vm131, %v3994, 0
    %v4075 = vsel %vm131, %v3995, 0
    %v4078 = vsel %vm131, %v3996, 0
    %v4081 = vsel %vm131, %v3997, 0
    %v4084 = vsel %vm131, %v3998, 0
    %v4087 = vsel %vm131, %v3999, 0
    %v4090 = vsel %vm131, %v4000, 0
    %v4093 = vsel %vm131, %v4001, 0
    %v4096 = vsel %vm131, %v4002, 0
    %v4099 = vsel %vm131, %v4003, 0
    %v4102 = vsel %vm131, %v4004, 0
    %v4105 = vsel %vm131, %v4005, 0
    %v4108 = vsel %vm131, %v4006, 0
    %v4111 = vsel %vm131, %v4007, 0
    %v4114 = vsel %vm131, %v4008, 0
    %v4117 = vsel %vm131, %v4009, 0
    %v4120 = vsel %vm131, %v4010, 0
    %v4123 = vsel %vm131, %v4011, 0
    %v4126 = vsel %vm131, %v4012, 0
    %v4129 = vsel %vm131, %v4013, 0
    %v4132 = vsel %vm131, %v4014, 0
    %v4135 = vsel %vm131, %v4015, 0
    %v4138 = vsel %vm131, %v4016, 0
    %v4141 = vsel %vm131, %v4017, 0
    %v4144 = vsel %vm131, %v4018, 0
    %v4147 = vsel %vm131, %v4019, 0
    %v4150 = vsel %vm131, %v4020, 0
    %v4153 = vsel %vm131, %v4021, 0
    %v4156 = vsel %vm131, %v4022, 0
    %v4159 = vsel %vm131, %v4023, 0
    %v4162 = vsel %vm131, %v4024, 0
    %v4165 = vsel %vm131, %v4025, 0
    %v4168 = vsel %vm131, %v4026, 0
    %v4171 = vsel %vm131, %v4027, 0
    %v4174 = vsel %vm131, %v4028, 0
    %v4177 = vsel %vm131, %v4029, 0
    %v4180 = vsel %vm131, %v4030, 0
    %v4183 = vsel %vm131, %v4031, 0
    %v4186 = vsel %vm131, %v4032, 0
    %v4189 = vsel %vm131, %v4033, 0
    %v4192 = vsel %vm131, %v4034, 0
    %v4195 = vsel %vm131, %v4035, 0
    %v4198 = vsel %vm131, %v4036, 0
    %v4201 = vsel %vm131, %v4037, 0
    %v4204 = vsel %vm131, %v4038, 0
    %v4207 = vsel %vm131, %v4039, 0
    %v4210 = vsel %vm131, %v4040, 0
    %4212 = vmatpush.msra.mxu0 0.0
    %4213 = vmatpush.msra.mxu0 0.0
    %4214 = vmatpush.msra.mxu0 0.0
    %4215 = vmatpush.msra.mxu0 0.0
    %4216 = vmatpush.msra.mxu0 0.0
    %4217 = vmatpush.msra.mxu0 0.0
    %4218 = vmatpush.msra.mxu0 0.0
    %4219 = vmatpush.msra.mxu0 0.0
    %4220 = vmatpush.msra.mxu0 0.0
    %4221 = vmatpush.msra.mxu0 0.0
    %4222 = vmatpush.msra.mxu0 0.0
    %4223 = vmatpush.msra.mxu0 0.0
    %4224 = vmatpush.msra.mxu0 0.0
    %4225 = vmatpush.msra.mxu0 %v4043
    %4226 = vmatpush.msra.mxu0 %v4042
    %4227 = vmatpush.msra.mxu0 %v4041
    %4228 = vmatmul.f32.gmra.mxu0 %v4045
    %v4229 = vpop.f32.mrf.mxu0
    %v4230 = vadd.f32 0.0, %v4229
    %4231 = vmatmul.f32.gmra.mxu0 %v4048
    %v4232 = vpop.f32.mrf.mxu0
    %v4233 = vadd.f32 0.0, %v4232
    %4234 = vmatmul.f32.gmra.mxu0 %v4051
    %v4235 = vpop.f32.mrf.mxu0
    %v4236 = vadd.f32 0.0, %v4235
    %4237 = vmatmul.f32.gmra.mxu0 %v4054
    %v4238 = vpop.f32.mrf.mxu0
    %v4239 = vadd.f32 0.0, %v4238
    %4240 = vmatmul.f32.gmra.mxu0 %v4057
    %v4241 = vpop.f32.mrf.mxu0
    %v4242 = vadd.f32 0.0, %v4241
    %4243 = vmatmul.f32.gmra.mxu0 %v4060
    %v4244 = vpop.f32.mrf.mxu0
    %v4245 = vadd.f32 0.0, %v4244
    %4246 = vmatmul.f32.gmra.mxu0 %v4063
    %v4247 = vpop.f32.mrf.mxu0
    %v4248 = vadd.f32 0.0, %v4247
    %4249 = vmatmul.f32.gmra.mxu0 %v4066
    %v4250 = vpop.f32.mrf.mxu0
    %v4251 = vadd.f32 0.0, %v4250
    %4252 = vmatmul.f32.gmra.mxu0 %v4069
    %v4253 = vpop.f32.mrf.mxu0
    %v4254 = vadd.f32 0.0, %v4253
    %4255 = vmatmul.f32.gmra.mxu0 %v4072
    %v4256 = vpop.f32.mrf.mxu0
    %v4257 = vadd.f32 0.0, %v4256
    %4258 = vmatmul.f32.gmra.mxu0 %v4075
    %v4259 = vpop.f32.mrf.mxu0
    %v4260 = vadd.f32 0.0, %v4259
    %4261 = vmatmul.f32.gmra.mxu0 %v4078
    %v4262 = vpop.f32.mrf.mxu0
    %v4263 = vadd.f32 0.0, %v4262
    %4264 = vmatmul.f32.gmra.mxu0 %v4081
    %v4265 = vpop.f32.mrf.mxu0
    %v4266 = vadd.f32 0.0, %v4265
    %4267 = vmatmul.f32.gmra.mxu0 %v4084
    %v4268 = vpop.f32.mrf.mxu0
    %v4269 = vadd.f32 0.0, %v4268
    %4270 = vmatmul.f32.gmra.mxu0 %v4087
    %v4271 = vpop.f32.mrf.mxu0
    %v4272 = vadd.f32 0.0, %v4271
    %4273 = vmatmul.f32.gmra.mxu0 %v4090
    %v4274 = vpop.f32.mrf.mxu0
    %v4275 = vadd.f32 0.0, %v4274
    %4276 = vmatmul.f32.gmra.mxu0 %v4093
    %v4277 = vpop.f32.mrf.mxu0
    %v4278 = vadd.f32 0.0, %v4277
    %4279 = vmatmul.f32.gmra.mxu0 %v4096
    %v4280 = vpop.f32.mrf.mxu0
    %v4281 = vadd.f32 0.0, %v4280
    %4282 = vmatmul.f32.gmra.mxu0 %v4099
    %v4283 = vpop.f32.mrf.mxu0
    %v4284 = vadd.f32 0.0, %v4283
    %4285 = vmatmul.f32.gmra.mxu0 %v4102
    %v4286 = vpop.f32.mrf.mxu0
    %v4287 = vadd.f32 0.0, %v4286
    %4288 = vmatmul.f32.gmra.mxu0 %v4105
    %v4289 = vpop.f32.mrf.mxu0
    %v4290 = vadd.f32 0.0, %v4289
    %4291 = vmatmul.f32.gmra.mxu0 %v4108
    %v4292 = vpop.f32.mrf.mxu0
    %v4293 = vadd.f32 0.0, %v4292
    %4294 = vmatmul.f32.gmra.mxu0 %v4111
    %v4295 = vpop.f32.mrf.mxu0
    %v4296 = vadd.f32 0.0, %v4295
    %4297 = vmatmul.f32.gmra.mxu0 %v4114
    %v4298 = vpop.f32.mrf.mxu0
    %v4299 = vadd.f32 0.0, %v4298
    %4300 = vmatmul.f32.gmra.mxu0 %v4117
    %v4301 = vpop.f32.mrf.mxu0
    %v4302 = vadd.f32 0.0, %v4301
    %4303 = vmatmul.f32.gmra.mxu0 %v4120
    %v4304 = vpop.f32.mrf.mxu0
    %v4305 = vadd.f32 0.0, %v4304
    %4306 = vmatmul.f32.gmra.mxu0 %v4123
    %v4307 = vpop.f32.mrf.mxu0
    %v4308 = vadd.f32 0.0, %v4307
    %4309 = vmatmul.f32.gmra.mxu0 %v4126
    %v4310 = vpop.f32.mrf.mxu0
    %v4311 = vadd.f32 0.0, %v4310
    %4312 = vmatmul.f32.gmra.mxu0 %v4129
    %v4313 = vpop.f32.mrf.mxu0
    %v4314 = vadd.f32 0.0, %v4313
    %4315 = vmatmul.f32.gmra.mxu0 %v4132
    %v4316 = vpop.f32.mrf.mxu0
    %v4317 = vadd.f32 0.0, %v4316
    %4318 = vmatmul.f32.gmra.mxu0 %v4135
    %v4319 = vpop.f32.mrf.mxu0
    %v4320 = vadd.f32 0.0, %v4319
    %4321 = vmatmul.f32.gmra.mxu0 %v4138
    %v4322 = vpop.f32.mrf.mxu0
    %v4323 = vadd.f32 0.0, %v4322
    %4324 = vmatmul.f32.gmra.mxu0 %v4141
    %v4325 = vpop.f32.mrf.mxu0
    %v4326 = vadd.f32 0.0, %v4325
    %4327 = vmatmul.f32.gmra.mxu0 %v4144
    %v4328 = vpop.f32.mrf.mxu0
    %v4329 = vadd.f32 0.0, %v4328
    %4330 = vmatmul.f32.gmra.mxu0 %v4147
    %v4331 = vpop.f32.mrf.mxu0
    %v4332 = vadd.f32 0.0, %v4331
    %4333 = vmatmul.f32.gmra.mxu0 %v4150
    %v4334 = vpop.f32.mrf.mxu0
    %v4335 = vadd.f32 0.0, %v4334
    %4336 = vmatmul.f32.gmra.mxu0 %v4153
    %v4337 = vpop.f32.mrf.mxu0
    %v4338 = vadd.f32 0.0, %v4337
    %4339 = vmatmul.f32.gmra.mxu0 %v4156
    %v4340 = vpop.f32.mrf.mxu0
    %v4341 = vadd.f32 0.0, %v4340
    %4342 = vmatmul.f32.gmra.mxu0 %v4159
    %v4343 = vpop.f32.mrf.mxu0
    %v4344 = vadd.f32 0.0, %v4343
    %4345 = vmatmul.f32.gmra.mxu0 %v4162
    %v4346 = vpop.f32.mrf.mxu0
    %v4347 = vadd.f32 0.0, %v4346
    %4348 = vmatmul.f32.gmra.mxu0 %v4165
    %v4349 = vpop.f32.mrf.mxu0
    %v4350 = vadd.f32 0.0, %v4349
    %4351 = vmatmul.f32.gmra.mxu0 %v4168
    %v4352 = vpop.f32.mrf.mxu0
    %v4353 = vadd.f32 0.0, %v4352
    %4354 = vmatmul.f32.gmra.mxu0 %v4171
    %v4355 = vpop.f32.mrf.mxu0
    %v4356 = vadd.f32 0.0, %v4355
    %4357 = vmatmul.f32.gmra.mxu0 %v4174
    %v4358 = vpop.f32.mrf.mxu0
    %v4359 = vadd.f32 0.0, %v4358
    %4360 = vmatmul.f32.gmra.mxu0 %v4177
    %v4361 = vpop.f32.mrf.mxu0
    %v4362 = vadd.f32 0.0, %v4361
    %4363 = vmatmul.f32.gmra.mxu0 %v4180
    %v4364 = vpop.f32.mrf.mxu0
    %v4365 = vadd.f32 0.0, %v4364
    %4366 = vmatmul.f32.gmra.mxu0 %v4183
    %v4367 = vpop.f32.mrf.mxu0
    %v4368 = vadd.f32 0.0, %v4367
    %4369 = vmatmul.f32.gmra.mxu0 %v4186
    %v4370 = vpop.f32.mrf.mxu0
    %v4371 = vadd.f32 0.0, %v4370
    %4372 = vmatmul.f32.gmra.mxu0 %v4189
    %v4373 = vpop.f32.mrf.mxu0
    %v4374 = vadd.f32 0.0, %v4373
    %4375 = vmatmul.f32.gmra.mxu0 %v4192
    %v4376 = vpop.f32.mrf.mxu0
    %v4377 = vadd.f32 0.0, %v4376
    %4378 = vmatmul.f32.gmra.mxu0 %v4195
    %v4379 = vpop.f32.mrf.mxu0
    %v4380 = vadd.f32 0.0, %v4379
    %4381 = vmatmul.f32.gmra.mxu0 %v4198
    %v4382 = vpop.f32.mrf.mxu0
    %v4383 = vadd.f32 0.0, %v4382
    %4384 = vmatmul.f32.gmra.mxu0 %v4201
    %v4385 = vpop.f32.mrf.mxu0
    %v4386 = vadd.f32 0.0, %v4385
    %4387 = vmatmul.f32.gmra.mxu0 %v4204
    %v4388 = vpop.f32.mrf.mxu0
    %v4389 = vadd.f32 0.0, %v4388
    %4390 = vmatmul.f32.gmra.mxu0 %v4207
    %v4391 = vpop.f32.mrf.mxu0
    %v4392 = vadd.f32 0.0, %v4391
    %4393 = vmatmul.f32.gmra.mxu0 %v4210
    %v4394 = vpop.f32.mrf.mxu0
    %v4395 = vadd.f32 0.0, %v4394
    %4396 = vdwg.mxu0
    %v4397 = vadd.f32 %v3929, %v4230
    %v4398 = vadd.f32 %v3930, %v4233
    %v4399 = vadd.f32 %v3931, %v4236
    %v4400 = vadd.f32 %v3932, %v4239
    %v4401 = vadd.f32 %v3933, %v4242
    %v4402 = vadd.f32 %v3934, %v4245
    %v4403 = vadd.f32 %v3935, %v4248
    %v4404 = vadd.f32 %v3936, %v4251
    %v4405 = vadd.f32 %v3937, %v4254
    %v4406 = vadd.f32 %v3938, %v4257
    %v4407 = vadd.f32 %v3939, %v4260
    %v4408 = vadd.f32 %v3940, %v4263
    %v4409 = vadd.f32 %v3941, %v4266
    %v4410 = vadd.f32 %v3942, %v4269
    %v4411 = vadd.f32 %v3943, %v4272
    %v4412 = vadd.f32 %v3944, %v4275
    %v4413 = vadd.f32 %v3945, %v4278
    %v4414 = vadd.f32 %v3946, %v4281
    %v4415 = vadd.f32 %v3947, %v4284
    %v4416 = vadd.f32 %v3948, %v4287
    %v4417 = vadd.f32 %v3949, %v4290
    %v4418 = vadd.f32 %v3950, %v4293
    %v4419 = vadd.f32 %v3951, %v4296
    %v4420 = vadd.f32 %v3952, %v4299
    %v4421 = vadd.f32 %v3953, %v4302
    %v4422 = vadd.f32 %v3954, %v4305
    %v4423 = vadd.f32 %v3955, %v4308
    %v4424 = vadd.f32 %v3956, %v4311
    %v4425 = vadd.f32 %v3957, %v4314
    %v4426 = vadd.f32 %v3958, %v4317
    %v4427 = vadd.f32 %v3959, %v4320
    %v4428 = vadd.f32 %v3960, %v4323
    %v4429 = vadd.f32 %v3961, %v4326
    %v4430 = vadd.f32 %v3962, %v4329
    %v4431 = vadd.f32 %v3963, %v4332
    %v4432 = vadd.f32 %v3964, %v4335
    %v4433 = vadd.f32 %v3965, %v4338
    %v4434 = vadd.f32 %v3966, %v4341
    %v4435 = vadd.f32 %v3967, %v4344
    %v4436 = vadd.f32 %v3968, %v4347
    %v4437 = vadd.f32 %v3969, %v4350
    %v4438 = vadd.f32 %v3970, %v4353
    %v4439 = vadd.f32 %v3971, %v4356
    %v4440 = vadd.f32 %v3972, %v4359
    %v4441 = vadd.f32 %v3973, %v4362
    %v4442 = vadd.f32 %v3974, %v4365
    %v4443 = vadd.f32 %v3975, %v4368
    %v4444 = vadd.f32 %v3976, %v4371
    %v4445 = vadd.f32 %v3977, %v4374
    %v4446 = vadd.f32 %v3978, %v4377
    %v4447 = vadd.f32 %v3979, %v4380
    %v4448 = vadd.f32 %v3980, %v4383
    %v4449 = vadd.f32 %v3981, %v4386
    %v4450 = vadd.f32 %v3982, %v4389
    %v4451 = vadd.f32 %v3983, %v4392
    %v4452 = vadd.f32 %v3984, %v4395
    %v4453 = vld [vmem:[#allocation2 + $0x10] sm:$0xff]
    %v4454 = vld [vmem:[#allocation2 + $0x18] sm:$0xff]
    %v4455 = vld [vmem:[#allocation2 + $0x20] sm:$0xff]
    %v4456 = vld [vmem:[#allocation2 + $0x28] sm:$0xff]
    %v4457 = vld [vmem:[#allocation2 + $0x30] sm:$0xff]
    %v4458 = vld [vmem:[#allocation2 + $0x38] sm:$0xff]
    %v4459 = vld [vmem:[#allocation2 + $0x40] sm:$0xff]
    %v4460 = vld [vmem:[#allocation2 + $0x48] sm:$0xff]
    %v4461 = vld [vmem:[#allocation2 + $0x50] sm:$0xff]
    %v4462 = vld [vmem:[#allocation2 + $0x58] sm:$0xff]
    %v4463 = vld [vmem:[#allocation2 + $0x60] sm:$0xff]
    %v4464 = vld [vmem:[#allocation2 + $0x68] sm:$0xff]
    %v4465 = vld [vmem:[#allocation2 + $0x70] sm:$0xff]
    %v4466 = vld [vmem:[#allocation2 + $0x78] sm:$0xff]
    %v4467 = vld [vmem:[#allocation2 + $0x80] sm:$0xff]
    %v4468 = vld [vmem:[#allocation2 + $0x88] sm:$0xff]
    %v4469 = vld [vmem:[#allocation2 + $0x90] sm:$0xff]
    %v4470 = vld [vmem:[#allocation2 + $0x98] sm:$0xff]
    %v4471 = vld [vmem:[#allocation2 + $0xa0] sm:$0xff]
    %v4472 = vld [vmem:[#allocation2 + $0xa8] sm:$0xff]
    %v4473 = vld [vmem:[#allocation2 + $0xb0] sm:$0xff]
    %v4474 = vld [vmem:[#allocation2 + $0xb8] sm:$0xff]
    %v4475 = vld [vmem:[#allocation2 + $0xc0] sm:$0xff]
    %v4476 = vld [vmem:[#allocation2 + $0xc8] sm:$0xff]
    %v4477 = vld [vmem:[#allocation2 + $0xd0] sm:$0xff]
    %v4478 = vld [vmem:[#allocation2 + $0xd8] sm:$0xff]
    %v4479 = vld [vmem:[#allocation2 + $0xe0] sm:$0xff]
    %v4480 = vld [vmem:[#allocation2 + $0xe8] sm:$0xff]
    %v4481 = vld [vmem:[#allocation2 + $0xf0] sm:$0xff]
    %v4482 = vld [vmem:[#allocation2 + $0xf8] sm:$0xff]
    %v4483 = vld [vmem:[#allocation2 + $0x100] sm:$0xff]
    %v4484 = vld [vmem:[#allocation2 + $0x108] sm:$0xff]
    %v4485 = vld [vmem:[#allocation2 + $0x110] sm:$0xff]
    %v4486 = vld [vmem:[#allocation2 + $0x118] sm:$0xff]
    %v4487 = vld [vmem:[#allocation2 + $0x120] sm:$0xff]
    %v4488 = vld [vmem:[#allocation2 + $0x128] sm:$0xff]
    %v4489 = vld [vmem:[#allocation2 + $0x130] sm:$0xff]
    %v4490 = vld [vmem:[#allocation2 + $0x138] sm:$0xff]
    %v4491 = vld [vmem:[#allocation2 + $0x140] sm:$0xff]
    %v4492 = vld [vmem:[#allocation2 + $0x148] sm:$0xff]
    %v4493 = vld [vmem:[#allocation2 + $0x150] sm:$0xff]
    %v4494 = vld [vmem:[#allocation2 + $0x158] sm:$0xff]
    %v4495 = vld [vmem:[#allocation2 + $0x160] sm:$0xff]
    %v4496 = vld [vmem:[#allocation2 + $0x168] sm:$0xff]
    %v4497 = vld [vmem:[#allocation2 + $0x170] sm:$0xff]
    %v4498 = vld [vmem:[#allocation2 + $0x178] sm:$0xff]
    %v4499 = vld [vmem:[#allocation2 + $0x180] sm:$0xff]
    %v4500 = vld [vmem:[#allocation2 + $0x188] sm:$0xff]
    %v4501 = vld [vmem:[#allocation2 + $0x190] sm:$0xff]
    %v4502 = vld [vmem:[#allocation2 + $0x198] sm:$0xff]
    %v4503 = vld [vmem:[#allocation2 + $0x1a0] sm:$0xff]
    %v4504 = vld [vmem:[#allocation2 + $0x1a8] sm:$0xff]
    %v4505 = vld [vmem:[#allocation2 + $0x1b0] sm:$0xff]
    %v4506 = vld [vmem:[#allocation2 + $0x1b8] sm:$0xff]
    %v4507 = vld [vmem:[#allocation2 + $0x1c0] sm:$0xff]
    %v4508 = vld [vmem:[#allocation2 + $0x1c8] sm:$0xff]
    %v4509 = vld [vmem:[#allocation6 + $0xc0] sm:$0xff]
    %v4510 = vld [vmem:[#allocation6 + $0xc8] sm:$0xff]
    %v4511 = vld [vmem:[#allocation6 + $0xd0] sm:$0xff]
    %v4513 = vsel %vm131, %v4453, 0
    %v4516 = vsel %vm131, %v4454, 0
    %v4519 = vsel %vm131, %v4455, 0
    %v4522 = vsel %vm131, %v4456, 0
    %v4525 = vsel %vm131, %v4457, 0
    %v4528 = vsel %vm131, %v4458, 0
    %v4531 = vsel %vm131, %v4459, 0
    %v4534 = vsel %vm131, %v4460, 0
    %v4537 = vsel %vm131, %v4461, 0
    %v4540 = vsel %vm131, %v4462, 0
    %v4543 = vsel %vm131, %v4463, 0
    %v4546 = vsel %vm131, %v4464, 0
    %v4549 = vsel %vm131, %v4465, 0
    %v4552 = vsel %vm131, %v4466, 0
    %v4555 = vsel %vm131, %v4467, 0
    %v4558 = vsel %vm131, %v4468, 0
    %v4561 = vsel %vm131, %v4469, 0
    %v4564 = vsel %vm131, %v4470, 0
    %v4567 = vsel %vm131, %v4471, 0
    %v4570 = vsel %vm131, %v4472, 0
    %v4573 = vsel %vm131, %v4473, 0
    %v4576 = vsel %vm131, %v4474, 0
    %v4579 = vsel %vm131, %v4475, 0
    %v4582 = vsel %vm131, %v4476, 0
    %v4585 = vsel %vm131, %v4477, 0
    %v4588 = vsel %vm131, %v4478, 0
    %v4591 = vsel %vm131, %v4479, 0
    %v4594 = vsel %vm131, %v4480, 0
    %v4597 = vsel %vm131, %v4481, 0
    %v4600 = vsel %vm131, %v4482, 0
    %v4603 = vsel %vm131, %v4483, 0
    %v4606 = vsel %vm131, %v4484, 0
    %v4609 = vsel %vm131, %v4485, 0
    %v4612 = vsel %vm131, %v4486, 0
    %v4615 = vsel %vm131, %v4487, 0
    %v4618 = vsel %vm131, %v4488, 0
    %v4621 = vsel %vm131, %v4489, 0
    %v4624 = vsel %vm131, %v4490, 0
    %v4627 = vsel %vm131, %v4491, 0
    %v4630 = vsel %vm131, %v4492, 0
    %v4633 = vsel %vm131, %v4493, 0
    %v4636 = vsel %vm131, %v4494, 0
    %v4639 = vsel %vm131, %v4495, 0
    %v4642 = vsel %vm131, %v4496, 0
    %v4645 = vsel %vm131, %v4497, 0
    %v4648 = vsel %vm131, %v4498, 0
    %v4651 = vsel %vm131, %v4499, 0
    %v4654 = vsel %vm131, %v4500, 0
    %v4657 = vsel %vm131, %v4501, 0
    %v4660 = vsel %vm131, %v4502, 0
    %v4663 = vsel %vm131, %v4503, 0
    %v4666 = vsel %vm131, %v4504, 0
    %v4669 = vsel %vm131, %v4505, 0
    %v4672 = vsel %vm131, %v4506, 0
    %v4675 = vsel %vm131, %v4507, 0
    %v4678 = vsel %vm131, %v4508, 0
    %4680 = vmatpush.msra.mxu0 0.0
    %4681 = vmatpush.msra.mxu0 0.0
    %4682 = vmatpush.msra.mxu0 0.0
    %4683 = vmatpush.msra.mxu0 0.0
    %4684 = vmatpush.msra.mxu0 0.0
    %4685 = vmatpush.msra.mxu0 0.0
    %4686 = vmatpush.msra.mxu0 0.0
    %4687 = vmatpush.msra.mxu0 0.0
    %4688 = vmatpush.msra.mxu0 0.0
    %4689 = vmatpush.msra.mxu0 0.0
    %4690 = vmatpush.msra.mxu0 0.0
    %4691 = vmatpush.msra.mxu0 0.0
    %4692 = vmatpush.msra.mxu0 0.0
    %4693 = vmatpush.msra.mxu0 %v4511
    %4694 = vmatpush.msra.mxu0 %v4510
    %4695 = vmatpush.msra.mxu0 %v4509
    %4696 = vmatmul.f32.gmra.mxu0 %v4513
    %v4697 = vpop.f32.mrf.mxu0
    %v4698 = vadd.f32 0.0, %v4697
    %4699 = vmatmul.f32.gmra.mxu0 %v4516
    %v4700 = vpop.f32.mrf.mxu0
    %v4701 = vadd.f32 0.0, %v4700
    %4702 = vmatmul.f32.gmra.mxu0 %v4519
    %v4703 = vpop.f32.mrf.mxu0
    %v4704 = vadd.f32 0.0, %v4703
    %4705 = vmatmul.f32.gmra.mxu0 %v4522
    %v4706 = vpop.f32.mrf.mxu0
    %v4707 = vadd.f32 0.0, %v4706
    %4708 = vmatmul.f32.gmra.mxu0 %v4525
    %v4709 = vpop.f32.mrf.mxu0
    %v4710 = vadd.f32 0.0, %v4709
    %4711 = vmatmul.f32.gmra.mxu0 %v4528
    %v4712 = vpop.f32.mrf.mxu0
    %v4713 = vadd.f32 0.0, %v4712
    %4714 = vmatmul.f32.gmra.mxu0 %v4531
    %v4715 = vpop.f32.mrf.mxu0
    %v4716 = vadd.f32 0.0, %v4715
    %4717 = vmatmul.f32.gmra.mxu0 %v4534
    %v4718 = vpop.f32.mrf.mxu0
    %v4719 = vadd.f32 0.0, %v4718
    %4720 = vmatmul.f32.gmra.mxu0 %v4537
    %v4721 = vpop.f32.mrf.mxu0
    %v4722 = vadd.f32 0.0, %v4721
    %4723 = vmatmul.f32.gmra.mxu0 %v4540
    %v4724 = vpop.f32.mrf.mxu0
    %v4725 = vadd.f32 0.0, %v4724
    %4726 = vmatmul.f32.gmra.mxu0 %v4543
    %v4727 = vpop.f32.mrf.mxu0
    %v4728 = vadd.f32 0.0, %v4727
    %4729 = vmatmul.f32.gmra.mxu0 %v4546
    %v4730 = vpop.f32.mrf.mxu0
    %v4731 = vadd.f32 0.0, %v4730
    %4732 = vmatmul.f32.gmra.mxu0 %v4549
    %v4733 = vpop.f32.mrf.mxu0
    %v4734 = vadd.f32 0.0, %v4733
    %4735 = vmatmul.f32.gmra.mxu0 %v4552
    %v4736 = vpop.f32.mrf.mxu0
    %v4737 = vadd.f32 0.0, %v4736
    %4738 = vmatmul.f32.gmra.mxu0 %v4555
    %v4739 = vpop.f32.mrf.mxu0
    %v4740 = vadd.f32 0.0, %v4739
    %4741 = vmatmul.f32.gmra.mxu0 %v4558
    %v4742 = vpop.f32.mrf.mxu0
    %v4743 = vadd.f32 0.0, %v4742
    %4744 = vmatmul.f32.gmra.mxu0 %v4561
    %v4745 = vpop.f32.mrf.mxu0
    %v4746 = vadd.f32 0.0, %v4745
    %4747 = vmatmul.f32.gmra.mxu0 %v4564
    %v4748 = vpop.f32.mrf.mxu0
    %v4749 = vadd.f32 0.0, %v4748
    %4750 = vmatmul.f32.gmra.mxu0 %v4567
    %v4751 = vpop.f32.mrf.mxu0
    %v4752 = vadd.f32 0.0, %v4751
    %4753 = vmatmul.f32.gmra.mxu0 %v4570
    %v4754 = vpop.f32.mrf.mxu0
    %v4755 = vadd.f32 0.0, %v4754
    %4756 = vmatmul.f32.gmra.mxu0 %v4573
    %v4757 = vpop.f32.mrf.mxu0
    %v4758 = vadd.f32 0.0, %v4757
    %4759 = vmatmul.f32.gmra.mxu0 %v4576
    %v4760 = vpop.f32.mrf.mxu0
    %v4761 = vadd.f32 0.0, %v4760
    %4762 = vmatmul.f32.gmra.mxu0 %v4579
    %v4763 = vpop.f32.mrf.mxu0
    %v4764 = vadd.f32 0.0, %v4763
    %4765 = vmatmul.f32.gmra.mxu0 %v4582
    %v4766 = vpop.f32.mrf.mxu0
    %v4767 = vadd.f32 0.0, %v4766
    %4768 = vmatmul.f32.gmra.mxu0 %v4585
    %v4769 = vpop.f32.mrf.mxu0
    %v4770 = vadd.f32 0.0, %v4769
    %4771 = vmatmul.f32.gmra.mxu0 %v4588
    %v4772 = vpop.f32.mrf.mxu0
    %v4773 = vadd.f32 0.0, %v4772
    %4774 = vmatmul.f32.gmra.mxu0 %v4591
    %v4775 = vpop.f32.mrf.mxu0
    %v4776 = vadd.f32 0.0, %v4775
    %4777 = vmatmul.f32.gmra.mxu0 %v4594
    %v4778 = vpop.f32.mrf.mxu0
    %v4779 = vadd.f32 0.0, %v4778
    %4780 = vmatmul.f32.gmra.mxu0 %v4597
    %v4781 = vpop.f32.mrf.mxu0
    %v4782 = vadd.f32 0.0, %v4781
    %4783 = vmatmul.f32.gmra.mxu0 %v4600
    %v4784 = vpop.f32.mrf.mxu0
    %v4785 = vadd.f32 0.0, %v4784
    %4786 = vmatmul.f32.gmra.mxu0 %v4603
    %v4787 = vpop.f32.mrf.mxu0
    %v4788 = vadd.f32 0.0, %v4787
    %4789 = vmatmul.f32.gmra.mxu0 %v4606
    %v4790 = vpop.f32.mrf.mxu0
    %v4791 = vadd.f32 0.0, %v4790
    %4792 = vmatmul.f32.gmra.mxu0 %v4609
    %v4793 = vpop.f32.mrf.mxu0
    %v4794 = vadd.f32 0.0, %v4793
    %4795 = vmatmul.f32.gmra.mxu0 %v4612
    %v4796 = vpop.f32.mrf.mxu0
    %v4797 = vadd.f32 0.0, %v4796
    %4798 = vmatmul.f32.gmra.mxu0 %v4615
    %v4799 = vpop.f32.mrf.mxu0
    %v4800 = vadd.f32 0.0, %v4799
    %4801 = vmatmul.f32.gmra.mxu0 %v4618
    %v4802 = vpop.f32.mrf.mxu0
    %v4803 = vadd.f32 0.0, %v4802
    %4804 = vmatmul.f32.gmra.mxu0 %v4621
    %v4805 = vpop.f32.mrf.mxu0
    %v4806 = vadd.f32 0.0, %v4805
    %4807 = vmatmul.f32.gmra.mxu0 %v4624
    %v4808 = vpop.f32.mrf.mxu0
    %v4809 = vadd.f32 0.0, %v4808
    %4810 = vmatmul.f32.gmra.mxu0 %v4627
    %v4811 = vpop.f32.mrf.mxu0
    %v4812 = vadd.f32 0.0, %v4811
    %4813 = vmatmul.f32.gmra.mxu0 %v4630
    %v4814 = vpop.f32.mrf.mxu0
    %v4815 = vadd.f32 0.0, %v4814
    %4816 = vmatmul.f32.gmra.mxu0 %v4633
    %v4817 = vpop.f32.mrf.mxu0
    %v4818 = vadd.f32 0.0, %v4817
    %4819 = vmatmul.f32.gmra.mxu0 %v4636
    %v4820 = vpop.f32.mrf.mxu0
    %v4821 = vadd.f32 0.0, %v4820
    %4822 = vmatmul.f32.gmra.mxu0 %v4639
    %v4823 = vpop.f32.mrf.mxu0
    %v4824 = vadd.f32 0.0, %v4823
    %4825 = vmatmul.f32.gmra.mxu0 %v4642
    %v4826 = vpop.f32.mrf.mxu0
    %v4827 = vadd.f32 0.0, %v4826
    %4828 = vmatmul.f32.gmra.mxu0 %v4645
    %v4829 = vpop.f32.mrf.mxu0
    %v4830 = vadd.f32 0.0, %v4829
    %4831 = vmatmul.f32.gmra.mxu0 %v4648
    %v4832 = vpop.f32.mrf.mxu0
    %v4833 = vadd.f32 0.0, %v4832
    %4834 = vmatmul.f32.gmra.mxu0 %v4651
    %v4835 = vpop.f32.mrf.mxu0
    %v4836 = vadd.f32 0.0, %v4835
    %4837 = vmatmul.f32.gmra.mxu0 %v4654
    %v4838 = vpop.f32.mrf.mxu0
    %v4839 = vadd.f32 0.0, %v4838
    %4840 = vmatmul.f32.gmra.mxu0 %v4657
    %v4841 = vpop.f32.mrf.mxu0
    %v4842 = vadd.f32 0.0, %v4841
    %4843 = vmatmul.f32.gmra.mxu0 %v4660
    %v4844 = vpop.f32.mrf.mxu0
    %v4845 = vadd.f32 0.0, %v4844
    %4846 = vmatmul.f32.gmra.mxu0 %v4663
    %v4847 = vpop.f32.mrf.mxu0
    %v4848 = vadd.f32 0.0, %v4847
    %4849 = vmatmul.f32.gmra.mxu0 %v4666
    %v4850 = vpop.f32.mrf.mxu0
    %v4851 = vadd.f32 0.0, %v4850
    %4852 = vmatmul.f32.gmra.mxu0 %v4669
    %v4853 = vpop.f32.mrf.mxu0
    %v4854 = vadd.f32 0.0, %v4853
    %4855 = vmatmul.f32.gmra.mxu0 %v4672
    %v4856 = vpop.f32.mrf.mxu0
    %v4857 = vadd.f32 0.0, %v4856
    %4858 = vmatmul.f32.gmra.mxu0 %v4675
    %v4859 = vpop.f32.mrf.mxu0
    %v4860 = vadd.f32 0.0, %v4859
    %4861 = vmatmul.f32.gmra.mxu0 %v4678
    %v4862 = vpop.f32.mrf.mxu0
    %v4863 = vadd.f32 0.0, %v4862
    %4864 = vdwg.mxu0
    %v4865 = vadd.f32 %v4397, %v4698
    %v4866 = vadd.f32 %v4398, %v4701
    %v4867 = vadd.f32 %v4399, %v4704
    %v4868 = vadd.f32 %v4400, %v4707
    %v4869 = vadd.f32 %v4401, %v4710
    %v4870 = vadd.f32 %v4402, %v4713
    %v4871 = vadd.f32 %v4403, %v4716
    %v4872 = vadd.f32 %v4404, %v4719
    %v4873 = vadd.f32 %v4405, %v4722
    %v4874 = vadd.f32 %v4406, %v4725
    %v4875 = vadd.f32 %v4407, %v4728
    %v4876 = vadd.f32 %v4408, %v4731
    %v4877 = vadd.f32 %v4409, %v4734
    %v4878 = vadd.f32 %v4410, %v4737
    %v4879 = vadd.f32 %v4411, %v4740
    %v4880 = vadd.f32 %v4412, %v4743
    %v4881 = vadd.f32 %v4413, %v4746
    %v4882 = vadd.f32 %v4414, %v4749
    %v4883 = vadd.f32 %v4415, %v4752
    %v4884 = vadd.f32 %v4416, %v4755
    %v4885 = vadd.f32 %v4417, %v4758
    %v4886 = vadd.f32 %v4418, %v4761
    %v4887 = vadd.f32 %v4419, %v4764
    %v4888 = vadd.f32 %v4420, %v4767
    %v4889 = vadd.f32 %v4421, %v4770
    %v4890 = vadd.f32 %v4422, %v4773
    %v4891 = vadd.f32 %v4423, %v4776
    %v4892 = vadd.f32 %v4424, %v4779
    %v4893 = vadd.f32 %v4425, %v4782
    %v4894 = vadd.f32 %v4426, %v4785
    %v4895 = vadd.f32 %v4427, %v4788
    %v4896 = vadd.f32 %v4428, %v4791
    %v4897 = vadd.f32 %v4429, %v4794
    %v4898 = vadd.f32 %v4430, %v4797
    %v4899 = vadd.f32 %v4431, %v4800
    %v4900 = vadd.f32 %v4432, %v4803
    %v4901 = vadd.f32 %v4433, %v4806
    %v4902 = vadd.f32 %v4434, %v4809
    %v4903 = vadd.f32 %v4435, %v4812
    %v4904 = vadd.f32 %v4436, %v4815
    %v4905 = vadd.f32 %v4437, %v4818
    %v4906 = vadd.f32 %v4438, %v4821
    %v4907 = vadd.f32 %v4439, %v4824
    %v4908 = vadd.f32 %v4440, %v4827
    %v4909 = vadd.f32 %v4441, %v4830
    %v4910 = vadd.f32 %v4442, %v4833
    %v4911 = vadd.f32 %v4443, %v4836
    %v4912 = vadd.f32 %v4444, %v4839
    %v4913 = vadd.f32 %v4445, %v4842
    %v4914 = vadd.f32 %v4446, %v4845
    %v4915 = vadd.f32 %v4447, %v4848
    %v4916 = vadd.f32 %v4448, %v4851
    %v4917 = vadd.f32 %v4449, %v4854
    %v4918 = vadd.f32 %v4450, %v4857
    %v4919 = vadd.f32 %v4451, %v4860
    %v4920 = vadd.f32 %v4452, %v4863
    %v4921 = vld [vmem:[%s3] sm:$0x1]
    %v4922 = vperm.slane %v4921, 0
    %v4923 = vadd.f32 %v4865, %v4922
    %v4924 = vadd.f32 %v4866, %v4922
    %v4925 = vadd.f32 %v4867, %v4922
    %v4926 = vadd.f32 %v4868, %v4922
    %v4927 = vadd.f32 %v4869, %v4922
    %v4928 = vadd.f32 %v4870, %v4922
    %v4929 = vadd.f32 %v4871, %v4922
    %v4930 = vadd.f32 %v4872, %v4922
    %v4931 = vadd.f32 %v4873, %v4922
    %v4932 = vadd.f32 %v4874, %v4922
    %v4933 = vadd.f32 %v4875, %v4922
    %v4934 = vadd.f32 %v4876, %v4922
    %v4935 = vadd.f32 %v4877, %v4922
    %v4936 = vadd.f32 %v4878, %v4922
    %v4937 = vadd.f32 %v4879, %v4922
    %v4938 = vadd.f32 %v4880, %v4922
    %v4939 = vadd.f32 %v4881, %v4922
    %v4940 = vadd.f32 %v4882, %v4922
    %v4941 = vadd.f32 %v4883, %v4922
    %v4942 = vadd.f32 %v4884, %v4922
    %v4943 = vadd.f32 %v4885, %v4922
    %v4944 = vadd.f32 %v4886, %v4922
    %v4945 = vadd.f32 %v4887, %v4922
    %v4946 = vadd.f32 %v4888, %v4922
    %v4947 = vadd.f32 %v4889, %v4922
    %v4948 = vadd.f32 %v4890, %v4922
    %v4949 = vadd.f32 %v4891, %v4922
    %v4950 = vadd.f32 %v4892, %v4922
    %v4951 = vadd.f32 %v4893, %v4922
    %v4952 = vadd.f32 %v4894, %v4922
    %v4953 = vadd.f32 %v4895, %v4922
    %v4954 = vadd.f32 %v4896, %v4922
    %v4955 = vadd.f32 %v4897, %v4922
    %v4956 = vadd.f32 %v4898, %v4922
    %v4957 = vadd.f32 %v4899, %v4922
    %v4958 = vadd.f32 %v4900, %v4922
    %v4959 = vadd.f32 %v4901, %v4922
    %v4960 = vadd.f32 %v4902, %v4922
    %v4961 = vadd.f32 %v4903, %v4922
    %v4962 = vadd.f32 %v4904, %v4922
    %v4963 = vadd.f32 %v4905, %v4922
    %v4964 = vadd.f32 %v4906, %v4922
    %v4965 = vadd.f32 %v4907, %v4922
    %v4966 = vadd.f32 %v4908, %v4922
    %v4967 = vadd.f32 %v4909, %v4922
    %v4968 = vadd.f32 %v4910, %v4922
    %v4969 = vadd.f32 %v4911, %v4922
    %v4970 = vadd.f32 %v4912, %v4922
    %v4971 = vadd.f32 %v4913, %v4922
    %v4972 = vadd.f32 %v4914, %v4922
    %v4973 = vadd.f32 %v4915, %v4922
    %v4974 = vadd.f32 %v4916, %v4922
    %v4975 = vadd.f32 %v4917, %v4922
    %v4976 = vadd.f32 %v4918, %v4922
    %v4977 = vadd.f32 %v4919, %v4922
    %v4978 = vadd.f32 %v4920, %v4922
    %v4979 = vld [vmem:[%s3 + $0x1] sm:$0x1]
    %vm4980 = vcmp.ge.f32.partialorder %v4923, 0.0
    %vm4981 = vcmp.ge.f32.partialorder %v4924, 0.0
    %vm4982 = vcmp.ge.f32.partialorder %v4925, 0.0
    %vm4983 = vcmp.ge.f32.partialorder %v4926, 0.0
    %vm4984 = vcmp.ge.f32.partialorder %v4927, 0.0
    %vm4985 = vcmp.ge.f32.partialorder %v4928, 0.0
    %vm4986 = vcmp.ge.f32.partialorder %v4929, 0.0
    %vm4987 = vcmp.ge.f32.partialorder %v4930, 0.0
    %vm4988 = vcmp.ge.f32.partialorder %v4931, 0.0
    %vm4989 = vcmp.ge.f32.partialorder %v4932, 0.0
    %vm4990 = vcmp.ge.f32.partialorder %v4933, 0.0
    %vm4991 = vcmp.ge.f32.partialorder %v4934, 0.0
    %vm4992 = vcmp.ge.f32.partialorder %v4935, 0.0
    %vm4993 = vcmp.ge.f32.partialorder %v4936, 0.0
    %vm4994 = vcmp.ge.f32.partialorder %v4937, 0.0
    %vm4995 = vcmp.ge.f32.partialorder %v4938, 0.0
    %vm4996 = vcmp.ge.f32.partialorder %v4939, 0.0
    %vm4997 = vcmp.ge.f32.partialorder %v4940, 0.0
    %vm4998 = vcmp.ge.f32.partialorder %v4941, 0.0
    %vm4999 = vcmp.ge.f32.partialorder %v4942, 0.0
    %vm5000 = vcmp.ge.f32.partialorder %v4943, 0.0
    %vm5001 = vcmp.ge.f32.partialorder %v4944, 0.0
    %vm5002 = vcmp.ge.f32.partialorder %v4945, 0.0
    %vm5003 = vcmp.ge.f32.partialorder %v4946, 0.0
    %vm5004 = vcmp.ge.f32.partialorder %v4947, 0.0
    %vm5005 = vcmp.ge.f32.partialorder %v4948, 0.0
    %vm5006 = vcmp.ge.f32.partialorder %v4949, 0.0
    %vm5007 = vcmp.ge.f32.partialorder %v4950, 0.0
    %vm5008 = vcmp.ge.f32.partialorder %v4951, 0.0
    %vm5009 = vcmp.ge.f32.partialorder %v4952, 0.0
    %vm5010 = vcmp.ge.f32.partialorder %v4953, 0.0
    %vm5011 = vcmp.ge.f32.partialorder %v4954, 0.0
    %vm5012 = vcmp.ge.f32.partialorder %v4955, 0.0
    %vm5013 = vcmp.ge.f32.partialorder %v4956, 0.0
    %vm5014 = vcmp.ge.f32.partialorder %v4957, 0.0
    %vm5015 = vcmp.ge.f32.partialorder %v4958, 0.0
    %vm5016 = vcmp.ge.f32.partialorder %v4959, 0.0
    %vm5017 = vcmp.ge.f32.partialorder %v4960, 0.0
    %vm5018 = vcmp.ge.f32.partialorder %v4961, 0.0
    %vm5019 = vcmp.ge.f32.partialorder %v4962, 0.0
    %vm5020 = vcmp.ge.f32.partialorder %v4963, 0.0
    %vm5021 = vcmp.ge.f32.partialorder %v4964, 0.0
    %vm5022 = vcmp.ge.f32.partialorder %v4965, 0.0
    %vm5023 = vcmp.ge.f32.partialorder %v4966, 0.0
    %vm5024 = vcmp.ge.f32.partialorder %v4967, 0.0
    %vm5025 = vcmp.ge.f32.partialorder %v4968, 0.0
    %vm5026 = vcmp.ge.f32.partialorder %v4969, 0.0
    %vm5027 = vcmp.ge.f32.partialorder %v4970, 0.0
    %vm5028 = vcmp.ge.f32.partialorder %v4971, 0.0
    %vm5029 = vcmp.ge.f32.partialorder %v4972, 0.0
    %vm5030 = vcmp.ge.f32.partialorder %v4973, 0.0
    %vm5031 = vcmp.ge.f32.partialorder %v4974, 0.0
    %vm5032 = vcmp.ge.f32.partialorder %v4975, 0.0
    %vm5033 = vcmp.ge.f32.partialorder %v4976, 0.0
    %vm5034 = vcmp.ge.f32.partialorder %v4977, 0.0
    %vm5035 = vcmp.ge.f32.partialorder %v4978, 0.0
    %v5036 = vperm.slane %v4979, 0
    %v5037 = vmul.f32 %v5036, %v4923
    %v5038 = vmul.f32 %v5036, %v4924
    %v5039 = vmul.f32 %v5036, %v4925
    %v5040 = vmul.f32 %v5036, %v4926
    %v5041 = vmul.f32 %v5036, %v4927
    %v5042 = vmul.f32 %v5036, %v4928
    %v5043 = vmul.f32 %v5036, %v4929
    %v5044 = vmul.f32 %v5036, %v4930
    %v5045 = vmul.f32 %v5036, %v4931
    %v5046 = vmul.f32 %v5036, %v4932
    %v5047 = vmul.f32 %v5036, %v4933
    %v5048 = vmul.f32 %v5036, %v4934
    %v5049 = vmul.f32 %v5036, %v4935
    %v5050 = vmul.f32 %v5036, %v4936
    %v5051 = vmul.f32 %v5036, %v4937
    %v5052 = vmul.f32 %v5036, %v4938
    %v5053 = vmul.f32 %v5036, %v4939
    %v5054 = vmul.f32 %v5036, %v4940
    %v5055 = vmul.f32 %v5036, %v4941
    %v5056 = vmul.f32 %v5036, %v4942
    %v5057 = vmul.f32 %v5036, %v4943
    %v5058 = vmul.f32 %v5036, %v4944
    %v5059 = vmul.f32 %v5036, %v4945
    %v5060 = vmul.f32 %v5036, %v4946
    %v5061 = vmul.f32 %v5036, %v4947
    %v5062 = vmul.f32 %v5036, %v4948
    %v5063 = vmul.f32 %v5036, %v4949
    %v5064 = vmul.f32 %v5036, %v4950
    %v5065 = vmul.f32 %v5036, %v4951
    %v5066 = vmul.f32 %v5036, %v4952
    %v5067 = vmul.f32 %v5036, %v4953
    %v5068 = vmul.f32 %v5036, %v4954
    %v5069 = vmul.f32 %v5036, %v4955
    %v5070 = vmul.f32 %v5036, %v4956
    %v5071 = vmul.f32 %v5036, %v4957
    %v5072 = vmul.f32 %v5036, %v4958
    %v5073 = vmul.f32 %v5036, %v4959
    %v5074 = vmul.f32 %v5036, %v4960
    %v5075 = vmul.f32 %v5036, %v4961
    %v5076 = vmul.f32 %v5036, %v4962
    %v5077 = vmul.f32 %v5036, %v4963
    %v5078 = vmul.f32 %v5036, %v4964
    %v5079 = vmul.f32 %v5036, %v4965
    %v5080 = vmul.f32 %v5036, %v4966
    %v5081 = vmul.f32 %v5036, %v4967
    %v5082 = vmul.f32 %v5036, %v4968
    %v5083 = vmul.f32 %v5036, %v4969
    %v5084 = vmul.f32 %v5036, %v4970
    %v5085 = vmul.f32 %v5036, %v4971
    %v5086 = vmul.f32 %v5036, %v4972
    %v5087 = vmul.f32 %v5036, %v4973
    %v5088 = vmul.f32 %v5036, %v4974
    %v5089 = vmul.f32 %v5036, %v4975
    %v5090 = vmul.f32 %v5036, %v4976
    %v5091 = vmul.f32 %v5036, %v4977
    %v5092 = vmul.f32 %v5036, %v4978
    %v5093 = vsel %vm4980, %v4923, %v5037
    %v5094 = vsel %vm4981, %v4924, %v5038
    %v5095 = vsel %vm4982, %v4925, %v5039
    %v5096 = vsel %vm4983, %v4926, %v5040
    %v5097 = vsel %vm4984, %v4927, %v5041
    %v5098 = vsel %vm4985, %v4928, %v5042
    %v5099 = vsel %vm4986, %v4929, %v5043
    %v5100 = vsel %vm4987, %v4930, %v5044
    %v5101 = vsel %vm4988, %v4931, %v5045
    %v5102 = vsel %vm4989, %v4932, %v5046
    %v5103 = vsel %vm4990, %v4933, %v5047
    %v5104 = vsel %vm4991, %v4934, %v5048
    %v5105 = vsel %vm4992, %v4935, %v5049
    %v5106 = vsel %vm4993, %v4936, %v5050
    %v5107 = vsel %vm4994, %v4937, %v5051
    %v5108 = vsel %vm4995, %v4938, %v5052
    %v5109 = vsel %vm4996, %v4939, %v5053
    %v5110 = vsel %vm4997, %v4940, %v5054
    %v5111 = vsel %vm4998, %v4941, %v5055
    %v5112 = vsel %vm4999, %v4942, %v5056
    %v5113 = vsel %vm5000, %v4943, %v5057
    %v5114 = vsel %vm5001, %v4944, %v5058
    %v5115 = vsel %vm5002, %v4945, %v5059
    %v5116 = vsel %vm5003, %v4946, %v5060
    %v5117 = vsel %vm5004, %v4947, %v5061
    %v5118 = vsel %vm5005, %v4948, %v5062
    %v5119 = vsel %vm5006, %v4949, %v5063
    %v5120 = vsel %vm5007, %v4950, %v5064
    %v5121 = vsel %vm5008, %v4951, %v5065
    %v5122 = vsel %vm5009, %v4952, %v5066
    %v5123 = vsel %vm5010, %v4953, %v5067
    %v5124 = vsel %vm5011, %v4954, %v5068
    %v5125 = vsel %vm5012, %v4955, %v5069
    %v5126 = vsel %vm5013, %v4956, %v5070
    %v5127 = vsel %vm5014, %v4957, %v5071
    %v5128 = vsel %vm5015, %v4958, %v5072
    %v5129 = vsel %vm5016, %v4959, %v5073
    %v5130 = vsel %vm5017, %v4960, %v5074
    %v5131 = vsel %vm5018, %v4961, %v5075
    %v5132 = vsel %vm5019, %v4962, %v5076
    %v5133 = vsel %vm5020, %v4963, %v5077
    %v5134 = vsel %vm5021, %v4964, %v5078
    %v5135 = vsel %vm5022, %v4965, %v5079
    %v5136 = vsel %vm5023, %v4966, %v5080
    %v5137 = vsel %vm5024, %v4967, %v5081
    %v5138 = vsel %vm5025, %v4968, %v5082
    %v5139 = vsel %vm5026, %v4969, %v5083
    %v5140 = vsel %vm5027, %v4970, %v5084
    %v5141 = vsel %vm5028, %v4971, %v5085
    %v5142 = vsel %vm5029, %v4972, %v5086
    %v5143 = vsel %vm5030, %v4973, %v5087
    %v5144 = vsel %vm5031, %v4974, %v5088
    %v5145 = vsel %vm5032, %v4975, %v5089
    %v5146 = vsel %vm5033, %v4976, %v5090
    %v5147 = vsel %vm5034, %v4977, %v5091
    %v5148 = vsel %vm5035, %v4978, %v5092
    %5149 = vst.msk [vmem:[#allocation3] sm:$0xff] %vm134, %v5093
    %5150 = vst.msk [vmem:[#allocation3 + $0x8] sm:$0xff] %vm134, %v5094
    %5151 = vst.msk [vmem:[#allocation3 + $0x10] sm:$0xff] %vm134, %v5095
    %5152 = vst.msk [vmem:[#allocation3 + $0x18] sm:$0xff] %vm134, %v5096
    %5153 = vst.msk [vmem:[#allocation3 + $0x20] sm:$0xff] %vm134, %v5097
    %5154 = vst.msk [vmem:[#allocation3 + $0x28] sm:$0xff] %vm134, %v5098
    %5155 = vst.msk [vmem:[#allocation3 + $0x30] sm:$0xff] %vm134, %v5099
    %5156 = vst.msk [vmem:[#allocation3 + $0x38] sm:$0xff] %vm134, %v5100
    %5157 = vst.msk [vmem:[#allocation3 + $0x40] sm:$0xff] %vm134, %v5101
    %5158 = vst.msk [vmem:[#allocation3 + $0x48] sm:$0xff] %vm134, %v5102
    %5159 = vst.msk [vmem:[#allocation3 + $0x50] sm:$0xff] %vm134, %v5103
    %5160 = vst.msk [vmem:[#allocation3 + $0x58] sm:$0xff] %vm134, %v5104
    %5161 = vst.msk [vmem:[#allocation3 + $0x60] sm:$0xff] %vm134, %v5105
    %5162 = vst.msk [vmem:[#allocation3 + $0x68] sm:$0xff] %vm134, %v5106
    %5163 = vst.msk [vmem:[#allocation3 + $0x70] sm:$0xff] %vm134, %v5107
    %5164 = vst.msk [vmem:[#allocation3 + $0x78] sm:$0xff] %vm134, %v5108
    %5165 = vst.msk [vmem:[#allocation3 + $0x80] sm:$0xff] %vm134, %v5109
    %5166 = vst.msk [vmem:[#allocation3 + $0x88] sm:$0xff] %vm134, %v5110
    %5167 = vst.msk [vmem:[#allocation3 + $0x90] sm:$0xff] %vm134, %v5111
    %5168 = vst.msk [vmem:[#allocation3 + $0x98] sm:$0xff] %vm134, %v5112
    %5169 = vst.msk [vmem:[#allocation3 + $0xa0] sm:$0xff] %vm134, %v5113
    %5170 = vst.msk [vmem:[#allocation3 + $0xa8] sm:$0xff] %vm134, %v5114
    %5171 = vst.msk [vmem:[#allocation3 + $0xb0] sm:$0xff] %vm134, %v5115
    %5172 = vst.msk [vmem:[#allocation3 + $0xb8] sm:$0xff] %vm134, %v5116
    %5173 = vst.msk [vmem:[#allocation3 + $0xc0] sm:$0xff] %vm134, %v5117
    %5174 = vst.msk [vmem:[#allocation3 + $0xc8] sm:$0xff] %vm134, %v5118
    %5175 = vst.msk [vmem:[#allocation3 + $0xd0] sm:$0xff] %vm134, %v5119
    %5176 = vst.msk [vmem:[#allocation3 + $0xd8] sm:$0xff] %vm134, %v5120
    %5177 = vst.msk [vmem:[#allocation3 + $0xe0] sm:$0xff] %vm134, %v5121
    %5178 = vst.msk [vmem:[#allocation3 + $0xe8] sm:$0xff] %vm134, %v5122
    %5179 = vst.msk [vmem:[#allocation3 + $0xf0] sm:$0xff] %vm134, %v5123
    %5180 = vst.msk [vmem:[#allocation3 + $0xf8] sm:$0xff] %vm134, %v5124
    %5181 = vst.msk [vmem:[#allocation3 + $0x100] sm:$0xff] %vm134, %v5125
    %5182 = vst.msk [vmem:[#allocation3 + $0x108] sm:$0xff] %vm134, %v5126
    %5183 = vst.msk [vmem:[#allocation3 + $0x110] sm:$0xff] %vm134, %v5127
    %5184 = vst.msk [vmem:[#allocation3 + $0x118] sm:$0xff] %vm134, %v5128
    %5185 = vst.msk [vmem:[#allocation3 + $0x120] sm:$0xff] %vm134, %v5129
    %5186 = vst.msk [vmem:[#allocation3 + $0x128] sm:$0xff] %vm134, %v5130
    %5187 = vst.msk [vmem:[#allocation3 + $0x130] sm:$0xff] %vm134, %v5131
    %5188 = vst.msk [vmem:[#allocation3 + $0x138] sm:$0xff] %vm134, %v5132
    %5189 = vst.msk [vmem:[#allocation3 + $0x140] sm:$0xff] %vm134, %v5133
    %5190 = vst.msk [vmem:[#allocation3 + $0x148] sm:$0xff] %vm134, %v5134
    %5191 = vst.msk [vmem:[#allocation3 + $0x150] sm:$0xff] %vm134, %v5135
    %5192 = vst.msk [vmem:[#allocation3 + $0x158] sm:$0xff] %vm134, %v5136
    %5193 = vst.msk [vmem:[#allocation3 + $0x160] sm:$0xff] %vm134, %v5137
    %5194 = vst.msk [vmem:[#allocation3 + $0x168] sm:$0xff] %vm134, %v5138
    %5195 = vst.msk [vmem:[#allocation3 + $0x170] sm:$0xff] %vm134, %v5139
    %5196 = vst.msk [vmem:[#allocation3 + $0x178] sm:$0xff] %vm134, %v5140
    %5197 = vst.msk [vmem:[#allocation3 + $0x180] sm:$0xff] %vm134, %v5141
    %5198 = vst.msk [vmem:[#allocation3 + $0x188] sm:$0xff] %vm134, %v5142
    %5199 = vst.msk [vmem:[#allocation3 + $0x190] sm:$0xff] %vm134, %v5143
    %5200 = vst.msk [vmem:[#allocation3 + $0x198] sm:$0xff] %vm134, %v5144
    %5201 = vst.msk [vmem:[#allocation3 + $0x1a0] sm:$0xff] %vm134, %v5145
    %5202 = vst.msk [vmem:[#allocation3 + $0x1a8] sm:$0xff] %vm134, %v5146
    %5203 = vst.msk [vmem:[#allocation3 + $0x1b0] sm:$0xff] %vm134, %v5147
    %5204 = vst.msk [vmem:[#allocation3 + $0x1b8] sm:$0xff] %vm134, %v5148
    %v5205 = vld [vmem:[#allocation3] sm:$0xff]
    %v5206 = vld [vmem:[#allocation3 + $0x8] sm:$0xff]
    %v5207 = vld [vmem:[#allocation3 + $0x10] sm:$0xff]
    %v5208 = vld [vmem:[#allocation3 + $0x18] sm:$0xff]
    %v5209 = vld [vmem:[#allocation3 + $0x20] sm:$0xff]
    %v5210 = vld [vmem:[#allocation3 + $0x28] sm:$0xff]
    %v5211 = vld [vmem:[#allocation3 + $0x30] sm:$0xff]
    %v5212 = vld [vmem:[#allocation3 + $0x38] sm:$0xff]
    %v5213 = vld [vmem:[#allocation3 + $0x40] sm:$0xff]
    %v5214 = vld [vmem:[#allocation3 + $0x48] sm:$0xff]
    %v5215 = vld [vmem:[#allocation3 + $0x50] sm:$0xff]
    %v5216 = vld [vmem:[#allocation3 + $0x58] sm:$0xff]
    %v5217 = vld [vmem:[#allocation3 + $0x60] sm:$0xff]
    %v5218 = vld [vmem:[#allocation3 + $0x68] sm:$0xff]
    %v5219 = vld [vmem:[#allocation3 + $0x70] sm:$0xff]
    %v5220 = vld [vmem:[#allocation3 + $0x78] sm:$0xff]
    %v5221 = vld [vmem:[#allocation3 + $0x80] sm:$0xff]
    %v5222 = vld [vmem:[#allocation3 + $0x88] sm:$0xff]
    %v5223 = vld [vmem:[#allocation3 + $0x90] sm:$0xff]
    %v5224 = vld [vmem:[#allocation3 + $0x98] sm:$0xff]
    %v5225 = vld [vmem:[#allocation3 + $0xa0] sm:$0xff]
    %v5226 = vld [vmem:[#allocation3 + $0xa8] sm:$0xff]
    %v5227 = vld [vmem:[#allocation3 + $0xb0] sm:$0xff]
    %v5228 = vld [vmem:[#allocation3 + $0xb8] sm:$0xff]
    %v5229 = vld [vmem:[#allocation3 + $0xc0] sm:$0xff]
    %v5230 = vld [vmem:[#allocation3 + $0xc8] sm:$0xff]
    %v5231 = vld [vmem:[#allocation3 + $0xd0] sm:$0xff]
    %v5232 = vld [vmem:[#allocation3 + $0xd8] sm:$0xff]
    %v5233 = vld [vmem:[#allocation3 + $0xe0] sm:$0xff]
    %v5234 = vld [vmem:[#allocation3 + $0xe8] sm:$0xff]
    %v5235 = vld [vmem:[#allocation3 + $0xf0] sm:$0xff]
    %v5236 = vld [vmem:[#allocation3 + $0xf8] sm:$0xff]
    %v5237 = vld [vmem:[#allocation3 + $0x100] sm:$0xff]
    %v5238 = vld [vmem:[#allocation3 + $0x108] sm:$0xff]
    %v5239 = vld [vmem:[#allocation3 + $0x110] sm:$0xff]
    %v5240 = vld [vmem:[#allocation3 + $0x118] sm:$0xff]
    %v5241 = vld [vmem:[#allocation3 + $0x120] sm:$0xff]
    %v5242 = vld [vmem:[#allocation3 + $0x128] sm:$0xff]
    %v5243 = vld [vmem:[#allocation3 + $0x130] sm:$0xff]
    %v5244 = vld [vmem:[#allocation3 + $0x138] sm:$0xff]
    %v5245 = vld [vmem:[#allocation3 + $0x140] sm:$0xff]
    %v5246 = vld [vmem:[#allocation3 + $0x148] sm:$0xff]
    %v5247 = vld [vmem:[#allocation3 + $0x150] sm:$0xff]
    %v5248 = vld [vmem:[#allocation3 + $0x158] sm:$0xff]
    %v5249 = vld [vmem:[#allocation3 + $0x160] sm:$0xff]
    %v5250 = vld [vmem:[#allocation3 + $0x168] sm:$0xff]
    %v5251 = vld [vmem:[#allocation3 + $0x170] sm:$0xff]
    %v5252 = vld [vmem:[#allocation3 + $0x178] sm:$0xff]
    %v5253 = vld [vmem:[#allocation3 + $0x180] sm:$0xff]
    %v5254 = vld [vmem:[#allocation3 + $0x188] sm:$0xff]
    %v5255 = vld [vmem:[#allocation3 + $0x190] sm:$0xff]
    %v5256 = vld [vmem:[#allocation3 + $0x198] sm:$0xff]
    %v5257 = vld [vmem:[#allocation3 + $0x1a0] sm:$0xff]
    %v5258 = vld [vmem:[#allocation3 + $0x1a8] sm:$0xff]
    %v5259 = vld [vmem:[#allocation3 + $0x1b0] sm:$0xff]
    %v5260 = vld [vmem:[#allocation3 + $0x1b8] sm:$0xff]
    %v5261 = vld [vmem:[#allocation8] sm:$0xff]
    %v5262 = vld [vmem:[#allocation8 + $0x8] sm:$0xff]
    %v5263 = vld [vmem:[#allocation8 + $0x10] sm:$0xff]
    %v5264 = vld [vmem:[#allocation8 + $0x18] sm:$0xff]
    %v5265 = vld [vmem:[#allocation8 + $0x20] sm:$0xff]
    %v5266 = vld [vmem:[#allocation8 + $0x28] sm:$0xff]
    %v5267 = vld [vmem:[#allocation8 + $0x30] sm:$0xff]
    %v5268 = vld [vmem:[#allocation8 + $0x38] sm:$0xff]
    %v5269 = vld [vmem:[#allocation3 + $0x1] sm:$0xff]
    %v5270 = vld [vmem:[#allocation3 + $0x9] sm:$0xff]
    %v5271 = vld [vmem:[#allocation3 + $0x11] sm:$0xff]
    %v5272 = vld [vmem:[#allocation3 + $0x19] sm:$0xff]
    %v5273 = vld [vmem:[#allocation3 + $0x21] sm:$0xff]
    %v5274 = vld [vmem:[#allocation3 + $0x29] sm:$0xff]
    %v5275 = vld [vmem:[#allocation3 + $0x31] sm:$0xff]
    %v5276 = vld [vmem:[#allocation3 + $0x39] sm:$0xff]
    %v5277 = vld [vmem:[#allocation3 + $0x41] sm:$0xff]
    %v5278 = vld [vmem:[#allocation3 + $0x49] sm:$0xff]
    %v5279 = vld [vmem:[#allocation3 + $0x51] sm:$0xff]
    %v5280 = vld [vmem:[#allocation3 + $0x59] sm:$0xff]
    %v5281 = vld [vmem:[#allocation3 + $0x61] sm:$0xff]
    %v5282 = vld [vmem:[#allocation3 + $0x69] sm:$0xff]
    %v5283 = vld [vmem:[#allocation3 + $0x71] sm:$0xff]
    %v5284 = vld [vmem:[#allocation3 + $0x79] sm:$0xff]
    %v5285 = vld [vmem:[#allocation3 + $0x81] sm:$0xff]
    %v5286 = vld [vmem:[#allocation3 + $0x89] sm:$0xff]
    %v5287 = vld [vmem:[#allocation3 + $0x91] sm:$0xff]
    %v5288 = vld [vmem:[#allocation3 + $0x99] sm:$0xff]
    %v5289 = vld [vmem:[#allocation3 + $0xa1] sm:$0xff]
    %v5290 = vld [vmem:[#allocation3 + $0xa9] sm:$0xff]
    %v5291 = vld [vmem:[#allocation3 + $0xb1] sm:$0xff]
    %v5292 = vld [vmem:[#allocation3 + $0xb9] sm:$0xff]
    %v5293 = vld [vmem:[#allocation3 + $0xc1] sm:$0xff]
    %v5294 = vld [vmem:[#allocation3 + $0xc9] sm:$0xff]
    %v5295 = vld [vmem:[#allocation3 + $0xd1] sm:$0xff]
    %v5296 = vld [vmem:[#allocation3 + $0xd9] sm:$0xff]
    %v5297 = vld [vmem:[#allocation3 + $0xe1] sm:$0xff]
    %v5298 = vld [vmem:[#allocation3 + $0xe9] sm:$0xff]
    %v5299 = vld [vmem:[#allocation3 + $0xf1] sm:$0xff]
    %v5300 = vld [vmem:[#allocation3 + $0xf9] sm:$0xff]
    %v5301 = vld [vmem:[#allocation3 + $0x101] sm:$0xff]
    %v5302 = vld [vmem:[#allocation3 + $0x109] sm:$0xff]
    %v5303 = vld [vmem:[#allocation3 + $0x111] sm:$0xff]
    %v5304 = vld [vmem:[#allocation3 + $0x119] sm:$0xff]
    %v5305 = vld [vmem:[#allocation3 + $0x121] sm:$0xff]
    %v5306 = vld [vmem:[#allocation3 + $0x129] sm:$0xff]
    %v5307 = vld [vmem:[#allocation3 + $0x131] sm:$0xff]
    %v5308 = vld [vmem:[#allocation3 + $0x139] sm:$0xff]
    %v5309 = vld [vmem:[#allocation3 + $0x141] sm:$0xff]
    %v5310 = vld [vmem:[#allocation3 + $0x149] sm:$0xff]
    %v5311 = vld [vmem:[#allocation3 + $0x151] sm:$0xff]
    %v5312 = vld [vmem:[#allocation3 + $0x159] sm:$0xff]
    %v5313 = vld [vmem:[#allocation3 + $0x161] sm:$0xff]
    %v5314 = vld [vmem:[#allocation3 + $0x169] sm:$0xff]
    %v5315 = vld [vmem:[#allocation3 + $0x171] sm:$0xff]
    %v5316 = vld [vmem:[#allocation3 + $0x179] sm:$0xff]
    %v5317 = vld [vmem:[#allocation3 + $0x181] sm:$0xff]
    %v5318 = vld [vmem:[#allocation3 + $0x189] sm:$0xff]
    %v5319 = vld [vmem:[#allocation3 + $0x191] sm:$0xff]
    %v5320 = vld [vmem:[#allocation3 + $0x199] sm:$0xff]
    %v5321 = vld [vmem:[#allocation3 + $0x1a1] sm:$0xff]
    %v5322 = vld [vmem:[#allocation3 + $0x1a9] sm:$0xff]
    %v5323 = vld [vmem:[#allocation3 + $0x1b1] sm:$0xff]
    %v5324 = vld [vmem:[#allocation3 + $0x1b9] sm:$0xff]
    %v5325 = vld [vmem:[#allocation8 + $0x40] sm:$0xff]
    %v5326 = vld [vmem:[#allocation8 + $0x48] sm:$0xff]
    %v5327 = vld [vmem:[#allocation8 + $0x50] sm:$0xff]
    %v5328 = vld [vmem:[#allocation8 + $0x58] sm:$0xff]
    %v5329 = vld [vmem:[#allocation8 + $0x60] sm:$0xff]
    %v5330 = vld [vmem:[#allocation8 + $0x68] sm:$0xff]
    %v5331 = vld [vmem:[#allocation8 + $0x70] sm:$0xff]
    %v5332 = vld [vmem:[#allocation8 + $0x78] sm:$0xff]
    %v5334 = vsel %vm134, %v5269, 0
    %v5337 = vsel %vm134, %v5270, 0
    %v5340 = vsel %vm134, %v5271, 0
    %v5343 = vsel %vm134, %v5272, 0
    %v5346 = vsel %vm134, %v5273, 0
    %v5349 = vsel %vm134, %v5274, 0
    %v5352 = vsel %vm134, %v5275, 0
    %v5355 = vsel %vm134, %v5276, 0
    %v5358 = vsel %vm134, %v5277, 0
    %v5361 = vsel %vm134, %v5278, 0
    %v5364 = vsel %vm134, %v5279, 0
    %v5367 = vsel %vm134, %v5280, 0
    %v5370 = vsel %vm134, %v5281, 0
    %v5373 = vsel %vm134, %v5282, 0
    %v5376 = vsel %vm134, %v5283, 0
    %v5379 = vsel %vm134, %v5284, 0
    %v5382 = vsel %vm134, %v5285, 0
    %v5385 = vsel %vm134, %v5286, 0
    %v5388 = vsel %vm134, %v5287, 0
    %v5391 = vsel %vm134, %v5288, 0
    %v5394 = vsel %vm134, %v5289, 0
    %v5397 = vsel %vm134, %v5290, 0
    %v5400 = vsel %vm134, %v5291, 0
    %v5403 = vsel %vm134, %v5292, 0
    %v5406 = vsel %vm134, %v5293, 0
    %v5409 = vsel %vm134, %v5294, 0
    %v5412 = vsel %vm134, %v5295, 0
    %v5415 = vsel %vm134, %v5296, 0
    %v5418 = vsel %vm134, %v5297, 0
    %v5421 = vsel %vm134, %v5298, 0
    %v5424 = vsel %vm134, %v5299, 0
    %v5427 = vsel %vm134, %v5300, 0
    %v5430 = vsel %vm134, %v5301, 0
    %v5433 = vsel %vm134, %v5302, 0
    %v5436 = vsel %vm134, %v5303, 0
    %v5439 = vsel %vm134, %v5304, 0
    %v5442 = vsel %vm134, %v5305, 0
    %v5445 = vsel %vm134, %v5306, 0
    %v5448 = vsel %vm134, %v5307, 0
    %v5451 = vsel %vm134, %v5308, 0
    %v5454 = vsel %vm134, %v5309, 0
    %v5457 = vsel %vm134, %v5310, 0
    %v5460 = vsel %vm134, %v5311, 0
    %v5463 = vsel %vm134, %v5312, 0
    %v5466 = vsel %vm134, %v5313, 0
    %v5469 = vsel %vm134, %v5314, 0
    %v5472 = vsel %vm134, %v5315, 0
    %v5475 = vsel %vm134, %v5316, 0
    %v5478 = vsel %vm134, %v5317, 0
    %v5481 = vsel %vm134, %v5318, 0
    %v5484 = vsel %vm134, %v5319, 0
    %v5487 = vsel %vm134, %v5320, 0
    %v5490 = vsel %vm134, %v5321, 0
    %v5493 = vsel %vm134, %v5322, 0
    %v5496 = vsel %vm134, %v5323, 0
    %v5499 = vsel %vm134, %v5324, 0
    %5501 = vmatpush.msra.mxu0 0.0
    %5502 = vmatpush.msra.mxu0 0.0
    %5503 = vmatpush.msra.mxu0 0.0
    %5504 = vmatpush.msra.mxu0 0.0
    %5505 = vmatpush.msra.mxu0 0.0
    %5506 = vmatpush.msra.mxu0 0.0
    %5507 = vmatpush.msra.mxu0 0.0
    %5508 = vmatpush.msra.mxu0 0.0
    %5509 = vmatpush.msra.mxu0 %v5332
    %5510 = vmatpush.msra.mxu0 %v5331
    %5511 = vmatpush.msra.mxu0 %v5330
    %5512 = vmatpush.msra.mxu0 %v5329
    %5513 = vmatpush.msra.mxu0 %v5328
    %5514 = vmatpush.msra.mxu0 %v5327
    %5515 = vmatpush.msra.mxu0 %v5326
    %5516 = vmatpush.msra.mxu0 %v5325
    %5517 = vmatmul.f32.gmra.mxu0 %v5334
    %v5518 = vpop.f32.mrf.mxu0
    %v5519 = vadd.f32 0.0, %v5518
    %5520 = vmatmul.f32.gmra.mxu0 %v5337
    %v5521 = vpop.f32.mrf.mxu0
    %v5522 = vadd.f32 0.0, %v5521
    %5523 = vmatmul.f32.gmra.mxu0 %v5340
    %v5524 = vpop.f32.mrf.mxu0
    %v5525 = vadd.f32 0.0, %v5524
    %5526 = vmatmul.f32.gmra.mxu0 %v5343
    %v5527 = vpop.f32.mrf.mxu0
    %v5528 = vadd.f32 0.0, %v5527
    %5529 = vmatmul.f32.gmra.mxu0 %v5346
    %v5530 = vpop.f32.mrf.mxu0
    %v5531 = vadd.f32 0.0, %v5530
    %5532 = vmatmul.f32.gmra.mxu0 %v5349
    %v5533 = vpop.f32.mrf.mxu0
    %v5534 = vadd.f32 0.0, %v5533
    %5535 = vmatmul.f32.gmra.mxu0 %v5352
    %v5536 = vpop.f32.mrf.mxu0
    %v5537 = vadd.f32 0.0, %v5536
    %5538 = vmatmul.f32.gmra.mxu0 %v5355
    %v5539 = vpop.f32.mrf.mxu0
    %v5540 = vadd.f32 0.0, %v5539
    %5541 = vmatmul.f32.gmra.mxu0 %v5358
    %v5542 = vpop.f32.mrf.mxu0
    %v5543 = vadd.f32 0.0, %v5542
    %5544 = vmatmul.f32.gmra.mxu0 %v5361
    %v5545 = vpop.f32.mrf.mxu0
    %v5546 = vadd.f32 0.0, %v5545
    %5547 = vmatmul.f32.gmra.mxu0 %v5364
    %v5548 = vpop.f32.mrf.mxu0
    %v5549 = vadd.f32 0.0, %v5548
    %5550 = vmatmul.f32.gmra.mxu0 %v5367
    %v5551 = vpop.f32.mrf.mxu0
    %v5552 = vadd.f32 0.0, %v5551
    %5553 = vmatmul.f32.gmra.mxu0 %v5370
    %v5554 = vpop.f32.mrf.mxu0
    %v5555 = vadd.f32 0.0, %v5554
    %5556 = vmatmul.f32.gmra.mxu0 %v5373
    %v5557 = vpop.f32.mrf.mxu0
    %v5558 = vadd.f32 0.0, %v5557
    %5559 = vmatmul.f32.gmra.mxu0 %v5376
    %v5560 = vpop.f32.mrf.mxu0
    %v5561 = vadd.f32 0.0, %v5560
    %5562 = vmatmul.f32.gmra.mxu0 %v5379
    %v5563 = vpop.f32.mrf.mxu0
    %v5564 = vadd.f32 0.0, %v5563
    %5565 = vmatmul.f32.gmra.mxu0 %v5382
    %v5566 = vpop.f32.mrf.mxu0
    %v5567 = vadd.f32 0.0, %v5566
    %5568 = vmatmul.f32.gmra.mxu0 %v5385
    %v5569 = vpop.f32.mrf.mxu0
    %v5570 = vadd.f32 0.0, %v5569
    %5571 = vmatmul.f32.gmra.mxu0 %v5388
    %v5572 = vpop.f32.mrf.mxu0
    %v5573 = vadd.f32 0.0, %v5572
    %5574 = vmatmul.f32.gmra.mxu0 %v5391
    %v5575 = vpop.f32.mrf.mxu0
    %v5576 = vadd.f32 0.0, %v5575
    %5577 = vmatmul.f32.gmra.mxu0 %v5394
    %v5578 = vpop.f32.mrf.mxu0
    %v5579 = vadd.f32 0.0, %v5578
    %5580 = vmatmul.f32.gmra.mxu0 %v5397
    %v5581 = vpop.f32.mrf.mxu0
    %v5582 = vadd.f32 0.0, %v5581
    %5583 = vmatmul.f32.gmra.mxu0 %v5400
    %v5584 = vpop.f32.mrf.mxu0
    %v5585 = vadd.f32 0.0, %v5584
    %5586 = vmatmul.f32.gmra.mxu0 %v5403
    %v5587 = vpop.f32.mrf.mxu0
    %v5588 = vadd.f32 0.0, %v5587
    %5589 = vmatmul.f32.gmra.mxu0 %v5406
    %v5590 = vpop.f32.mrf.mxu0
    %v5591 = vadd.f32 0.0, %v5590
    %5592 = vmatmul.f32.gmra.mxu0 %v5409
    %v5593 = vpop.f32.mrf.mxu0
    %v5594 = vadd.f32 0.0, %v5593
    %5595 = vmatmul.f32.gmra.mxu0 %v5412
    %v5596 = vpop.f32.mrf.mxu0
    %v5597 = vadd.f32 0.0, %v5596
    %5598 = vmatmul.f32.gmra.mxu0 %v5415
    %v5599 = vpop.f32.mrf.mxu0
    %v5600 = vadd.f32 0.0, %v5599
    %5601 = vmatmul.f32.gmra.mxu0 %v5418
    %v5602 = vpop.f32.mrf.mxu0
    %v5603 = vadd.f32 0.0, %v5602
    %5604 = vmatmul.f32.gmra.mxu0 %v5421
    %v5605 = vpop.f32.mrf.mxu0
    %v5606 = vadd.f32 0.0, %v5605
    %5607 = vmatmul.f32.gmra.mxu0 %v5424
    %v5608 = vpop.f32.mrf.mxu0
    %v5609 = vadd.f32 0.0, %v5608
    %5610 = vmatmul.f32.gmra.mxu0 %v5427
    %v5611 = vpop.f32.mrf.mxu0
    %v5612 = vadd.f32 0.0, %v5611
    %5613 = vmatmul.f32.gmra.mxu0 %v5430
    %v5614 = vpop.f32.mrf.mxu0
    %v5615 = vadd.f32 0.0, %v5614
    %5616 = vmatmul.f32.gmra.mxu0 %v5433
    %v5617 = vpop.f32.mrf.mxu0
    %v5618 = vadd.f32 0.0, %v5617
    %5619 = vmatmul.f32.gmra.mxu0 %v5436
    %v5620 = vpop.f32.mrf.mxu0
    %v5621 = vadd.f32 0.0, %v5620
    %5622 = vmatmul.f32.gmra.mxu0 %v5439
    %v5623 = vpop.f32.mrf.mxu0
    %v5624 = vadd.f32 0.0, %v5623
    %5625 = vmatmul.f32.gmra.mxu0 %v5442
    %v5626 = vpop.f32.mrf.mxu0
    %v5627 = vadd.f32 0.0, %v5626
    %5628 = vmatmul.f32.gmra.mxu0 %v5445
    %v5629 = vpop.f32.mrf.mxu0
    %v5630 = vadd.f32 0.0, %v5629
    %5631 = vmatmul.f32.gmra.mxu0 %v5448
    %v5632 = vpop.f32.mrf.mxu0
    %v5633 = vadd.f32 0.0, %v5632
    %5634 = vmatmul.f32.gmra.mxu0 %v5451
    %v5635 = vpop.f32.mrf.mxu0
    %v5636 = vadd.f32 0.0, %v5635
    %5637 = vmatmul.f32.gmra.mxu0 %v5454
    %v5638 = vpop.f32.mrf.mxu0
    %v5639 = vadd.f32 0.0, %v5638
    %5640 = vmatmul.f32.gmra.mxu0 %v5457
    %v5641 = vpop.f32.mrf.mxu0
    %v5642 = vadd.f32 0.0, %v5641
    %5643 = vmatmul.f32.gmra.mxu0 %v5460
    %v5644 = vpop.f32.mrf.mxu0
    %v5645 = vadd.f32 0.0, %v5644
    %5646 = vmatmul.f32.gmra.mxu0 %v5463
    %v5647 = vpop.f32.mrf.mxu0
    %v5648 = vadd.f32 0.0, %v5647
    %5649 = vmatmul.f32.gmra.mxu0 %v5466
    %v5650 = vpop.f32.mrf.mxu0
    %v5651 = vadd.f32 0.0, %v5650
    %5652 = vmatmul.f32.gmra.mxu0 %v5469
    %v5653 = vpop.f32.mrf.mxu0
    %v5654 = vadd.f32 0.0, %v5653
    %5655 = vmatmul.f32.gmra.mxu0 %v5472
    %v5656 = vpop.f32.mrf.mxu0
    %v5657 = vadd.f32 0.0, %v5656
    %5658 = vmatmul.f32.gmra.mxu0 %v5475
    %v5659 = vpop.f32.mrf.mxu0
    %v5660 = vadd.f32 0.0, %v5659
    %5661 = vmatmul.f32.gmra.mxu0 %v5478
    %v5662 = vpop.f32.mrf.mxu0
    %v5663 = vadd.f32 0.0, %v5662
    %5664 = vmatmul.f32.gmra.mxu0 %v5481
    %v5665 = vpop.f32.mrf.mxu0
    %v5666 = vadd.f32 0.0, %v5665
    %5667 = vmatmul.f32.gmra.mxu0 %v5484
    %v5668 = vpop.f32.mrf.mxu0
    %v5669 = vadd.f32 0.0, %v5668
    %5670 = vmatmul.f32.gmra.mxu0 %v5487
    %v5671 = vpop.f32.mrf.mxu0
    %v5672 = vadd.f32 0.0, %v5671
    %5673 = vmatmul.f32.gmra.mxu0 %v5490
    %v5674 = vpop.f32.mrf.mxu0
    %v5675 = vadd.f32 0.0, %v5674
    %5676 = vmatmul.f32.gmra.mxu0 %v5493
    %v5677 = vpop.f32.mrf.mxu0
    %v5678 = vadd.f32 0.0, %v5677
    %5679 = vmatmul.f32.gmra.mxu0 %v5496
    %v5680 = vpop.f32.mrf.mxu0
    %v5681 = vadd.f32 0.0, %v5680
    %5682 = vmatmul.f32.gmra.mxu0 %v5499
    %v5683 = vpop.f32.mrf.mxu0
    %v5684 = vadd.f32 0.0, %v5683
    %5685 = vdwg.mxu0
    %v5687 = vsel %vm134, %v5205, 0
    %v5690 = vsel %vm134, %v5206, 0
    %v5693 = vsel %vm134, %v5207, 0
    %v5696 = vsel %vm134, %v5208, 0
    %v5699 = vsel %vm134, %v5209, 0
    %v5702 = vsel %vm134, %v5210, 0
    %v5705 = vsel %vm134, %v5211, 0
    %v5708 = vsel %vm134, %v5212, 0
    %v5711 = vsel %vm134, %v5213, 0
    %v5714 = vsel %vm134, %v5214, 0
    %v5717 = vsel %vm134, %v5215, 0
    %v5720 = vsel %vm134, %v5216, 0
    %v5723 = vsel %vm134, %v5217, 0
    %v5726 = vsel %vm134, %v5218, 0
    %v5729 = vsel %vm134, %v5219, 0
    %v5732 = vsel %vm134, %v5220, 0
    %v5735 = vsel %vm134, %v5221, 0
    %v5738 = vsel %vm134, %v5222, 0
    %v5741 = vsel %vm134, %v5223, 0
    %v5744 = vsel %vm134, %v5224, 0
    %v5747 = vsel %vm134, %v5225, 0
    %v5750 = vsel %vm134, %v5226, 0
    %v5753 = vsel %vm134, %v5227, 0
    %v5756 = vsel %vm134, %v5228, 0
    %v5759 = vsel %vm134, %v5229, 0
    %v5762 = vsel %vm134, %v5230, 0
    %v5765 = vsel %vm134, %v5231, 0
    %v5768 = vsel %vm134, %v5232, 0
    %v5771 = vsel %vm134, %v5233, 0
    %v5774 = vsel %vm134, %v5234, 0
    %v5777 = vsel %vm134, %v5235, 0
    %v5780 = vsel %vm134, %v5236, 0
    %v5783 = vsel %vm134, %v5237, 0
    %v5786 = vsel %vm134, %v5238, 0
    %v5789 = vsel %vm134, %v5239, 0
    %v5792 = vsel %vm134, %v5240, 0
    %v5795 = vsel %vm134, %v5241, 0
    %v5798 = vsel %vm134, %v5242, 0
    %v5801 = vsel %vm134, %v5243, 0
    %v5804 = vsel %vm134, %v5244, 0
    %v5807 = vsel %vm134, %v5245, 0
    %v5810 = vsel %vm134, %v5246, 0
    %v5813 = vsel %vm134, %v5247, 0
    %v5816 = vsel %vm134, %v5248, 0
    %v5819 = vsel %vm134, %v5249, 0
    %v5822 = vsel %vm134, %v5250, 0
    %v5825 = vsel %vm134, %v5251, 0
    %v5828 = vsel %vm134, %v5252, 0
    %v5831 = vsel %vm134, %v5253, 0
    %v5834 = vsel %vm134, %v5254, 0
    %v5837 = vsel %vm134, %v5255, 0
    %v5840 = vsel %vm134, %v5256, 0
    %v5843 = vsel %vm134, %v5257, 0
    %v5846 = vsel %vm134, %v5258, 0
    %v5849 = vsel %vm134, %v5259, 0
    %v5852 = vsel %vm134, %v5260, 0
    %5854 = vmatpush.msra.mxu0 0.0
    %5855 = vmatpush.msra.mxu0 0.0
    %5856 = vmatpush.msra.mxu0 0.0
    %5857 = vmatpush.msra.mxu0 0.0
    %5858 = vmatpush.msra.mxu0 0.0
    %5859 = vmatpush.msra.mxu0 0.0
    %5860 = vmatpush.msra.mxu0 0.0
    %5861 = vmatpush.msra.mxu0 0.0
    %5862 = vmatpush.msra.mxu0 %v5268
    %5863 = vmatpush.msra.mxu0 %v5267
    %5864 = vmatpush.msra.mxu0 %v5266
    %5865 = vmatpush.msra.mxu0 %v5265
    %5866 = vmatpush.msra.mxu0 %v5264
    %5867 = vmatpush.msra.mxu0 %v5263
    %5868 = vmatpush.msra.mxu0 %v5262
    %5869 = vmatpush.msra.mxu0 %v5261
    %5870 = vmatmul.f32.gmra.mxu0 %v5687
    %v5871 = vpop.f32.mrf.mxu0
    %v5872 = vadd.f32 %v5519, %v5871
    %5873 = vmatmul.f32.gmra.mxu0 %v5690
    %v5874 = vpop.f32.mrf.mxu0
    %v5875 = vadd.f32 %v5522, %v5874
    %5876 = vmatmul.f32.gmra.mxu0 %v5693
    %v5877 = vpop.f32.mrf.mxu0
    %v5878 = vadd.f32 %v5525, %v5877
    %5879 = vmatmul.f32.gmra.mxu0 %v5696
    %v5880 = vpop.f32.mrf.mxu0
    %v5881 = vadd.f32 %v5528, %v5880
    %5882 = vmatmul.f32.gmra.mxu0 %v5699
    %v5883 = vpop.f32.mrf.mxu0
    %v5884 = vadd.f32 %v5531, %v5883
    %5885 = vmatmul.f32.gmra.mxu0 %v5702
    %v5886 = vpop.f32.mrf.mxu0
    %v5887 = vadd.f32 %v5534, %v5886
    %5888 = vmatmul.f32.gmra.mxu0 %v5705
    %v5889 = vpop.f32.mrf.mxu0
    %v5890 = vadd.f32 %v5537, %v5889
    %5891 = vmatmul.f32.gmra.mxu0 %v5708
    %v5892 = vpop.f32.mrf.mxu0
    %v5893 = vadd.f32 %v5540, %v5892
    %5894 = vmatmul.f32.gmra.mxu0 %v5711
    %v5895 = vpop.f32.mrf.mxu0
    %v5896 = vadd.f32 %v5543, %v5895
    %5897 = vmatmul.f32.gmra.mxu0 %v5714
    %v5898 = vpop.f32.mrf.mxu0
    %v5899 = vadd.f32 %v5546, %v5898
    %5900 = vmatmul.f32.gmra.mxu0 %v5717
    %v5901 = vpop.f32.mrf.mxu0
    %v5902 = vadd.f32 %v5549, %v5901
    %5903 = vmatmul.f32.gmra.mxu0 %v5720
    %v5904 = vpop.f32.mrf.mxu0
    %v5905 = vadd.f32 %v5552, %v5904
    %5906 = vmatmul.f32.gmra.mxu0 %v5723
    %v5907 = vpop.f32.mrf.mxu0
    %v5908 = vadd.f32 %v5555, %v5907
    %5909 = vmatmul.f32.gmra.mxu0 %v5726
    %v5910 = vpop.f32.mrf.mxu0
    %v5911 = vadd.f32 %v5558, %v5910
    %5912 = vmatmul.f32.gmra.mxu0 %v5729
    %v5913 = vpop.f32.mrf.mxu0
    %v5914 = vadd.f32 %v5561, %v5913
    %5915 = vmatmul.f32.gmra.mxu0 %v5732
    %v5916 = vpop.f32.mrf.mxu0
    %v5917 = vadd.f32 %v5564, %v5916
    %5918 = vmatmul.f32.gmra.mxu0 %v5735
    %v5919 = vpop.f32.mrf.mxu0
    %v5920 = vadd.f32 %v5567, %v5919
    %5921 = vmatmul.f32.gmra.mxu0 %v5738
    %v5922 = vpop.f32.mrf.mxu0
    %v5923 = vadd.f32 %v5570, %v5922
    %5924 = vmatmul.f32.gmra.mxu0 %v5741
    %v5925 = vpop.f32.mrf.mxu0
    %v5926 = vadd.f32 %v5573, %v5925
    %5927 = vmatmul.f32.gmra.mxu0 %v5744
    %v5928 = vpop.f32.mrf.mxu0
    %v5929 = vadd.f32 %v5576, %v5928
    %5930 = vmatmul.f32.gmra.mxu0 %v5747
    %v5931 = vpop.f32.mrf.mxu0
    %v5932 = vadd.f32 %v5579, %v5931
    %5933 = vmatmul.f32.gmra.mxu0 %v5750
    %v5934 = vpop.f32.mrf.mxu0
    %v5935 = vadd.f32 %v5582, %v5934
    %5936 = vmatmul.f32.gmra.mxu0 %v5753
    %v5937 = vpop.f32.mrf.mxu0
    %v5938 = vadd.f32 %v5585, %v5937
    %5939 = vmatmul.f32.gmra.mxu0 %v5756
    %v5940 = vpop.f32.mrf.mxu0
    %v5941 = vadd.f32 %v5588, %v5940
    %5942 = vmatmul.f32.gmra.mxu0 %v5759
    %v5943 = vpop.f32.mrf.mxu0
    %v5944 = vadd.f32 %v5591, %v5943
    %5945 = vmatmul.f32.gmra.mxu0 %v5762
    %v5946 = vpop.f32.mrf.mxu0
    %v5947 = vadd.f32 %v5594, %v5946
    %5948 = vmatmul.f32.gmra.mxu0 %v5765
    %v5949 = vpop.f32.mrf.mxu0
    %v5950 = vadd.f32 %v5597, %v5949
    %5951 = vmatmul.f32.gmra.mxu0 %v5768
    %v5952 = vpop.f32.mrf.mxu0
    %v5953 = vadd.f32 %v5600, %v5952
    %5954 = vmatmul.f32.gmra.mxu0 %v5771
    %v5955 = vpop.f32.mrf.mxu0
    %v5956 = vadd.f32 %v5603, %v5955
    %5957 = vmatmul.f32.gmra.mxu0 %v5774
    %v5958 = vpop.f32.mrf.mxu0
    %v5959 = vadd.f32 %v5606, %v5958
    %5960 = vmatmul.f32.gmra.mxu0 %v5777
    %v5961 = vpop.f32.mrf.mxu0
    %v5962 = vadd.f32 %v5609, %v5961
    %5963 = vmatmul.f32.gmra.mxu0 %v5780
    %v5964 = vpop.f32.mrf.mxu0
    %v5965 = vadd.f32 %v5612, %v5964
    %5966 = vmatmul.f32.gmra.mxu0 %v5783
    %v5967 = vpop.f32.mrf.mxu0
    %v5968 = vadd.f32 %v5615, %v5967
    %5969 = vmatmul.f32.gmra.mxu0 %v5786
    %v5970 = vpop.f32.mrf.mxu0
    %v5971 = vadd.f32 %v5618, %v5970
    %5972 = vmatmul.f32.gmra.mxu0 %v5789
    %v5973 = vpop.f32.mrf.mxu0
    %v5974 = vadd.f32 %v5621, %v5973
    %5975 = vmatmul.f32.gmra.mxu0 %v5792
    %v5976 = vpop.f32.mrf.mxu0
    %v5977 = vadd.f32 %v5624, %v5976
    %5978 = vmatmul.f32.gmra.mxu0 %v5795
    %v5979 = vpop.f32.mrf.mxu0
    %v5980 = vadd.f32 %v5627, %v5979
    %5981 = vmatmul.f32.gmra.mxu0 %v5798
    %v5982 = vpop.f32.mrf.mxu0
    %v5983 = vadd.f32 %v5630, %v5982
    %5984 = vmatmul.f32.gmra.mxu0 %v5801
    %v5985 = vpop.f32.mrf.mxu0
    %v5986 = vadd.f32 %v5633, %v5985
    %5987 = vmatmul.f32.gmra.mxu0 %v5804
    %v5988 = vpop.f32.mrf.mxu0
    %v5989 = vadd.f32 %v5636, %v5988
    %5990 = vmatmul.f32.gmra.mxu0 %v5807
    %v5991 = vpop.f32.mrf.mxu0
    %v5992 = vadd.f32 %v5639, %v5991
    %5993 = vmatmul.f32.gmra.mxu0 %v5810
    %v5994 = vpop.f32.mrf.mxu0
    %v5995 = vadd.f32 %v5642, %v5994
    %5996 = vmatmul.f32.gmra.mxu0 %v5813
    %v5997 = vpop.f32.mrf.mxu0
    %v5998 = vadd.f32 %v5645, %v5997
    %5999 = vmatmul.f32.gmra.mxu0 %v5816
    %v6000 = vpop.f32.mrf.mxu0
    %v6001 = vadd.f32 %v5648, %v6000
    %6002 = vmatmul.f32.gmra.mxu0 %v5819
    %v6003 = vpop.f32.mrf.mxu0
    %v6004 = vadd.f32 %v5651, %v6003
    %6005 = vmatmul.f32.gmra.mxu0 %v5822
    %v6006 = vpop.f32.mrf.mxu0
    %v6007 = vadd.f32 %v5654, %v6006
    %6008 = vmatmul.f32.gmra.mxu0 %v5825
    %v6009 = vpop.f32.mrf.mxu0
    %v6010 = vadd.f32 %v5657, %v6009
    %6011 = vmatmul.f32.gmra.mxu0 %v5828
    %v6012 = vpop.f32.mrf.mxu0
    %v6013 = vadd.f32 %v5660, %v6012
    %6014 = vmatmul.f32.gmra.mxu0 %v5831
    %v6015 = vpop.f32.mrf.mxu0
    %v6016 = vadd.f32 %v5663, %v6015
    %6017 = vmatmul.f32.gmra.mxu0 %v5834
    %v6018 = vpop.f32.mrf.mxu0
    %v6019 = vadd.f32 %v5666, %v6018
    %6020 = vmatmul.f32.gmra.mxu0 %v5837
    %v6021 = vpop.f32.mrf.mxu0
    %v6022 = vadd.f32 %v5669, %v6021
    %6023 = vmatmul.f32.gmra.mxu0 %v5840
    %v6024 = vpop.f32.mrf.mxu0
    %v6025 = vadd.f32 %v5672, %v6024
    %6026 = vmatmul.f32.gmra.mxu0 %v5843
    %v6027 = vpop.f32.mrf.mxu0
    %v6028 = vadd.f32 %v5675, %v6027
    %6029 = vmatmul.f32.gmra.mxu0 %v5846
    %v6030 = vpop.f32.mrf.mxu0
    %v6031 = vadd.f32 %v5678, %v6030
    %6032 = vmatmul.f32.gmra.mxu0 %v5849
    %v6033 = vpop.f32.mrf.mxu0
    %v6034 = vadd.f32 %v5681, %v6033
    %6035 = vmatmul.f32.gmra.mxu0 %v5852
    %v6036 = vpop.f32.mrf.mxu0
    %v6037 = vadd.f32 %v5684, %v6036
    %6038 = vdwg.mxu0
    %v6039 = vld [vmem:[#allocation3 + $0x2] sm:$0xff]
    %v6040 = vld [vmem:[#allocation3 + $0xa] sm:$0xff]
    %v6041 = vld [vmem:[#allocation3 + $0x12] sm:$0xff]
    %v6042 = vld [vmem:[#allocation3 + $0x1a] sm:$0xff]
    %v6043 = vld [vmem:[#allocation3 + $0x22] sm:$0xff]
    %v6044 = vld [vmem:[#allocation3 + $0x2a] sm:$0xff]
    %v6045 = vld [vmem:[#allocation3 + $0x32] sm:$0xff]
    %v6046 = vld [vmem:[#allocation3 + $0x3a] sm:$0xff]
    %v6047 = vld [vmem:[#allocation3 + $0x42] sm:$0xff]
    %v6048 = vld [vmem:[#allocation3 + $0x4a] sm:$0xff]
    %v6049 = vld [vmem:[#allocation3 + $0x52] sm:$0xff]
    %v6050 = vld [vmem:[#allocation3 + $0x5a] sm:$0xff]
    %v6051 = vld [vmem:[#allocation3 + $0x62] sm:$0xff]
    %v6052 = vld [vmem:[#allocation3 + $0x6a] sm:$0xff]
    %v6053 = vld [vmem:[#allocation3 + $0x72] sm:$0xff]
    %v6054 = vld [vmem:[#allocation3 + $0x7a] sm:$0xff]
    %v6055 = vld [vmem:[#allocation3 + $0x82] sm:$0xff]
    %v6056 = vld [vmem:[#allocation3 + $0x8a] sm:$0xff]
    %v6057 = vld [vmem:[#allocation3 + $0x92] sm:$0xff]
    %v6058 = vld [vmem:[#allocation3 + $0x9a] sm:$0xff]
    %v6059 = vld [vmem:[#allocation3 + $0xa2] sm:$0xff]
    %v6060 = vld [vmem:[#allocation3 + $0xaa] sm:$0xff]
    %v6061 = vld [vmem:[#allocation3 + $0xb2] sm:$0xff]
    %v6062 = vld [vmem:[#allocation3 + $0xba] sm:$0xff]
    %v6063 = vld [vmem:[#allocation3 + $0xc2] sm:$0xff]
    %v6064 = vld [vmem:[#allocation3 + $0xca] sm:$0xff]
    %v6065 = vld [vmem:[#allocation3 + $0xd2] sm:$0xff]
    %v6066 = vld [vmem:[#allocation3 + $0xda] sm:$0xff]
    %v6067 = vld [vmem:[#allocation3 + $0xe2] sm:$0xff]
    %v6068 = vld [vmem:[#allocation3 + $0xea] sm:$0xff]
    %v6069 = vld [vmem:[#allocation3 + $0xf2] sm:$0xff]
    %v6070 = vld [vmem:[#allocation3 + $0xfa] sm:$0xff]
    %v6071 = vld [vmem:[#allocation3 + $0x102] sm:$0xff]
    %v6072 = vld [vmem:[#allocation3 + $0x10a] sm:$0xff]
    %v6073 = vld [vmem:[#allocation3 + $0x112] sm:$0xff]
    %v6074 = vld [vmem:[#allocation3 + $0x11a] sm:$0xff]
    %v6075 = vld [vmem:[#allocation3 + $0x122] sm:$0xff]
    %v6076 = vld [vmem:[#allocation3 + $0x12a] sm:$0xff]
    %v6077 = vld [vmem:[#allocation3 + $0x132] sm:$0xff]
    %v6078 = vld [vmem:[#allocation3 + $0x13a] sm:$0xff]
    %v6079 = vld [vmem:[#allocation3 + $0x142] sm:$0xff]
    %v6080 = vld [vmem:[#allocation3 + $0x14a] sm:$0xff]
    %v6081 = vld [vmem:[#allocation3 + $0x152] sm:$0xff]
    %v6082 = vld [vmem:[#allocation3 + $0x15a] sm:$0xff]
    %v6083 = vld [vmem:[#allocation3 + $0x162] sm:$0xff]
    %v6084 = vld [vmem:[#allocation3 + $0x16a] sm:$0xff]
    %v6085 = vld [vmem:[#allocation3 + $0x172] sm:$0xff]
    %v6086 = vld [vmem:[#allocation3 + $0x17a] sm:$0xff]
    %v6087 = vld [vmem:[#allocation3 + $0x182] sm:$0xff]
    %v6088 = vld [vmem:[#allocation3 + $0x18a] sm:$0xff]
    %v6089 = vld [vmem:[#allocation3 + $0x192] sm:$0xff]
    %v6090 = vld [vmem:[#allocation3 + $0x19a] sm:$0xff]
    %v6091 = vld [vmem:[#allocation3 + $0x1a2] sm:$0xff]
    %v6092 = vld [vmem:[#allocation3 + $0x1aa] sm:$0xff]
    %v6093 = vld [vmem:[#allocation3 + $0x1b2] sm:$0xff]
    %v6094 = vld [vmem:[#allocation3 + $0x1ba] sm:$0xff]
    %v6095 = vld [vmem:[#allocation8 + $0x80] sm:$0xff]
    %v6096 = vld [vmem:[#allocation8 + $0x88] sm:$0xff]
    %v6097 = vld [vmem:[#allocation8 + $0x90] sm:$0xff]
    %v6098 = vld [vmem:[#allocation8 + $0x98] sm:$0xff]
    %v6099 = vld [vmem:[#allocation8 + $0xa0] sm:$0xff]
    %v6100 = vld [vmem:[#allocation8 + $0xa8] sm:$0xff]
    %v6101 = vld [vmem:[#allocation8 + $0xb0] sm:$0xff]
    %v6102 = vld [vmem:[#allocation8 + $0xb8] sm:$0xff]
    %v6104 = vsel %vm134, %v6039, 0
    %v6107 = vsel %vm134, %v6040, 0
    %v6110 = vsel %vm134, %v6041, 0
    %v6113 = vsel %vm134, %v6042, 0
    %v6116 = vsel %vm134, %v6043, 0
    %v6119 = vsel %vm134, %v6044, 0
    %v6122 = vsel %vm134, %v6045, 0
    %v6125 = vsel %vm134, %v6046, 0
    %v6128 = vsel %vm134, %v6047, 0
    %v6131 = vsel %vm134, %v6048, 0
    %v6134 = vsel %vm134, %v6049, 0
    %v6137 = vsel %vm134, %v6050, 0
    %v6140 = vsel %vm134, %v6051, 0
    %v6143 = vsel %vm134, %v6052, 0
    %v6146 = vsel %vm134, %v6053, 0
    %v6149 = vsel %vm134, %v6054, 0
    %v6152 = vsel %vm134, %v6055, 0
    %v6155 = vsel %vm134, %v6056, 0
    %v6158 = vsel %vm134, %v6057, 0
    %v6161 = vsel %vm134, %v6058, 0
    %v6164 = vsel %vm134, %v6059, 0
    %v6167 = vsel %vm134, %v6060, 0
    %v6170 = vsel %vm134, %v6061, 0
    %v6173 = vsel %vm134, %v6062, 0
    %v6176 = vsel %vm134, %v6063, 0
    %v6179 = vsel %vm134, %v6064, 0
    %v6182 = vsel %vm134, %v6065, 0
    %v6185 = vsel %vm134, %v6066, 0
    %v6188 = vsel %vm134, %v6067, 0
    %v6191 = vsel %vm134, %v6068, 0
    %v6194 = vsel %vm134, %v6069, 0
    %v6197 = vsel %vm134, %v6070, 0
    %v6200 = vsel %vm134, %v6071, 0
    %v6203 = vsel %vm134, %v6072, 0
    %v6206 = vsel %vm134, %v6073, 0
    %v6209 = vsel %vm134, %v6074, 0
    %v6212 = vsel %vm134, %v6075, 0
    %v6215 = vsel %vm134, %v6076, 0
    %v6218 = vsel %vm134, %v6077, 0
    %v6221 = vsel %vm134, %v6078, 0
    %v6224 = vsel %vm134, %v6079, 0
    %v6227 = vsel %vm134, %v6080, 0
    %v6230 = vsel %vm134, %v6081, 0
    %v6233 = vsel %vm134, %v6082, 0
    %v6236 = vsel %vm134, %v6083, 0
    %v6239 = vsel %vm134, %v6084, 0
    %v6242 = vsel %vm134, %v6085, 0
    %v6245 = vsel %vm134, %v6086, 0
    %v6248 = vsel %vm134, %v6087, 0
    %v6251 = vsel %vm134, %v6088, 0
    %v6254 = vsel %vm134, %v6089, 0
    %v6257 = vsel %vm134, %v6090, 0
    %v6260 = vsel %vm134, %v6091, 0
    %v6263 = vsel %vm134, %v6092, 0
    %v6266 = vsel %vm134, %v6093, 0
    %v6269 = vsel %vm134, %v6094, 0
    %6271 = vmatpush.msra.mxu0 0.0
    %6272 = vmatpush.msra.mxu0 0.0
    %6273 = vmatpush.msra.mxu0 0.0
    %6274 = vmatpush.msra.mxu0 0.0
    %6275 = vmatpush.msra.mxu0 0.0
    %6276 = vmatpush.msra.mxu0 0.0
    %6277 = vmatpush.msra.mxu0 0.0
    %6278 = vmatpush.msra.mxu0 0.0
    %6279 = vmatpush.msra.mxu0 %v6102
    %6280 = vmatpush.msra.mxu0 %v6101
    %6281 = vmatpush.msra.mxu0 %v6100
    %6282 = vmatpush.msra.mxu0 %v6099
    %6283 = vmatpush.msra.mxu0 %v6098
    %6284 = vmatpush.msra.mxu0 %v6097
    %6285 = vmatpush.msra.mxu0 %v6096
    %6286 = vmatpush.msra.mxu0 %v6095
    %6287 = vmatmul.f32.gmra.mxu0 %v6104
    %v6288 = vpop.f32.mrf.mxu0
    %v6289 = vadd.f32 0.0, %v6288
    %6290 = vmatmul.f32.gmra.mxu0 %v6107
    %v6291 = vpop.f32.mrf.mxu0
    %v6292 = vadd.f32 0.0, %v6291
    %6293 = vmatmul.f32.gmra.mxu0 %v6110
    %v6294 = vpop.f32.mrf.mxu0
    %v6295 = vadd.f32 0.0, %v6294
    %6296 = vmatmul.f32.gmra.mxu0 %v6113
    %v6297 = vpop.f32.mrf.mxu0
    %v6298 = vadd.f32 0.0, %v6297
    %6299 = vmatmul.f32.gmra.mxu0 %v6116
    %v6300 = vpop.f32.mrf.mxu0
    %v6301 = vadd.f32 0.0, %v6300
    %6302 = vmatmul.f32.gmra.mxu0 %v6119
    %v6303 = vpop.f32.mrf.mxu0
    %v6304 = vadd.f32 0.0, %v6303
    %6305 = vmatmul.f32.gmra.mxu0 %v6122
    %v6306 = vpop.f32.mrf.mxu0
    %v6307 = vadd.f32 0.0, %v6306
    %6308 = vmatmul.f32.gmra.mxu0 %v6125
    %v6309 = vpop.f32.mrf.mxu0
    %v6310 = vadd.f32 0.0, %v6309
    %6311 = vmatmul.f32.gmra.mxu0 %v6128
    %v6312 = vpop.f32.mrf.mxu0
    %v6313 = vadd.f32 0.0, %v6312
    %6314 = vmatmul.f32.gmra.mxu0 %v6131
    %v6315 = vpop.f32.mrf.mxu0
    %v6316 = vadd.f32 0.0, %v6315
    %6317 = vmatmul.f32.gmra.mxu0 %v6134
    %v6318 = vpop.f32.mrf.mxu0
    %v6319 = vadd.f32 0.0, %v6318
    %6320 = vmatmul.f32.gmra.mxu0 %v6137
    %v6321 = vpop.f32.mrf.mxu0
    %v6322 = vadd.f32 0.0, %v6321
    %6323 = vmatmul.f32.gmra.mxu0 %v6140
    %v6324 = vpop.f32.mrf.mxu0
    %v6325 = vadd.f32 0.0, %v6324
    %6326 = vmatmul.f32.gmra.mxu0 %v6143
    %v6327 = vpop.f32.mrf.mxu0
    %v6328 = vadd.f32 0.0, %v6327
    %6329 = vmatmul.f32.gmra.mxu0 %v6146
    %v6330 = vpop.f32.mrf.mxu0
    %v6331 = vadd.f32 0.0, %v6330
    %6332 = vmatmul.f32.gmra.mxu0 %v6149
    %v6333 = vpop.f32.mrf.mxu0
    %v6334 = vadd.f32 0.0, %v6333
    %6335 = vmatmul.f32.gmra.mxu0 %v6152
    %v6336 = vpop.f32.mrf.mxu0
    %v6337 = vadd.f32 0.0, %v6336
    %6338 = vmatmul.f32.gmra.mxu0 %v6155
    %v6339 = vpop.f32.mrf.mxu0
    %v6340 = vadd.f32 0.0, %v6339
    %6341 = vmatmul.f32.gmra.mxu0 %v6158
    %v6342 = vpop.f32.mrf.mxu0
    %v6343 = vadd.f32 0.0, %v6342
    %6344 = vmatmul.f32.gmra.mxu0 %v6161
    %v6345 = vpop.f32.mrf.mxu0
    %v6346 = vadd.f32 0.0, %v6345
    %6347 = vmatmul.f32.gmra.mxu0 %v6164
    %v6348 = vpop.f32.mrf.mxu0
    %v6349 = vadd.f32 0.0, %v6348
    %6350 = vmatmul.f32.gmra.mxu0 %v6167
    %v6351 = vpop.f32.mrf.mxu0
    %v6352 = vadd.f32 0.0, %v6351
    %6353 = vmatmul.f32.gmra.mxu0 %v6170
    %v6354 = vpop.f32.mrf.mxu0
    %v6355 = vadd.f32 0.0, %v6354
    %6356 = vmatmul.f32.gmra.mxu0 %v6173
    %v6357 = vpop.f32.mrf.mxu0
    %v6358 = vadd.f32 0.0, %v6357
    %6359 = vmatmul.f32.gmra.mxu0 %v6176
    %v6360 = vpop.f32.mrf.mxu0
    %v6361 = vadd.f32 0.0, %v6360
    %6362 = vmatmul.f32.gmra.mxu0 %v6179
    %v6363 = vpop.f32.mrf.mxu0
    %v6364 = vadd.f32 0.0, %v6363
    %6365 = vmatmul.f32.gmra.mxu0 %v6182
    %v6366 = vpop.f32.mrf.mxu0
    %v6367 = vadd.f32 0.0, %v6366
    %6368 = vmatmul.f32.gmra.mxu0 %v6185
    %v6369 = vpop.f32.mrf.mxu0
    %v6370 = vadd.f32 0.0, %v6369
    %6371 = vmatmul.f32.gmra.mxu0 %v6188
    %v6372 = vpop.f32.mrf.mxu0
    %v6373 = vadd.f32 0.0, %v6372
    %6374 = vmatmul.f32.gmra.mxu0 %v6191
    %v6375 = vpop.f32.mrf.mxu0
    %v6376 = vadd.f32 0.0, %v6375
    %6377 = vmatmul.f32.gmra.mxu0 %v6194
    %v6378 = vpop.f32.mrf.mxu0
    %v6379 = vadd.f32 0.0, %v6378
    %6380 = vmatmul.f32.gmra.mxu0 %v6197
    %v6381 = vpop.f32.mrf.mxu0
    %v6382 = vadd.f32 0.0, %v6381
    %6383 = vmatmul.f32.gmra.mxu0 %v6200
    %v6384 = vpop.f32.mrf.mxu0
    %v6385 = vadd.f32 0.0, %v6384
    %6386 = vmatmul.f32.gmra.mxu0 %v6203
    %v6387 = vpop.f32.mrf.mxu0
    %v6388 = vadd.f32 0.0, %v6387
    %6389 = vmatmul.f32.gmra.mxu0 %v6206
    %v6390 = vpop.f32.mrf.mxu0
    %v6391 = vadd.f32 0.0, %v6390
    %6392 = vmatmul.f32.gmra.mxu0 %v6209
    %v6393 = vpop.f32.mrf.mxu0
    %v6394 = vadd.f32 0.0, %v6393
    %6395 = vmatmul.f32.gmra.mxu0 %v6212
    %v6396 = vpop.f32.mrf.mxu0
    %v6397 = vadd.f32 0.0, %v6396
    %6398 = vmatmul.f32.gmra.mxu0 %v6215
    %v6399 = vpop.f32.mrf.mxu0
    %v6400 = vadd.f32 0.0, %v6399
    %6401 = vmatmul.f32.gmra.mxu0 %v6218
    %v6402 = vpop.f32.mrf.mxu0
    %v6403 = vadd.f32 0.0, %v6402
    %6404 = vmatmul.f32.gmra.mxu0 %v6221
    %v6405 = vpop.f32.mrf.mxu0
    %v6406 = vadd.f32 0.0, %v6405
    %6407 = vmatmul.f32.gmra.mxu0 %v6224
    %v6408 = vpop.f32.mrf.mxu0
    %v6409 = vadd.f32 0.0, %v6408
    %6410 = vmatmul.f32.gmra.mxu0 %v6227
    %v6411 = vpop.f32.mrf.mxu0
    %v6412 = vadd.f32 0.0, %v6411
    %6413 = vmatmul.f32.gmra.mxu0 %v6230
    %v6414 = vpop.f32.mrf.mxu0
    %v6415 = vadd.f32 0.0, %v6414
    %6416 = vmatmul.f32.gmra.mxu0 %v6233
    %v6417 = vpop.f32.mrf.mxu0
    %v6418 = vadd.f32 0.0, %v6417
    %6419 = vmatmul.f32.gmra.mxu0 %v6236
    %v6420 = vpop.f32.mrf.mxu0
    %v6421 = vadd.f32 0.0, %v6420
    %6422 = vmatmul.f32.gmra.mxu0 %v6239
    %v6423 = vpop.f32.mrf.mxu0
    %v6424 = vadd.f32 0.0, %v6423
    %6425 = vmatmul.f32.gmra.mxu0 %v6242
    %v6426 = vpop.f32.mrf.mxu0
    %v6427 = vadd.f32 0.0, %v6426
    %6428 = vmatmul.f32.gmra.mxu0 %v6245
    %v6429 = vpop.f32.mrf.mxu0
    %v6430 = vadd.f32 0.0, %v6429
    %6431 = vmatmul.f32.gmra.mxu0 %v6248
    %v6432 = vpop.f32.mrf.mxu0
    %v6433 = vadd.f32 0.0, %v6432
    %6434 = vmatmul.f32.gmra.mxu0 %v6251
    %v6435 = vpop.f32.mrf.mxu0
    %v6436 = vadd.f32 0.0, %v6435
    %6437 = vmatmul.f32.gmra.mxu0 %v6254
    %v6438 = vpop.f32.mrf.mxu0
    %v6439 = vadd.f32 0.0, %v6438
    %6440 = vmatmul.f32.gmra.mxu0 %v6257
    %v6441 = vpop.f32.mrf.mxu0
    %v6442 = vadd.f32 0.0, %v6441
    %6443 = vmatmul.f32.gmra.mxu0 %v6260
    %v6444 = vpop.f32.mrf.mxu0
    %v6445 = vadd.f32 0.0, %v6444
    %6446 = vmatmul.f32.gmra.mxu0 %v6263
    %v6447 = vpop.f32.mrf.mxu0
    %v6448 = vadd.f32 0.0, %v6447
    %6449 = vmatmul.f32.gmra.mxu0 %v6266
    %v6450 = vpop.f32.mrf.mxu0
    %v6451 = vadd.f32 0.0, %v6450
    %6452 = vmatmul.f32.gmra.mxu0 %v6269
    %v6453 = vpop.f32.mrf.mxu0
    %v6454 = vadd.f32 0.0, %v6453
    %6455 = vdwg.mxu0
    %v6456 = vadd.f32 %v5872, %v6289
    %v6457 = vadd.f32 %v5875, %v6292
    %v6458 = vadd.f32 %v5878, %v6295
    %v6459 = vadd.f32 %v5881, %v6298
    %v6460 = vadd.f32 %v5884, %v6301
    %v6461 = vadd.f32 %v5887, %v6304
    %v6462 = vadd.f32 %v5890, %v6307
    %v6463 = vadd.f32 %v5893, %v6310
    %v6464 = vadd.f32 %v5896, %v6313
    %v6465 = vadd.f32 %v5899, %v6316
    %v6466 = vadd.f32 %v5902, %v6319
    %v6467 = vadd.f32 %v5905, %v6322
    %v6468 = vadd.f32 %v5908, %v6325
    %v6469 = vadd.f32 %v5911, %v6328
    %v6470 = vadd.f32 %v5914, %v6331
    %v6471 = vadd.f32 %v5917, %v6334
    %v6472 = vadd.f32 %v5920, %v6337
    %v6473 = vadd.f32 %v5923, %v6340
    %v6474 = vadd.f32 %v5926, %v6343
    %v6475 = vadd.f32 %v5929, %v6346
    %v6476 = vadd.f32 %v5932, %v6349
    %v6477 = vadd.f32 %v5935, %v6352
    %v6478 = vadd.f32 %v5938, %v6355
    %v6479 = vadd.f32 %v5941, %v6358
    %v6480 = vadd.f32 %v5944, %v6361
    %v6481 = vadd.f32 %v5947, %v6364
    %v6482 = vadd.f32 %v5950, %v6367
    %v6483 = vadd.f32 %v5953, %v6370
    %v6484 = vadd.f32 %v5956, %v6373
    %v6485 = vadd.f32 %v5959, %v6376
    %v6486 = vadd.f32 %v5962, %v6379
    %v6487 = vadd.f32 %v5965, %v6382
    %v6488 = vadd.f32 %v5968, %v6385
    %v6489 = vadd.f32 %v5971, %v6388
    %v6490 = vadd.f32 %v5974, %v6391
    %v6491 = vadd.f32 %v5977, %v6394
    %v6492 = vadd.f32 %v5980, %v6397
    %v6493 = vadd.f32 %v5983, %v6400
    %v6494 = vadd.f32 %v5986, %v6403
    %v6495 = vadd.f32 %v5989, %v6406
    %v6496 = vadd.f32 %v5992, %v6409
    %v6497 = vadd.f32 %v5995, %v6412
    %v6498 = vadd.f32 %v5998, %v6415
    %v6499 = vadd.f32 %v6001, %v6418
    %v6500 = vadd.f32 %v6004, %v6421
    %v6501 = vadd.f32 %v6007, %v6424
    %v6502 = vadd.f32 %v6010, %v6427
    %v6503 = vadd.f32 %v6013, %v6430
    %v6504 = vadd.f32 %v6016, %v6433
    %v6505 = vadd.f32 %v6019, %v6436
    %v6506 = vadd.f32 %v6022, %v6439
    %v6507 = vadd.f32 %v6025, %v6442
    %v6508 = vadd.f32 %v6028, %v6445
    %v6509 = vadd.f32 %v6031, %v6448
    %v6510 = vadd.f32 %v6034, %v6451
    %v6511 = vadd.f32 %v6037, %v6454
    %v6512 = vld [vmem:[#allocation3 + $0x7] sm:$0xff]
    %v6513 = vld [vmem:[#allocation3 + $0xf] sm:$0xff]
    %v6514 = vld [vmem:[#allocation3 + $0x17] sm:$0xff]
    %v6515 = vld [vmem:[#allocation3 + $0x1f] sm:$0xff]
    %v6516 = vld [vmem:[#allocation3 + $0x27] sm:$0xff]
    %v6517 = vld [vmem:[#allocation3 + $0x2f] sm:$0xff]
    %v6518 = vld [vmem:[#allocation3 + $0x37] sm:$0xff]
    %v6519 = vld [vmem:[#allocation3 + $0x3f] sm:$0xff]
    %v6520 = vld [vmem:[#allocation3 + $0x47] sm:$0xff]
    %v6521 = vld [vmem:[#allocation3 + $0x4f] sm:$0xff]
    %v6522 = vld [vmem:[#allocation3 + $0x57] sm:$0xff]
    %v6523 = vld [vmem:[#allocation3 + $0x5f] sm:$0xff]
    %v6524 = vld [vmem:[#allocation3 + $0x67] sm:$0xff]
    %v6525 = vld [vmem:[#allocation3 + $0x6f] sm:$0xff]
    %v6526 = vld [vmem:[#allocation3 + $0x77] sm:$0xff]
    %v6527 = vld [vmem:[#allocation3 + $0x7f] sm:$0xff]
    %v6528 = vld [vmem:[#allocation3 + $0x87] sm:$0xff]
    %v6529 = vld [vmem:[#allocation3 + $0x8f] sm:$0xff]
    %v6530 = vld [vmem:[#allocation3 + $0x97] sm:$0xff]
    %v6531 = vld [vmem:[#allocation3 + $0x9f] sm:$0xff]
    %v6532 = vld [vmem:[#allocation3 + $0xa7] sm:$0xff]
    %v6533 = vld [vmem:[#allocation3 + $0xaf] sm:$0xff]
    %v6534 = vld [vmem:[#allocation3 + $0xb7] sm:$0xff]
    %v6535 = vld [vmem:[#allocation3 + $0xbf] sm:$0xff]
    %v6536 = vld [vmem:[#allocation3 + $0xc7] sm:$0xff]
    %v6537 = vld [vmem:[#allocation3 + $0xcf] sm:$0xff]
    %v6538 = vld [vmem:[#allocation3 + $0xd7] sm:$0xff]
    %v6539 = vld [vmem:[#allocation3 + $0xdf] sm:$0xff]
    %v6540 = vld [vmem:[#allocation3 + $0xe7] sm:$0xff]
    %v6541 = vld [vmem:[#allocation3 + $0xef] sm:$0xff]
    %v6542 = vld [vmem:[#allocation3 + $0xf7] sm:$0xff]
    %v6543 = vld [vmem:[#allocation3 + $0xff] sm:$0xff]
    %v6544 = vld [vmem:[#allocation3 + $0x107] sm:$0xff]
    %v6545 = vld [vmem:[#allocation3 + $0x10f] sm:$0xff]
    %v6546 = vld [vmem:[#allocation3 + $0x117] sm:$0xff]
    %v6547 = vld [vmem:[#allocation3 + $0x11f] sm:$0xff]
    %v6548 = vld [vmem:[#allocation3 + $0x127] sm:$0xff]
    %v6549 = vld [vmem:[#allocation3 + $0x12f] sm:$0xff]
    %v6550 = vld [vmem:[#allocation3 + $0x137] sm:$0xff]
    %v6551 = vld [vmem:[#allocation3 + $0x13f] sm:$0xff]
    %v6552 = vld [vmem:[#allocation3 + $0x147] sm:$0xff]
    %v6553 = vld [vmem:[#allocation3 + $0x14f] sm:$0xff]
    %v6554 = vld [vmem:[#allocation3 + $0x157] sm:$0xff]
    %v6555 = vld [vmem:[#allocation3 + $0x15f] sm:$0xff]
    %v6556 = vld [vmem:[#allocation3 + $0x167] sm:$0xff]
    %v6557 = vld [vmem:[#allocation3 + $0x16f] sm:$0xff]
    %v6558 = vld [vmem:[#allocation3 + $0x177] sm:$0xff]
    %v6559 = vld [vmem:[#allocation3 + $0x17f] sm:$0xff]
    %v6560 = vld [vmem:[#allocation3 + $0x187] sm:$0xff]
    %v6561 = vld [vmem:[#allocation3 + $0x18f] sm:$0xff]
    %v6562 = vld [vmem:[#allocation3 + $0x197] sm:$0xff]
    %v6563 = vld [vmem:[#allocation3 + $0x19f] sm:$0xff]
    %v6564 = vld [vmem:[#allocation3 + $0x1a7] sm:$0xff]
    %v6565 = vld [vmem:[#allocation3 + $0x1af] sm:$0xff]
    %v6566 = vld [vmem:[#allocation3 + $0x1b7] sm:$0xff]
    %v6567 = vld [vmem:[#allocation3 + $0x1bf] sm:$0xff]
    %v6568 = vld [vmem:[#allocation8 + $0xc0] sm:$0xff]
    %v6569 = vld [vmem:[#allocation8 + $0xc8] sm:$0xff]
    %v6570 = vld [vmem:[#allocation8 + $0xd0] sm:$0xff]
    %v6571 = vld [vmem:[#allocation8 + $0xd8] sm:$0xff]
    %v6572 = vld [vmem:[#allocation8 + $0xe0] sm:$0xff]
    %v6573 = vld [vmem:[#allocation8 + $0xe8] sm:$0xff]
    %v6574 = vld [vmem:[#allocation8 + $0xf0] sm:$0xff]
    %v6575 = vld [vmem:[#allocation8 + $0xf8] sm:$0xff]
    %v6577 = vsel %vm134, %v6512, 0
    %v6580 = vsel %vm134, %v6513, 0
    %v6583 = vsel %vm134, %v6514, 0
    %v6586 = vsel %vm134, %v6515, 0
    %v6589 = vsel %vm134, %v6516, 0
    %v6592 = vsel %vm134, %v6517, 0
    %v6595 = vsel %vm134, %v6518, 0
    %v6598 = vsel %vm134, %v6519, 0
    %v6601 = vsel %vm134, %v6520, 0
    %v6604 = vsel %vm134, %v6521, 0
    %v6607 = vsel %vm134, %v6522, 0
    %v6610 = vsel %vm134, %v6523, 0
    %v6613 = vsel %vm134, %v6524, 0
    %v6616 = vsel %vm134, %v6525, 0
    %v6619 = vsel %vm134, %v6526, 0
    %v6622 = vsel %vm134, %v6527, 0
    %v6625 = vsel %vm134, %v6528, 0
    %v6628 = vsel %vm134, %v6529, 0
    %v6631 = vsel %vm134, %v6530, 0
    %v6634 = vsel %vm134, %v6531, 0
    %v6637 = vsel %vm134, %v6532, 0
    %v6640 = vsel %vm134, %v6533, 0
    %v6643 = vsel %vm134, %v6534, 0
    %v6646 = vsel %vm134, %v6535, 0
    %v6649 = vsel %vm134, %v6536, 0
    %v6652 = vsel %vm134, %v6537, 0
    %v6655 = vsel %vm134, %v6538, 0
    %v6658 = vsel %vm134, %v6539, 0
    %v6661 = vsel %vm134, %v6540, 0
    %v6664 = vsel %vm134, %v6541, 0
    %v6667 = vsel %vm134, %v6542, 0
    %v6670 = vsel %vm134, %v6543, 0
    %v6673 = vsel %vm134, %v6544, 0
    %v6676 = vsel %vm134, %v6545, 0
    %v6679 = vsel %vm134, %v6546, 0
    %v6682 = vsel %vm134, %v6547, 0
    %v6685 = vsel %vm134, %v6548, 0
    %v6688 = vsel %vm134, %v6549, 0
    %v6691 = vsel %vm134, %v6550, 0
    %v6694 = vsel %vm134, %v6551, 0
    %v6697 = vsel %vm134, %v6552, 0
    %v6700 = vsel %vm134, %v6553, 0
    %v6703 = vsel %vm134, %v6554, 0
    %v6706 = vsel %vm134, %v6555, 0
    %v6709 = vsel %vm134, %v6556, 0
    %v6712 = vsel %vm134, %v6557, 0
    %v6715 = vsel %vm134, %v6558, 0
    %v6718 = vsel %vm134, %v6559, 0
    %v6721 = vsel %vm134, %v6560, 0
    %v6724 = vsel %vm134, %v6561, 0
    %v6727 = vsel %vm134, %v6562, 0
    %v6730 = vsel %vm134, %v6563, 0
    %v6733 = vsel %vm134, %v6564, 0
    %v6736 = vsel %vm134, %v6565, 0
    %v6739 = vsel %vm134, %v6566, 0
    %v6742 = vsel %vm134, %v6567, 0
    %6744 = vmatpush.msra.mxu0 0.0
    %6745 = vmatpush.msra.mxu0 0.0
    %6746 = vmatpush.msra.mxu0 0.0
    %6747 = vmatpush.msra.mxu0 0.0
    %6748 = vmatpush.msra.mxu0 0.0
    %6749 = vmatpush.msra.mxu0 0.0
    %6750 = vmatpush.msra.mxu0 0.0
    %6751 = vmatpush.msra.mxu0 0.0
    %6752 = vmatpush.msra.mxu0 %v6575
    %6753 = vmatpush.msra.mxu0 %v6574
    %6754 = vmatpush.msra.mxu0 %v6573
    %6755 = vmatpush.msra.mxu0 %v6572
    %6756 = vmatpush.msra.mxu0 %v6571
    %6757 = vmatpush.msra.mxu0 %v6570
    %6758 = vmatpush.msra.mxu0 %v6569
    %6759 = vmatpush.msra.mxu0 %v6568
    %6760 = vmatmul.f32.gmra.mxu0 %v6577
    %v6761 = vpop.f32.mrf.mxu0
    %v6762 = vadd.f32 0.0, %v6761
    %6763 = vmatmul.f32.gmra.mxu0 %v6580
    %v6764 = vpop.f32.mrf.mxu0
    %v6765 = vadd.f32 0.0, %v6764
    %6766 = vmatmul.f32.gmra.mxu0 %v6583
    %v6767 = vpop.f32.mrf.mxu0
    %v6768 = vadd.f32 0.0, %v6767
    %6769 = vmatmul.f32.gmra.mxu0 %v6586
    %v6770 = vpop.f32.mrf.mxu0
    %v6771 = vadd.f32 0.0, %v6770
    %6772 = vmatmul.f32.gmra.mxu0 %v6589
    %v6773 = vpop.f32.mrf.mxu0
    %v6774 = vadd.f32 0.0, %v6773
    %6775 = vmatmul.f32.gmra.mxu0 %v6592
    %v6776 = vpop.f32.mrf.mxu0
    %v6777 = vadd.f32 0.0, %v6776
    %6778 = vmatmul.f32.gmra.mxu0 %v6595
    %v6779 = vpop.f32.mrf.mxu0
    %v6780 = vadd.f32 0.0, %v6779
    %6781 = vmatmul.f32.gmra.mxu0 %v6598
    %v6782 = vpop.f32.mrf.mxu0
    %v6783 = vadd.f32 0.0, %v6782
    %6784 = vmatmul.f32.gmra.mxu0 %v6601
    %v6785 = vpop.f32.mrf.mxu0
    %v6786 = vadd.f32 0.0, %v6785
    %6787 = vmatmul.f32.gmra.mxu0 %v6604
    %v6788 = vpop.f32.mrf.mxu0
    %v6789 = vadd.f32 0.0, %v6788
    %6790 = vmatmul.f32.gmra.mxu0 %v6607
    %v6791 = vpop.f32.mrf.mxu0
    %v6792 = vadd.f32 0.0, %v6791
    %6793 = vmatmul.f32.gmra.mxu0 %v6610
    %v6794 = vpop.f32.mrf.mxu0
    %v6795 = vadd.f32 0.0, %v6794
    %6796 = vmatmul.f32.gmra.mxu0 %v6613
    %v6797 = vpop.f32.mrf.mxu0
    %v6798 = vadd.f32 0.0, %v6797
    %6799 = vmatmul.f32.gmra.mxu0 %v6616
    %v6800 = vpop.f32.mrf.mxu0
    %v6801 = vadd.f32 0.0, %v6800
    %6802 = vmatmul.f32.gmra.mxu0 %v6619
    %v6803 = vpop.f32.mrf.mxu0
    %v6804 = vadd.f32 0.0, %v6803
    %6805 = vmatmul.f32.gmra.mxu0 %v6622
    %v6806 = vpop.f32.mrf.mxu0
    %v6807 = vadd.f32 0.0, %v6806
    %6808 = vmatmul.f32.gmra.mxu0 %v6625
    %v6809 = vpop.f32.mrf.mxu0
    %v6810 = vadd.f32 0.0, %v6809
    %6811 = vmatmul.f32.gmra.mxu0 %v6628
    %v6812 = vpop.f32.mrf.mxu0
    %v6813 = vadd.f32 0.0, %v6812
    %6814 = vmatmul.f32.gmra.mxu0 %v6631
    %v6815 = vpop.f32.mrf.mxu0
    %v6816 = vadd.f32 0.0, %v6815
    %6817 = vmatmul.f32.gmra.mxu0 %v6634
    %v6818 = vpop.f32.mrf.mxu0
    %v6819 = vadd.f32 0.0, %v6818
    %6820 = vmatmul.f32.gmra.mxu0 %v6637
    %v6821 = vpop.f32.mrf.mxu0
    %v6822 = vadd.f32 0.0, %v6821
    %6823 = vmatmul.f32.gmra.mxu0 %v6640
    %v6824 = vpop.f32.mrf.mxu0
    %v6825 = vadd.f32 0.0, %v6824
    %6826 = vmatmul.f32.gmra.mxu0 %v6643
    %v6827 = vpop.f32.mrf.mxu0
    %v6828 = vadd.f32 0.0, %v6827
    %6829 = vmatmul.f32.gmra.mxu0 %v6646
    %v6830 = vpop.f32.mrf.mxu0
    %v6831 = vadd.f32 0.0, %v6830
    %6832 = vmatmul.f32.gmra.mxu0 %v6649
    %v6833 = vpop.f32.mrf.mxu0
    %v6834 = vadd.f32 0.0, %v6833
    %6835 = vmatmul.f32.gmra.mxu0 %v6652
    %v6836 = vpop.f32.mrf.mxu0
    %v6837 = vadd.f32 0.0, %v6836
    %6838 = vmatmul.f32.gmra.mxu0 %v6655
    %v6839 = vpop.f32.mrf.mxu0
    %v6840 = vadd.f32 0.0, %v6839
    %6841 = vmatmul.f32.gmra.mxu0 %v6658
    %v6842 = vpop.f32.mrf.mxu0
    %v6843 = vadd.f32 0.0, %v6842
    %6844 = vmatmul.f32.gmra.mxu0 %v6661
    %v6845 = vpop.f32.mrf.mxu0
    %v6846 = vadd.f32 0.0, %v6845
    %6847 = vmatmul.f32.gmra.mxu0 %v6664
    %v6848 = vpop.f32.mrf.mxu0
    %v6849 = vadd.f32 0.0, %v6848
    %6850 = vmatmul.f32.gmra.mxu0 %v6667
    %v6851 = vpop.f32.mrf.mxu0
    %v6852 = vadd.f32 0.0, %v6851
    %6853 = vmatmul.f32.gmra.mxu0 %v6670
    %v6854 = vpop.f32.mrf.mxu0
    %v6855 = vadd.f32 0.0, %v6854
    %6856 = vmatmul.f32.gmra.mxu0 %v6673
    %v6857 = vpop.f32.mrf.mxu0
    %v6858 = vadd.f32 0.0, %v6857
    %6859 = vmatmul.f32.gmra.mxu0 %v6676
    %v6860 = vpop.f32.mrf.mxu0
    %v6861 = vadd.f32 0.0, %v6860
    %6862 = vmatmul.f32.gmra.mxu0 %v6679
    %v6863 = vpop.f32.mrf.mxu0
    %v6864 = vadd.f32 0.0, %v6863
    %6865 = vmatmul.f32.gmra.mxu0 %v6682
    %v6866 = vpop.f32.mrf.mxu0
    %v6867 = vadd.f32 0.0, %v6866
    %6868 = vmatmul.f32.gmra.mxu0 %v6685
    %v6869 = vpop.f32.mrf.mxu0
    %v6870 = vadd.f32 0.0, %v6869
    %6871 = vmatmul.f32.gmra.mxu0 %v6688
    %v6872 = vpop.f32.mrf.mxu0
    %v6873 = vadd.f32 0.0, %v6872
    %6874 = vmatmul.f32.gmra.mxu0 %v6691
    %v6875 = vpop.f32.mrf.mxu0
    %v6876 = vadd.f32 0.0, %v6875
    %6877 = vmatmul.f32.gmra.mxu0 %v6694
    %v6878 = vpop.f32.mrf.mxu0
    %v6879 = vadd.f32 0.0, %v6878
    %6880 = vmatmul.f32.gmra.mxu0 %v6697
    %v6881 = vpop.f32.mrf.mxu0
    %v6882 = vadd.f32 0.0, %v6881
    %6883 = vmatmul.f32.gmra.mxu0 %v6700
    %v6884 = vpop.f32.mrf.mxu0
    %v6885 = vadd.f32 0.0, %v6884
    %6886 = vmatmul.f32.gmra.mxu0 %v6703
    %v6887 = vpop.f32.mrf.mxu0
    %v6888 = vadd.f32 0.0, %v6887
    %6889 = vmatmul.f32.gmra.mxu0 %v6706
    %v6890 = vpop.f32.mrf.mxu0
    %v6891 = vadd.f32 0.0, %v6890
    %6892 = vmatmul.f32.gmra.mxu0 %v6709
    %v6893 = vpop.f32.mrf.mxu0
    %v6894 = vadd.f32 0.0, %v6893
    %6895 = vmatmul.f32.gmra.mxu0 %v6712
    %v6896 = vpop.f32.mrf.mxu0
    %v6897 = vadd.f32 0.0, %v6896
    %6898 = vmatmul.f32.gmra.mxu0 %v6715
    %v6899 = vpop.f32.mrf.mxu0
    %v6900 = vadd.f32 0.0, %v6899
    %6901 = vmatmul.f32.gmra.mxu0 %v6718
    %v6902 = vpop.f32.mrf.mxu0
    %v6903 = vadd.f32 0.0, %v6902
    %6904 = vmatmul.f32.gmra.mxu0 %v6721
    %v6905 = vpop.f32.mrf.mxu0
    %v6906 = vadd.f32 0.0, %v6905
    %6907 = vmatmul.f32.gmra.mxu0 %v6724
    %v6908 = vpop.f32.mrf.mxu0
    %v6909 = vadd.f32 0.0, %v6908
    %6910 = vmatmul.f32.gmra.mxu0 %v6727
    %v6911 = vpop.f32.mrf.mxu0
    %v6912 = vadd.f32 0.0, %v6911
    %6913 = vmatmul.f32.gmra.mxu0 %v6730
    %v6914 = vpop.f32.mrf.mxu0
    %v6915 = vadd.f32 0.0, %v6914
    %6916 = vmatmul.f32.gmra.mxu0 %v6733
    %v6917 = vpop.f32.mrf.mxu0
    %v6918 = vadd.f32 0.0, %v6917
    %6919 = vmatmul.f32.gmra.mxu0 %v6736
    %v6920 = vpop.f32.mrf.mxu0
    %v6921 = vadd.f32 0.0, %v6920
    %6922 = vmatmul.f32.gmra.mxu0 %v6739
    %v6923 = vpop.f32.mrf.mxu0
    %v6924 = vadd.f32 0.0, %v6923
    %6925 = vmatmul.f32.gmra.mxu0 %v6742
    %v6926 = vpop.f32.mrf.mxu0
    %v6927 = vadd.f32 0.0, %v6926
    %6928 = vdwg.mxu0
    %v6929 = vadd.f32 %v6456, %v6762
    %v6930 = vadd.f32 %v6457, %v6765
    %v6931 = vadd.f32 %v6458, %v6768
    %v6932 = vadd.f32 %v6459, %v6771
    %v6933 = vadd.f32 %v6460, %v6774
    %v6934 = vadd.f32 %v6461, %v6777
    %v6935 = vadd.f32 %v6462, %v6780
    %v6936 = vadd.f32 %v6463, %v6783
    %v6937 = vadd.f32 %v6464, %v6786
    %v6938 = vadd.f32 %v6465, %v6789
    %v6939 = vadd.f32 %v6466, %v6792
    %v6940 = vadd.f32 %v6467, %v6795
    %v6941 = vadd.f32 %v6468, %v6798
    %v6942 = vadd.f32 %v6469, %v6801
    %v6943 = vadd.f32 %v6470, %v6804
    %v6944 = vadd.f32 %v6471, %v6807
    %v6945 = vadd.f32 %v6472, %v6810
    %v6946 = vadd.f32 %v6473, %v6813
    %v6947 = vadd.f32 %v6474, %v6816
    %v6948 = vadd.f32 %v6475, %v6819
    %v6949 = vadd.f32 %v6476, %v6822
    %v6950 = vadd.f32 %v6477, %v6825
    %v6951 = vadd.f32 %v6478, %v6828
    %v6952 = vadd.f32 %v6479, %v6831
    %v6953 = vadd.f32 %v6480, %v6834
    %v6954 = vadd.f32 %v6481, %v6837
    %v6955 = vadd.f32 %v6482, %v6840
    %v6956 = vadd.f32 %v6483, %v6843
    %v6957 = vadd.f32 %v6484, %v6846
    %v6958 = vadd.f32 %v6485, %v6849
    %v6959 = vadd.f32 %v6486, %v6852
    %v6960 = vadd.f32 %v6487, %v6855
    %v6961 = vadd.f32 %v6488, %v6858
    %v6962 = vadd.f32 %v6489, %v6861
    %v6963 = vadd.f32 %v6490, %v6864
    %v6964 = vadd.f32 %v6491, %v6867
    %v6965 = vadd.f32 %v6492, %v6870
    %v6966 = vadd.f32 %v6493, %v6873
    %v6967 = vadd.f32 %v6494, %v6876
    %v6968 = vadd.f32 %v6495, %v6879
    %v6969 = vadd.f32 %v6496, %v6882
    %v6970 = vadd.f32 %v6497, %v6885
    %v6971 = vadd.f32 %v6498, %v6888
    %v6972 = vadd.f32 %v6499, %v6891
    %v6973 = vadd.f32 %v6500, %v6894
    %v6974 = vadd.f32 %v6501, %v6897
    %v6975 = vadd.f32 %v6502, %v6900
    %v6976 = vadd.f32 %v6503, %v6903
    %v6977 = vadd.f32 %v6504, %v6906
    %v6978 = vadd.f32 %v6505, %v6909
    %v6979 = vadd.f32 %v6506, %v6912
    %v6980 = vadd.f32 %v6507, %v6915
    %v6981 = vadd.f32 %v6508, %v6918
    %v6982 = vadd.f32 %v6509, %v6921
    %v6983 = vadd.f32 %v6510, %v6924
    %v6984 = vadd.f32 %v6511, %v6927
    %v6985 = vld [vmem:[#allocation3 + $0x8] sm:$0xff]
    %v6986 = vld [vmem:[#allocation3 + $0x10] sm:$0xff]
    %v6987 = vld [vmem:[#allocation3 + $0x18] sm:$0xff]
    %v6988 = vld [vmem:[#allocation3 + $0x20] sm:$0xff]
    %v6989 = vld [vmem:[#allocation3 + $0x28] sm:$0xff]
    %v6990 = vld [vmem:[#allocation3 + $0x30] sm:$0xff]
    %v6991 = vld [vmem:[#allocation3 + $0x38] sm:$0xff]
    %v6992 = vld [vmem:[#allocation3 + $0x40] sm:$0xff]
    %v6993 = vld [vmem:[#allocation3 + $0x48] sm:$0xff]
    %v6994 = vld [vmem:[#allocation3 + $0x50] sm:$0xff]
    %v6995 = vld [vmem:[#allocation3 + $0x58] sm:$0xff]
    %v6996 = vld [vmem:[#allocation3 + $0x60] sm:$0xff]
    %v6997 = vld [vmem:[#allocation3 + $0x68] sm:$0xff]
    %v6998 = vld [vmem:[#allocation3 + $0x70] sm:$0xff]
    %v6999 = vld [vmem:[#allocation3 + $0x78] sm:$0xff]
    %v7000 = vld [vmem:[#allocation3 + $0x80] sm:$0xff]
    %v7001 = vld [vmem:[#allocation3 + $0x88] sm:$0xff]
    %v7002 = vld [vmem:[#allocation3 + $0x90] sm:$0xff]
    %v7003 = vld [vmem:[#allocation3 + $0x98] sm:$0xff]
    %v7004 = vld [vmem:[#allocation3 + $0xa0] sm:$0xff]
    %v7005 = vld [vmem:[#allocation3 + $0xa8] sm:$0xff]
    %v7006 = vld [vmem:[#allocation3 + $0xb0] sm:$0xff]
    %v7007 = vld [vmem:[#allocation3 + $0xb8] sm:$0xff]
    %v7008 = vld [vmem:[#allocation3 + $0xc0] sm:$0xff]
    %v7009 = vld [vmem:[#allocation3 + $0xc8] sm:$0xff]
    %v7010 = vld [vmem:[#allocation3 + $0xd0] sm:$0xff]
    %v7011 = vld [vmem:[#allocation3 + $0xd8] sm:$0xff]
    %v7012 = vld [vmem:[#allocation3 + $0xe0] sm:$0xff]
    %v7013 = vld [vmem:[#allocation3 + $0xe8] sm:$0xff]
    %v7014 = vld [vmem:[#allocation3 + $0xf0] sm:$0xff]
    %v7015 = vld [vmem:[#allocation3 + $0xf8] sm:$0xff]
    %v7016 = vld [vmem:[#allocation3 + $0x100] sm:$0xff]
    %v7017 = vld [vmem:[#allocation3 + $0x108] sm:$0xff]
    %v7018 = vld [vmem:[#allocation3 + $0x110] sm:$0xff]
    %v7019 = vld [vmem:[#allocation3 + $0x118] sm:$0xff]
    %v7020 = vld [vmem:[#allocation3 + $0x120] sm:$0xff]
    %v7021 = vld [vmem:[#allocation3 + $0x128] sm:$0xff]
    %v7022 = vld [vmem:[#allocation3 + $0x130] sm:$0xff]
    %v7023 = vld [vmem:[#allocation3 + $0x138] sm:$0xff]
    %v7024 = vld [vmem:[#allocation3 + $0x140] sm:$0xff]
    %v7025 = vld [vmem:[#allocation3 + $0x148] sm:$0xff]
    %v7026 = vld [vmem:[#allocation3 + $0x150] sm:$0xff]
    %v7027 = vld [vmem:[#allocation3 + $0x158] sm:$0xff]
    %v7028 = vld [vmem:[#allocation3 + $0x160] sm:$0xff]
    %v7029 = vld [vmem:[#allocation3 + $0x168] sm:$0xff]
    %v7030 = vld [vmem:[#allocation3 + $0x170] sm:$0xff]
    %v7031 = vld [vmem:[#allocation3 + $0x178] sm:$0xff]
    %v7032 = vld [vmem:[#allocation3 + $0x180] sm:$0xff]
    %v7033 = vld [vmem:[#allocation3 + $0x188] sm:$0xff]
    %v7034 = vld [vmem:[#allocation3 + $0x190] sm:$0xff]
    %v7035 = vld [vmem:[#allocation3 + $0x198] sm:$0xff]
    %v7036 = vld [vmem:[#allocation3 + $0x1a0] sm:$0xff]
    %v7037 = vld [vmem:[#allocation3 + $0x1a8] sm:$0xff]
    %v7038 = vld [vmem:[#allocation3 + $0x1b0] sm:$0xff]
    %v7039 = vld [vmem:[#allocation3 + $0x1b8] sm:$0xff]
    %v7040 = vld [vmem:[#allocation3 + $0x1c0] sm:$0xff]
    %v7041 = vld [vmem:[#allocation8 + $0x100] sm:$0xff]
    %v7042 = vld [vmem:[#allocation8 + $0x108] sm:$0xff]
    %v7043 = vld [vmem:[#allocation8 + $0x110] sm:$0xff]
    %v7044 = vld [vmem:[#allocation8 + $0x118] sm:$0xff]
    %v7045 = vld [vmem:[#allocation8 + $0x120] sm:$0xff]
    %v7046 = vld [vmem:[#allocation8 + $0x128] sm:$0xff]
    %v7047 = vld [vmem:[#allocation8 + $0x130] sm:$0xff]
    %v7048 = vld [vmem:[#allocation8 + $0x138] sm:$0xff]
    %v7050 = vsel %vm134, %v6985, 0
    %v7053 = vsel %vm134, %v6986, 0
    %v7056 = vsel %vm134, %v6987, 0
    %v7059 = vsel %vm134, %v6988, 0
    %v7062 = vsel %vm134, %v6989, 0
    %v7065 = vsel %vm134, %v6990, 0
    %v7068 = vsel %vm134, %v6991, 0
    %v7071 = vsel %vm134, %v6992, 0
    %v7074 = vsel %vm134, %v6993, 0
    %v7077 = vsel %vm134, %v6994, 0
    %v7080 = vsel %vm134, %v6995, 0
    %v7083 = vsel %vm134, %v6996, 0
    %v7086 = vsel %vm134, %v6997, 0
    %v7089 = vsel %vm134, %v6998, 0
    %v7092 = vsel %vm134, %v6999, 0
    %v7095 = vsel %vm134, %v7000, 0
    %v7098 = vsel %vm134, %v7001, 0
    %v7101 = vsel %vm134, %v7002, 0
    %v7104 = vsel %vm134, %v7003, 0
    %v7107 = vsel %vm134, %v7004, 0
    %v7110 = vsel %vm134, %v7005, 0
    %v7113 = vsel %vm134, %v7006, 0
    %v7116 = vsel %vm134, %v7007, 0
    %v7119 = vsel %vm134, %v7008, 0
    %v7122 = vsel %vm134, %v7009, 0
    %v7125 = vsel %vm134, %v7010, 0
    %v7128 = vsel %vm134, %v7011, 0
    %v7131 = vsel %vm134, %v7012, 0
    %v7134 = vsel %vm134, %v7013, 0
    %v7137 = vsel %vm134, %v7014, 0
    %v7140 = vsel %vm134, %v7015, 0
    %v7143 = vsel %vm134, %v7016, 0
    %v7146 = vsel %vm134, %v7017, 0
    %v7149 = vsel %vm134, %v7018, 0
    %v7152 = vsel %vm134, %v7019, 0
    %v7155 = vsel %vm134, %v7020, 0
    %v7158 = vsel %vm134, %v7021, 0
    %v7161 = vsel %vm134, %v7022, 0
    %v7164 = vsel %vm134, %v7023, 0
    %v7167 = vsel %vm134, %v7024, 0
    %v7170 = vsel %vm134, %v7025, 0
    %v7173 = vsel %vm134, %v7026, 0
    %v7176 = vsel %vm134, %v7027, 0
    %v7179 = vsel %vm134, %v7028, 0
    %v7182 = vsel %vm134, %v7029, 0
    %v7185 = vsel %vm134, %v7030, 0
    %v7188 = vsel %vm134, %v7031, 0
    %v7191 = vsel %vm134, %v7032, 0
    %v7194 = vsel %vm134, %v7033, 0
    %v7197 = vsel %vm134, %v7034, 0
    %v7200 = vsel %vm134, %v7035, 0
    %v7203 = vsel %vm134, %v7036, 0
    %v7206 = vsel %vm134, %v7037, 0
    %v7209 = vsel %vm134, %v7038, 0
    %v7212 = vsel %vm134, %v7039, 0
    %v7215 = vsel %vm134, %v7040, 0
    %7217 = vmatpush.msra.mxu0 0.0
    %7218 = vmatpush.msra.mxu0 0.0
    %7219 = vmatpush.msra.mxu0 0.0
    %7220 = vmatpush.msra.mxu0 0.0
    %7221 = vmatpush.msra.mxu0 0.0
    %7222 = vmatpush.msra.mxu0 0.0
    %7223 = vmatpush.msra.mxu0 0.0
    %7224 = vmatpush.msra.mxu0 0.0
    %7225 = vmatpush.msra.mxu0 %v7048
    %7226 = vmatpush.msra.mxu0 %v7047
    %7227 = vmatpush.msra.mxu0 %v7046
    %7228 = vmatpush.msra.mxu0 %v7045
    %7229 = vmatpush.msra.mxu0 %v7044
    %7230 = vmatpush.msra.mxu0 %v7043
    %7231 = vmatpush.msra.mxu0 %v7042
    %7232 = vmatpush.msra.mxu0 %v7041
    %7233 = vmatmul.f32.gmra.mxu0 %v7050
    %v7234 = vpop.f32.mrf.mxu0
    %v7235 = vadd.f32 0.0, %v7234
    %7236 = vmatmul.f32.gmra.mxu0 %v7053
    %v7237 = vpop.f32.mrf.mxu0
    %v7238 = vadd.f32 0.0, %v7237
    %7239 = vmatmul.f32.gmra.mxu0 %v7056
    %v7240 = vpop.f32.mrf.mxu0
    %v7241 = vadd.f32 0.0, %v7240
    %7242 = vmatmul.f32.gmra.mxu0 %v7059
    %v7243 = vpop.f32.mrf.mxu0
    %v7244 = vadd.f32 0.0, %v7243
    %7245 = vmatmul.f32.gmra.mxu0 %v7062
    %v7246 = vpop.f32.mrf.mxu0
    %v7247 = vadd.f32 0.0, %v7246
    %7248 = vmatmul.f32.gmra.mxu0 %v7065
    %v7249 = vpop.f32.mrf.mxu0
    %v7250 = vadd.f32 0.0, %v7249
    %7251 = vmatmul.f32.gmra.mxu0 %v7068
    %v7252 = vpop.f32.mrf.mxu0
    %v7253 = vadd.f32 0.0, %v7252
    %7254 = vmatmul.f32.gmra.mxu0 %v7071
    %v7255 = vpop.f32.mrf.mxu0
    %v7256 = vadd.f32 0.0, %v7255
    %7257 = vmatmul.f32.gmra.mxu0 %v7074
    %v7258 = vpop.f32.mrf.mxu0
    %v7259 = vadd.f32 0.0, %v7258
    %7260 = vmatmul.f32.gmra.mxu0 %v7077
    %v7261 = vpop.f32.mrf.mxu0
    %v7262 = vadd.f32 0.0, %v7261
    %7263 = vmatmul.f32.gmra.mxu0 %v7080
    %v7264 = vpop.f32.mrf.mxu0
    %v7265 = vadd.f32 0.0, %v7264
    %7266 = vmatmul.f32.gmra.mxu0 %v7083
    %v7267 = vpop.f32.mrf.mxu0
    %v7268 = vadd.f32 0.0, %v7267
    %7269 = vmatmul.f32.gmra.mxu0 %v7086
    %v7270 = vpop.f32.mrf.mxu0
    %v7271 = vadd.f32 0.0, %v7270
    %7272 = vmatmul.f32.gmra.mxu0 %v7089
    %v7273 = vpop.f32.mrf.mxu0
    %v7274 = vadd.f32 0.0, %v7273
    %7275 = vmatmul.f32.gmra.mxu0 %v7092
    %v7276 = vpop.f32.mrf.mxu0
    %v7277 = vadd.f32 0.0, %v7276
    %7278 = vmatmul.f32.gmra.mxu0 %v7095
    %v7279 = vpop.f32.mrf.mxu0
    %v7280 = vadd.f32 0.0, %v7279
    %7281 = vmatmul.f32.gmra.mxu0 %v7098
    %v7282 = vpop.f32.mrf.mxu0
    %v7283 = vadd.f32 0.0, %v7282
    %7284 = vmatmul.f32.gmra.mxu0 %v7101
    %v7285 = vpop.f32.mrf.mxu0
    %v7286 = vadd.f32 0.0, %v7285
    %7287 = vmatmul.f32.gmra.mxu0 %v7104
    %v7288 = vpop.f32.mrf.mxu0
    %v7289 = vadd.f32 0.0, %v7288
    %7290 = vmatmul.f32.gmra.mxu0 %v7107
    %v7291 = vpop.f32.mrf.mxu0
    %v7292 = vadd.f32 0.0, %v7291
    %7293 = vmatmul.f32.gmra.mxu0 %v7110
    %v7294 = vpop.f32.mrf.mxu0
    %v7295 = vadd.f32 0.0, %v7294
    %7296 = vmatmul.f32.gmra.mxu0 %v7113
    %v7297 = vpop.f32.mrf.mxu0
    %v7298 = vadd.f32 0.0, %v7297
    %7299 = vmatmul.f32.gmra.mxu0 %v7116
    %v7300 = vpop.f32.mrf.mxu0
    %v7301 = vadd.f32 0.0, %v7300
    %7302 = vmatmul.f32.gmra.mxu0 %v7119
    %v7303 = vpop.f32.mrf.mxu0
    %v7304 = vadd.f32 0.0, %v7303
    %7305 = vmatmul.f32.gmra.mxu0 %v7122
    %v7306 = vpop.f32.mrf.mxu0
    %v7307 = vadd.f32 0.0, %v7306
    %7308 = vmatmul.f32.gmra.mxu0 %v7125
    %v7309 = vpop.f32.mrf.mxu0
    %v7310 = vadd.f32 0.0, %v7309
    %7311 = vmatmul.f32.gmra.mxu0 %v7128
    %v7312 = vpop.f32.mrf.mxu0
    %v7313 = vadd.f32 0.0, %v7312
    %7314 = vmatmul.f32.gmra.mxu0 %v7131
    %v7315 = vpop.f32.mrf.mxu0
    %v7316 = vadd.f32 0.0, %v7315
    %7317 = vmatmul.f32.gmra.mxu0 %v7134
    %v7318 = vpop.f32.mrf.mxu0
    %v7319 = vadd.f32 0.0, %v7318
    %7320 = vmatmul.f32.gmra.mxu0 %v7137
    %v7321 = vpop.f32.mrf.mxu0
    %v7322 = vadd.f32 0.0, %v7321
    %7323 = vmatmul.f32.gmra.mxu0 %v7140
    %v7324 = vpop.f32.mrf.mxu0
    %v7325 = vadd.f32 0.0, %v7324
    %7326 = vmatmul.f32.gmra.mxu0 %v7143
    %v7327 = vpop.f32.mrf.mxu0
    %v7328 = vadd.f32 0.0, %v7327
    %7329 = vmatmul.f32.gmra.mxu0 %v7146
    %v7330 = vpop.f32.mrf.mxu0
    %v7331 = vadd.f32 0.0, %v7330
    %7332 = vmatmul.f32.gmra.mxu0 %v7149
    %v7333 = vpop.f32.mrf.mxu0
    %v7334 = vadd.f32 0.0, %v7333
    %7335 = vmatmul.f32.gmra.mxu0 %v7152
    %v7336 = vpop.f32.mrf.mxu0
    %v7337 = vadd.f32 0.0, %v7336
    %7338 = vmatmul.f32.gmra.mxu0 %v7155
    %v7339 = vpop.f32.mrf.mxu0
    %v7340 = vadd.f32 0.0, %v7339
    %7341 = vmatmul.f32.gmra.mxu0 %v7158
    %v7342 = vpop.f32.mrf.mxu0
    %v7343 = vadd.f32 0.0, %v7342
    %7344 = vmatmul.f32.gmra.mxu0 %v7161
    %v7345 = vpop.f32.mrf.mxu0
    %v7346 = vadd.f32 0.0, %v7345
    %7347 = vmatmul.f32.gmra.mxu0 %v7164
    %v7348 = vpop.f32.mrf.mxu0
    %v7349 = vadd.f32 0.0, %v7348
    %7350 = vmatmul.f32.gmra.mxu0 %v7167
    %v7351 = vpop.f32.mrf.mxu0
    %v7352 = vadd.f32 0.0, %v7351
    %7353 = vmatmul.f32.gmra.mxu0 %v7170
    %v7354 = vpop.f32.mrf.mxu0
    %v7355 = vadd.f32 0.0, %v7354
    %7356 = vmatmul.f32.gmra.mxu0 %v7173
    %v7357 = vpop.f32.mrf.mxu0
    %v7358 = vadd.f32 0.0, %v7357
    %7359 = vmatmul.f32.gmra.mxu0 %v7176
    %v7360 = vpop.f32.mrf.mxu0
    %v7361 = vadd.f32 0.0, %v7360
    %7362 = vmatmul.f32.gmra.mxu0 %v7179
    %v7363 = vpop.f32.mrf.mxu0
    %v7364 = vadd.f32 0.0, %v7363
    %7365 = vmatmul.f32.gmra.mxu0 %v7182
    %v7366 = vpop.f32.mrf.mxu0
    %v7367 = vadd.f32 0.0, %v7366
    %7368 = vmatmul.f32.gmra.mxu0 %v7185
    %v7369 = vpop.f32.mrf.mxu0
    %v7370 = vadd.f32 0.0, %v7369
    %7371 = vmatmul.f32.gmra.mxu0 %v7188
    %v7372 = vpop.f32.mrf.mxu0
    %v7373 = vadd.f32 0.0, %v7372
    %7374 = vmatmul.f32.gmra.mxu0 %v7191
    %v7375 = vpop.f32.mrf.mxu0
    %v7376 = vadd.f32 0.0, %v7375
    %7377 = vmatmul.f32.gmra.mxu0 %v7194
    %v7378 = vpop.f32.mrf.mxu0
    %v7379 = vadd.f32 0.0, %v7378
    %7380 = vmatmul.f32.gmra.mxu0 %v7197
    %v7381 = vpop.f32.mrf.mxu0
    %v7382 = vadd.f32 0.0, %v7381
    %7383 = vmatmul.f32.gmra.mxu0 %v7200
    %v7384 = vpop.f32.mrf.mxu0
    %v7385 = vadd.f32 0.0, %v7384
    %7386 = vmatmul.f32.gmra.mxu0 %v7203
    %v7387 = vpop.f32.mrf.mxu0
    %v7388 = vadd.f32 0.0, %v7387
    %7389 = vmatmul.f32.gmra.mxu0 %v7206
    %v7390 = vpop.f32.mrf.mxu0
    %v7391 = vadd.f32 0.0, %v7390
    %7392 = vmatmul.f32.gmra.mxu0 %v7209
    %v7393 = vpop.f32.mrf.mxu0
    %v7394 = vadd.f32 0.0, %v7393
    %7395 = vmatmul.f32.gmra.mxu0 %v7212
    %v7396 = vpop.f32.mrf.mxu0
    %v7397 = vadd.f32 0.0, %v7396
    %7398 = vmatmul.f32.gmra.mxu0 %v7215
    %v7399 = vpop.f32.mrf.mxu0
    %v7400 = vadd.f32 0.0, %v7399
    %7401 = vdwg.mxu0
    %v7402 = vadd.f32 %v6929, %v7235
    %v7403 = vadd.f32 %v6930, %v7238
    %v7404 = vadd.f32 %v6931, %v7241
    %v7405 = vadd.f32 %v6932, %v7244
    %v7406 = vadd.f32 %v6933, %v7247
    %v7407 = vadd.f32 %v6934, %v7250
    %v7408 = vadd.f32 %v6935, %v7253
    %v7409 = vadd.f32 %v6936, %v7256
    %v7410 = vadd.f32 %v6937, %v7259
    %v7411 = vadd.f32 %v6938, %v7262
    %v7412 = vadd.f32 %v6939, %v7265
    %v7413 = vadd.f32 %v6940, %v7268
    %v7414 = vadd.f32 %v6941, %v7271
    %v7415 = vadd.f32 %v6942, %v7274
    %v7416 = vadd.f32 %v6943, %v7277
    %v7417 = vadd.f32 %v6944, %v7280
    %v7418 = vadd.f32 %v6945, %v7283
    %v7419 = vadd.f32 %v6946, %v7286
    %v7420 = vadd.f32 %v6947, %v7289
    %v7421 = vadd.f32 %v6948, %v7292
    %v7422 = vadd.f32 %v6949, %v7295
    %v7423 = vadd.f32 %v6950, %v7298
    %v7424 = vadd.f32 %v6951, %v7301
    %v7425 = vadd.f32 %v6952, %v7304
    %v7426 = vadd.f32 %v6953, %v7307
    %v7427 = vadd.f32 %v6954, %v7310
    %v7428 = vadd.f32 %v6955, %v7313
    %v7429 = vadd.f32 %v6956, %v7316
    %v7430 = vadd.f32 %v6957, %v7319
    %v7431 = vadd.f32 %v6958, %v7322
    %v7432 = vadd.f32 %v6959, %v7325
    %v7433 = vadd.f32 %v6960, %v7328
    %v7434 = vadd.f32 %v6961, %v7331
    %v7435 = vadd.f32 %v6962, %v7334
    %v7436 = vadd.f32 %v6963, %v7337
    %v7437 = vadd.f32 %v6964, %v7340
    %v7438 = vadd.f32 %v6965, %v7343
    %v7439 = vadd.f32 %v6966, %v7346
    %v7440 = vadd.f32 %v6967, %v7349
    %v7441 = vadd.f32 %v6968, %v7352
    %v7442 = vadd.f32 %v6969, %v7355
    %v7443 = vadd.f32 %v6970, %v7358
    %v7444 = vadd.f32 %v6971, %v7361
    %v7445 = vadd.f32 %v6972, %v7364
    %v7446 = vadd.f32 %v6973, %v7367
    %v7447 = vadd.f32 %v6974, %v7370
    %v7448 = vadd.f32 %v6975, %v7373
    %v7449 = vadd.f32 %v6976, %v7376
    %v7450 = vadd.f32 %v6977, %v7379
    %v7451 = vadd.f32 %v6978, %v7382
    %v7452 = vadd.f32 %v6979, %v7385
    %v7453 = vadd.f32 %v6980, %v7388
    %v7454 = vadd.f32 %v6981, %v7391
    %v7455 = vadd.f32 %v6982, %v7394
    %v7456 = vadd.f32 %v6983, %v7397
    %v7457 = vadd.f32 %v6984, %v7400
    %v7458 = vld [vmem:[#allocation3 + $0x9] sm:$0xff]
    %v7459 = vld [vmem:[#allocation3 + $0x11] sm:$0xff]
    %v7460 = vld [vmem:[#allocation3 + $0x19] sm:$0xff]
    %v7461 = vld [vmem:[#allocation3 + $0x21] sm:$0xff]
    %v7462 = vld [vmem:[#allocation3 + $0x29] sm:$0xff]
    %v7463 = vld [vmem:[#allocation3 + $0x31] sm:$0xff]
    %v7464 = vld [vmem:[#allocation3 + $0x39] sm:$0xff]
    %v7465 = vld [vmem:[#allocation3 + $0x41] sm:$0xff]
    %v7466 = vld [vmem:[#allocation3 + $0x49] sm:$0xff]
    %v7467 = vld [vmem:[#allocation3 + $0x51] sm:$0xff]
    %v7468 = vld [vmem:[#allocation3 + $0x59] sm:$0xff]
    %v7469 = vld [vmem:[#allocation3 + $0x61] sm:$0xff]
    %v7470 = vld [vmem:[#allocation3 + $0x69] sm:$0xff]
    %v7471 = vld [vmem:[#allocation3 + $0x71] sm:$0xff]
    %v7472 = vld [vmem:[#allocation3 + $0x79] sm:$0xff]
    %v7473 = vld [vmem:[#allocation3 + $0x81] sm:$0xff]
    %v7474 = vld [vmem:[#allocation3 + $0x89] sm:$0xff]
    %v7475 = vld [vmem:[#allocation3 + $0x91] sm:$0xff]
    %v7476 = vld [vmem:[#allocation3 + $0x99] sm:$0xff]
    %v7477 = vld [vmem:[#allocation3 + $0xa1] sm:$0xff]
    %v7478 = vld [vmem:[#allocation3 + $0xa9] sm:$0xff]
    %v7479 = vld [vmem:[#allocation3 + $0xb1] sm:$0xff]
    %v7480 = vld [vmem:[#allocation3 + $0xb9] sm:$0xff]
    %v7481 = vld [vmem:[#allocation3 + $0xc1] sm:$0xff]
    %v7482 = vld [vmem:[#allocation3 + $0xc9] sm:$0xff]
    %v7483 = vld [vmem:[#allocation3 + $0xd1] sm:$0xff]
    %v7484 = vld [vmem:[#allocation3 + $0xd9] sm:$0xff]
    %v7485 = vld [vmem:[#allocation3 + $0xe1] sm:$0xff]
    %v7486 = vld [vmem:[#allocation3 + $0xe9] sm:$0xff]
    %v7487 = vld [vmem:[#allocation3 + $0xf1] sm:$0xff]
    %v7488 = vld [vmem:[#allocation3 + $0xf9] sm:$0xff]
    %v7489 = vld [vmem:[#allocation3 + $0x101] sm:$0xff]
    %v7490 = vld [vmem:[#allocation3 + $0x109] sm:$0xff]
    %v7491 = vld [vmem:[#allocation3 + $0x111] sm:$0xff]
    %v7492 = vld [vmem:[#allocation3 + $0x119] sm:$0xff]
    %v7493 = vld [vmem:[#allocation3 + $0x121] sm:$0xff]
    %v7494 = vld [vmem:[#allocation3 + $0x129] sm:$0xff]
    %v7495 = vld [vmem:[#allocation3 + $0x131] sm:$0xff]
    %v7496 = vld [vmem:[#allocation3 + $0x139] sm:$0xff]
    %v7497 = vld [vmem:[#allocation3 + $0x141] sm:$0xff]
    %v7498 = vld [vmem:[#allocation3 + $0x149] sm:$0xff]
    %v7499 = vld [vmem:[#allocation3 + $0x151] sm:$0xff]
    %v7500 = vld [vmem:[#allocation3 + $0x159] sm:$0xff]
    %v7501 = vld [vmem:[#allocation3 + $0x161] sm:$0xff]
    %v7502 = vld [vmem:[#allocation3 + $0x169] sm:$0xff]
    %v7503 = vld [vmem:[#allocation3 + $0x171] sm:$0xff]
    %v7504 = vld [vmem:[#allocation3 + $0x179] sm:$0xff]
    %v7505 = vld [vmem:[#allocation3 + $0x181] sm:$0xff]
    %v7506 = vld [vmem:[#allocation3 + $0x189] sm:$0xff]
    %v7507 = vld [vmem:[#allocation3 + $0x191] sm:$0xff]
    %v7508 = vld [vmem:[#allocation3 + $0x199] sm:$0xff]
    %v7509 = vld [vmem:[#allocation3 + $0x1a1] sm:$0xff]
    %v7510 = vld [vmem:[#allocation3 + $0x1a9] sm:$0xff]
    %v7511 = vld [vmem:[#allocation3 + $0x1b1] sm:$0xff]
    %v7512 = vld [vmem:[#allocation3 + $0x1b9] sm:$0xff]
    %v7513 = vld [vmem:[#allocation3 + $0x1c1] sm:$0xff]
    %v7514 = vld [vmem:[#allocation8 + $0x140] sm:$0xff]
    %v7515 = vld [vmem:[#allocation8 + $0x148] sm:$0xff]
    %v7516 = vld [vmem:[#allocation8 + $0x150] sm:$0xff]
    %v7517 = vld [vmem:[#allocation8 + $0x158] sm:$0xff]
    %v7518 = vld [vmem:[#allocation8 + $0x160] sm:$0xff]
    %v7519 = vld [vmem:[#allocation8 + $0x168] sm:$0xff]
    %v7520 = vld [vmem:[#allocation8 + $0x170] sm:$0xff]
    %v7521 = vld [vmem:[#allocation8 + $0x178] sm:$0xff]
    %v7523 = vsel %vm134, %v7458, 0
    %v7526 = vsel %vm134, %v7459, 0
    %v7529 = vsel %vm134, %v7460, 0
    %v7532 = vsel %vm134, %v7461, 0
    %v7535 = vsel %vm134, %v7462, 0
    %v7538 = vsel %vm134, %v7463, 0
    %v7541 = vsel %vm134, %v7464, 0
    %v7544 = vsel %vm134, %v7465, 0
    %v7547 = vsel %vm134, %v7466, 0
    %v7550 = vsel %vm134, %v7467, 0
    %v7553 = vsel %vm134, %v7468, 0
    %v7556 = vsel %vm134, %v7469, 0
    %v7559 = vsel %vm134, %v7470, 0
    %v7562 = vsel %vm134, %v7471, 0
    %v7565 = vsel %vm134, %v7472, 0
    %v7568 = vsel %vm134, %v7473, 0
    %v7571 = vsel %vm134, %v7474, 0
    %v7574 = vsel %vm134, %v7475, 0
    %v7577 = vsel %vm134, %v7476, 0
    %v7580 = vsel %vm134, %v7477, 0
    %v7583 = vsel %vm134, %v7478, 0
    %v7586 = vsel %vm134, %v7479, 0
    %v7589 = vsel %vm134, %v7480, 0
    %v7592 = vsel %vm134, %v7481, 0
    %v7595 = vsel %vm134, %v7482, 0
    %v7598 = vsel %vm134, %v7483, 0
    %v7601 = vsel %vm134, %v7484, 0
    %v7604 = vsel %vm134, %v7485, 0
    %v7607 = vsel %vm134, %v7486, 0
    %v7610 = vsel %vm134, %v7487, 0
    %v7613 = vsel %vm134, %v7488, 0
    %v7616 = vsel %vm134, %v7489, 0
    %v7619 = vsel %vm134, %v7490, 0
    %v7622 = vsel %vm134, %v7491, 0
    %v7625 = vsel %vm134, %v7492, 0
    %v7628 = vsel %vm134, %v7493, 0
    %v7631 = vsel %vm134, %v7494, 0
    %v7634 = vsel %vm134, %v7495, 0
    %v7637 = vsel %vm134, %v7496, 0
    %v7640 = vsel %vm134, %v7497, 0
    %v7643 = vsel %vm134, %v7498, 0
    %v7646 = vsel %vm134, %v7499, 0
    %v7649 = vsel %vm134, %v7500, 0
    %v7652 = vsel %vm134, %v7501, 0
    %v7655 = vsel %vm134, %v7502, 0
    %v7658 = vsel %vm134, %v7503, 0
    %v7661 = vsel %vm134, %v7504, 0
    %v7664 = vsel %vm134, %v7505, 0
    %v7667 = vsel %vm134, %v7506, 0
    %v7670 = vsel %vm134, %v7507, 0
    %v7673 = vsel %vm134, %v7508, 0
    %v7676 = vsel %vm134, %v7509, 0
    %v7679 = vsel %vm134, %v7510, 0
    %v7682 = vsel %vm134, %v7511, 0
    %v7685 = vsel %vm134, %v7512, 0
    %v7688 = vsel %vm134, %v7513, 0
    %7690 = vmatpush.msra.mxu0 0.0
    %7691 = vmatpush.msra.mxu0 0.0
    %7692 = vmatpush.msra.mxu0 0.0
    %7693 = vmatpush.msra.mxu0 0.0
    %7694 = vmatpush.msra.mxu0 0.0
    %7695 = vmatpush.msra.mxu0 0.0
    %7696 = vmatpush.msra.mxu0 0.0
    %7697 = vmatpush.msra.mxu0 0.0
    %7698 = vmatpush.msra.mxu0 %v7521
    %7699 = vmatpush.msra.mxu0 %v7520
    %7700 = vmatpush.msra.mxu0 %v7519
    %7701 = vmatpush.msra.mxu0 %v7518
    %7702 = vmatpush.msra.mxu0 %v7517
    %7703 = vmatpush.msra.mxu0 %v7516
    %7704 = vmatpush.msra.mxu0 %v7515
    %7705 = vmatpush.msra.mxu0 %v7514
    %7706 = vmatmul.f32.gmra.mxu0 %v7523
    %v7707 = vpop.f32.mrf.mxu0
    %v7708 = vadd.f32 0.0, %v7707
    %7709 = vmatmul.f32.gmra.mxu0 %v7526
    %v7710 = vpop.f32.mrf.mxu0
    %v7711 = vadd.f32 0.0, %v7710
    %7712 = vmatmul.f32.gmra.mxu0 %v7529
    %v7713 = vpop.f32.mrf.mxu0
    %v7714 = vadd.f32 0.0, %v7713
    %7715 = vmatmul.f32.gmra.mxu0 %v7532
    %v7716 = vpop.f32.mrf.mxu0
    %v7717 = vadd.f32 0.0, %v7716
    %7718 = vmatmul.f32.gmra.mxu0 %v7535
    %v7719 = vpop.f32.mrf.mxu0
    %v7720 = vadd.f32 0.0, %v7719
    %7721 = vmatmul.f32.gmra.mxu0 %v7538
    %v7722 = vpop.f32.mrf.mxu0
    %v7723 = vadd.f32 0.0, %v7722
    %7724 = vmatmul.f32.gmra.mxu0 %v7541
    %v7725 = vpop.f32.mrf.mxu0
    %v7726 = vadd.f32 0.0, %v7725
    %7727 = vmatmul.f32.gmra.mxu0 %v7544
    %v7728 = vpop.f32.mrf.mxu0
    %v7729 = vadd.f32 0.0, %v7728
    %7730 = vmatmul.f32.gmra.mxu0 %v7547
    %v7731 = vpop.f32.mrf.mxu0
    %v7732 = vadd.f32 0.0, %v7731
    %7733 = vmatmul.f32.gmra.mxu0 %v7550
    %v7734 = vpop.f32.mrf.mxu0
    %v7735 = vadd.f32 0.0, %v7734
    %7736 = vmatmul.f32.gmra.mxu0 %v7553
    %v7737 = vpop.f32.mrf.mxu0
    %v7738 = vadd.f32 0.0, %v7737
    %7739 = vmatmul.f32.gmra.mxu0 %v7556
    %v7740 = vpop.f32.mrf.mxu0
    %v7741 = vadd.f32 0.0, %v7740
    %7742 = vmatmul.f32.gmra.mxu0 %v7559
    %v7743 = vpop.f32.mrf.mxu0
    %v7744 = vadd.f32 0.0, %v7743
    %7745 = vmatmul.f32.gmra.mxu0 %v7562
    %v7746 = vpop.f32.mrf.mxu0
    %v7747 = vadd.f32 0.0, %v7746
    %7748 = vmatmul.f32.gmra.mxu0 %v7565
    %v7749 = vpop.f32.mrf.mxu0
    %v7750 = vadd.f32 0.0, %v7749
    %7751 = vmatmul.f32.gmra.mxu0 %v7568
    %v7752 = vpop.f32.mrf.mxu0
    %v7753 = vadd.f32 0.0, %v7752
    %7754 = vmatmul.f32.gmra.mxu0 %v7571
    %v7755 = vpop.f32.mrf.mxu0
    %v7756 = vadd.f32 0.0, %v7755
    %7757 = vmatmul.f32.gmra.mxu0 %v7574
    %v7758 = vpop.f32.mrf.mxu0
    %v7759 = vadd.f32 0.0, %v7758
    %7760 = vmatmul.f32.gmra.mxu0 %v7577
    %v7761 = vpop.f32.mrf.mxu0
    %v7762 = vadd.f32 0.0, %v7761
    %7763 = vmatmul.f32.gmra.mxu0 %v7580
    %v7764 = vpop.f32.mrf.mxu0
    %v7765 = vadd.f32 0.0, %v7764
    %7766 = vmatmul.f32.gmra.mxu0 %v7583
    %v7767 = vpop.f32.mrf.mxu0
    %v7768 = vadd.f32 0.0, %v7767
    %7769 = vmatmul.f32.gmra.mxu0 %v7586
    %v7770 = vpop.f32.mrf.mxu0
    %v7771 = vadd.f32 0.0, %v7770
    %7772 = vmatmul.f32.gmra.mxu0 %v7589
    %v7773 = vpop.f32.mrf.mxu0
    %v7774 = vadd.f32 0.0, %v7773
    %7775 = vmatmul.f32.gmra.mxu0 %v7592
    %v7776 = vpop.f32.mrf.mxu0
    %v7777 = vadd.f32 0.0, %v7776
    %7778 = vmatmul.f32.gmra.mxu0 %v7595
    %v7779 = vpop.f32.mrf.mxu0
    %v7780 = vadd.f32 0.0, %v7779
    %7781 = vmatmul.f32.gmra.mxu0 %v7598
    %v7782 = vpop.f32.mrf.mxu0
    %v7783 = vadd.f32 0.0, %v7782
    %7784 = vmatmul.f32.gmra.mxu0 %v7601
    %v7785 = vpop.f32.mrf.mxu0
    %v7786 = vadd.f32 0.0, %v7785
    %7787 = vmatmul.f32.gmra.mxu0 %v7604
    %v7788 = vpop.f32.mrf.mxu0
    %v7789 = vadd.f32 0.0, %v7788
    %7790 = vmatmul.f32.gmra.mxu0 %v7607
    %v7791 = vpop.f32.mrf.mxu0
    %v7792 = vadd.f32 0.0, %v7791
    %7793 = vmatmul.f32.gmra.mxu0 %v7610
    %v7794 = vpop.f32.mrf.mxu0
    %v7795 = vadd.f32 0.0, %v7794
    %7796 = vmatmul.f32.gmra.mxu0 %v7613
    %v7797 = vpop.f32.mrf.mxu0
    %v7798 = vadd.f32 0.0, %v7797
    %7799 = vmatmul.f32.gmra.mxu0 %v7616
    %v7800 = vpop.f32.mrf.mxu0
    %v7801 = vadd.f32 0.0, %v7800
    %7802 = vmatmul.f32.gmra.mxu0 %v7619
    %v7803 = vpop.f32.mrf.mxu0
    %v7804 = vadd.f32 0.0, %v7803
    %7805 = vmatmul.f32.gmra.mxu0 %v7622
    %v7806 = vpop.f32.mrf.mxu0
    %v7807 = vadd.f32 0.0, %v7806
    %7808 = vmatmul.f32.gmra.mxu0 %v7625
    %v7809 = vpop.f32.mrf.mxu0
    %v7810 = vadd.f32 0.0, %v7809
    %7811 = vmatmul.f32.gmra.mxu0 %v7628
    %v7812 = vpop.f32.mrf.mxu0
    %v7813 = vadd.f32 0.0, %v7812
    %7814 = vmatmul.f32.gmra.mxu0 %v7631
    %v7815 = vpop.f32.mrf.mxu0
    %v7816 = vadd.f32 0.0, %v7815
    %7817 = vmatmul.f32.gmra.mxu0 %v7634
    %v7818 = vpop.f32.mrf.mxu0
    %v7819 = vadd.f32 0.0, %v7818
    %7820 = vmatmul.f32.gmra.mxu0 %v7637
    %v7821 = vpop.f32.mrf.mxu0
    %v7822 = vadd.f32 0.0, %v7821
    %7823 = vmatmul.f32.gmra.mxu0 %v7640
    %v7824 = vpop.f32.mrf.mxu0
    %v7825 = vadd.f32 0.0, %v7824
    %7826 = vmatmul.f32.gmra.mxu0 %v7643
    %v7827 = vpop.f32.mrf.mxu0
    %v7828 = vadd.f32 0.0, %v7827
    %7829 = vmatmul.f32.gmra.mxu0 %v7646
    %v7830 = vpop.f32.mrf.mxu0
    %v7831 = vadd.f32 0.0, %v7830
    %7832 = vmatmul.f32.gmra.mxu0 %v7649
    %v7833 = vpop.f32.mrf.mxu0
    %v7834 = vadd.f32 0.0, %v7833
    %7835 = vmatmul.f32.gmra.mxu0 %v7652
    %v7836 = vpop.f32.mrf.mxu0
    %v7837 = vadd.f32 0.0, %v7836
    %7838 = vmatmul.f32.gmra.mxu0 %v7655
    %v7839 = vpop.f32.mrf.mxu0
    %v7840 = vadd.f32 0.0, %v7839
    %7841 = vmatmul.f32.gmra.mxu0 %v7658
    %v7842 = vpop.f32.mrf.mxu0
    %v7843 = vadd.f32 0.0, %v7842
    %7844 = vmatmul.f32.gmra.mxu0 %v7661
    %v7845 = vpop.f32.mrf.mxu0
    %v7846 = vadd.f32 0.0, %v7845
    %7847 = vmatmul.f32.gmra.mxu0 %v7664
    %v7848 = vpop.f32.mrf.mxu0
    %v7849 = vadd.f32 0.0, %v7848
    %7850 = vmatmul.f32.gmra.mxu0 %v7667
    %v7851 = vpop.f32.mrf.mxu0
    %v7852 = vadd.f32 0.0, %v7851
    %7853 = vmatmul.f32.gmra.mxu0 %v7670
    %v7854 = vpop.f32.mrf.mxu0
    %v7855 = vadd.f32 0.0, %v7854
    %7856 = vmatmul.f32.gmra.mxu0 %v7673
    %v7857 = vpop.f32.mrf.mxu0
    %v7858 = vadd.f32 0.0, %v7857
    %7859 = vmatmul.f32.gmra.mxu0 %v7676
    %v7860 = vpop.f32.mrf.mxu0
    %v7861 = vadd.f32 0.0, %v7860
    %7862 = vmatmul.f32.gmra.mxu0 %v7679
    %v7863 = vpop.f32.mrf.mxu0
    %v7864 = vadd.f32 0.0, %v7863
    %7865 = vmatmul.f32.gmra.mxu0 %v7682
    %v7866 = vpop.f32.mrf.mxu0
    %v7867 = vadd.f32 0.0, %v7866
    %7868 = vmatmul.f32.gmra.mxu0 %v7685
    %v7869 = vpop.f32.mrf.mxu0
    %v7870 = vadd.f32 0.0, %v7869
    %7871 = vmatmul.f32.gmra.mxu0 %v7688
    %v7872 = vpop.f32.mrf.mxu0
    %v7873 = vadd.f32 0.0, %v7872
    %7874 = vdwg.mxu0
    %v7875 = vadd.f32 %v7402, %v7708
    %v7876 = vadd.f32 %v7403, %v7711
    %v7877 = vadd.f32 %v7404, %v7714
    %v7878 = vadd.f32 %v7405, %v7717
    %v7879 = vadd.f32 %v7406, %v7720
    %v7880 = vadd.f32 %v7407, %v7723
    %v7881 = vadd.f32 %v7408, %v7726
    %v7882 = vadd.f32 %v7409, %v7729
    %v7883 = vadd.f32 %v7410, %v7732
    %v7884 = vadd.f32 %v7411, %v7735
    %v7885 = vadd.f32 %v7412, %v7738
    %v7886 = vadd.f32 %v7413, %v7741
    %v7887 = vadd.f32 %v7414, %v7744
    %v7888 = vadd.f32 %v7415, %v7747
    %v7889 = vadd.f32 %v7416, %v7750
    %v7890 = vadd.f32 %v7417, %v7753
    %v7891 = vadd.f32 %v7418, %v7756
    %v7892 = vadd.f32 %v7419, %v7759
    %v7893 = vadd.f32 %v7420, %v7762
    %v7894 = vadd.f32 %v7421, %v7765
    %v7895 = vadd.f32 %v7422, %v7768
    %v7896 = vadd.f32 %v7423, %v7771
    %v7897 = vadd.f32 %v7424, %v7774
    %v7898 = vadd.f32 %v7425, %v7777
    %v7899 = vadd.f32 %v7426, %v7780
    %v7900 = vadd.f32 %v7427, %v7783
    %v7901 = vadd.f32 %v7428, %v7786
    %v7902 = vadd.f32 %v7429, %v7789
    %v7903 = vadd.f32 %v7430, %v7792
    %v7904 = vadd.f32 %v7431, %v7795
    %v7905 = vadd.f32 %v7432, %v7798
    %v7906 = vadd.f32 %v7433, %v7801
    %v7907 = vadd.f32 %v7434, %v7804
    %v7908 = vadd.f32 %v7435, %v7807
    %v7909 = vadd.f32 %v7436, %v7810
    %v7910 = vadd.f32 %v7437, %v7813
    %v7911 = vadd.f32 %v7438, %v7816
    %v7912 = vadd.f32 %v7439, %v7819
    %v7913 = vadd.f32 %v7440, %v7822
    %v7914 = vadd.f32 %v7441, %v7825
    %v7915 = vadd.f32 %v7442, %v7828
    %v7916 = vadd.f32 %v7443, %v7831
    %v7917 = vadd.f32 %v7444, %v7834
    %v7918 = vadd.f32 %v7445, %v7837
    %v7919 = vadd.f32 %v7446, %v7840
    %v7920 = vadd.f32 %v7447, %v7843
    %v7921 = vadd.f32 %v7448, %v7846
    %v7922 = vadd.f32 %v7449, %v7849
    %v7923 = vadd.f32 %v7450, %v7852
    %v7924 = vadd.f32 %v7451, %v7855
    %v7925 = vadd.f32 %v7452, %v7858
    %v7926 = vadd.f32 %v7453, %v7861
    %v7927 = vadd.f32 %v7454, %v7864
    %v7928 = vadd.f32 %v7455, %v7867
    %v7929 = vadd.f32 %v7456, %v7870
    %v7930 = vadd.f32 %v7457, %v7873
    %v7931 = vld [vmem:[#allocation3 + $0xe] sm:$0xff]
    %v7932 = vld [vmem:[#allocation3 + $0x16] sm:$0xff]
    %v7933 = vld [vmem:[#allocation3 + $0x1e] sm:$0xff]
    %v7934 = vld [vmem:[#allocation3 + $0x26] sm:$0xff]
    %v7935 = vld [vmem:[#allocation3 + $0x2e] sm:$0xff]
    %v7936 = vld [vmem:[#allocation3 + $0x36] sm:$0xff]
    %v7937 = vld [vmem:[#allocation3 + $0x3e] sm:$0xff]
    %v7938 = vld [vmem:[#allocation3 + $0x46] sm:$0xff]
    %v7939 = vld [vmem:[#allocation3 + $0x4e] sm:$0xff]
    %v7940 = vld [vmem:[#allocation3 + $0x56] sm:$0xff]
    %v7941 = vld [vmem:[#allocation3 + $0x5e] sm:$0xff]
    %v7942 = vld [vmem:[#allocation3 + $0x66] sm:$0xff]
    %v7943 = vld [vmem:[#allocation3 + $0x6e] sm:$0xff]
    %v7944 = vld [vmem:[#allocation3 + $0x76] sm:$0xff]
    %v7945 = vld [vmem:[#allocation3 + $0x7e] sm:$0xff]
    %v7946 = vld [vmem:[#allocation3 + $0x86] sm:$0xff]
    %v7947 = vld [vmem:[#allocation3 + $0x8e] sm:$0xff]
    %v7948 = vld [vmem:[#allocation3 + $0x96] sm:$0xff]
    %v7949 = vld [vmem:[#allocation3 + $0x9e] sm:$0xff]
    %v7950 = vld [vmem:[#allocation3 + $0xa6] sm:$0xff]
    %v7951 = vld [vmem:[#allocation3 + $0xae] sm:$0xff]
    %v7952 = vld [vmem:[#allocation3 + $0xb6] sm:$0xff]
    %v7953 = vld [vmem:[#allocation3 + $0xbe] sm:$0xff]
    %v7954 = vld [vmem:[#allocation3 + $0xc6] sm:$0xff]
    %v7955 = vld [vmem:[#allocation3 + $0xce] sm:$0xff]
    %v7956 = vld [vmem:[#allocation3 + $0xd6] sm:$0xff]
    %v7957 = vld [vmem:[#allocation3 + $0xde] sm:$0xff]
    %v7958 = vld [vmem:[#allocation3 + $0xe6] sm:$0xff]
    %v7959 = vld [vmem:[#allocation3 + $0xee] sm:$0xff]
    %v7960 = vld [vmem:[#allocation3 + $0xf6] sm:$0xff]
    %v7961 = vld [vmem:[#allocation3 + $0xfe] sm:$0xff]
    %v7962 = vld [vmem:[#allocation3 + $0x106] sm:$0xff]
    %v7963 = vld [vmem:[#allocation3 + $0x10e] sm:$0xff]
    %v7964 = vld [vmem:[#allocation3 + $0x116] sm:$0xff]
    %v7965 = vld [vmem:[#allocation3 + $0x11e] sm:$0xff]
    %v7966 = vld [vmem:[#allocation3 + $0x126] sm:$0xff]
    %v7967 = vld [vmem:[#allocation3 + $0x12e] sm:$0xff]
    %v7968 = vld [vmem:[#allocation3 + $0x136] sm:$0xff]
    %v7969 = vld [vmem:[#allocation3 + $0x13e] sm:$0xff]
    %v7970 = vld [vmem:[#allocation3 + $0x146] sm:$0xff]
    %v7971 = vld [vmem:[#allocation3 + $0x14e] sm:$0xff]
    %v7972 = vld [vmem:[#allocation3 + $0x156] sm:$0xff]
    %v7973 = vld [vmem:[#allocation3 + $0x15e] sm:$0xff]
    %v7974 = vld [vmem:[#allocation3 + $0x166] sm:$0xff]
    %v7975 = vld [vmem:[#allocation3 + $0x16e] sm:$0xff]
    %v7976 = vld [vmem:[#allocation3 + $0x176] sm:$0xff]
    %v7977 = vld [vmem:[#allocation3 + $0x17e] sm:$0xff]
    %v7978 = vld [vmem:[#allocation3 + $0x186] sm:$0xff]
    %v7979 = vld [vmem:[#allocation3 + $0x18e] sm:$0xff]
    %v7980 = vld [vmem:[#allocation3 + $0x196] sm:$0xff]
    %v7981 = vld [vmem:[#allocation3 + $0x19e] sm:$0xff]
    %v7982 = vld [vmem:[#allocation3 + $0x1a6] sm:$0xff]
    %v7983 = vld [vmem:[#allocation3 + $0x1ae] sm:$0xff]
    %v7984 = vld [vmem:[#allocation3 + $0x1b6] sm:$0xff]
    %v7985 = vld [vmem:[#allocation3 + $0x1be] sm:$0xff]
    %v7986 = vld [vmem:[#allocation3 + $0x1c6] sm:$0xff]
    %v7987 = vld [vmem:[#allocation8 + $0x180] sm:$0xff]
    %v7988 = vld [vmem:[#allocation8 + $0x188] sm:$0xff]
    %v7989 = vld [vmem:[#allocation8 + $0x190] sm:$0xff]
    %v7990 = vld [vmem:[#allocation8 + $0x198] sm:$0xff]
    %v7991 = vld [vmem:[#allocation8 + $0x1a0] sm:$0xff]
    %v7992 = vld [vmem:[#allocation8 + $0x1a8] sm:$0xff]
    %v7993 = vld [vmem:[#allocation8 + $0x1b0] sm:$0xff]
    %v7994 = vld [vmem:[#allocation8 + $0x1b8] sm:$0xff]
    %v7996 = vsel %vm134, %v7931, 0
    %v7999 = vsel %vm134, %v7932, 0
    %v8002 = vsel %vm134, %v7933, 0
    %v8005 = vsel %vm134, %v7934, 0
    %v8008 = vsel %vm134, %v7935, 0
    %v8011 = vsel %vm134, %v7936, 0
    %v8014 = vsel %vm134, %v7937, 0
    %v8017 = vsel %vm134, %v7938, 0
    %v8020 = vsel %vm134, %v7939, 0
    %v8023 = vsel %vm134, %v7940, 0
    %v8026 = vsel %vm134, %v7941, 0
    %v8029 = vsel %vm134, %v7942, 0
    %v8032 = vsel %vm134, %v7943, 0
    %v8035 = vsel %vm134, %v7944, 0
    %v8038 = vsel %vm134, %v7945, 0
    %v8041 = vsel %vm134, %v7946, 0
    %v8044 = vsel %vm134, %v7947, 0
    %v8047 = vsel %vm134, %v7948, 0
    %v8050 = vsel %vm134, %v7949, 0
    %v8053 = vsel %vm134, %v7950, 0
    %v8056 = vsel %vm134, %v7951, 0
    %v8059 = vsel %vm134, %v7952, 0
    %v8062 = vsel %vm134, %v7953, 0
    %v8065 = vsel %vm134, %v7954, 0
    %v8068 = vsel %vm134, %v7955, 0
    %v8071 = vsel %vm134, %v7956, 0
    %v8074 = vsel %vm134, %v7957, 0
    %v8077 = vsel %vm134, %v7958, 0
    %v8080 = vsel %vm134, %v7959, 0
    %v8083 = vsel %vm134, %v7960, 0
    %v8086 = vsel %vm134, %v7961, 0
    %v8089 = vsel %vm134, %v7962, 0
    %v8092 = vsel %vm134, %v7963, 0
    %v8095 = vsel %vm134, %v7964, 0
    %v8098 = vsel %vm134, %v7965, 0
    %v8101 = vsel %vm134, %v7966, 0
    %v8104 = vsel %vm134, %v7967, 0
    %v8107 = vsel %vm134, %v7968, 0
    %v8110 = vsel %vm134, %v7969, 0
    %v8113 = vsel %vm134, %v7970, 0
    %v8116 = vsel %vm134, %v7971, 0
    %v8119 = vsel %vm134, %v7972, 0
    %v8122 = vsel %vm134, %v7973, 0
    %v8125 = vsel %vm134, %v7974, 0
    %v8128 = vsel %vm134, %v7975, 0
    %v8131 = vsel %vm134, %v7976, 0
    %v8134 = vsel %vm134, %v7977, 0
    %v8137 = vsel %vm134, %v7978, 0
    %v8140 = vsel %vm134, %v7979, 0
    %v8143 = vsel %vm134, %v7980, 0
    %v8146 = vsel %vm134, %v7981, 0
    %v8149 = vsel %vm134, %v7982, 0
    %v8152 = vsel %vm134, %v7983, 0
    %v8155 = vsel %vm134, %v7984, 0
    %v8158 = vsel %vm134, %v7985, 0
    %v8161 = vsel %vm134, %v7986, 0
    %8163 = vmatpush.msra.mxu0 0.0
    %8164 = vmatpush.msra.mxu0 0.0
    %8165 = vmatpush.msra.mxu0 0.0
    %8166 = vmatpush.msra.mxu0 0.0
    %8167 = vmatpush.msra.mxu0 0.0
    %8168 = vmatpush.msra.mxu0 0.0
    %8169 = vmatpush.msra.mxu0 0.0
    %8170 = vmatpush.msra.mxu0 0.0
    %8171 = vmatpush.msra.mxu0 %v7994
    %8172 = vmatpush.msra.mxu0 %v7993
    %8173 = vmatpush.msra.mxu0 %v7992
    %8174 = vmatpush.msra.mxu0 %v7991
    %8175 = vmatpush.msra.mxu0 %v7990
    %8176 = vmatpush.msra.mxu0 %v7989
    %8177 = vmatpush.msra.mxu0 %v7988
    %8178 = vmatpush.msra.mxu0 %v7987
    %8179 = vmatmul.f32.gmra.mxu0 %v7996
    %v8180 = vpop.f32.mrf.mxu0
    %v8181 = vadd.f32 0.0, %v8180
    %8182 = vmatmul.f32.gmra.mxu0 %v7999
    %v8183 = vpop.f32.mrf.mxu0
    %v8184 = vadd.f32 0.0, %v8183
    %8185 = vmatmul.f32.gmra.mxu0 %v8002
    %v8186 = vpop.f32.mrf.mxu0
    %v8187 = vadd.f32 0.0, %v8186
    %8188 = vmatmul.f32.gmra.mxu0 %v8005
    %v8189 = vpop.f32.mrf.mxu0
    %v8190 = vadd.f32 0.0, %v8189
    %8191 = vmatmul.f32.gmra.mxu0 %v8008
    %v8192 = vpop.f32.mrf.mxu0
    %v8193 = vadd.f32 0.0, %v8192
    %8194 = vmatmul.f32.gmra.mxu0 %v8011
    %v8195 = vpop.f32.mrf.mxu0
    %v8196 = vadd.f32 0.0, %v8195
    %8197 = vmatmul.f32.gmra.mxu0 %v8014
    %v8198 = vpop.f32.mrf.mxu0
    %v8199 = vadd.f32 0.0, %v8198
    %8200 = vmatmul.f32.gmra.mxu0 %v8017
    %v8201 = vpop.f32.mrf.mxu0
    %v8202 = vadd.f32 0.0, %v8201
    %8203 = vmatmul.f32.gmra.mxu0 %v8020
    %v8204 = vpop.f32.mrf.mxu0
    %v8205 = vadd.f32 0.0, %v8204
    %8206 = vmatmul.f32.gmra.mxu0 %v8023
    %v8207 = vpop.f32.mrf.mxu0
    %v8208 = vadd.f32 0.0, %v8207
    %8209 = vmatmul.f32.gmra.mxu0 %v8026
    %v8210 = vpop.f32.mrf.mxu0
    %v8211 = vadd.f32 0.0, %v8210
    %8212 = vmatmul.f32.gmra.mxu0 %v8029
    %v8213 = vpop.f32.mrf.mxu0
    %v8214 = vadd.f32 0.0, %v8213
    %8215 = vmatmul.f32.gmra.mxu0 %v8032
    %v8216 = vpop.f32.mrf.mxu0
    %v8217 = vadd.f32 0.0, %v8216
    %8218 = vmatmul.f32.gmra.mxu0 %v8035
    %v8219 = vpop.f32.mrf.mxu0
    %v8220 = vadd.f32 0.0, %v8219
    %8221 = vmatmul.f32.gmra.mxu0 %v8038
    %v8222 = vpop.f32.mrf.mxu0
    %v8223 = vadd.f32 0.0, %v8222
    %8224 = vmatmul.f32.gmra.mxu0 %v8041
    %v8225 = vpop.f32.mrf.mxu0
    %v8226 = vadd.f32 0.0, %v8225
    %8227 = vmatmul.f32.gmra.mxu0 %v8044
    %v8228 = vpop.f32.mrf.mxu0
    %v8229 = vadd.f32 0.0, %v8228
    %8230 = vmatmul.f32.gmra.mxu0 %v8047
    %v8231 = vpop.f32.mrf.mxu0
    %v8232 = vadd.f32 0.0, %v8231
    %8233 = vmatmul.f32.gmra.mxu0 %v8050
    %v8234 = vpop.f32.mrf.mxu0
    %v8235 = vadd.f32 0.0, %v8234
    %8236 = vmatmul.f32.gmra.mxu0 %v8053
    %v8237 = vpop.f32.mrf.mxu0
    %v8238 = vadd.f32 0.0, %v8237
    %8239 = vmatmul.f32.gmra.mxu0 %v8056
    %v8240 = vpop.f32.mrf.mxu0
    %v8241 = vadd.f32 0.0, %v8240
    %8242 = vmatmul.f32.gmra.mxu0 %v8059
    %v8243 = vpop.f32.mrf.mxu0
    %v8244 = vadd.f32 0.0, %v8243
    %8245 = vmatmul.f32.gmra.mxu0 %v8062
    %v8246 = vpop.f32.mrf.mxu0
    %v8247 = vadd.f32 0.0, %v8246
    %8248 = vmatmul.f32.gmra.mxu0 %v8065
    %v8249 = vpop.f32.mrf.mxu0
    %v8250 = vadd.f32 0.0, %v8249
    %8251 = vmatmul.f32.gmra.mxu0 %v8068
    %v8252 = vpop.f32.mrf.mxu0
    %v8253 = vadd.f32 0.0, %v8252
    %8254 = vmatmul.f32.gmra.mxu0 %v8071
    %v8255 = vpop.f32.mrf.mxu0
    %v8256 = vadd.f32 0.0, %v8255
    %8257 = vmatmul.f32.gmra.mxu0 %v8074
    %v8258 = vpop.f32.mrf.mxu0
    %v8259 = vadd.f32 0.0, %v8258
    %8260 = vmatmul.f32.gmra.mxu0 %v8077
    %v8261 = vpop.f32.mrf.mxu0
    %v8262 = vadd.f32 0.0, %v8261
    %8263 = vmatmul.f32.gmra.mxu0 %v8080
    %v8264 = vpop.f32.mrf.mxu0
    %v8265 = vadd.f32 0.0, %v8264
    %8266 = vmatmul.f32.gmra.mxu0 %v8083
    %v8267 = vpop.f32.mrf.mxu0
    %v8268 = vadd.f32 0.0, %v8267
    %8269 = vmatmul.f32.gmra.mxu0 %v8086
    %v8270 = vpop.f32.mrf.mxu0
    %v8271 = vadd.f32 0.0, %v8270
    %8272 = vmatmul.f32.gmra.mxu0 %v8089
    %v8273 = vpop.f32.mrf.mxu0
    %v8274 = vadd.f32 0.0, %v8273
    %8275 = vmatmul.f32.gmra.mxu0 %v8092
    %v8276 = vpop.f32.mrf.mxu0
    %v8277 = vadd.f32 0.0, %v8276
    %8278 = vmatmul.f32.gmra.mxu0 %v8095
    %v8279 = vpop.f32.mrf.mxu0
    %v8280 = vadd.f32 0.0, %v8279
    %8281 = vmatmul.f32.gmra.mxu0 %v8098
    %v8282 = vpop.f32.mrf.mxu0
    %v8283 = vadd.f32 0.0, %v8282
    %8284 = vmatmul.f32.gmra.mxu0 %v8101
    %v8285 = vpop.f32.mrf.mxu0
    %v8286 = vadd.f32 0.0, %v8285
    %8287 = vmatmul.f32.gmra.mxu0 %v8104
    %v8288 = vpop.f32.mrf.mxu0
    %v8289 = vadd.f32 0.0, %v8288
    %8290 = vmatmul.f32.gmra.mxu0 %v8107
    %v8291 = vpop.f32.mrf.mxu0
    %v8292 = vadd.f32 0.0, %v8291
    %8293 = vmatmul.f32.gmra.mxu0 %v8110
    %v8294 = vpop.f32.mrf.mxu0
    %v8295 = vadd.f32 0.0, %v8294
    %8296 = vmatmul.f32.gmra.mxu0 %v8113
    %v8297 = vpop.f32.mrf.mxu0
    %v8298 = vadd.f32 0.0, %v8297
    %8299 = vmatmul.f32.gmra.mxu0 %v8116
    %v8300 = vpop.f32.mrf.mxu0
    %v8301 = vadd.f32 0.0, %v8300
    %8302 = vmatmul.f32.gmra.mxu0 %v8119
    %v8303 = vpop.f32.mrf.mxu0
    %v8304 = vadd.f32 0.0, %v8303
    %8305 = vmatmul.f32.gmra.mxu0 %v8122
    %v8306 = vpop.f32.mrf.mxu0
    %v8307 = vadd.f32 0.0, %v8306
    %8308 = vmatmul.f32.gmra.mxu0 %v8125
    %v8309 = vpop.f32.mrf.mxu0
    %v8310 = vadd.f32 0.0, %v8309
    %8311 = vmatmul.f32.gmra.mxu0 %v8128
    %v8312 = vpop.f32.mrf.mxu0
    %v8313 = vadd.f32 0.0, %v8312
    %8314 = vmatmul.f32.gmra.mxu0 %v8131
    %v8315 = vpop.f32.mrf.mxu0
    %v8316 = vadd.f32 0.0, %v8315
    %8317 = vmatmul.f32.gmra.mxu0 %v8134
    %v8318 = vpop.f32.mrf.mxu0
    %v8319 = vadd.f32 0.0, %v8318
    %8320 = vmatmul.f32.gmra.mxu0 %v8137
    %v8321 = vpop.f32.mrf.mxu0
    %v8322 = vadd.f32 0.0, %v8321
    %8323 = vmatmul.f32.gmra.mxu0 %v8140
    %v8324 = vpop.f32.mrf.mxu0
    %v8325 = vadd.f32 0.0, %v8324
    %8326 = vmatmul.f32.gmra.mxu0 %v8143
    %v8327 = vpop.f32.mrf.mxu0
    %v8328 = vadd.f32 0.0, %v8327
    %8329 = vmatmul.f32.gmra.mxu0 %v8146
    %v8330 = vpop.f32.mrf.mxu0
    %v8331 = vadd.f32 0.0, %v8330
    %8332 = vmatmul.f32.gmra.mxu0 %v8149
    %v8333 = vpop.f32.mrf.mxu0
    %v8334 = vadd.f32 0.0, %v8333
    %8335 = vmatmul.f32.gmra.mxu0 %v8152
    %v8336 = vpop.f32.mrf.mxu0
    %v8337 = vadd.f32 0.0, %v8336
    %8338 = vmatmul.f32.gmra.mxu0 %v8155
    %v8339 = vpop.f32.mrf.mxu0
    %v8340 = vadd.f32 0.0, %v8339
    %8341 = vmatmul.f32.gmra.mxu0 %v8158
    %v8342 = vpop.f32.mrf.mxu0
    %v8343 = vadd.f32 0.0, %v8342
    %8344 = vmatmul.f32.gmra.mxu0 %v8161
    %v8345 = vpop.f32.mrf.mxu0
    %v8346 = vadd.f32 0.0, %v8345
    %8347 = vdwg.mxu0
    %v8348 = vadd.f32 %v7875, %v8181
    %v8349 = vadd.f32 %v7876, %v8184
    %v8350 = vadd.f32 %v7877, %v8187
    %v8351 = vadd.f32 %v7878, %v8190
    %v8352 = vadd.f32 %v7879, %v8193
    %v8353 = vadd.f32 %v7880, %v8196
    %v8354 = vadd.f32 %v7881, %v8199
    %v8355 = vadd.f32 %v7882, %v8202
    %v8356 = vadd.f32 %v7883, %v8205
    %v8357 = vadd.f32 %v7884, %v8208
    %v8358 = vadd.f32 %v7885, %v8211
    %v8359 = vadd.f32 %v7886, %v8214
    %v8360 = vadd.f32 %v7887, %v8217
    %v8361 = vadd.f32 %v7888, %v8220
    %v8362 = vadd.f32 %v7889, %v8223
    %v8363 = vadd.f32 %v7890, %v8226
    %v8364 = vadd.f32 %v7891, %v8229
    %v8365 = vadd.f32 %v7892, %v8232
    %v8366 = vadd.f32 %v7893, %v8235
    %v8367 = vadd.f32 %v7894, %v8238
    %v8368 = vadd.f32 %v7895, %v8241
    %v8369 = vadd.f32 %v7896, %v8244
    %v8370 = vadd.f32 %v7897, %v8247
    %v8371 = vadd.f32 %v7898, %v8250
    %v8372 = vadd.f32 %v7899, %v8253
    %v8373 = vadd.f32 %v7900, %v8256
    %v8374 = vadd.f32 %v7901, %v8259
    %v8375 = vadd.f32 %v7902, %v8262
    %v8376 = vadd.f32 %v7903, %v8265
    %v8377 = vadd.f32 %v7904, %v8268
    %v8378 = vadd.f32 %v7905, %v8271
    %v8379 = vadd.f32 %v7906, %v8274
    %v8380 = vadd.f32 %v7907, %v8277
    %v8381 = vadd.f32 %v7908, %v8280
    %v8382 = vadd.f32 %v7909, %v8283
    %v8383 = vadd.f32 %v7910, %v8286
    %v8384 = vadd.f32 %v7911, %v8289
    %v8385 = vadd.f32 %v7912, %v8292
    %v8386 = vadd.f32 %v7913, %v8295
    %v8387 = vadd.f32 %v7914, %v8298
    %v8388 = vadd.f32 %v7915, %v8301
    %v8389 = vadd.f32 %v7916, %v8304
    %v8390 = vadd.f32 %v7917, %v8307
    %v8391 = vadd.f32 %v7918, %v8310
    %v8392 = vadd.f32 %v7919, %v8313
    %v8393 = vadd.f32 %v7920, %v8316
    %v8394 = vadd.f32 %v7921, %v8319
    %v8395 = vadd.f32 %v7922, %v8322
    %v8396 = vadd.f32 %v7923, %v8325
    %v8397 = vadd.f32 %v7924, %v8328
    %v8398 = vadd.f32 %v7925, %v8331
    %v8399 = vadd.f32 %v7926, %v8334
    %v8400 = vadd.f32 %v7927, %v8337
    %v8401 = vadd.f32 %v7928, %v8340
    %v8402 = vadd.f32 %v7929, %v8343
    %v8403 = vadd.f32 %v7930, %v8346
    %v8404 = vld [vmem:[#allocation3 + $0xf] sm:$0xff]
    %v8405 = vld [vmem:[#allocation3 + $0x17] sm:$0xff]
    %v8406 = vld [vmem:[#allocation3 + $0x1f] sm:$0xff]
    %v8407 = vld [vmem:[#allocation3 + $0x27] sm:$0xff]
    %v8408 = vld [vmem:[#allocation3 + $0x2f] sm:$0xff]
    %v8409 = vld [vmem:[#allocation3 + $0x37] sm:$0xff]
    %v8410 = vld [vmem:[#allocation3 + $0x3f] sm:$0xff]
    %v8411 = vld [vmem:[#allocation3 + $0x47] sm:$0xff]
    %v8412 = vld [vmem:[#allocation3 + $0x4f] sm:$0xff]
    %v8413 = vld [vmem:[#allocation3 + $0x57] sm:$0xff]
    %v8414 = vld [vmem:[#allocation3 + $0x5f] sm:$0xff]
    %v8415 = vld [vmem:[#allocation3 + $0x67] sm:$0xff]
    %v8416 = vld [vmem:[#allocation3 + $0x6f] sm:$0xff]
    %v8417 = vld [vmem:[#allocation3 + $0x77] sm:$0xff]
    %v8418 = vld [vmem:[#allocation3 + $0x7f] sm:$0xff]
    %v8419 = vld [vmem:[#allocation3 + $0x87] sm:$0xff]
    %v8420 = vld [vmem:[#allocation3 + $0x8f] sm:$0xff]
    %v8421 = vld [vmem:[#allocation3 + $0x97] sm:$0xff]
    %v8422 = vld [vmem:[#allocation3 + $0x9f] sm:$0xff]
    %v8423 = vld [vmem:[#allocation3 + $0xa7] sm:$0xff]
    %v8424 = vld [vmem:[#allocation3 + $0xaf] sm:$0xff]
    %v8425 = vld [vmem:[#allocation3 + $0xb7] sm:$0xff]
    %v8426 = vld [vmem:[#allocation3 + $0xbf] sm:$0xff]
    %v8427 = vld [vmem:[#allocation3 + $0xc7] sm:$0xff]
    %v8428 = vld [vmem:[#allocation3 + $0xcf] sm:$0xff]
    %v8429 = vld [vmem:[#allocation3 + $0xd7] sm:$0xff]
    %v8430 = vld [vmem:[#allocation3 + $0xdf] sm:$0xff]
    %v8431 = vld [vmem:[#allocation3 + $0xe7] sm:$0xff]
    %v8432 = vld [vmem:[#allocation3 + $0xef] sm:$0xff]
    %v8433 = vld [vmem:[#allocation3 + $0xf7] sm:$0xff]
    %v8434 = vld [vmem:[#allocation3 + $0xff] sm:$0xff]
    %v8435 = vld [vmem:[#allocation3 + $0x107] sm:$0xff]
    %v8436 = vld [vmem:[#allocation3 + $0x10f] sm:$0xff]
    %v8437 = vld [vmem:[#allocation3 + $0x117] sm:$0xff]
    %v8438 = vld [vmem:[#allocation3 + $0x11f] sm:$0xff]
    %v8439 = vld [vmem:[#allocation3 + $0x127] sm:$0xff]
    %v8440 = vld [vmem:[#allocation3 + $0x12f] sm:$0xff]
    %v8441 = vld [vmem:[#allocation3 + $0x137] sm:$0xff]
    %v8442 = vld [vmem:[#allocation3 + $0x13f] sm:$0xff]
    %v8443 = vld [vmem:[#allocation3 + $0x147] sm:$0xff]
    %v8444 = vld [vmem:[#allocation3 + $0x14f] sm:$0xff]
    %v8445 = vld [vmem:[#allocation3 + $0x157] sm:$0xff]
    %v8446 = vld [vmem:[#allocation3 + $0x15f] sm:$0xff]
    %v8447 = vld [vmem:[#allocation3 + $0x167] sm:$0xff]
    %v8448 = vld [vmem:[#allocation3 + $0x16f] sm:$0xff]
    %v8449 = vld [vmem:[#allocation3 + $0x177] sm:$0xff]
    %v8450 = vld [vmem:[#allocation3 + $0x17f] sm:$0xff]
    %v8451 = vld [vmem:[#allocation3 + $0x187] sm:$0xff]
    %v8452 = vld [vmem:[#allocation3 + $0x18f] sm:$0xff]
    %v8453 = vld [vmem:[#allocation3 + $0x197] sm:$0xff]
    %v8454 = vld [vmem:[#allocation3 + $0x19f] sm:$0xff]
    %v8455 = vld [vmem:[#allocation3 + $0x1a7] sm:$0xff]
    %v8456 = vld [vmem:[#allocation3 + $0x1af] sm:$0xff]
    %v8457 = vld [vmem:[#allocation3 + $0x1b7] sm:$0xff]
    %v8458 = vld [vmem:[#allocation3 + $0x1bf] sm:$0xff]
    %v8459 = vld [vmem:[#allocation3 + $0x1c7] sm:$0xff]
    %v8460 = vld [vmem:[#allocation8 + $0x1c0] sm:$0xff]
    %v8461 = vld [vmem:[#allocation8 + $0x1c8] sm:$0xff]
    %v8462 = vld [vmem:[#allocation8 + $0x1d0] sm:$0xff]
    %v8463 = vld [vmem:[#allocation8 + $0x1d8] sm:$0xff]
    %v8464 = vld [vmem:[#allocation8 + $0x1e0] sm:$0xff]
    %v8465 = vld [vmem:[#allocation8 + $0x1e8] sm:$0xff]
    %v8466 = vld [vmem:[#allocation8 + $0x1f0] sm:$0xff]
    %v8467 = vld [vmem:[#allocation8 + $0x1f8] sm:$0xff]
    %v8469 = vsel %vm134, %v8404, 0
    %v8472 = vsel %vm134, %v8405, 0
    %v8475 = vsel %vm134, %v8406, 0
    %v8478 = vsel %vm134, %v8407, 0
    %v8481 = vsel %vm134, %v8408, 0
    %v8484 = vsel %vm134, %v8409, 0
    %v8487 = vsel %vm134, %v8410, 0
    %v8490 = vsel %vm134, %v8411, 0
    %v8493 = vsel %vm134, %v8412, 0
    %v8496 = vsel %vm134, %v8413, 0
    %v8499 = vsel %vm134, %v8414, 0
    %v8502 = vsel %vm134, %v8415, 0
    %v8505 = vsel %vm134, %v8416, 0
    %v8508 = vsel %vm134, %v8417, 0
    %v8511 = vsel %vm134, %v8418, 0
    %v8514 = vsel %vm134, %v8419, 0
    %v8517 = vsel %vm134, %v8420, 0
    %v8520 = vsel %vm134, %v8421, 0
    %v8523 = vsel %vm134, %v8422, 0
    %v8526 = vsel %vm134, %v8423, 0
    %v8529 = vsel %vm134, %v8424, 0
    %v8532 = vsel %vm134, %v8425, 0
    %v8535 = vsel %vm134, %v8426, 0
    %v8538 = vsel %vm134, %v8427, 0
    %v8541 = vsel %vm134, %v8428, 0
    %v8544 = vsel %vm134, %v8429, 0
    %v8547 = vsel %vm134, %v8430, 0
    %v8550 = vsel %vm134, %v8431, 0
    %v8553 = vsel %vm134, %v8432, 0
    %v8556 = vsel %vm134, %v8433, 0
    %v8559 = vsel %vm134, %v8434, 0
    %v8562 = vsel %vm134, %v8435, 0
    %v8565 = vsel %vm134, %v8436, 0
    %v8568 = vsel %vm134, %v8437, 0
    %v8571 = vsel %vm134, %v8438, 0
    %v8574 = vsel %vm134, %v8439, 0
    %v8577 = vsel %vm134, %v8440, 0
    %v8580 = vsel %vm134, %v8441, 0
    %v8583 = vsel %vm134, %v8442, 0
    %v8586 = vsel %vm134, %v8443, 0
    %v8589 = vsel %vm134, %v8444, 0
    %v8592 = vsel %vm134, %v8445, 0
    %v8595 = vsel %vm134, %v8446, 0
    %v8598 = vsel %vm134, %v8447, 0
    %v8601 = vsel %vm134, %v8448, 0
    %v8604 = vsel %vm134, %v8449, 0
    %v8607 = vsel %vm134, %v8450, 0
    %v8610 = vsel %vm134, %v8451, 0
    %v8613 = vsel %vm134, %v8452, 0
    %v8616 = vsel %vm134, %v8453, 0
    %v8619 = vsel %vm134, %v8454, 0
    %v8622 = vsel %vm134, %v8455, 0
    %v8625 = vsel %vm134, %v8456, 0
    %v8628 = vsel %vm134, %v8457, 0
    %v8631 = vsel %vm134, %v8458, 0
    %v8634 = vsel %vm134, %v8459, 0
    %8636 = vmatpush.msra.mxu0 0.0
    %8637 = vmatpush.msra.mxu0 0.0
    %8638 = vmatpush.msra.mxu0 0.0
    %8639 = vmatpush.msra.mxu0 0.0
    %8640 = vmatpush.msra.mxu0 0.0
    %8641 = vmatpush.msra.mxu0 0.0
    %8642 = vmatpush.msra.mxu0 0.0
    %8643 = vmatpush.msra.mxu0 0.0
    %8644 = vmatpush.msra.mxu0 %v8467
    %8645 = vmatpush.msra.mxu0 %v8466
    %8646 = vmatpush.msra.mxu0 %v8465
    %8647 = vmatpush.msra.mxu0 %v8464
    %8648 = vmatpush.msra.mxu0 %v8463
    %8649 = vmatpush.msra.mxu0 %v8462
    %8650 = vmatpush.msra.mxu0 %v8461
    %8651 = vmatpush.msra.mxu0 %v8460
    %8652 = vmatmul.f32.gmra.mxu0 %v8469
    %v8653 = vpop.f32.mrf.mxu0
    %v8654 = vadd.f32 0.0, %v8653
    %8655 = vmatmul.f32.gmra.mxu0 %v8472
    %v8656 = vpop.f32.mrf.mxu0
    %v8657 = vadd.f32 0.0, %v8656
    %8658 = vmatmul.f32.gmra.mxu0 %v8475
    %v8659 = vpop.f32.mrf.mxu0
    %v8660 = vadd.f32 0.0, %v8659
    %8661 = vmatmul.f32.gmra.mxu0 %v8478
    %v8662 = vpop.f32.mrf.mxu0
    %v8663 = vadd.f32 0.0, %v8662
    %8664 = vmatmul.f32.gmra.mxu0 %v8481
    %v8665 = vpop.f32.mrf.mxu0
    %v8666 = vadd.f32 0.0, %v8665
    %8667 = vmatmul.f32.gmra.mxu0 %v8484
    %v8668 = vpop.f32.mrf.mxu0
    %v8669 = vadd.f32 0.0, %v8668
    %8670 = vmatmul.f32.gmra.mxu0 %v8487
    %v8671 = vpop.f32.mrf.mxu0
    %v8672 = vadd.f32 0.0, %v8671
    %8673 = vmatmul.f32.gmra.mxu0 %v8490
    %v8674 = vpop.f32.mrf.mxu0
    %v8675 = vadd.f32 0.0, %v8674
    %8676 = vmatmul.f32.gmra.mxu0 %v8493
    %v8677 = vpop.f32.mrf.mxu0
    %v8678 = vadd.f32 0.0, %v8677
    %8679 = vmatmul.f32.gmra.mxu0 %v8496
    %v8680 = vpop.f32.mrf.mxu0
    %v8681 = vadd.f32 0.0, %v8680
    %8682 = vmatmul.f32.gmra.mxu0 %v8499
    %v8683 = vpop.f32.mrf.mxu0
    %v8684 = vadd.f32 0.0, %v8683
    %8685 = vmatmul.f32.gmra.mxu0 %v8502
    %v8686 = vpop.f32.mrf.mxu0
    %v8687 = vadd.f32 0.0, %v8686
    %8688 = vmatmul.f32.gmra.mxu0 %v8505
    %v8689 = vpop.f32.mrf.mxu0
    %v8690 = vadd.f32 0.0, %v8689
    %8691 = vmatmul.f32.gmra.mxu0 %v8508
    %v8692 = vpop.f32.mrf.mxu0
    %v8693 = vadd.f32 0.0, %v8692
    %8694 = vmatmul.f32.gmra.mxu0 %v8511
    %v8695 = vpop.f32.mrf.mxu0
    %v8696 = vadd.f32 0.0, %v8695
    %8697 = vmatmul.f32.gmra.mxu0 %v8514
    %v8698 = vpop.f32.mrf.mxu0
    %v8699 = vadd.f32 0.0, %v8698
    %8700 = vmatmul.f32.gmra.mxu0 %v8517
    %v8701 = vpop.f32.mrf.mxu0
    %v8702 = vadd.f32 0.0, %v8701
    %8703 = vmatmul.f32.gmra.mxu0 %v8520
    %v8704 = vpop.f32.mrf.mxu0
    %v8705 = vadd.f32 0.0, %v8704
    %8706 = vmatmul.f32.gmra.mxu0 %v8523
    %v8707 = vpop.f32.mrf.mxu0
    %v8708 = vadd.f32 0.0, %v8707
    %8709 = vmatmul.f32.gmra.mxu0 %v8526
    %v8710 = vpop.f32.mrf.mxu0
    %v8711 = vadd.f32 0.0, %v8710
    %8712 = vmatmul.f32.gmra.mxu0 %v8529
    %v8713 = vpop.f32.mrf.mxu0
    %v8714 = vadd.f32 0.0, %v8713
    %8715 = vmatmul.f32.gmra.mxu0 %v8532
    %v8716 = vpop.f32.mrf.mxu0
    %v8717 = vadd.f32 0.0, %v8716
    %8718 = vmatmul.f32.gmra.mxu0 %v8535
    %v8719 = vpop.f32.mrf.mxu0
    %v8720 = vadd.f32 0.0, %v8719
    %8721 = vmatmul.f32.gmra.mxu0 %v8538
    %v8722 = vpop.f32.mrf.mxu0
    %v8723 = vadd.f32 0.0, %v8722
    %8724 = vmatmul.f32.gmra.mxu0 %v8541
    %v8725 = vpop.f32.mrf.mxu0
    %v8726 = vadd.f32 0.0, %v8725
    %8727 = vmatmul.f32.gmra.mxu0 %v8544
    %v8728 = vpop.f32.mrf.mxu0
    %v8729 = vadd.f32 0.0, %v8728
    %8730 = vmatmul.f32.gmra.mxu0 %v8547
    %v8731 = vpop.f32.mrf.mxu0
    %v8732 = vadd.f32 0.0, %v8731
    %8733 = vmatmul.f32.gmra.mxu0 %v8550
    %v8734 = vpop.f32.mrf.mxu0
    %v8735 = vadd.f32 0.0, %v8734
    %8736 = vmatmul.f32.gmra.mxu0 %v8553
    %v8737 = vpop.f32.mrf.mxu0
    %v8738 = vadd.f32 0.0, %v8737
    %8739 = vmatmul.f32.gmra.mxu0 %v8556
    %v8740 = vpop.f32.mrf.mxu0
    %v8741 = vadd.f32 0.0, %v8740
    %8742 = vmatmul.f32.gmra.mxu0 %v8559
    %v8743 = vpop.f32.mrf.mxu0
    %v8744 = vadd.f32 0.0, %v8743
    %8745 = vmatmul.f32.gmra.mxu0 %v8562
    %v8746 = vpop.f32.mrf.mxu0
    %v8747 = vadd.f32 0.0, %v8746
    %8748 = vmatmul.f32.gmra.mxu0 %v8565
    %v8749 = vpop.f32.mrf.mxu0
    %v8750 = vadd.f32 0.0, %v8749
    %8751 = vmatmul.f32.gmra.mxu0 %v8568
    %v8752 = vpop.f32.mrf.mxu0
    %v8753 = vadd.f32 0.0, %v8752
    %8754 = vmatmul.f32.gmra.mxu0 %v8571
    %v8755 = vpop.f32.mrf.mxu0
    %v8756 = vadd.f32 0.0, %v8755
    %8757 = vmatmul.f32.gmra.mxu0 %v8574
    %v8758 = vpop.f32.mrf.mxu0
    %v8759 = vadd.f32 0.0, %v8758
    %8760 = vmatmul.f32.gmra.mxu0 %v8577
    %v8761 = vpop.f32.mrf.mxu0
    %v8762 = vadd.f32 0.0, %v8761
    %8763 = vmatmul.f32.gmra.mxu0 %v8580
    %v8764 = vpop.f32.mrf.mxu0
    %v8765 = vadd.f32 0.0, %v8764
    %8766 = vmatmul.f32.gmra.mxu0 %v8583
    %v8767 = vpop.f32.mrf.mxu0
    %v8768 = vadd.f32 0.0, %v8767
    %8769 = vmatmul.f32.gmra.mxu0 %v8586
    %v8770 = vpop.f32.mrf.mxu0
    %v8771 = vadd.f32 0.0, %v8770
    %8772 = vmatmul.f32.gmra.mxu0 %v8589
    %v8773 = vpop.f32.mrf.mxu0
    %v8774 = vadd.f32 0.0, %v8773
    %8775 = vmatmul.f32.gmra.mxu0 %v8592
    %v8776 = vpop.f32.mrf.mxu0
    %v8777 = vadd.f32 0.0, %v8776
    %8778 = vmatmul.f32.gmra.mxu0 %v8595
    %v8779 = vpop.f32.mrf.mxu0
    %v8780 = vadd.f32 0.0, %v8779
    %8781 = vmatmul.f32.gmra.mxu0 %v8598
    %v8782 = vpop.f32.mrf.mxu0
    %v8783 = vadd.f32 0.0, %v8782
    %8784 = vmatmul.f32.gmra.mxu0 %v8601
    %v8785 = vpop.f32.mrf.mxu0
    %v8786 = vadd.f32 0.0, %v8785
    %8787 = vmatmul.f32.gmra.mxu0 %v8604
    %v8788 = vpop.f32.mrf.mxu0
    %v8789 = vadd.f32 0.0, %v8788
    %8790 = vmatmul.f32.gmra.mxu0 %v8607
    %v8791 = vpop.f32.mrf.mxu0
    %v8792 = vadd.f32 0.0, %v8791
    %8793 = vmatmul.f32.gmra.mxu0 %v8610
    %v8794 = vpop.f32.mrf.mxu0
    %v8795 = vadd.f32 0.0, %v8794
    %8796 = vmatmul.f32.gmra.mxu0 %v8613
    %v8797 = vpop.f32.mrf.mxu0
    %v8798 = vadd.f32 0.0, %v8797
    %8799 = vmatmul.f32.gmra.mxu0 %v8616
    %v8800 = vpop.f32.mrf.mxu0
    %v8801 = vadd.f32 0.0, %v8800
    %8802 = vmatmul.f32.gmra.mxu0 %v8619
    %v8803 = vpop.f32.mrf.mxu0
    %v8804 = vadd.f32 0.0, %v8803
    %8805 = vmatmul.f32.gmra.mxu0 %v8622
    %v8806 = vpop.f32.mrf.mxu0
    %v8807 = vadd.f32 0.0, %v8806
    %8808 = vmatmul.f32.gmra.mxu0 %v8625
    %v8809 = vpop.f32.mrf.mxu0
    %v8810 = vadd.f32 0.0, %v8809
    %8811 = vmatmul.f32.gmra.mxu0 %v8628
    %v8812 = vpop.f32.mrf.mxu0
    %v8813 = vadd.f32 0.0, %v8812
    %8814 = vmatmul.f32.gmra.mxu0 %v8631
    %v8815 = vpop.f32.mrf.mxu0
    %v8816 = vadd.f32 0.0, %v8815
    %8817 = vmatmul.f32.gmra.mxu0 %v8634
    %v8818 = vpop.f32.mrf.mxu0
    %v8819 = vadd.f32 0.0, %v8818
    %8820 = vdwg.mxu0
    %v8821 = vadd.f32 %v8348, %v8654
    %v8822 = vadd.f32 %v8349, %v8657
    %v8823 = vadd.f32 %v8350, %v8660
    %v8824 = vadd.f32 %v8351, %v8663
    %v8825 = vadd.f32 %v8352, %v8666
    %v8826 = vadd.f32 %v8353, %v8669
    %v8827 = vadd.f32 %v8354, %v8672
    %v8828 = vadd.f32 %v8355, %v8675
    %v8829 = vadd.f32 %v8356, %v8678
    %v8830 = vadd.f32 %v8357, %v8681
    %v8831 = vadd.f32 %v8358, %v8684
    %v8832 = vadd.f32 %v8359, %v8687
    %v8833 = vadd.f32 %v8360, %v8690
    %v8834 = vadd.f32 %v8361, %v8693
    %v8835 = vadd.f32 %v8362, %v8696
    %v8836 = vadd.f32 %v8363, %v8699
    %v8837 = vadd.f32 %v8364, %v8702
    %v8838 = vadd.f32 %v8365, %v8705
    %v8839 = vadd.f32 %v8366, %v8708
    %v8840 = vadd.f32 %v8367, %v8711
    %v8841 = vadd.f32 %v8368, %v8714
    %v8842 = vadd.f32 %v8369, %v8717
    %v8843 = vadd.f32 %v8370, %v8720
    %v8844 = vadd.f32 %v8371, %v8723
    %v8845 = vadd.f32 %v8372, %v8726
    %v8846 = vadd.f32 %v8373, %v8729
    %v8847 = vadd.f32 %v8374, %v8732
    %v8848 = vadd.f32 %v8375, %v8735
    %v8849 = vadd.f32 %v8376, %v8738
    %v8850 = vadd.f32 %v8377, %v8741
    %v8851 = vadd.f32 %v8378, %v8744
    %v8852 = vadd.f32 %v8379, %v8747
    %v8853 = vadd.f32 %v8380, %v8750
    %v8854 = vadd.f32 %v8381, %v8753
    %v8855 = vadd.f32 %v8382, %v8756
    %v8856 = vadd.f32 %v8383, %v8759
    %v8857 = vadd.f32 %v8384, %v8762
    %v8858 = vadd.f32 %v8385, %v8765
    %v8859 = vadd.f32 %v8386, %v8768
    %v8860 = vadd.f32 %v8387, %v8771
    %v8861 = vadd.f32 %v8388, %v8774
    %v8862 = vadd.f32 %v8389, %v8777
    %v8863 = vadd.f32 %v8390, %v8780
    %v8864 = vadd.f32 %v8391, %v8783
    %v8865 = vadd.f32 %v8392, %v8786
    %v8866 = vadd.f32 %v8393, %v8789
    %v8867 = vadd.f32 %v8394, %v8792
    %v8868 = vadd.f32 %v8395, %v8795
    %v8869 = vadd.f32 %v8396, %v8798
    %v8870 = vadd.f32 %v8397, %v8801
    %v8871 = vadd.f32 %v8398, %v8804
    %v8872 = vadd.f32 %v8399, %v8807
    %v8873 = vadd.f32 %v8400, %v8810
    %v8874 = vadd.f32 %v8401, %v8813
    %v8875 = vadd.f32 %v8402, %v8816
    %v8876 = vadd.f32 %v8403, %v8819
    %v8877 = vld [vmem:[#allocation3 + $0x10] sm:$0xff]
    %v8878 = vld [vmem:[#allocation3 + $0x18] sm:$0xff]
    %v8879 = vld [vmem:[#allocation3 + $0x20] sm:$0xff]
    %v8880 = vld [vmem:[#allocation3 + $0x28] sm:$0xff]
    %v8881 = vld [vmem:[#allocation3 + $0x30] sm:$0xff]
    %v8882 = vld [vmem:[#allocation3 + $0x38] sm:$0xff]
    %v8883 = vld [vmem:[#allocation3 + $0x40] sm:$0xff]
    %v8884 = vld [vmem:[#allocation3 + $0x48] sm:$0xff]
    %v8885 = vld [vmem:[#allocation3 + $0x50] sm:$0xff]
    %v8886 = vld [vmem:[#allocation3 + $0x58] sm:$0xff]
    %v8887 = vld [vmem:[#allocation3 + $0x60] sm:$0xff]
    %v8888 = vld [vmem:[#allocation3 + $0x68] sm:$0xff]
    %v8889 = vld [vmem:[#allocation3 + $0x70] sm:$0xff]
    %v8890 = vld [vmem:[#allocation3 + $0x78] sm:$0xff]
    %v8891 = vld [vmem:[#allocation3 + $0x80] sm:$0xff]
    %v8892 = vld [vmem:[#allocation3 + $0x88] sm:$0xff]
    %v8893 = vld [vmem:[#allocation3 + $0x90] sm:$0xff]
    %v8894 = vld [vmem:[#allocation3 + $0x98] sm:$0xff]
    %v8895 = vld [vmem:[#allocation3 + $0xa0] sm:$0xff]
    %v8896 = vld [vmem:[#allocation3 + $0xa8] sm:$0xff]
    %v8897 = vld [vmem:[#allocation3 + $0xb0] sm:$0xff]
    %v8898 = vld [vmem:[#allocation3 + $0xb8] sm:$0xff]
    %v8899 = vld [vmem:[#allocation3 + $0xc0] sm:$0xff]
    %v8900 = vld [vmem:[#allocation3 + $0xc8] sm:$0xff]
    %v8901 = vld [vmem:[#allocation3 + $0xd0] sm:$0xff]
    %v8902 = vld [vmem:[#allocation3 + $0xd8] sm:$0xff]
    %v8903 = vld [vmem:[#allocation3 + $0xe0] sm:$0xff]
    %v8904 = vld [vmem:[#allocation3 + $0xe8] sm:$0xff]
    %v8905 = vld [vmem:[#allocation3 + $0xf0] sm:$0xff]
    %v8906 = vld [vmem:[#allocation3 + $0xf8] sm:$0xff]
    %v8907 = vld [vmem:[#allocation3 + $0x100] sm:$0xff]
    %v8908 = vld [vmem:[#allocation3 + $0x108] sm:$0xff]
    %v8909 = vld [vmem:[#allocation3 + $0x110] sm:$0xff]
    %v8910 = vld [vmem:[#allocation3 + $0x118] sm:$0xff]
    %v8911 = vld [vmem:[#allocation3 + $0x120] sm:$0xff]
    %v8912 = vld [vmem:[#allocation3 + $0x128] sm:$0xff]
    %v8913 = vld [vmem:[#allocation3 + $0x130] sm:$0xff]
    %v8914 = vld [vmem:[#allocation3 + $0x138] sm:$0xff]
    %v8915 = vld [vmem:[#allocation3 + $0x140] sm:$0xff]
    %v8916 = vld [vmem:[#allocation3 + $0x148] sm:$0xff]
    %v8917 = vld [vmem:[#allocation3 + $0x150] sm:$0xff]
    %v8918 = vld [vmem:[#allocation3 + $0x158] sm:$0xff]
    %v8919 = vld [vmem:[#allocation3 + $0x160] sm:$0xff]
    %v8920 = vld [vmem:[#allocation3 + $0x168] sm:$0xff]
    %v8921 = vld [vmem:[#allocation3 + $0x170] sm:$0xff]
    %v8922 = vld [vmem:[#allocation3 + $0x178] sm:$0xff]
    %v8923 = vld [vmem:[#allocation3 + $0x180] sm:$0xff]
    %v8924 = vld [vmem:[#allocation3 + $0x188] sm:$0xff]
    %v8925 = vld [vmem:[#allocation3 + $0x190] sm:$0xff]
    %v8926 = vld [vmem:[#allocation3 + $0x198] sm:$0xff]
    %v8927 = vld [vmem:[#allocation3 + $0x1a0] sm:$0xff]
    %v8928 = vld [vmem:[#allocation3 + $0x1a8] sm:$0xff]
    %v8929 = vld [vmem:[#allocation3 + $0x1b0] sm:$0xff]
    %v8930 = vld [vmem:[#allocation3 + $0x1b8] sm:$0xff]
    %v8931 = vld [vmem:[#allocation3 + $0x1c0] sm:$0xff]
    %v8932 = vld [vmem:[#allocation3 + $0x1c8] sm:$0xff]
    %v8933 = vld [vmem:[#allocation8 + $0x200] sm:$0xff]
    %v8934 = vld [vmem:[#allocation8 + $0x208] sm:$0xff]
    %v8935 = vld [vmem:[#allocation8 + $0x210] sm:$0xff]
    %v8936 = vld [vmem:[#allocation8 + $0x218] sm:$0xff]
    %v8937 = vld [vmem:[#allocation8 + $0x220] sm:$0xff]
    %v8938 = vld [vmem:[#allocation8 + $0x228] sm:$0xff]
    %v8939 = vld [vmem:[#allocation8 + $0x230] sm:$0xff]
    %v8940 = vld [vmem:[#allocation8 + $0x238] sm:$0xff]
    %v8942 = vsel %vm134, %v8877, 0
    %v8945 = vsel %vm134, %v8878, 0
    %v8948 = vsel %vm134, %v8879, 0
    %v8951 = vsel %vm134, %v8880, 0
    %v8954 = vsel %vm134, %v8881, 0
    %v8957 = vsel %vm134, %v8882, 0
    %v8960 = vsel %vm134, %v8883, 0
    %v8963 = vsel %vm134, %v8884, 0
    %v8966 = vsel %vm134, %v8885, 0
    %v8969 = vsel %vm134, %v8886, 0
    %v8972 = vsel %vm134, %v8887, 0
    %v8975 = vsel %vm134, %v8888, 0
    %v8978 = vsel %vm134, %v8889, 0
    %v8981 = vsel %vm134, %v8890, 0
    %v8984 = vsel %vm134, %v8891, 0
    %v8987 = vsel %vm134, %v8892, 0
    %v8990 = vsel %vm134, %v8893, 0
    %v8993 = vsel %vm134, %v8894, 0
    %v8996 = vsel %vm134, %v8895, 0
    %v8999 = vsel %vm134, %v8896, 0
    %v9002 = vsel %vm134, %v8897, 0
    %v9005 = vsel %vm134, %v8898, 0
    %v9008 = vsel %vm134, %v8899, 0
    %v9011 = vsel %vm134, %v8900, 0
    %v9014 = vsel %vm134, %v8901, 0
    %v9017 = vsel %vm134, %v8902, 0
    %v9020 = vsel %vm134, %v8903, 0
    %v9023 = vsel %vm134, %v8904, 0
    %v9026 = vsel %vm134, %v8905, 0
    %v9029 = vsel %vm134, %v8906, 0
    %v9032 = vsel %vm134, %v8907, 0
    %v9035 = vsel %vm134, %v8908, 0
    %v9038 = vsel %vm134, %v8909, 0
    %v9041 = vsel %vm134, %v8910, 0
    %v9044 = vsel %vm134, %v8911, 0
    %v9047 = vsel %vm134, %v8912, 0
    %v9050 = vsel %vm134, %v8913, 0
    %v9053 = vsel %vm134, %v8914, 0
    %v9056 = vsel %vm134, %v8915, 0
    %v9059 = vsel %vm134, %v8916, 0
    %v9062 = vsel %vm134, %v8917, 0
    %v9065 = vsel %vm134, %v8918, 0
    %v9068 = vsel %vm134, %v8919, 0
    %v9071 = vsel %vm134, %v8920, 0
    %v9074 = vsel %vm134, %v8921, 0
    %v9077 = vsel %vm134, %v8922, 0
    %v9080 = vsel %vm134, %v8923, 0
    %v9083 = vsel %vm134, %v8924, 0
    %v9086 = vsel %vm134, %v8925, 0
    %v9089 = vsel %vm134, %v8926, 0
    %v9092 = vsel %vm134, %v8927, 0
    %v9095 = vsel %vm134, %v8928, 0
    %v9098 = vsel %vm134, %v8929, 0
    %v9101 = vsel %vm134, %v8930, 0
    %v9104 = vsel %vm134, %v8931, 0
    %v9107 = vsel %vm134, %v8932, 0
    %9109 = vmatpush.msra.mxu0 0.0
    %9110 = vmatpush.msra.mxu0 0.0
    %9111 = vmatpush.msra.mxu0 0.0
    %9112 = vmatpush.msra.mxu0 0.0
    %9113 = vmatpush.msra.mxu0 0.0
    %9114 = vmatpush.msra.mxu0 0.0
    %9115 = vmatpush.msra.mxu0 0.0
    %9116 = vmatpush.msra.mxu0 0.0
    %9117 = vmatpush.msra.mxu0 %v8940
    %9118 = vmatpush.msra.mxu0 %v8939
    %9119 = vmatpush.msra.mxu0 %v8938
    %9120 = vmatpush.msra.mxu0 %v8937
    %9121 = vmatpush.msra.mxu0 %v8936
    %9122 = vmatpush.msra.mxu0 %v8935
    %9123 = vmatpush.msra.mxu0 %v8934
    %9124 = vmatpush.msra.mxu0 %v8933
    %9125 = vmatmul.f32.gmra.mxu0 %v8942
    %v9126 = vpop.f32.mrf.mxu0
    %v9127 = vadd.f32 0.0, %v9126
    %9128 = vmatmul.f32.gmra.mxu0 %v8945
    %v9129 = vpop.f32.mrf.mxu0
    %v9130 = vadd.f32 0.0, %v9129
    %9131 = vmatmul.f32.gmra.mxu0 %v8948
    %v9132 = vpop.f32.mrf.mxu0
    %v9133 = vadd.f32 0.0, %v9132
    %9134 = vmatmul.f32.gmra.mxu0 %v8951
    %v9135 = vpop.f32.mrf.mxu0
    %v9136 = vadd.f32 0.0, %v9135
    %9137 = vmatmul.f32.gmra.mxu0 %v8954
    %v9138 = vpop.f32.mrf.mxu0
    %v9139 = vadd.f32 0.0, %v9138
    %9140 = vmatmul.f32.gmra.mxu0 %v8957
    %v9141 = vpop.f32.mrf.mxu0
    %v9142 = vadd.f32 0.0, %v9141
    %9143 = vmatmul.f32.gmra.mxu0 %v8960
    %v9144 = vpop.f32.mrf.mxu0
    %v9145 = vadd.f32 0.0, %v9144
    %9146 = vmatmul.f32.gmra.mxu0 %v8963
    %v9147 = vpop.f32.mrf.mxu0
    %v9148 = vadd.f32 0.0, %v9147
    %9149 = vmatmul.f32.gmra.mxu0 %v8966
    %v9150 = vpop.f32.mrf.mxu0
    %v9151 = vadd.f32 0.0, %v9150
    %9152 = vmatmul.f32.gmra.mxu0 %v8969
    %v9153 = vpop.f32.mrf.mxu0
    %v9154 = vadd.f32 0.0, %v9153
    %9155 = vmatmul.f32.gmra.mxu0 %v8972
    %v9156 = vpop.f32.mrf.mxu0
    %v9157 = vadd.f32 0.0, %v9156
    %9158 = vmatmul.f32.gmra.mxu0 %v8975
    %v9159 = vpop.f32.mrf.mxu0
    %v9160 = vadd.f32 0.0, %v9159
    %9161 = vmatmul.f32.gmra.mxu0 %v8978
    %v9162 = vpop.f32.mrf.mxu0
    %v9163 = vadd.f32 0.0, %v9162
    %9164 = vmatmul.f32.gmra.mxu0 %v8981
    %v9165 = vpop.f32.mrf.mxu0
    %v9166 = vadd.f32 0.0, %v9165
    %9167 = vmatmul.f32.gmra.mxu0 %v8984
    %v9168 = vpop.f32.mrf.mxu0
    %v9169 = vadd.f32 0.0, %v9168
    %9170 = vmatmul.f32.gmra.mxu0 %v8987
    %v9171 = vpop.f32.mrf.mxu0
    %v9172 = vadd.f32 0.0, %v9171
    %9173 = vmatmul.f32.gmra.mxu0 %v8990
    %v9174 = vpop.f32.mrf.mxu0
    %v9175 = vadd.f32 0.0, %v9174
    %9176 = vmatmul.f32.gmra.mxu0 %v8993
    %v9177 = vpop.f32.mrf.mxu0
    %v9178 = vadd.f32 0.0, %v9177
    %9179 = vmatmul.f32.gmra.mxu0 %v8996
    %v9180 = vpop.f32.mrf.mxu0
    %v9181 = vadd.f32 0.0, %v9180
    %9182 = vmatmul.f32.gmra.mxu0 %v8999
    %v9183 = vpop.f32.mrf.mxu0
    %v9184 = vadd.f32 0.0, %v9183
    %9185 = vmatmul.f32.gmra.mxu0 %v9002
    %v9186 = vpop.f32.mrf.mxu0
    %v9187 = vadd.f32 0.0, %v9186
    %9188 = vmatmul.f32.gmra.mxu0 %v9005
    %v9189 = vpop.f32.mrf.mxu0
    %v9190 = vadd.f32 0.0, %v9189
    %9191 = vmatmul.f32.gmra.mxu0 %v9008
    %v9192 = vpop.f32.mrf.mxu0
    %v9193 = vadd.f32 0.0, %v9192
    %9194 = vmatmul.f32.gmra.mxu0 %v9011
    %v9195 = vpop.f32.mrf.mxu0
    %v9196 = vadd.f32 0.0, %v9195
    %9197 = vmatmul.f32.gmra.mxu0 %v9014
    %v9198 = vpop.f32.mrf.mxu0
    %v9199 = vadd.f32 0.0, %v9198
    %9200 = vmatmul.f32.gmra.mxu0 %v9017
    %v9201 = vpop.f32.mrf.mxu0
    %v9202 = vadd.f32 0.0, %v9201
    %9203 = vmatmul.f32.gmra.mxu0 %v9020
    %v9204 = vpop.f32.mrf.mxu0
    %v9205 = vadd.f32 0.0, %v9204
    %9206 = vmatmul.f32.gmra.mxu0 %v9023
    %v9207 = vpop.f32.mrf.mxu0
    %v9208 = vadd.f32 0.0, %v9207
    %9209 = vmatmul.f32.gmra.mxu0 %v9026
    %v9210 = vpop.f32.mrf.mxu0
    %v9211 = vadd.f32 0.0, %v9210
    %9212 = vmatmul.f32.gmra.mxu0 %v9029
    %v9213 = vpop.f32.mrf.mxu0
    %v9214 = vadd.f32 0.0, %v9213
    %9215 = vmatmul.f32.gmra.mxu0 %v9032
    %v9216 = vpop.f32.mrf.mxu0
    %v9217 = vadd.f32 0.0, %v9216
    %9218 = vmatmul.f32.gmra.mxu0 %v9035
    %v9219 = vpop.f32.mrf.mxu0
    %v9220 = vadd.f32 0.0, %v9219
    %9221 = vmatmul.f32.gmra.mxu0 %v9038
    %v9222 = vpop.f32.mrf.mxu0
    %v9223 = vadd.f32 0.0, %v9222
    %9224 = vmatmul.f32.gmra.mxu0 %v9041
    %v9225 = vpop.f32.mrf.mxu0
    %v9226 = vadd.f32 0.0, %v9225
    %9227 = vmatmul.f32.gmra.mxu0 %v9044
    %v9228 = vpop.f32.mrf.mxu0
    %v9229 = vadd.f32 0.0, %v9228
    %9230 = vmatmul.f32.gmra.mxu0 %v9047
    %v9231 = vpop.f32.mrf.mxu0
    %v9232 = vadd.f32 0.0, %v9231
    %9233 = vmatmul.f32.gmra.mxu0 %v9050
    %v9234 = vpop.f32.mrf.mxu0
    %v9235 = vadd.f32 0.0, %v9234
    %9236 = vmatmul.f32.gmra.mxu0 %v9053
    %v9237 = vpop.f32.mrf.mxu0
    %v9238 = vadd.f32 0.0, %v9237
    %9239 = vmatmul.f32.gmra.mxu0 %v9056
    %v9240 = vpop.f32.mrf.mxu0
    %v9241 = vadd.f32 0.0, %v9240
    %9242 = vmatmul.f32.gmra.mxu0 %v9059
    %v9243 = vpop.f32.mrf.mxu0
    %v9244 = vadd.f32 0.0, %v9243
    %9245 = vmatmul.f32.gmra.mxu0 %v9062
    %v9246 = vpop.f32.mrf.mxu0
    %v9247 = vadd.f32 0.0, %v9246
    %9248 = vmatmul.f32.gmra.mxu0 %v9065
    %v9249 = vpop.f32.mrf.mxu0
    %v9250 = vadd.f32 0.0, %v9249
    %9251 = vmatmul.f32.gmra.mxu0 %v9068
    %v9252 = vpop.f32.mrf.mxu0
    %v9253 = vadd.f32 0.0, %v9252
    %9254 = vmatmul.f32.gmra.mxu0 %v9071
    %v9255 = vpop.f32.mrf.mxu0
    %v9256 = vadd.f32 0.0, %v9255
    %9257 = vmatmul.f32.gmra.mxu0 %v9074
    %v9258 = vpop.f32.mrf.mxu0
    %v9259 = vadd.f32 0.0, %v9258
    %9260 = vmatmul.f32.gmra.mxu0 %v9077
    %v9261 = vpop.f32.mrf.mxu0
    %v9262 = vadd.f32 0.0, %v9261
    %9263 = vmatmul.f32.gmra.mxu0 %v9080
    %v9264 = vpop.f32.mrf.mxu0
    %v9265 = vadd.f32 0.0, %v9264
    %9266 = vmatmul.f32.gmra.mxu0 %v9083
    %v9267 = vpop.f32.mrf.mxu0
    %v9268 = vadd.f32 0.0, %v9267
    %9269 = vmatmul.f32.gmra.mxu0 %v9086
    %v9270 = vpop.f32.mrf.mxu0
    %v9271 = vadd.f32 0.0, %v9270
    %9272 = vmatmul.f32.gmra.mxu0 %v9089
    %v9273 = vpop.f32.mrf.mxu0
    %v9274 = vadd.f32 0.0, %v9273
    %9275 = vmatmul.f32.gmra.mxu0 %v9092
    %v9276 = vpop.f32.mrf.mxu0
    %v9277 = vadd.f32 0.0, %v9276
    %9278 = vmatmul.f32.gmra.mxu0 %v9095
    %v9279 = vpop.f32.mrf.mxu0
    %v9280 = vadd.f32 0.0, %v9279
    %9281 = vmatmul.f32.gmra.mxu0 %v9098
    %v9282 = vpop.f32.mrf.mxu0
    %v9283 = vadd.f32 0.0, %v9282
    %9284 = vmatmul.f32.gmra.mxu0 %v9101
    %v9285 = vpop.f32.mrf.mxu0
    %v9286 = vadd.f32 0.0, %v9285
    %9287 = vmatmul.f32.gmra.mxu0 %v9104
    %v9288 = vpop.f32.mrf.mxu0
    %v9289 = vadd.f32 0.0, %v9288
    %9290 = vmatmul.f32.gmra.mxu0 %v9107
    %v9291 = vpop.f32.mrf.mxu0
    %v9292 = vadd.f32 0.0, %v9291
    %9293 = vdwg.mxu0
    %v9294 = vadd.f32 %v8821, %v9127
    %v9295 = vadd.f32 %v8822, %v9130
    %v9296 = vadd.f32 %v8823, %v9133
    %v9297 = vadd.f32 %v8824, %v9136
    %v9298 = vadd.f32 %v8825, %v9139
    %v9299 = vadd.f32 %v8826, %v9142
    %v9300 = vadd.f32 %v8827, %v9145
    %v9301 = vadd.f32 %v8828, %v9148
    %v9302 = vadd.f32 %v8829, %v9151
    %v9303 = vadd.f32 %v8830, %v9154
    %v9304 = vadd.f32 %v8831, %v9157
    %v9305 = vadd.f32 %v8832, %v9160
    %v9306 = vadd.f32 %v8833, %v9163
    %v9307 = vadd.f32 %v8834, %v9166
    %v9308 = vadd.f32 %v8835, %v9169
    %v9309 = vadd.f32 %v8836, %v9172
    %v9310 = vadd.f32 %v8837, %v9175
    %v9311 = vadd.f32 %v8838, %v9178
    %v9312 = vadd.f32 %v8839, %v9181
    %v9313 = vadd.f32 %v8840, %v9184
    %v9314 = vadd.f32 %v8841, %v9187
    %v9315 = vadd.f32 %v8842, %v9190
    %v9316 = vadd.f32 %v8843, %v9193
    %v9317 = vadd.f32 %v8844, %v9196
    %v9318 = vadd.f32 %v8845, %v9199
    %v9319 = vadd.f32 %v8846, %v9202
    %v9320 = vadd.f32 %v8847, %v9205
    %v9321 = vadd.f32 %v8848, %v9208
    %v9322 = vadd.f32 %v8849, %v9211
    %v9323 = vadd.f32 %v8850, %v9214
    %v9324 = vadd.f32 %v8851, %v9217
    %v9325 = vadd.f32 %v8852, %v9220
    %v9326 = vadd.f32 %v8853, %v9223
    %v9327 = vadd.f32 %v8854, %v9226
    %v9328 = vadd.f32 %v8855, %v9229
    %v9329 = vadd.f32 %v8856, %v9232
    %v9330 = vadd.f32 %v8857, %v9235
    %v9331 = vadd.f32 %v8858, %v9238
    %v9332 = vadd.f32 %v8859, %v9241
    %v9333 = vadd.f32 %v8860, %v9244
    %v9334 = vadd.f32 %v8861, %v9247
    %v9335 = vadd.f32 %v8862, %v9250
    %v9336 = vadd.f32 %v8863, %v9253
    %v9337 = vadd.f32 %v8864, %v9256
    %v9338 = vadd.f32 %v8865, %v9259
    %v9339 = vadd.f32 %v8866, %v9262
    %v9340 = vadd.f32 %v8867, %v9265
    %v9341 = vadd.f32 %v8868, %v9268
    %v9342 = vadd.f32 %v8869, %v9271
    %v9343 = vadd.f32 %v8870, %v9274
    %v9344 = vadd.f32 %v8871, %v9277
    %v9345 = vadd.f32 %v8872, %v9280
    %v9346 = vadd.f32 %v8873, %v9283
    %v9347 = vadd.f32 %v8874, %v9286
    %v9348 = vadd.f32 %v8875, %v9289
    %v9349 = vadd.f32 %v8876, %v9292
    %v9350 = vld [vmem:[%s5] sm:$0x1]
    %v9351 = vperm.slane %v9350, 0
    %v9352 = vadd.f32 %v9294, %v9351
    %v9353 = vadd.f32 %v9295, %v9351
    %v9354 = vadd.f32 %v9296, %v9351
    %v9355 = vadd.f32 %v9297, %v9351
    %v9356 = vadd.f32 %v9298, %v9351
    %v9357 = vadd.f32 %v9299, %v9351
    %v9358 = vadd.f32 %v9300, %v9351
    %v9359 = vadd.f32 %v9301, %v9351
    %v9360 = vadd.f32 %v9302, %v9351
    %v9361 = vadd.f32 %v9303, %v9351
    %v9362 = vadd.f32 %v9304, %v9351
    %v9363 = vadd.f32 %v9305, %v9351
    %v9364 = vadd.f32 %v9306, %v9351
    %v9365 = vadd.f32 %v9307, %v9351
    %v9366 = vadd.f32 %v9308, %v9351
    %v9367 = vadd.f32 %v9309, %v9351
    %v9368 = vadd.f32 %v9310, %v9351
    %v9369 = vadd.f32 %v9311, %v9351
    %v9370 = vadd.f32 %v9312, %v9351
    %v9371 = vadd.f32 %v9313, %v9351
    %v9372 = vadd.f32 %v9314, %v9351
    %v9373 = vadd.f32 %v9315, %v9351
    %v9374 = vadd.f32 %v9316, %v9351
    %v9375 = vadd.f32 %v9317, %v9351
    %v9376 = vadd.f32 %v9318, %v9351
    %v9377 = vadd.f32 %v9319, %v9351
    %v9378 = vadd.f32 %v9320, %v9351
    %v9379 = vadd.f32 %v9321, %v9351
    %v9380 = vadd.f32 %v9322, %v9351
    %v9381 = vadd.f32 %v9323, %v9351
    %v9382 = vadd.f32 %v9324, %v9351
    %v9383 = vadd.f32 %v9325, %v9351
    %v9384 = vadd.f32 %v9326, %v9351
    %v9385 = vadd.f32 %v9327, %v9351
    %v9386 = vadd.f32 %v9328, %v9351
    %v9387 = vadd.f32 %v9329, %v9351
    %v9388 = vadd.f32 %v9330, %v9351
    %v9389 = vadd.f32 %v9331, %v9351
    %v9390 = vadd.f32 %v9332, %v9351
    %v9391 = vadd.f32 %v9333, %v9351
    %v9392 = vadd.f32 %v9334, %v9351
    %v9393 = vadd.f32 %v9335, %v9351
    %v9394 = vadd.f32 %v9336, %v9351
    %v9395 = vadd.f32 %v9337, %v9351
    %v9396 = vadd.f32 %v9338, %v9351
    %v9397 = vadd.f32 %v9339, %v9351
    %v9398 = vadd.f32 %v9340, %v9351
    %v9399 = vadd.f32 %v9341, %v9351
    %v9400 = vadd.f32 %v9342, %v9351
    %v9401 = vadd.f32 %v9343, %v9351
    %v9402 = vadd.f32 %v9344, %v9351
    %v9403 = vadd.f32 %v9345, %v9351
    %v9404 = vadd.f32 %v9346, %v9351
    %v9405 = vadd.f32 %v9347, %v9351
    %v9406 = vadd.f32 %v9348, %v9351
    %v9407 = vadd.f32 %v9349, %v9351
    %v9408 = vld [vmem:[%s5 + $0x1] sm:$0x1]
    %vm9409 = vcmp.ge.f32.partialorder %v9352, 0.0
    %vm9410 = vcmp.ge.f32.partialorder %v9353, 0.0
    %vm9411 = vcmp.ge.f32.partialorder %v9354, 0.0
    %vm9412 = vcmp.ge.f32.partialorder %v9355, 0.0
    %vm9413 = vcmp.ge.f32.partialorder %v9356, 0.0
    %vm9414 = vcmp.ge.f32.partialorder %v9357, 0.0
    %vm9415 = vcmp.ge.f32.partialorder %v9358, 0.0
    %vm9416 = vcmp.ge.f32.partialorder %v9359, 0.0
    %vm9417 = vcmp.ge.f32.partialorder %v9360, 0.0
    %vm9418 = vcmp.ge.f32.partialorder %v9361, 0.0
    %vm9419 = vcmp.ge.f32.partialorder %v9362, 0.0
    %vm9420 = vcmp.ge.f32.partialorder %v9363, 0.0
    %vm9421 = vcmp.ge.f32.partialorder %v9364, 0.0
    %vm9422 = vcmp.ge.f32.partialorder %v9365, 0.0
    %vm9423 = vcmp.ge.f32.partialorder %v9366, 0.0
    %vm9424 = vcmp.ge.f32.partialorder %v9367, 0.0
    %vm9425 = vcmp.ge.f32.partialorder %v9368, 0.0
    %vm9426 = vcmp.ge.f32.partialorder %v9369, 0.0
    %vm9427 = vcmp.ge.f32.partialorder %v9370, 0.0
    %vm9428 = vcmp.ge.f32.partialorder %v9371, 0.0
    %vm9429 = vcmp.ge.f32.partialorder %v9372, 0.0
    %vm9430 = vcmp.ge.f32.partialorder %v9373, 0.0
    %vm9431 = vcmp.ge.f32.partialorder %v9374, 0.0
    %vm9432 = vcmp.ge.f32.partialorder %v9375, 0.0
    %vm9433 = vcmp.ge.f32.partialorder %v9376, 0.0
    %vm9434 = vcmp.ge.f32.partialorder %v9377, 0.0
    %vm9435 = vcmp.ge.f32.partialorder %v9378, 0.0
    %vm9436 = vcmp.ge.f32.partialorder %v9379, 0.0
    %vm9437 = vcmp.ge.f32.partialorder %v9380, 0.0
    %vm9438 = vcmp.ge.f32.partialorder %v9381, 0.0
    %vm9439 = vcmp.ge.f32.partialorder %v9382, 0.0
    %vm9440 = vcmp.ge.f32.partialorder %v9383, 0.0
    %vm9441 = vcmp.ge.f32.partialorder %v9384, 0.0
    %vm9442 = vcmp.ge.f32.partialorder %v9385, 0.0
    %vm9443 = vcmp.ge.f32.partialorder %v9386, 0.0
    %vm9444 = vcmp.ge.f32.partialorder %v9387, 0.0
    %vm9445 = vcmp.ge.f32.partialorder %v9388, 0.0
    %vm9446 = vcmp.ge.f32.partialorder %v9389, 0.0
    %vm9447 = vcmp.ge.f32.partialorder %v9390, 0.0
    %vm9448 = vcmp.ge.f32.partialorder %v9391, 0.0
    %vm9449 = vcmp.ge.f32.partialorder %v9392, 0.0
    %vm9450 = vcmp.ge.f32.partialorder %v9393, 0.0
    %vm9451 = vcmp.ge.f32.partialorder %v9394, 0.0
    %vm9452 = vcmp.ge.f32.partialorder %v9395, 0.0
    %vm9453 = vcmp.ge.f32.partialorder %v9396, 0.0
    %vm9454 = vcmp.ge.f32.partialorder %v9397, 0.0
    %vm9455 = vcmp.ge.f32.partialorder %v9398, 0.0
    %vm9456 = vcmp.ge.f32.partialorder %v9399, 0.0
    %vm9457 = vcmp.ge.f32.partialorder %v9400, 0.0
    %vm9458 = vcmp.ge.f32.partialorder %v9401, 0.0
    %vm9459 = vcmp.ge.f32.partialorder %v9402, 0.0
    %vm9460 = vcmp.ge.f32.partialorder %v9403, 0.0
    %vm9461 = vcmp.ge.f32.partialorder %v9404, 0.0
    %vm9462 = vcmp.ge.f32.partialorder %v9405, 0.0
    %vm9463 = vcmp.ge.f32.partialorder %v9406, 0.0
    %vm9464 = vcmp.ge.f32.partialorder %v9407, 0.0
    %v9465 = vperm.slane %v9408, 0
    %v9466 = vmul.f32 %v9465, %v9352
    %v9467 = vmul.f32 %v9465, %v9353
    %v9468 = vmul.f32 %v9465, %v9354
    %v9469 = vmul.f32 %v9465, %v9355
    %v9470 = vmul.f32 %v9465, %v9356
    %v9471 = vmul.f32 %v9465, %v9357
    %v9472 = vmul.f32 %v9465, %v9358
    %v9473 = vmul.f32 %v9465, %v9359
    %v9474 = vmul.f32 %v9465, %v9360
    %v9475 = vmul.f32 %v9465, %v9361
    %v9476 = vmul.f32 %v9465, %v9362
    %v9477 = vmul.f32 %v9465, %v9363
    %v9478 = vmul.f32 %v9465, %v9364
    %v9479 = vmul.f32 %v9465, %v9365
    %v9480 = vmul.f32 %v9465, %v9366
    %v9481 = vmul.f32 %v9465, %v9367
    %v9482 = vmul.f32 %v9465, %v9368
    %v9483 = vmul.f32 %v9465, %v9369
    %v9484 = vmul.f32 %v9465, %v9370
    %v9485 = vmul.f32 %v9465, %v9371
    %v9486 = vmul.f32 %v9465, %v9372
    %v9487 = vmul.f32 %v9465, %v9373
    %v9488 = vmul.f32 %v9465, %v9374
    %v9489 = vmul.f32 %v9465, %v9375
    %v9490 = vmul.f32 %v9465, %v9376
    %v9491 = vmul.f32 %v9465, %v9377
    %v9492 = vmul.f32 %v9465, %v9378
    %v9493 = vmul.f32 %v9465, %v9379
    %v9494 = vmul.f32 %v9465, %v9380
    %v9495 = vmul.f32 %v9465, %v9381
    %v9496 = vmul.f32 %v9465, %v9382
    %v9497 = vmul.f32 %v9465, %v9383
    %v9498 = vmul.f32 %v9465, %v9384
    %v9499 = vmul.f32 %v9465, %v9385
    %v9500 = vmul.f32 %v9465, %v9386
    %v9501 = vmul.f32 %v9465, %v9387
    %v9502 = vmul.f32 %v9465, %v9388
    %v9503 = vmul.f32 %v9465, %v9389
    %v9504 = vmul.f32 %v9465, %v9390
    %v9505 = vmul.f32 %v9465, %v9391
    %v9506 = vmul.f32 %v9465, %v9392
    %v9507 = vmul.f32 %v9465, %v9393
    %v9508 = vmul.f32 %v9465, %v9394
    %v9509 = vmul.f32 %v9465, %v9395
    %v9510 = vmul.f32 %v9465, %v9396
    %v9511 = vmul.f32 %v9465, %v9397
    %v9512 = vmul.f32 %v9465, %v9398
    %v9513 = vmul.f32 %v9465, %v9399
    %v9514 = vmul.f32 %v9465, %v9400
    %v9515 = vmul.f32 %v9465, %v9401
    %v9516 = vmul.f32 %v9465, %v9402
    %v9517 = vmul.f32 %v9465, %v9403
    %v9518 = vmul.f32 %v9465, %v9404
    %v9519 = vmul.f32 %v9465, %v9405
    %v9520 = vmul.f32 %v9465, %v9406
    %v9521 = vmul.f32 %v9465, %v9407
    %v9522 = vsel %vm9409, %v9352, %v9466
    %v9523 = vsel %vm9410, %v9353, %v9467
    %v9524 = vsel %vm9411, %v9354, %v9468
    %v9525 = vsel %vm9412, %v9355, %v9469
    %v9526 = vsel %vm9413, %v9356, %v9470
    %v9527 = vsel %vm9414, %v9357, %v9471
    %v9528 = vsel %vm9415, %v9358, %v9472
    %v9529 = vsel %vm9416, %v9359, %v9473
    %v9530 = vsel %vm9417, %v9360, %v9474
    %v9531 = vsel %vm9418, %v9361, %v9475
    %v9532 = vsel %vm9419, %v9362, %v9476
    %v9533 = vsel %vm9420, %v9363, %v9477
    %v9534 = vsel %vm9421, %v9364, %v9478
    %v9535 = vsel %vm9422, %v9365, %v9479
    %v9536 = vsel %vm9423, %v9366, %v9480
    %v9537 = vsel %vm9424, %v9367, %v9481
    %v9538 = vsel %vm9425, %v9368, %v9482
    %v9539 = vsel %vm9426, %v9369, %v9483
    %v9540 = vsel %vm9427, %v9370, %v9484
    %v9541 = vsel %vm9428, %v9371, %v9485
    %v9542 = vsel %vm9429, %v9372, %v9486
    %v9543 = vsel %vm9430, %v9373, %v9487
    %v9544 = vsel %vm9431, %v9374, %v9488
    %v9545 = vsel %vm9432, %v9375, %v9489
    %v9546 = vsel %vm9433, %v9376, %v9490
    %v9547 = vsel %vm9434, %v9377, %v9491
    %v9548 = vsel %vm9435, %v9378, %v9492
    %v9549 = vsel %vm9436, %v9379, %v9493
    %v9550 = vsel %vm9437, %v9380, %v9494
    %v9551 = vsel %vm9438, %v9381, %v9495
    %v9552 = vsel %vm9439, %v9382, %v9496
    %v9553 = vsel %vm9440, %v9383, %v9497
    %v9554 = vsel %vm9441, %v9384, %v9498
    %v9555 = vsel %vm9442, %v9385, %v9499
    %v9556 = vsel %vm9443, %v9386, %v9500
    %v9557 = vsel %vm9444, %v9387, %v9501
    %v9558 = vsel %vm9445, %v9388, %v9502
    %v9559 = vsel %vm9446, %v9389, %v9503
    %v9560 = vsel %vm9447, %v9390, %v9504
    %v9561 = vsel %vm9448, %v9391, %v9505
    %v9562 = vsel %vm9449, %v9392, %v9506
    %v9563 = vsel %vm9450, %v9393, %v9507
    %v9564 = vsel %vm9451, %v9394, %v9508
    %v9565 = vsel %vm9452, %v9395, %v9509
    %v9566 = vsel %vm9453, %v9396, %v9510
    %v9567 = vsel %vm9454, %v9397, %v9511
    %v9568 = vsel %vm9455, %v9398, %v9512
    %v9569 = vsel %vm9456, %v9399, %v9513
    %v9570 = vsel %vm9457, %v9400, %v9514
    %v9571 = vsel %vm9458, %v9401, %v9515
    %v9572 = vsel %vm9459, %v9402, %v9516
    %v9573 = vsel %vm9460, %v9403, %v9517
    %v9574 = vsel %vm9461, %v9404, %v9518
    %v9575 = vsel %vm9462, %v9405, %v9519
    %v9576 = vsel %vm9463, %v9406, %v9520
    %v9577 = vsel %vm9464, %v9407, %v9521
    %9578 = vst.msk [vmem:[#allocation4] sm:$0xff] %vm137, %v9522
    %9579 = vst.msk [vmem:[#allocation4 + $0x8] sm:$0xff] %vm137, %v9523
    %9580 = vst.msk [vmem:[#allocation4 + $0x10] sm:$0xff] %vm137, %v9524
    %9581 = vst.msk [vmem:[#allocation4 + $0x18] sm:$0xff] %vm137, %v9525
    %9582 = vst.msk [vmem:[#allocation4 + $0x20] sm:$0xff] %vm137, %v9526
    %9583 = vst.msk [vmem:[#allocation4 + $0x28] sm:$0xff] %vm137, %v9527
    %9584 = vst.msk [vmem:[#allocation4 + $0x30] sm:$0xff] %vm137, %v9528
    %9585 = vst.msk [vmem:[#allocation4 + $0x38] sm:$0xff] %vm137, %v9529
    %9586 = vst.msk [vmem:[#allocation4 + $0x40] sm:$0xff] %vm137, %v9530
    %9587 = vst.msk [vmem:[#allocation4 + $0x48] sm:$0xff] %vm137, %v9531
    %9588 = vst.msk [vmem:[#allocation4 + $0x50] sm:$0xff] %vm137, %v9532
    %9589 = vst.msk [vmem:[#allocation4 + $0x58] sm:$0xff] %vm137, %v9533
    %9590 = vst.msk [vmem:[#allocation4 + $0x60] sm:$0xff] %vm137, %v9534
    %9591 = vst.msk [vmem:[#allocation4 + $0x68] sm:$0xff] %vm137, %v9535
    %9592 = vst.msk [vmem:[#allocation4 + $0x70] sm:$0xff] %vm137, %v9536
    %9593 = vst.msk [vmem:[#allocation4 + $0x78] sm:$0xff] %vm137, %v9537
    %9594 = vst.msk [vmem:[#allocation4 + $0x80] sm:$0xff] %vm137, %v9538
    %9595 = vst.msk [vmem:[#allocation4 + $0x88] sm:$0xff] %vm137, %v9539
    %9596 = vst.msk [vmem:[#allocation4 + $0x90] sm:$0xff] %vm137, %v9540
    %9597 = vst.msk [vmem:[#allocation4 + $0x98] sm:$0xff] %vm137, %v9541
    %9598 = vst.msk [vmem:[#allocation4 + $0xa0] sm:$0xff] %vm137, %v9542
    %9599 = vst.msk [vmem:[#allocation4 + $0xa8] sm:$0xff] %vm137, %v9543
    %9600 = vst.msk [vmem:[#allocation4 + $0xb0] sm:$0xff] %vm137, %v9544
    %9601 = vst.msk [vmem:[#allocation4 + $0xb8] sm:$0xff] %vm137, %v9545
    %9602 = vst.msk [vmem:[#allocation4 + $0xc0] sm:$0xff] %vm137, %v9546
    %9603 = vst.msk [vmem:[#allocation4 + $0xc8] sm:$0xff] %vm137, %v9547
    %9604 = vst.msk [vmem:[#allocation4 + $0xd0] sm:$0xff] %vm137, %v9548
    %9605 = vst.msk [vmem:[#allocation4 + $0xd8] sm:$0xff] %vm137, %v9549
    %9606 = vst.msk [vmem:[#allocation4 + $0xe0] sm:$0xff] %vm137, %v9550
    %9607 = vst.msk [vmem:[#allocation4 + $0xe8] sm:$0xff] %vm137, %v9551
    %9608 = vst.msk [vmem:[#allocation4 + $0xf0] sm:$0xff] %vm137, %v9552
    %9609 = vst.msk [vmem:[#allocation4 + $0xf8] sm:$0xff] %vm137, %v9553
    %9610 = vst.msk [vmem:[#allocation4 + $0x100] sm:$0xff] %vm137, %v9554
    %9611 = vst.msk [vmem:[#allocation4 + $0x108] sm:$0xff] %vm137, %v9555
    %9612 = vst.msk [vmem:[#allocation4 + $0x110] sm:$0xff] %vm137, %v9556
    %9613 = vst.msk [vmem:[#allocation4 + $0x118] sm:$0xff] %vm137, %v9557
    %9614 = vst.msk [vmem:[#allocation4 + $0x120] sm:$0xff] %vm137, %v9558
    %9615 = vst.msk [vmem:[#allocation4 + $0x128] sm:$0xff] %vm137, %v9559
    %9616 = vst.msk [vmem:[#allocation4 + $0x130] sm:$0xff] %vm137, %v9560
    %9617 = vst.msk [vmem:[#allocation4 + $0x138] sm:$0xff] %vm137, %v9561
    %9618 = vst.msk [vmem:[#allocation4 + $0x140] sm:$0xff] %vm137, %v9562
    %9619 = vst.msk [vmem:[#allocation4 + $0x148] sm:$0xff] %vm137, %v9563
    %9620 = vst.msk [vmem:[#allocation4 + $0x150] sm:$0xff] %vm137, %v9564
    %9621 = vst.msk [vmem:[#allocation4 + $0x158] sm:$0xff] %vm137, %v9565
    %9622 = vst.msk [vmem:[#allocation4 + $0x160] sm:$0xff] %vm137, %v9566
    %9623 = vst.msk [vmem:[#allocation4 + $0x168] sm:$0xff] %vm137, %v9567
    %9624 = vst.msk [vmem:[#allocation4 + $0x170] sm:$0xff] %vm137, %v9568
    %9625 = vst.msk [vmem:[#allocation4 + $0x178] sm:$0xff] %vm137, %v9569
    %9626 = vst.msk [vmem:[#allocation4 + $0x180] sm:$0xff] %vm137, %v9570
    %9627 = vst.msk [vmem:[#allocation4 + $0x188] sm:$0xff] %vm137, %v9571
    %9628 = vst.msk [vmem:[#allocation4 + $0x190] sm:$0xff] %vm137, %v9572
    %9629 = vst.msk [vmem:[#allocation4 + $0x198] sm:$0xff] %vm137, %v9573
    %9630 = vst.msk [vmem:[#allocation4 + $0x1a0] sm:$0xff] %vm137, %v9574
    %9631 = vst.msk [vmem:[#allocation4 + $0x1a8] sm:$0xff] %vm137, %v9575
    %9632 = vst.msk [vmem:[#allocation4 + $0x1b0] sm:$0xff] %vm137, %v9576
    %9633 = vst.msk [vmem:[#allocation4 + $0x1b8] sm:$0xff] %vm137, %v9577
    %v9634 = vld [vmem:[#allocation4] sm:$0xff]
    %v9635 = vld [vmem:[#allocation4 + $0x8] sm:$0xff]
    %v9636 = vld [vmem:[#allocation4 + $0x10] sm:$0xff]
    %v9637 = vld [vmem:[#allocation4 + $0x18] sm:$0xff]
    %v9638 = vld [vmem:[#allocation4 + $0x20] sm:$0xff]
    %v9639 = vld [vmem:[#allocation4 + $0x28] sm:$0xff]
    %v9640 = vld [vmem:[#allocation4 + $0x30] sm:$0xff]
    %v9641 = vld [vmem:[#allocation4 + $0x38] sm:$0xff]
    %v9642 = vld [vmem:[#allocation4 + $0x40] sm:$0xff]
    %v9643 = vld [vmem:[#allocation4 + $0x48] sm:$0xff]
    %v9644 = vld [vmem:[#allocation4 + $0x50] sm:$0xff]
    %v9645 = vld [vmem:[#allocation4 + $0x58] sm:$0xff]
    %v9646 = vld [vmem:[#allocation4 + $0x60] sm:$0xff]
    %v9647 = vld [vmem:[#allocation4 + $0x68] sm:$0xff]
    %v9648 = vld [vmem:[#allocation4 + $0x70] sm:$0xff]
    %v9649 = vld [vmem:[#allocation4 + $0x78] sm:$0xff]
    %v9650 = vld [vmem:[#allocation4 + $0x80] sm:$0xff]
    %v9651 = vld [vmem:[#allocation4 + $0x88] sm:$0xff]
    %v9652 = vld [vmem:[#allocation4 + $0x90] sm:$0xff]
    %v9653 = vld [vmem:[#allocation4 + $0x98] sm:$0xff]
    %v9654 = vld [vmem:[#allocation4 + $0xa0] sm:$0xff]
    %v9655 = vld [vmem:[#allocation4 + $0xa8] sm:$0xff]
    %v9656 = vld [vmem:[#allocation4 + $0xb0] sm:$0xff]
    %v9657 = vld [vmem:[#allocation4 + $0xb8] sm:$0xff]
    %v9658 = vld [vmem:[#allocation4 + $0xc0] sm:$0xff]
    %v9659 = vld [vmem:[#allocation4 + $0xc8] sm:$0xff]
    %v9660 = vld [vmem:[#allocation4 + $0xd0] sm:$0xff]
    %v9661 = vld [vmem:[#allocation4 + $0xd8] sm:$0xff]
    %v9662 = vld [vmem:[#allocation4 + $0xe0] sm:$0xff]
    %v9663 = vld [vmem:[#allocation4 + $0xe8] sm:$0xff]
    %v9664 = vld [vmem:[#allocation4 + $0xf0] sm:$0xff]
    %v9665 = vld [vmem:[#allocation4 + $0xf8] sm:$0xff]
    %v9666 = vld [vmem:[#allocation4 + $0x100] sm:$0xff]
    %v9667 = vld [vmem:[#allocation4 + $0x108] sm:$0xff]
    %v9668 = vld [vmem:[#allocation4 + $0x110] sm:$0xff]
    %v9669 = vld [vmem:[#allocation4 + $0x118] sm:$0xff]
    %v9670 = vld [vmem:[#allocation4 + $0x120] sm:$0xff]
    %v9671 = vld [vmem:[#allocation4 + $0x128] sm:$0xff]
    %v9672 = vld [vmem:[#allocation4 + $0x130] sm:$0xff]
    %v9673 = vld [vmem:[#allocation4 + $0x138] sm:$0xff]
    %v9674 = vld [vmem:[#allocation4 + $0x140] sm:$0xff]
    %v9675 = vld [vmem:[#allocation4 + $0x148] sm:$0xff]
    %v9676 = vld [vmem:[#allocation4 + $0x150] sm:$0xff]
    %v9677 = vld [vmem:[#allocation4 + $0x158] sm:$0xff]
    %v9678 = vld [vmem:[#allocation4 + $0x160] sm:$0xff]
    %v9679 = vld [vmem:[#allocation4 + $0x168] sm:$0xff]
    %v9680 = vld [vmem:[#allocation4 + $0x170] sm:$0xff]
    %v9681 = vld [vmem:[#allocation4 + $0x178] sm:$0xff]
    %v9682 = vld [vmem:[#allocation4 + $0x180] sm:$0xff]
    %v9683 = vld [vmem:[#allocation4 + $0x188] sm:$0xff]
    %v9684 = vld [vmem:[#allocation4 + $0x190] sm:$0xff]
    %v9685 = vld [vmem:[#allocation4 + $0x198] sm:$0xff]
    %v9686 = vld [vmem:[#allocation4 + $0x1a0] sm:$0xff]
    %v9687 = vld [vmem:[#allocation4 + $0x1a8] sm:$0xff]
    %v9688 = vld [vmem:[#allocation4 + $0x1b0] sm:$0xff]
    %v9689 = vld [vmem:[#allocation4 + $0x1b8] sm:$0xff]
    %v9690 = vld [vmem:[%s6] sm:$0xff]
    %v9691 = vld [vmem:[%s6 + $0x8] sm:$0xff]
    %v9692 = vld [vmem:[%s6 + $0x10] sm:$0xff]
    %v9693 = vld [vmem:[%s6 + $0x18] sm:$0xff]
    %v9694 = vld [vmem:[%s6 + $0x20] sm:$0xff]
    %v9695 = vld [vmem:[%s6 + $0x28] sm:$0xff]
    %v9696 = vld [vmem:[%s6 + $0x30] sm:$0xff]
    %v9697 = vld [vmem:[%s6 + $0x38] sm:$0xff]
    %v9698 = vld [vmem:[%s6 + $0x40] sm:$0xff]
    %v9699 = vld [vmem:[%s6 + $0x48] sm:$0xff]
    %v9700 = vld [vmem:[%s6 + $0x50] sm:$0xff]
    %v9701 = vld [vmem:[%s6 + $0x58] sm:$0xff]
    %v9702 = vld [vmem:[#allocation4 + $0x1] sm:$0xff]
    %v9703 = vld [vmem:[#allocation4 + $0x9] sm:$0xff]
    %v9704 = vld [vmem:[#allocation4 + $0x11] sm:$0xff]
    %v9705 = vld [vmem:[#allocation4 + $0x19] sm:$0xff]
    %v9706 = vld [vmem:[#allocation4 + $0x21] sm:$0xff]
    %v9707 = vld [vmem:[#allocation4 + $0x29] sm:$0xff]
    %v9708 = vld [vmem:[#allocation4 + $0x31] sm:$0xff]
    %v9709 = vld [vmem:[#allocation4 + $0x39] sm:$0xff]
    %v9710 = vld [vmem:[#allocation4 + $0x41] sm:$0xff]
    %v9711 = vld [vmem:[#allocation4 + $0x49] sm:$0xff]
    %v9712 = vld [vmem:[#allocation4 + $0x51] sm:$0xff]
    %v9713 = vld [vmem:[#allocation4 + $0x59] sm:$0xff]
    %v9714 = vld [vmem:[#allocation4 + $0x61] sm:$0xff]
    %v9715 = vld [vmem:[#allocation4 + $0x69] sm:$0xff]
    %v9716 = vld [vmem:[#allocation4 + $0x71] sm:$0xff]
    %v9717 = vld [vmem:[#allocation4 + $0x79] sm:$0xff]
    %v9718 = vld [vmem:[#allocation4 + $0x81] sm:$0xff]
    %v9719 = vld [vmem:[#allocation4 + $0x89] sm:$0xff]
    %v9720 = vld [vmem:[#allocation4 + $0x91] sm:$0xff]
    %v9721 = vld [vmem:[#allocation4 + $0x99] sm:$0xff]
    %v9722 = vld [vmem:[#allocation4 + $0xa1] sm:$0xff]
    %v9723 = vld [vmem:[#allocation4 + $0xa9] sm:$0xff]
    %v9724 = vld [vmem:[#allocation4 + $0xb1] sm:$0xff]
    %v9725 = vld [vmem:[#allocation4 + $0xb9] sm:$0xff]
    %v9726 = vld [vmem:[#allocation4 + $0xc1] sm:$0xff]
    %v9727 = vld [vmem:[#allocation4 + $0xc9] sm:$0xff]
    %v9728 = vld [vmem:[#allocation4 + $0xd1] sm:$0xff]
    %v9729 = vld [vmem:[#allocation4 + $0xd9] sm:$0xff]
    %v9730 = vld [vmem:[#allocation4 + $0xe1] sm:$0xff]
    %v9731 = vld [vmem:[#allocation4 + $0xe9] sm:$0xff]
    %v9732 = vld [vmem:[#allocation4 + $0xf1] sm:$0xff]
    %v9733 = vld [vmem:[#allocation4 + $0xf9] sm:$0xff]
    %v9734 = vld [vmem:[#allocation4 + $0x101] sm:$0xff]
    %v9735 = vld [vmem:[#allocation4 + $0x109] sm:$0xff]
    %v9736 = vld [vmem:[#allocation4 + $0x111] sm:$0xff]
    %v9737 = vld [vmem:[#allocation4 + $0x119] sm:$0xff]
    %v9738 = vld [vmem:[#allocation4 + $0x121] sm:$0xff]
    %v9739 = vld [vmem:[#allocation4 + $0x129] sm:$0xff]
    %v9740 = vld [vmem:[#allocation4 + $0x131] sm:$0xff]
    %v9741 = vld [vmem:[#allocation4 + $0x139] sm:$0xff]
    %v9742 = vld [vmem:[#allocation4 + $0x141] sm:$0xff]
    %v9743 = vld [vmem:[#allocation4 + $0x149] sm:$0xff]
    %v9744 = vld [vmem:[#allocation4 + $0x151] sm:$0xff]
    %v9745 = vld [vmem:[#allocation4 + $0x159] sm:$0xff]
    %v9746 = vld [vmem:[#allocation4 + $0x161] sm:$0xff]
    %v9747 = vld [vmem:[#allocation4 + $0x169] sm:$0xff]
    %v9748 = vld [vmem:[#allocation4 + $0x171] sm:$0xff]
    %v9749 = vld [vmem:[#allocation4 + $0x179] sm:$0xff]
    %v9750 = vld [vmem:[#allocation4 + $0x181] sm:$0xff]
    %v9751 = vld [vmem:[#allocation4 + $0x189] sm:$0xff]
    %v9752 = vld [vmem:[#allocation4 + $0x191] sm:$0xff]
    %v9753 = vld [vmem:[#allocation4 + $0x199] sm:$0xff]
    %v9754 = vld [vmem:[#allocation4 + $0x1a1] sm:$0xff]
    %v9755 = vld [vmem:[#allocation4 + $0x1a9] sm:$0xff]
    %v9756 = vld [vmem:[#allocation4 + $0x1b1] sm:$0xff]
    %v9757 = vld [vmem:[#allocation4 + $0x1b9] sm:$0xff]
    %v9758 = vld [vmem:[%s6 + $0x60] sm:$0xff]
    %v9759 = vld [vmem:[%s6 + $0x68] sm:$0xff]
    %v9760 = vld [vmem:[%s6 + $0x70] sm:$0xff]
    %v9761 = vld [vmem:[%s6 + $0x78] sm:$0xff]
    %v9762 = vld [vmem:[%s6 + $0x80] sm:$0xff]
    %v9763 = vld [vmem:[%s6 + $0x88] sm:$0xff]
    %v9764 = vld [vmem:[%s6 + $0x90] sm:$0xff]
    %v9765 = vld [vmem:[%s6 + $0x98] sm:$0xff]
    %v9766 = vld [vmem:[%s6 + $0xa0] sm:$0xff]
    %v9767 = vld [vmem:[%s6 + $0xa8] sm:$0xff]
    %v9768 = vld [vmem:[%s6 + $0xb0] sm:$0xff]
    %v9769 = vld [vmem:[%s6 + $0xb8] sm:$0xff]
    %v9771 = vsel %vm137, %v9702, 0
    %v9774 = vsel %vm137, %v9703, 0
    %v9777 = vsel %vm137, %v9704, 0
    %v9780 = vsel %vm137, %v9705, 0
    %v9783 = vsel %vm137, %v9706, 0
    %v9786 = vsel %vm137, %v9707, 0
    %v9789 = vsel %vm137, %v9708, 0
    %v9792 = vsel %vm137, %v9709, 0
    %v9795 = vsel %vm137, %v9710, 0
    %v9798 = vsel %vm137, %v9711, 0
    %v9801 = vsel %vm137, %v9712, 0
    %v9804 = vsel %vm137, %v9713, 0
    %v9807 = vsel %vm137, %v9714, 0
    %v9810 = vsel %vm137, %v9715, 0
    %v9813 = vsel %vm137, %v9716, 0
    %v9816 = vsel %vm137, %v9717, 0
    %v9819 = vsel %vm137, %v9718, 0
    %v9822 = vsel %vm137, %v9719, 0
    %v9825 = vsel %vm137, %v9720, 0
    %v9828 = vsel %vm137, %v9721, 0
    %v9831 = vsel %vm137, %v9722, 0
    %v9834 = vsel %vm137, %v9723, 0
    %v9837 = vsel %vm137, %v9724, 0
    %v9840 = vsel %vm137, %v9725, 0
    %v9843 = vsel %vm137, %v9726, 0
    %v9846 = vsel %vm137, %v9727, 0
    %v9849 = vsel %vm137, %v9728, 0
    %v9852 = vsel %vm137, %v9729, 0
    %v9855 = vsel %vm137, %v9730, 0
    %v9858 = vsel %vm137, %v9731, 0
    %v9861 = vsel %vm137, %v9732, 0
    %v9864 = vsel %vm137, %v9733, 0
    %v9867 = vsel %vm137, %v9734, 0
    %v9870 = vsel %vm137, %v9735, 0
    %v9873 = vsel %vm137, %v9736, 0
    %v9876 = vsel %vm137, %v9737, 0
    %v9879 = vsel %vm137, %v9738, 0
    %v9882 = vsel %vm137, %v9739, 0
    %v9885 = vsel %vm137, %v9740, 0
    %v9888 = vsel %vm137, %v9741, 0
    %v9891 = vsel %vm137, %v9742, 0
    %v9894 = vsel %vm137, %v9743, 0
    %v9897 = vsel %vm137, %v9744, 0
    %v9900 = vsel %vm137, %v9745, 0
    %v9903 = vsel %vm137, %v9746, 0
    %v9906 = vsel %vm137, %v9747, 0
    %v9909 = vsel %vm137, %v9748, 0
    %v9912 = vsel %vm137, %v9749, 0
    %v9915 = vsel %vm137, %v9750, 0
    %v9918 = vsel %vm137, %v9751, 0
    %v9921 = vsel %vm137, %v9752, 0
    %v9924 = vsel %vm137, %v9753, 0
    %v9927 = vsel %vm137, %v9754, 0
    %v9930 = vsel %vm137, %v9755, 0
    %v9933 = vsel %vm137, %v9756, 0
    %v9936 = vsel %vm137, %v9757, 0
    %9938 = vmatpush.msra.mxu0 0.0
    %9939 = vmatpush.msra.mxu0 0.0
    %9940 = vmatpush.msra.mxu0 0.0
    %9941 = vmatpush.msra.mxu0 0.0
    %9942 = vmatpush.msra.mxu0 %v9769
    %9943 = vmatpush.msra.mxu0 %v9768
    %9944 = vmatpush.msra.mxu0 %v9767
    %9945 = vmatpush.msra.mxu0 %v9766
    %9946 = vmatpush.msra.mxu0 %v9765
    %9947 = vmatpush.msra.mxu0 %v9764
    %9948 = vmatpush.msra.mxu0 %v9763
    %9949 = vmatpush.msra.mxu0 %v9762
    %9950 = vmatpush.msra.mxu0 %v9761
    %9951 = vmatpush.msra.mxu0 %v9760
    %9952 = vmatpush.msra.mxu0 %v9759
    %9953 = vmatpush.msra.mxu0 %v9758
    %9954 = vmatmul.f32.gmra.mxu0 %v9771
    %v9955 = vpop.f32.mrf.mxu0
    %v9956 = vadd.f32 0.0, %v9955
    %9957 = vmatmul.f32.gmra.mxu0 %v9774
    %v9958 = vpop.f32.mrf.mxu0
    %v9959 = vadd.f32 0.0, %v9958
    %9960 = vmatmul.f32.gmra.mxu0 %v9777
    %v9961 = vpop.f32.mrf.mxu0
    %v9962 = vadd.f32 0.0, %v9961
    %9963 = vmatmul.f32.gmra.mxu0 %v9780
    %v9964 = vpop.f32.mrf.mxu0
    %v9965 = vadd.f32 0.0, %v9964
    %9966 = vmatmul.f32.gmra.mxu0 %v9783
    %v9967 = vpop.f32.mrf.mxu0
    %v9968 = vadd.f32 0.0, %v9967
    %9969 = vmatmul.f32.gmra.mxu0 %v9786
    %v9970 = vpop.f32.mrf.mxu0
    %v9971 = vadd.f32 0.0, %v9970
    %9972 = vmatmul.f32.gmra.mxu0 %v9789
    %v9973 = vpop.f32.mrf.mxu0
    %v9974 = vadd.f32 0.0, %v9973
    %9975 = vmatmul.f32.gmra.mxu0 %v9792
    %v9976 = vpop.f32.mrf.mxu0
    %v9977 = vadd.f32 0.0, %v9976
    %9978 = vmatmul.f32.gmra.mxu0 %v9795
    %v9979 = vpop.f32.mrf.mxu0
    %v9980 = vadd.f32 0.0, %v9979
    %9981 = vmatmul.f32.gmra.mxu0 %v9798
    %v9982 = vpop.f32.mrf.mxu0
    %v9983 = vadd.f32 0.0, %v9982
    %9984 = vmatmul.f32.gmra.mxu0 %v9801
    %v9985 = vpop.f32.mrf.mxu0
    %v9986 = vadd.f32 0.0, %v9985
    %9987 = vmatmul.f32.gmra.mxu0 %v9804
    %v9988 = vpop.f32.mrf.mxu0
    %v9989 = vadd.f32 0.0, %v9988
    %9990 = vmatmul.f32.gmra.mxu0 %v9807
    %v9991 = vpop.f32.mrf.mxu0
    %v9992 = vadd.f32 0.0, %v9991
    %9993 = vmatmul.f32.gmra.mxu0 %v9810
    %v9994 = vpop.f32.mrf.mxu0
    %v9995 = vadd.f32 0.0, %v9994
    %9996 = vmatmul.f32.gmra.mxu0 %v9813
    %v9997 = vpop.f32.mrf.mxu0
    %v9998 = vadd.f32 0.0, %v9997
    %9999 = vmatmul.f32.gmra.mxu0 %v9816
    %v10000 = vpop.f32.mrf.mxu0
    %v10001 = vadd.f32 0.0, %v10000
    %10002 = vmatmul.f32.gmra.mxu0 %v9819
    %v10003 = vpop.f32.mrf.mxu0
    %v10004 = vadd.f32 0.0, %v10003
    %10005 = vmatmul.f32.gmra.mxu0 %v9822
    %v10006 = vpop.f32.mrf.mxu0
    %v10007 = vadd.f32 0.0, %v10006
    %10008 = vmatmul.f32.gmra.mxu0 %v9825
    %v10009 = vpop.f32.mrf.mxu0
    %v10010 = vadd.f32 0.0, %v10009
    %10011 = vmatmul.f32.gmra.mxu0 %v9828
    %v10012 = vpop.f32.mrf.mxu0
    %v10013 = vadd.f32 0.0, %v10012
    %10014 = vmatmul.f32.gmra.mxu0 %v9831
    %v10015 = vpop.f32.mrf.mxu0
    %v10016 = vadd.f32 0.0, %v10015
    %10017 = vmatmul.f32.gmra.mxu0 %v9834
    %v10018 = vpop.f32.mrf.mxu0
    %v10019 = vadd.f32 0.0, %v10018
    %10020 = vmatmul.f32.gmra.mxu0 %v9837
    %v10021 = vpop.f32.mrf.mxu0
    %v10022 = vadd.f32 0.0, %v10021
    %10023 = vmatmul.f32.gmra.mxu0 %v9840
    %v10024 = vpop.f32.mrf.mxu0
    %v10025 = vadd.f32 0.0, %v10024
    %10026 = vmatmul.f32.gmra.mxu0 %v9843
    %v10027 = vpop.f32.mrf.mxu0
    %v10028 = vadd.f32 0.0, %v10027
    %10029 = vmatmul.f32.gmra.mxu0 %v9846
    %v10030 = vpop.f32.mrf.mxu0
    %v10031 = vadd.f32 0.0, %v10030
    %10032 = vmatmul.f32.gmra.mxu0 %v9849
    %v10033 = vpop.f32.mrf.mxu0
    %v10034 = vadd.f32 0.0, %v10033
    %10035 = vmatmul.f32.gmra.mxu0 %v9852
    %v10036 = vpop.f32.mrf.mxu0
    %v10037 = vadd.f32 0.0, %v10036
    %10038 = vmatmul.f32.gmra.mxu0 %v9855
    %v10039 = vpop.f32.mrf.mxu0
    %v10040 = vadd.f32 0.0, %v10039
    %10041 = vmatmul.f32.gmra.mxu0 %v9858
    %v10042 = vpop.f32.mrf.mxu0
    %v10043 = vadd.f32 0.0, %v10042
    %10044 = vmatmul.f32.gmra.mxu0 %v9861
    %v10045 = vpop.f32.mrf.mxu0
    %v10046 = vadd.f32 0.0, %v10045
    %10047 = vmatmul.f32.gmra.mxu0 %v9864
    %v10048 = vpop.f32.mrf.mxu0
    %v10049 = vadd.f32 0.0, %v10048
    %10050 = vmatmul.f32.gmra.mxu0 %v9867
    %v10051 = vpop.f32.mrf.mxu0
    %v10052 = vadd.f32 0.0, %v10051
    %10053 = vmatmul.f32.gmra.mxu0 %v9870
    %v10054 = vpop.f32.mrf.mxu0
    %v10055 = vadd.f32 0.0, %v10054
    %10056 = vmatmul.f32.gmra.mxu0 %v9873
    %v10057 = vpop.f32.mrf.mxu0
    %v10058 = vadd.f32 0.0, %v10057
    %10059 = vmatmul.f32.gmra.mxu0 %v9876
    %v10060 = vpop.f32.mrf.mxu0
    %v10061 = vadd.f32 0.0, %v10060
    %10062 = vmatmul.f32.gmra.mxu0 %v9879
    %v10063 = vpop.f32.mrf.mxu0
    %v10064 = vadd.f32 0.0, %v10063
    %10065 = vmatmul.f32.gmra.mxu0 %v9882
    %v10066 = vpop.f32.mrf.mxu0
    %v10067 = vadd.f32 0.0, %v10066
    %10068 = vmatmul.f32.gmra.mxu0 %v9885
    %v10069 = vpop.f32.mrf.mxu0
    %v10070 = vadd.f32 0.0, %v10069
    %10071 = vmatmul.f32.gmra.mxu0 %v9888
    %v10072 = vpop.f32.mrf.mxu0
    %v10073 = vadd.f32 0.0, %v10072
    %10074 = vmatmul.f32.gmra.mxu0 %v9891
    %v10075 = vpop.f32.mrf.mxu0
    %v10076 = vadd.f32 0.0, %v10075
    %10077 = vmatmul.f32.gmra.mxu0 %v9894
    %v10078 = vpop.f32.mrf.mxu0
    %v10079 = vadd.f32 0.0, %v10078
    %10080 = vmatmul.f32.gmra.mxu0 %v9897
    %v10081 = vpop.f32.mrf.mxu0
    %v10082 = vadd.f32 0.0, %v10081
    %10083 = vmatmul.f32.gmra.mxu0 %v9900
    %v10084 = vpop.f32.mrf.mxu0
    %v10085 = vadd.f32 0.0, %v10084
    %10086 = vmatmul.f32.gmra.mxu0 %v9903
    %v10087 = vpop.f32.mrf.mxu0
    %v10088 = vadd.f32 0.0, %v10087
    %10089 = vmatmul.f32.gmra.mxu0 %v9906
    %v10090 = vpop.f32.mrf.mxu0
    %v10091 = vadd.f32 0.0, %v10090
    %10092 = vmatmul.f32.gmra.mxu0 %v9909
    %v10093 = vpop.f32.mrf.mxu0
    %v10094 = vadd.f32 0.0, %v10093
    %10095 = vmatmul.f32.gmra.mxu0 %v9912
    %v10096 = vpop.f32.mrf.mxu0
    %v10097 = vadd.f32 0.0, %v10096
    %10098 = vmatmul.f32.gmra.mxu0 %v9915
    %v10099 = vpop.f32.mrf.mxu0
    %v10100 = vadd.f32 0.0, %v10099
    %10101 = vmatmul.f32.gmra.mxu0 %v9918
    %v10102 = vpop.f32.mrf.mxu0
    %v10103 = vadd.f32 0.0, %v10102
    %10104 = vmatmul.f32.gmra.mxu0 %v9921
    %v10105 = vpop.f32.mrf.mxu0
    %v10106 = vadd.f32 0.0, %v10105
    %10107 = vmatmul.f32.gmra.mxu0 %v9924
    %v10108 = vpop.f32.mrf.mxu0
    %v10109 = vadd.f32 0.0, %v10108
    %10110 = vmatmul.f32.gmra.mxu0 %v9927
    %v10111 = vpop.f32.mrf.mxu0
    %v10112 = vadd.f32 0.0, %v10111
    %10113 = vmatmul.f32.gmra.mxu0 %v9930
    %v10114 = vpop.f32.mrf.mxu0
    %v10115 = vadd.f32 0.0, %v10114
    %10116 = vmatmul.f32.gmra.mxu0 %v9933
    %v10117 = vpop.f32.mrf.mxu0
    %v10118 = vadd.f32 0.0, %v10117
    %10119 = vmatmul.f32.gmra.mxu0 %v9936
    %v10120 = vpop.f32.mrf.mxu0
    %v10121 = vadd.f32 0.0, %v10120
    %10122 = vdwg.mxu0
    %v10124 = vsel %vm137, %v9634, 0
    %v10127 = vsel %vm137, %v9635, 0
    %v10130 = vsel %vm137, %v9636, 0
    %v10133 = vsel %vm137, %v9637, 0
    %v10136 = vsel %vm137, %v9638, 0
    %v10139 = vsel %vm137, %v9639, 0
    %v10142 = vsel %vm137, %v9640, 0
    %v10145 = vsel %vm137, %v9641, 0
    %v10148 = vsel %vm137, %v9642, 0
    %v10151 = vsel %vm137, %v9643, 0
    %v10154 = vsel %vm137, %v9644, 0
    %v10157 = vsel %vm137, %v9645, 0
    %v10160 = vsel %vm137, %v9646, 0
    %v10163 = vsel %vm137, %v9647, 0
    %v10166 = vsel %vm137, %v9648, 0
    %v10169 = vsel %vm137, %v9649, 0
    %v10172 = vsel %vm137, %v9650, 0
    %v10175 = vsel %vm137, %v9651, 0
    %v10178 = vsel %vm137, %v9652, 0
    %v10181 = vsel %vm137, %v9653, 0
    %v10184 = vsel %vm137, %v9654, 0
    %v10187 = vsel %vm137, %v9655, 0
    %v10190 = vsel %vm137, %v9656, 0
    %v10193 = vsel %vm137, %v9657, 0
    %v10196 = vsel %vm137, %v9658, 0
    %v10199 = vsel %vm137, %v9659, 0
    %v10202 = vsel %vm137, %v9660, 0
    %v10205 = vsel %vm137, %v9661, 0
    %v10208 = vsel %vm137, %v9662, 0
    %v10211 = vsel %vm137, %v9663, 0
    %v10214 = vsel %vm137, %v9664, 0
    %v10217 = vsel %vm137, %v9665, 0
    %v10220 = vsel %vm137, %v9666, 0
    %v10223 = vsel %vm137, %v9667, 0
    %v10226 = vsel %vm137, %v9668, 0
    %v10229 = vsel %vm137, %v9669, 0
    %v10232 = vsel %vm137, %v9670, 0
    %v10235 = vsel %vm137, %v9671, 0
    %v10238 = vsel %vm137, %v9672, 0
    %v10241 = vsel %vm137, %v9673, 0
    %v10244 = vsel %vm137, %v9674, 0
    %v10247 = vsel %vm137, %v9675, 0
    %v10250 = vsel %vm137, %v9676, 0
    %v10253 = vsel %vm137, %v9677, 0
    %v10256 = vsel %vm137, %v9678, 0
    %v10259 = vsel %vm137, %v9679, 0
    %v10262 = vsel %vm137, %v9680, 0
    %v10265 = vsel %vm137, %v9681, 0
    %v10268 = vsel %vm137, %v9682, 0
    %v10271 = vsel %vm137, %v9683, 0
    %v10274 = vsel %vm137, %v9684, 0
    %v10277 = vsel %vm137, %v9685, 0
    %v10280 = vsel %vm137, %v9686, 0
    %v10283 = vsel %vm137, %v9687, 0
    %v10286 = vsel %vm137, %v9688, 0
    %v10289 = vsel %vm137, %v9689, 0
    %10291 = vmatpush.msra.mxu0 0.0
    %10292 = vmatpush.msra.mxu0 0.0
    %10293 = vmatpush.msra.mxu0 0.0
    %10294 = vmatpush.msra.mxu0 0.0
    %10295 = vmatpush.msra.mxu0 %v9701
    %10296 = vmatpush.msra.mxu0 %v9700
    %10297 = vmatpush.msra.mxu0 %v9699
    %10298 = vmatpush.msra.mxu0 %v9698
    %10299 = vmatpush.msra.mxu0 %v9697
    %10300 = vmatpush.msra.mxu0 %v9696
    %10301 = vmatpush.msra.mxu0 %v9695
    %10302 = vmatpush.msra.mxu0 %v9694
    %10303 = vmatpush.msra.mxu0 %v9693
    %10304 = vmatpush.msra.mxu0 %v9692
    %10305 = vmatpush.msra.mxu0 %v9691
    %10306 = vmatpush.msra.mxu0 %v9690
    %10307 = vmatmul.f32.gmra.mxu0 %v10124
    %v10308 = vpop.f32.mrf.mxu0
    %v10309 = vadd.f32 %v9956, %v10308
    %10310 = vmatmul.f32.gmra.mxu0 %v10127
    %v10311 = vpop.f32.mrf.mxu0
    %v10312 = vadd.f32 %v9959, %v10311
    %10313 = vmatmul.f32.gmra.mxu0 %v10130
    %v10314 = vpop.f32.mrf.mxu0
    %v10315 = vadd.f32 %v9962, %v10314
    %10316 = vmatmul.f32.gmra.mxu0 %v10133
    %v10317 = vpop.f32.mrf.mxu0
    %v10318 = vadd.f32 %v9965, %v10317
    %10319 = vmatmul.f32.gmra.mxu0 %v10136
    %v10320 = vpop.f32.mrf.mxu0
    %v10321 = vadd.f32 %v9968, %v10320
    %10322 = vmatmul.f32.gmra.mxu0 %v10139
    %v10323 = vpop.f32.mrf.mxu0
    %v10324 = vadd.f32 %v9971, %v10323
    %10325 = vmatmul.f32.gmra.mxu0 %v10142
    %v10326 = vpop.f32.mrf.mxu0
    %v10327 = vadd.f32 %v9974, %v10326
    %10328 = vmatmul.f32.gmra.mxu0 %v10145
    %v10329 = vpop.f32.mrf.mxu0
    %v10330 = vadd.f32 %v9977, %v10329
    %10331 = vmatmul.f32.gmra.mxu0 %v10148
    %v10332 = vpop.f32.mrf.mxu0
    %v10333 = vadd.f32 %v9980, %v10332
    %10334 = vmatmul.f32.gmra.mxu0 %v10151
    %v10335 = vpop.f32.mrf.mxu0
    %v10336 = vadd.f32 %v9983, %v10335
    %10337 = vmatmul.f32.gmra.mxu0 %v10154
    %v10338 = vpop.f32.mrf.mxu0
    %v10339 = vadd.f32 %v9986, %v10338
    %10340 = vmatmul.f32.gmra.mxu0 %v10157
    %v10341 = vpop.f32.mrf.mxu0
    %v10342 = vadd.f32 %v9989, %v10341
    %10343 = vmatmul.f32.gmra.mxu0 %v10160
    %v10344 = vpop.f32.mrf.mxu0
    %v10345 = vadd.f32 %v9992, %v10344
    %10346 = vmatmul.f32.gmra.mxu0 %v10163
    %v10347 = vpop.f32.mrf.mxu0
    %v10348 = vadd.f32 %v9995, %v10347
    %10349 = vmatmul.f32.gmra.mxu0 %v10166
    %v10350 = vpop.f32.mrf.mxu0
    %v10351 = vadd.f32 %v9998, %v10350
    %10352 = vmatmul.f32.gmra.mxu0 %v10169
    %v10353 = vpop.f32.mrf.mxu0
    %v10354 = vadd.f32 %v10001, %v10353
    %10355 = vmatmul.f32.gmra.mxu0 %v10172
    %v10356 = vpop.f32.mrf.mxu0
    %v10357 = vadd.f32 %v10004, %v10356
    %10358 = vmatmul.f32.gmra.mxu0 %v10175
    %v10359 = vpop.f32.mrf.mxu0
    %v10360 = vadd.f32 %v10007, %v10359
    %10361 = vmatmul.f32.gmra.mxu0 %v10178
    %v10362 = vpop.f32.mrf.mxu0
    %v10363 = vadd.f32 %v10010, %v10362
    %10364 = vmatmul.f32.gmra.mxu0 %v10181
    %v10365 = vpop.f32.mrf.mxu0
    %v10366 = vadd.f32 %v10013, %v10365
    %10367 = vmatmul.f32.gmra.mxu0 %v10184
    %v10368 = vpop.f32.mrf.mxu0
    %v10369 = vadd.f32 %v10016, %v10368
    %10370 = vmatmul.f32.gmra.mxu0 %v10187
    %v10371 = vpop.f32.mrf.mxu0
    %v10372 = vadd.f32 %v10019, %v10371
    %10373 = vmatmul.f32.gmra.mxu0 %v10190
    %v10374 = vpop.f32.mrf.mxu0
    %v10375 = vadd.f32 %v10022, %v10374
    %10376 = vmatmul.f32.gmra.mxu0 %v10193
    %v10377 = vpop.f32.mrf.mxu0
    %v10378 = vadd.f32 %v10025, %v10377
    %10379 = vmatmul.f32.gmra.mxu0 %v10196
    %v10380 = vpop.f32.mrf.mxu0
    %v10381 = vadd.f32 %v10028, %v10380
    %10382 = vmatmul.f32.gmra.mxu0 %v10199
    %v10383 = vpop.f32.mrf.mxu0
    %v10384 = vadd.f32 %v10031, %v10383
    %10385 = vmatmul.f32.gmra.mxu0 %v10202
    %v10386 = vpop.f32.mrf.mxu0
    %v10387 = vadd.f32 %v10034, %v10386
    %10388 = vmatmul.f32.gmra.mxu0 %v10205
    %v10389 = vpop.f32.mrf.mxu0
    %v10390 = vadd.f32 %v10037, %v10389
    %10391 = vmatmul.f32.gmra.mxu0 %v10208
    %v10392 = vpop.f32.mrf.mxu0
    %v10393 = vadd.f32 %v10040, %v10392
    %10394 = vmatmul.f32.gmra.mxu0 %v10211
    %v10395 = vpop.f32.mrf.mxu0
    %v10396 = vadd.f32 %v10043, %v10395
    %10397 = vmatmul.f32.gmra.mxu0 %v10214
    %v10398 = vpop.f32.mrf.mxu0
    %v10399 = vadd.f32 %v10046, %v10398
    %10400 = vmatmul.f32.gmra.mxu0 %v10217
    %v10401 = vpop.f32.mrf.mxu0
    %v10402 = vadd.f32 %v10049, %v10401
    %10403 = vmatmul.f32.gmra.mxu0 %v10220
    %v10404 = vpop.f32.mrf.mxu0
    %v10405 = vadd.f32 %v10052, %v10404
    %10406 = vmatmul.f32.gmra.mxu0 %v10223
    %v10407 = vpop.f32.mrf.mxu0
    %v10408 = vadd.f32 %v10055, %v10407
    %10409 = vmatmul.f32.gmra.mxu0 %v10226
    %v10410 = vpop.f32.mrf.mxu0
    %v10411 = vadd.f32 %v10058, %v10410
    %10412 = vmatmul.f32.gmra.mxu0 %v10229
    %v10413 = vpop.f32.mrf.mxu0
    %v10414 = vadd.f32 %v10061, %v10413
    %10415 = vmatmul.f32.gmra.mxu0 %v10232
    %v10416 = vpop.f32.mrf.mxu0
    %v10417 = vadd.f32 %v10064, %v10416
    %10418 = vmatmul.f32.gmra.mxu0 %v10235
    %v10419 = vpop.f32.mrf.mxu0
    %v10420 = vadd.f32 %v10067, %v10419
    %10421 = vmatmul.f32.gmra.mxu0 %v10238
    %v10422 = vpop.f32.mrf.mxu0
    %v10423 = vadd.f32 %v10070, %v10422
    %10424 = vmatmul.f32.gmra.mxu0 %v10241
    %v10425 = vpop.f32.mrf.mxu0
    %v10426 = vadd.f32 %v10073, %v10425
    %10427 = vmatmul.f32.gmra.mxu0 %v10244
    %v10428 = vpop.f32.mrf.mxu0
    %v10429 = vadd.f32 %v10076, %v10428
    %10430 = vmatmul.f32.gmra.mxu0 %v10247
    %v10431 = vpop.f32.mrf.mxu0
    %v10432 = vadd.f32 %v10079, %v10431
    %10433 = vmatmul.f32.gmra.mxu0 %v10250
    %v10434 = vpop.f32.mrf.mxu0
    %v10435 = vadd.f32 %v10082, %v10434
    %10436 = vmatmul.f32.gmra.mxu0 %v10253
    %v10437 = vpop.f32.mrf.mxu0
    %v10438 = vadd.f32 %v10085, %v10437
    %10439 = vmatmul.f32.gmra.mxu0 %v10256
    %v10440 = vpop.f32.mrf.mxu0
    %v10441 = vadd.f32 %v10088, %v10440
    %10442 = vmatmul.f32.gmra.mxu0 %v10259
    %v10443 = vpop.f32.mrf.mxu0
    %v10444 = vadd.f32 %v10091, %v10443
    %10445 = vmatmul.f32.gmra.mxu0 %v10262
    %v10446 = vpop.f32.mrf.mxu0
    %v10447 = vadd.f32 %v10094, %v10446
    %10448 = vmatmul.f32.gmra.mxu0 %v10265
    %v10449 = vpop.f32.mrf.mxu0
    %v10450 = vadd.f32 %v10097, %v10449
    %10451 = vmatmul.f32.gmra.mxu0 %v10268
    %v10452 = vpop.f32.mrf.mxu0
    %v10453 = vadd.f32 %v10100, %v10452
    %10454 = vmatmul.f32.gmra.mxu0 %v10271
    %v10455 = vpop.f32.mrf.mxu0
    %v10456 = vadd.f32 %v10103, %v10455
    %10457 = vmatmul.f32.gmra.mxu0 %v10274
    %v10458 = vpop.f32.mrf.mxu0
    %v10459 = vadd.f32 %v10106, %v10458
    %10460 = vmatmul.f32.gmra.mxu0 %v10277
    %v10461 = vpop.f32.mrf.mxu0
    %v10462 = vadd.f32 %v10109, %v10461
    %10463 = vmatmul.f32.gmra.mxu0 %v10280
    %v10464 = vpop.f32.mrf.mxu0
    %v10465 = vadd.f32 %v10112, %v10464
    %10466 = vmatmul.f32.gmra.mxu0 %v10283
    %v10467 = vpop.f32.mrf.mxu0
    %v10468 = vadd.f32 %v10115, %v10467
    %10469 = vmatmul.f32.gmra.mxu0 %v10286
    %v10470 = vpop.f32.mrf.mxu0
    %v10471 = vadd.f32 %v10118, %v10470
    %10472 = vmatmul.f32.gmra.mxu0 %v10289
    %v10473 = vpop.f32.mrf.mxu0
    %v10474 = vadd.f32 %v10121, %v10473
    %10475 = vdwg.mxu0
    %v10476 = vld [vmem:[#allocation4 + $0x7] sm:$0xff]
    %v10477 = vld [vmem:[#allocation4 + $0xf] sm:$0xff]
    %v10478 = vld [vmem:[#allocation4 + $0x17] sm:$0xff]
    %v10479 = vld [vmem:[#allocation4 + $0x1f] sm:$0xff]
    %v10480 = vld [vmem:[#allocation4 + $0x27] sm:$0xff]
    %v10481 = vld [vmem:[#allocation4 + $0x2f] sm:$0xff]
    %v10482 = vld [vmem:[#allocation4 + $0x37] sm:$0xff]
    %v10483 = vld [vmem:[#allocation4 + $0x3f] sm:$0xff]
    %v10484 = vld [vmem:[#allocation4 + $0x47] sm:$0xff]
    %v10485 = vld [vmem:[#allocation4 + $0x4f] sm:$0xff]
    %v10486 = vld [vmem:[#allocation4 + $0x57] sm:$0xff]
    %v10487 = vld [vmem:[#allocation4 + $0x5f] sm:$0xff]
    %v10488 = vld [vmem:[#allocation4 + $0x67] sm:$0xff]
    %v10489 = vld [vmem:[#allocation4 + $0x6f] sm:$0xff]
    %v10490 = vld [vmem:[#allocation4 + $0x77] sm:$0xff]
    %v10491 = vld [vmem:[#allocation4 + $0x7f] sm:$0xff]
    %v10492 = vld [vmem:[#allocation4 + $0x87] sm:$0xff]
    %v10493 = vld [vmem:[#allocation4 + $0x8f] sm:$0xff]
    %v10494 = vld [vmem:[#allocation4 + $0x97] sm:$0xff]
    %v10495 = vld [vmem:[#allocation4 + $0x9f] sm:$0xff]
    %v10496 = vld [vmem:[#allocation4 + $0xa7] sm:$0xff]
    %v10497 = vld [vmem:[#allocation4 + $0xaf] sm:$0xff]
    %v10498 = vld [vmem:[#allocation4 + $0xb7] sm:$0xff]
    %v10499 = vld [vmem:[#allocation4 + $0xbf] sm:$0xff]
    %v10500 = vld [vmem:[#allocation4 + $0xc7] sm:$0xff]
    %v10501 = vld [vmem:[#allocation4 + $0xcf] sm:$0xff]
    %v10502 = vld [vmem:[#allocation4 + $0xd7] sm:$0xff]
    %v10503 = vld [vmem:[#allocation4 + $0xdf] sm:$0xff]
    %v10504 = vld [vmem:[#allocation4 + $0xe7] sm:$0xff]
    %v10505 = vld [vmem:[#allocation4 + $0xef] sm:$0xff]
    %v10506 = vld [vmem:[#allocation4 + $0xf7] sm:$0xff]
    %v10507 = vld [vmem:[#allocation4 + $0xff] sm:$0xff]
    %v10508 = vld [vmem:[#allocation4 + $0x107] sm:$0xff]
    %v10509 = vld [vmem:[#allocation4 + $0x10f] sm:$0xff]
    %v10510 = vld [vmem:[#allocation4 + $0x117] sm:$0xff]
    %v10511 = vld [vmem:[#allocation4 + $0x11f] sm:$0xff]
    %v10512 = vld [vmem:[#allocation4 + $0x127] sm:$0xff]
    %v10513 = vld [vmem:[#allocation4 + $0x12f] sm:$0xff]
    %v10514 = vld [vmem:[#allocation4 + $0x137] sm:$0xff]
    %v10515 = vld [vmem:[#allocation4 + $0x13f] sm:$0xff]
    %v10516 = vld [vmem:[#allocation4 + $0x147] sm:$0xff]
    %v10517 = vld [vmem:[#allocation4 + $0x14f] sm:$0xff]
    %v10518 = vld [vmem:[#allocation4 + $0x157] sm:$0xff]
    %v10519 = vld [vmem:[#allocation4 + $0x15f] sm:$0xff]
    %v10520 = vld [vmem:[#allocation4 + $0x167] sm:$0xff]
    %v10521 = vld [vmem:[#allocation4 + $0x16f] sm:$0xff]
    %v10522 = vld [vmem:[#allocation4 + $0x177] sm:$0xff]
    %v10523 = vld [vmem:[#allocation4 + $0x17f] sm:$0xff]
    %v10524 = vld [vmem:[#allocation4 + $0x187] sm:$0xff]
    %v10525 = vld [vmem:[#allocation4 + $0x18f] sm:$0xff]
    %v10526 = vld [vmem:[#allocation4 + $0x197] sm:$0xff]
    %v10527 = vld [vmem:[#allocation4 + $0x19f] sm:$0xff]
    %v10528 = vld [vmem:[#allocation4 + $0x1a7] sm:$0xff]
    %v10529 = vld [vmem:[#allocation4 + $0x1af] sm:$0xff]
    %v10530 = vld [vmem:[#allocation4 + $0x1b7] sm:$0xff]
    %v10531 = vld [vmem:[#allocation4 + $0x1bf] sm:$0xff]
    %v10532 = vld [vmem:[%s6 + $0xc0] sm:$0xff]
    %v10533 = vld [vmem:[%s6 + $0xc8] sm:$0xff]
    %v10534 = vld [vmem:[%s6 + $0xd0] sm:$0xff]
    %v10535 = vld [vmem:[%s6 + $0xd8] sm:$0xff]
    %v10536 = vld [vmem:[%s6 + $0xe0] sm:$0xff]
    %v10537 = vld [vmem:[%s6 + $0xe8] sm:$0xff]
    %v10538 = vld [vmem:[%s6 + $0xf0] sm:$0xff]
    %v10539 = vld [vmem:[%s6 + $0xf8] sm:$0xff]
    %v10540 = vld [vmem:[%s6 + $0x100] sm:$0xff]
    %v10541 = vld [vmem:[%s6 + $0x108] sm:$0xff]
    %v10542 = vld [vmem:[%s6 + $0x110] sm:$0xff]
    %v10543 = vld [vmem:[%s6 + $0x118] sm:$0xff]
    %v10545 = vsel %vm137, %v10476, 0
    %v10548 = vsel %vm137, %v10477, 0
    %v10551 = vsel %vm137, %v10478, 0
    %v10554 = vsel %vm137, %v10479, 0
    %v10557 = vsel %vm137, %v10480, 0
    %v10560 = vsel %vm137, %v10481, 0
    %v10563 = vsel %vm137, %v10482, 0
    %v10566 = vsel %vm137, %v10483, 0
    %v10569 = vsel %vm137, %v10484, 0
    %v10572 = vsel %vm137, %v10485, 0
    %v10575 = vsel %vm137, %v10486, 0
    %v10578 = vsel %vm137, %v10487, 0
    %v10581 = vsel %vm137, %v10488, 0
    %v10584 = vsel %vm137, %v10489, 0
    %v10587 = vsel %vm137, %v10490, 0
    %v10590 = vsel %vm137, %v10491, 0
    %v10593 = vsel %vm137, %v10492, 0
    %v10596 = vsel %vm137, %v10493, 0
    %v10599 = vsel %vm137, %v10494, 0
    %v10602 = vsel %vm137, %v10495, 0
    %v10605 = vsel %vm137, %v10496, 0
    %v10608 = vsel %vm137, %v10497, 0
    %v10611 = vsel %vm137, %v10498, 0
    %v10614 = vsel %vm137, %v10499, 0
    %v10617 = vsel %vm137, %v10500, 0
    %v10620 = vsel %vm137, %v10501, 0
    %v10623 = vsel %vm137, %v10502, 0
    %v10626 = vsel %vm137, %v10503, 0
    %v10629 = vsel %vm137, %v10504, 0
    %v10632 = vsel %vm137, %v10505, 0
    %v10635 = vsel %vm137, %v10506, 0
    %v10638 = vsel %vm137, %v10507, 0
    %v10641 = vsel %vm137, %v10508, 0
    %v10644 = vsel %vm137, %v10509, 0
    %v10647 = vsel %vm137, %v10510, 0
    %v10650 = vsel %vm137, %v10511, 0
    %v10653 = vsel %vm137, %v10512, 0
    %v10656 = vsel %vm137, %v10513, 0
    %v10659 = vsel %vm137, %v10514, 0
    %v10662 = vsel %vm137, %v10515, 0
    %v10665 = vsel %vm137, %v10516, 0
    %v10668 = vsel %vm137, %v10517, 0
    %v10671 = vsel %vm137, %v10518, 0
    %v10674 = vsel %vm137, %v10519, 0
    %v10677 = vsel %vm137, %v10520, 0
    %v10680 = vsel %vm137, %v10521, 0
    %v10683 = vsel %vm137, %v10522, 0
    %v10686 = vsel %vm137, %v10523, 0
    %v10689 = vsel %vm137, %v10524, 0
    %v10692 = vsel %vm137, %v10525, 0
    %v10695 = vsel %vm137, %v10526, 0
    %v10698 = vsel %vm137, %v10527, 0
    %v10701 = vsel %vm137, %v10528, 0
    %v10704 = vsel %vm137, %v10529, 0
    %v10707 = vsel %vm137, %v10530, 0
    %v10710 = vsel %vm137, %v10531, 0
    %10712 = vmatpush.msra.mxu0 0.0
    %10713 = vmatpush.msra.mxu0 0.0
    %10714 = vmatpush.msra.mxu0 0.0
    %10715 = vmatpush.msra.mxu0 0.0
    %10716 = vmatpush.msra.mxu0 %v10543
    %10717 = vmatpush.msra.mxu0 %v10542
    %10718 = vmatpush.msra.mxu0 %v10541
    %10719 = vmatpush.msra.mxu0 %v10540
    %10720 = vmatpush.msra.mxu0 %v10539
    %10721 = vmatpush.msra.mxu0 %v10538
    %10722 = vmatpush.msra.mxu0 %v10537
    %10723 = vmatpush.msra.mxu0 %v10536
    %10724 = vmatpush.msra.mxu0 %v10535
    %10725 = vmatpush.msra.mxu0 %v10534
    %10726 = vmatpush.msra.mxu0 %v10533
    %10727 = vmatpush.msra.mxu0 %v10532
    %10728 = vmatmul.f32.gmra.mxu0 %v10545
    %v10729 = vpop.f32.mrf.mxu0
    %v10730 = vadd.f32 0.0, %v10729
    %10731 = vmatmul.f32.gmra.mxu0 %v10548
    %v10732 = vpop.f32.mrf.mxu0
    %v10733 = vadd.f32 0.0, %v10732
    %10734 = vmatmul.f32.gmra.mxu0 %v10551
    %v10735 = vpop.f32.mrf.mxu0
    %v10736 = vadd.f32 0.0, %v10735
    %10737 = vmatmul.f32.gmra.mxu0 %v10554
    %v10738 = vpop.f32.mrf.mxu0
    %v10739 = vadd.f32 0.0, %v10738
    %10740 = vmatmul.f32.gmra.mxu0 %v10557
    %v10741 = vpop.f32.mrf.mxu0
    %v10742 = vadd.f32 0.0, %v10741
    %10743 = vmatmul.f32.gmra.mxu0 %v10560
    %v10744 = vpop.f32.mrf.mxu0
    %v10745 = vadd.f32 0.0, %v10744
    %10746 = vmatmul.f32.gmra.mxu0 %v10563
    %v10747 = vpop.f32.mrf.mxu0
    %v10748 = vadd.f32 0.0, %v10747
    %10749 = vmatmul.f32.gmra.mxu0 %v10566
    %v10750 = vpop.f32.mrf.mxu0
    %v10751 = vadd.f32 0.0, %v10750
    %10752 = vmatmul.f32.gmra.mxu0 %v10569
    %v10753 = vpop.f32.mrf.mxu0
    %v10754 = vadd.f32 0.0, %v10753
    %10755 = vmatmul.f32.gmra.mxu0 %v10572
    %v10756 = vpop.f32.mrf.mxu0
    %v10757 = vadd.f32 0.0, %v10756
    %10758 = vmatmul.f32.gmra.mxu0 %v10575
    %v10759 = vpop.f32.mrf.mxu0
    %v10760 = vadd.f32 0.0, %v10759
    %10761 = vmatmul.f32.gmra.mxu0 %v10578
    %v10762 = vpop.f32.mrf.mxu0
    %v10763 = vadd.f32 0.0, %v10762
    %10764 = vmatmul.f32.gmra.mxu0 %v10581
    %v10765 = vpop.f32.mrf.mxu0
    %v10766 = vadd.f32 0.0, %v10765
    %10767 = vmatmul.f32.gmra.mxu0 %v10584
    %v10768 = vpop.f32.mrf.mxu0
    %v10769 = vadd.f32 0.0, %v10768
    %10770 = vmatmul.f32.gmra.mxu0 %v10587
    %v10771 = vpop.f32.mrf.mxu0
    %v10772 = vadd.f32 0.0, %v10771
    %10773 = vmatmul.f32.gmra.mxu0 %v10590
    %v10774 = vpop.f32.mrf.mxu0
    %v10775 = vadd.f32 0.0, %v10774
    %10776 = vmatmul.f32.gmra.mxu0 %v10593
    %v10777 = vpop.f32.mrf.mxu0
    %v10778 = vadd.f32 0.0, %v10777
    %10779 = vmatmul.f32.gmra.mxu0 %v10596
    %v10780 = vpop.f32.mrf.mxu0
    %v10781 = vadd.f32 0.0, %v10780
    %10782 = vmatmul.f32.gmra.mxu0 %v10599
    %v10783 = vpop.f32.mrf.mxu0
    %v10784 = vadd.f32 0.0, %v10783
    %10785 = vmatmul.f32.gmra.mxu0 %v10602
    %v10786 = vpop.f32.mrf.mxu0
    %v10787 = vadd.f32 0.0, %v10786
    %10788 = vmatmul.f32.gmra.mxu0 %v10605
    %v10789 = vpop.f32.mrf.mxu0
    %v10790 = vadd.f32 0.0, %v10789
    %10791 = vmatmul.f32.gmra.mxu0 %v10608
    %v10792 = vpop.f32.mrf.mxu0
    %v10793 = vadd.f32 0.0, %v10792
    %10794 = vmatmul.f32.gmra.mxu0 %v10611
    %v10795 = vpop.f32.mrf.mxu0
    %v10796 = vadd.f32 0.0, %v10795
    %10797 = vmatmul.f32.gmra.mxu0 %v10614
    %v10798 = vpop.f32.mrf.mxu0
    %v10799 = vadd.f32 0.0, %v10798
    %10800 = vmatmul.f32.gmra.mxu0 %v10617
    %v10801 = vpop.f32.mrf.mxu0
    %v10802 = vadd.f32 0.0, %v10801
    %10803 = vmatmul.f32.gmra.mxu0 %v10620
    %v10804 = vpop.f32.mrf.mxu0
    %v10805 = vadd.f32 0.0, %v10804
    %10806 = vmatmul.f32.gmra.mxu0 %v10623
    %v10807 = vpop.f32.mrf.mxu0
    %v10808 = vadd.f32 0.0, %v10807
    %10809 = vmatmul.f32.gmra.mxu0 %v10626
    %v10810 = vpop.f32.mrf.mxu0
    %v10811 = vadd.f32 0.0, %v10810
    %10812 = vmatmul.f32.gmra.mxu0 %v10629
    %v10813 = vpop.f32.mrf.mxu0
    %v10814 = vadd.f32 0.0, %v10813
    %10815 = vmatmul.f32.gmra.mxu0 %v10632
    %v10816 = vpop.f32.mrf.mxu0
    %v10817 = vadd.f32 0.0, %v10816
    %10818 = vmatmul.f32.gmra.mxu0 %v10635
    %v10819 = vpop.f32.mrf.mxu0
    %v10820 = vadd.f32 0.0, %v10819
    %10821 = vmatmul.f32.gmra.mxu0 %v10638
    %v10822 = vpop.f32.mrf.mxu0
    %v10823 = vadd.f32 0.0, %v10822
    %10824 = vmatmul.f32.gmra.mxu0 %v10641
    %v10825 = vpop.f32.mrf.mxu0
    %v10826 = vadd.f32 0.0, %v10825
    %10827 = vmatmul.f32.gmra.mxu0 %v10644
    %v10828 = vpop.f32.mrf.mxu0
    %v10829 = vadd.f32 0.0, %v10828
    %10830 = vmatmul.f32.gmra.mxu0 %v10647
    %v10831 = vpop.f32.mrf.mxu0
    %v10832 = vadd.f32 0.0, %v10831
    %10833 = vmatmul.f32.gmra.mxu0 %v10650
    %v10834 = vpop.f32.mrf.mxu0
    %v10835 = vadd.f32 0.0, %v10834
    %10836 = vmatmul.f32.gmra.mxu0 %v10653
    %v10837 = vpop.f32.mrf.mxu0
    %v10838 = vadd.f32 0.0, %v10837
    %10839 = vmatmul.f32.gmra.mxu0 %v10656
    %v10840 = vpop.f32.mrf.mxu0
    %v10841 = vadd.f32 0.0, %v10840
    %10842 = vmatmul.f32.gmra.mxu0 %v10659
    %v10843 = vpop.f32.mrf.mxu0
    %v10844 = vadd.f32 0.0, %v10843
    %10845 = vmatmul.f32.gmra.mxu0 %v10662
    %v10846 = vpop.f32.mrf.mxu0
    %v10847 = vadd.f32 0.0, %v10846
    %10848 = vmatmul.f32.gmra.mxu0 %v10665
    %v10849 = vpop.f32.mrf.mxu0
    %v10850 = vadd.f32 0.0, %v10849
    %10851 = vmatmul.f32.gmra.mxu0 %v10668
    %v10852 = vpop.f32.mrf.mxu0
    %v10853 = vadd.f32 0.0, %v10852
    %10854 = vmatmul.f32.gmra.mxu0 %v10671
    %v10855 = vpop.f32.mrf.mxu0
    %v10856 = vadd.f32 0.0, %v10855
    %10857 = vmatmul.f32.gmra.mxu0 %v10674
    %v10858 = vpop.f32.mrf.mxu0
    %v10859 = vadd.f32 0.0, %v10858
    %10860 = vmatmul.f32.gmra.mxu0 %v10677
    %v10861 = vpop.f32.mrf.mxu0
    %v10862 = vadd.f32 0.0, %v10861
    %10863 = vmatmul.f32.gmra.mxu0 %v10680
    %v10864 = vpop.f32.mrf.mxu0
    %v10865 = vadd.f32 0.0, %v10864
    %10866 = vmatmul.f32.gmra.mxu0 %v10683
    %v10867 = vpop.f32.mrf.mxu0
    %v10868 = vadd.f32 0.0, %v10867
    %10869 = vmatmul.f32.gmra.mxu0 %v10686
    %v10870 = vpop.f32.mrf.mxu0
    %v10871 = vadd.f32 0.0, %v10870
    %10872 = vmatmul.f32.gmra.mxu0 %v10689
    %v10873 = vpop.f32.mrf.mxu0
    %v10874 = vadd.f32 0.0, %v10873
    %10875 = vmatmul.f32.gmra.mxu0 %v10692
    %v10876 = vpop.f32.mrf.mxu0
    %v10877 = vadd.f32 0.0, %v10876
    %10878 = vmatmul.f32.gmra.mxu0 %v10695
    %v10879 = vpop.f32.mrf.mxu0
    %v10880 = vadd.f32 0.0, %v10879
    %10881 = vmatmul.f32.gmra.mxu0 %v10698
    %v10882 = vpop.f32.mrf.mxu0
    %v10883 = vadd.f32 0.0, %v10882
    %10884 = vmatmul.f32.gmra.mxu0 %v10701
    %v10885 = vpop.f32.mrf.mxu0
    %v10886 = vadd.f32 0.0, %v10885
    %10887 = vmatmul.f32.gmra.mxu0 %v10704
    %v10888 = vpop.f32.mrf.mxu0
    %v10889 = vadd.f32 0.0, %v10888
    %10890 = vmatmul.f32.gmra.mxu0 %v10707
    %v10891 = vpop.f32.mrf.mxu0
    %v10892 = vadd.f32 0.0, %v10891
    %10893 = vmatmul.f32.gmra.mxu0 %v10710
    %v10894 = vpop.f32.mrf.mxu0
    %v10895 = vadd.f32 0.0, %v10894
    %10896 = vdwg.mxu0
    %v10897 = vadd.f32 %v10309, %v10730
    %v10898 = vadd.f32 %v10312, %v10733
    %v10899 = vadd.f32 %v10315, %v10736
    %v10900 = vadd.f32 %v10318, %v10739
    %v10901 = vadd.f32 %v10321, %v10742
    %v10902 = vadd.f32 %v10324, %v10745
    %v10903 = vadd.f32 %v10327, %v10748
    %v10904 = vadd.f32 %v10330, %v10751
    %v10905 = vadd.f32 %v10333, %v10754
    %v10906 = vadd.f32 %v10336, %v10757
    %v10907 = vadd.f32 %v10339, %v10760
    %v10908 = vadd.f32 %v10342, %v10763
    %v10909 = vadd.f32 %v10345, %v10766
    %v10910 = vadd.f32 %v10348, %v10769
    %v10911 = vadd.f32 %v10351, %v10772
    %v10912 = vadd.f32 %v10354, %v10775
    %v10913 = vadd.f32 %v10357, %v10778
    %v10914 = vadd.f32 %v10360, %v10781
    %v10915 = vadd.f32 %v10363, %v10784
    %v10916 = vadd.f32 %v10366, %v10787
    %v10917 = vadd.f32 %v10369, %v10790
    %v10918 = vadd.f32 %v10372, %v10793
    %v10919 = vadd.f32 %v10375, %v10796
    %v10920 = vadd.f32 %v10378, %v10799
    %v10921 = vadd.f32 %v10381, %v10802
    %v10922 = vadd.f32 %v10384, %v10805
    %v10923 = vadd.f32 %v10387, %v10808
    %v10924 = vadd.f32 %v10390, %v10811
    %v10925 = vadd.f32 %v10393, %v10814
    %v10926 = vadd.f32 %v10396, %v10817
    %v10927 = vadd.f32 %v10399, %v10820
    %v10928 = vadd.f32 %v10402, %v10823
    %v10929 = vadd.f32 %v10405, %v10826
    %v10930 = vadd.f32 %v10408, %v10829
    %v10931 = vadd.f32 %v10411, %v10832
    %v10932 = vadd.f32 %v10414, %v10835
    %v10933 = vadd.f32 %v10417, %v10838
    %v10934 = vadd.f32 %v10420, %v10841
    %v10935 = vadd.f32 %v10423, %v10844
    %v10936 = vadd.f32 %v10426, %v10847
    %v10937 = vadd.f32 %v10429, %v10850
    %v10938 = vadd.f32 %v10432, %v10853
    %v10939 = vadd.f32 %v10435, %v10856
    %v10940 = vadd.f32 %v10438, %v10859
    %v10941 = vadd.f32 %v10441, %v10862
    %v10942 = vadd.f32 %v10444, %v10865
    %v10943 = vadd.f32 %v10447, %v10868
    %v10944 = vadd.f32 %v10450, %v10871
    %v10945 = vadd.f32 %v10453, %v10874
    %v10946 = vadd.f32 %v10456, %v10877
    %v10947 = vadd.f32 %v10459, %v10880
    %v10948 = vadd.f32 %v10462, %v10883
    %v10949 = vadd.f32 %v10465, %v10886
    %v10950 = vadd.f32 %v10468, %v10889
    %v10951 = vadd.f32 %v10471, %v10892
    %v10952 = vadd.f32 %v10474, %v10895
    %v10953 = vld [vmem:[#allocation4 + $0x8] sm:$0xff]
    %v10954 = vld [vmem:[#allocation4 + $0x10] sm:$0xff]
    %v10955 = vld [vmem:[#allocation4 + $0x18] sm:$0xff]
    %v10956 = vld [vmem:[#allocation4 + $0x20] sm:$0xff]
    %v10957 = vld [vmem:[#allocation4 + $0x28] sm:$0xff]
    %v10958 = vld [vmem:[#allocation4 + $0x30] sm:$0xff]
    %v10959 = vld [vmem:[#allocation4 + $0x38] sm:$0xff]
    %v10960 = vld [vmem:[#allocation4 + $0x40] sm:$0xff]
    %v10961 = vld [vmem:[#allocation4 + $0x48] sm:$0xff]
    %v10962 = vld [vmem:[#allocation4 + $0x50] sm:$0xff]
    %v10963 = vld [vmem:[#allocation4 + $0x58] sm:$0xff]
    %v10964 = vld [vmem:[#allocation4 + $0x60] sm:$0xff]
    %v10965 = vld [vmem:[#allocation4 + $0x68] sm:$0xff]
    %v10966 = vld [vmem:[#allocation4 + $0x70] sm:$0xff]
    %v10967 = vld [vmem:[#allocation4 + $0x78] sm:$0xff]
    %v10968 = vld [vmem:[#allocation4 + $0x80] sm:$0xff]
    %v10969 = vld [vmem:[#allocation4 + $0x88] sm:$0xff]
    %v10970 = vld [vmem:[#allocation4 + $0x90] sm:$0xff]
    %v10971 = vld [vmem:[#allocation4 + $0x98] sm:$0xff]
    %v10972 = vld [vmem:[#allocation4 + $0xa0] sm:$0xff]
    %v10973 = vld [vmem:[#allocation4 + $0xa8] sm:$0xff]
    %v10974 = vld [vmem:[#allocation4 + $0xb0] sm:$0xff]
    %v10975 = vld [vmem:[#allocation4 + $0xb8] sm:$0xff]
    %v10976 = vld [vmem:[#allocation4 + $0xc0] sm:$0xff]
    %v10977 = vld [vmem:[#allocation4 + $0xc8] sm:$0xff]
    %v10978 = vld [vmem:[#allocation4 + $0xd0] sm:$0xff]
    %v10979 = vld [vmem:[#allocation4 + $0xd8] sm:$0xff]
    %v10980 = vld [vmem:[#allocation4 + $0xe0] sm:$0xff]
    %v10981 = vld [vmem:[#allocation4 + $0xe8] sm:$0xff]
    %v10982 = vld [vmem:[#allocation4 + $0xf0] sm:$0xff]
    %v10983 = vld [vmem:[#allocation4 + $0xf8] sm:$0xff]
    %v10984 = vld [vmem:[#allocation4 + $0x100] sm:$0xff]
    %v10985 = vld [vmem:[#allocation4 + $0x108] sm:$0xff]
    %v10986 = vld [vmem:[#allocation4 + $0x110] sm:$0xff]
    %v10987 = vld [vmem:[#allocation4 + $0x118] sm:$0xff]
    %v10988 = vld [vmem:[#allocation4 + $0x120] sm:$0xff]
    %v10989 = vld [vmem:[#allocation4 + $0x128] sm:$0xff]
    %v10990 = vld [vmem:[#allocation4 + $0x130] sm:$0xff]
    %v10991 = vld [vmem:[#allocation4 + $0x138] sm:$0xff]
    %v10992 = vld [vmem:[#allocation4 + $0x140] sm:$0xff]
    %v10993 = vld [vmem:[#allocation4 + $0x148] sm:$0xff]
    %v10994 = vld [vmem:[#allocation4 + $0x150] sm:$0xff]
    %v10995 = vld [vmem:[#allocation4 + $0x158] sm:$0xff]
    %v10996 = vld [vmem:[#allocation4 + $0x160] sm:$0xff]
    %v10997 = vld [vmem:[#allocation4 + $0x168] sm:$0xff]
    %v10998 = vld [vmem:[#allocation4 + $0x170] sm:$0xff]
    %v10999 = vld [vmem:[#allocation4 + $0x178] sm:$0xff]
    %v11000 = vld [vmem:[#allocation4 + $0x180] sm:$0xff]
    %v11001 = vld [vmem:[#allocation4 + $0x188] sm:$0xff]
    %v11002 = vld [vmem:[#allocation4 + $0x190] sm:$0xff]
    %v11003 = vld [vmem:[#allocation4 + $0x198] sm:$0xff]
    %v11004 = vld [vmem:[#allocation4 + $0x1a0] sm:$0xff]
    %v11005 = vld [vmem:[#allocation4 + $0x1a8] sm:$0xff]
    %v11006 = vld [vmem:[#allocation4 + $0x1b0] sm:$0xff]
    %v11007 = vld [vmem:[#allocation4 + $0x1b8] sm:$0xff]
    %v11008 = vld [vmem:[#allocation4 + $0x1c0] sm:$0xff]
    %v11009 = vld [vmem:[%s6 + $0x120] sm:$0xff]
    %v11010 = vld [vmem:[%s6 + $0x128] sm:$0xff]
    %v11011 = vld [vmem:[%s6 + $0x130] sm:$0xff]
    %v11012 = vld [vmem:[%s6 + $0x138] sm:$0xff]
    %v11013 = vld [vmem:[%s6 + $0x140] sm:$0xff]
    %v11014 = vld [vmem:[%s6 + $0x148] sm:$0xff]
    %v11015 = vld [vmem:[%s6 + $0x150] sm:$0xff]
    %v11016 = vld [vmem:[%s6 + $0x158] sm:$0xff]
    %v11017 = vld [vmem:[%s6 + $0x160] sm:$0xff]
    %v11018 = vld [vmem:[%s6 + $0x168] sm:$0xff]
    %v11019 = vld [vmem:[%s6 + $0x170] sm:$0xff]
    %v11020 = vld [vmem:[%s6 + $0x178] sm:$0xff]
    %v11022 = vsel %vm137, %v10953, 0
    %v11025 = vsel %vm137, %v10954, 0
    %v11028 = vsel %vm137, %v10955, 0
    %v11031 = vsel %vm137, %v10956, 0
    %v11034 = vsel %vm137, %v10957, 0
    %v11037 = vsel %vm137, %v10958, 0
    %v11040 = vsel %vm137, %v10959, 0
    %v11043 = vsel %vm137, %v10960, 0
    %v11046 = vsel %vm137, %v10961, 0
    %v11049 = vsel %vm137, %v10962, 0
    %v11052 = vsel %vm137, %v10963, 0
    %v11055 = vsel %vm137, %v10964, 0
    %v11058 = vsel %vm137, %v10965, 0
    %v11061 = vsel %vm137, %v10966, 0
    %v11064 = vsel %vm137, %v10967, 0
    %v11067 = vsel %vm137, %v10968, 0
    %v11070 = vsel %vm137, %v10969, 0
    %v11073 = vsel %vm137, %v10970, 0
    %v11076 = vsel %vm137, %v10971, 0
    %v11079 = vsel %vm137, %v10972, 0
    %v11082 = vsel %vm137, %v10973, 0
    %v11085 = vsel %vm137, %v10974, 0
    %v11088 = vsel %vm137, %v10975, 0
    %v11091 = vsel %vm137, %v10976, 0
    %v11094 = vsel %vm137, %v10977, 0
    %v11097 = vsel %vm137, %v10978, 0
    %v11100 = vsel %vm137, %v10979, 0
    %v11103 = vsel %vm137, %v10980, 0
    %v11106 = vsel %vm137, %v10981, 0
    %v11109 = vsel %vm137, %v10982, 0
    %v11112 = vsel %vm137, %v10983, 0
    %v11115 = vsel %vm137, %v10984, 0
    %v11118 = vsel %vm137, %v10985, 0
    %v11121 = vsel %vm137, %v10986, 0
    %v11124 = vsel %vm137, %v10987, 0
    %v11127 = vsel %vm137, %v10988, 0
    %v11130 = vsel %vm137, %v10989, 0
    %v11133 = vsel %vm137, %v10990, 0
    %v11136 = vsel %vm137, %v10991, 0
    %v11139 = vsel %vm137, %v10992, 0
    %v11142 = vsel %vm137, %v10993, 0
    %v11145 = vsel %vm137, %v10994, 0
    %v11148 = vsel %vm137, %v10995, 0
    %v11151 = vsel %vm137, %v10996, 0
    %v11154 = vsel %vm137, %v10997, 0
    %v11157 = vsel %vm137, %v10998, 0
    %v11160 = vsel %vm137, %v10999, 0
    %v11163 = vsel %vm137, %v11000, 0
    %v11166 = vsel %vm137, %v11001, 0
    %v11169 = vsel %vm137, %v11002, 0
    %v11172 = vsel %vm137, %v11003, 0
    %v11175 = vsel %vm137, %v11004, 0
    %v11178 = vsel %vm137, %v11005, 0
    %v11181 = vsel %vm137, %v11006, 0
    %v11184 = vsel %vm137, %v11007, 0
    %v11187 = vsel %vm137, %v11008, 0
    %11189 = vmatpush.msra.mxu0 0.0
    %11190 = vmatpush.msra.mxu0 0.0
    %11191 = vmatpush.msra.mxu0 0.0
    %11192 = vmatpush.msra.mxu0 0.0
    %11193 = vmatpush.msra.mxu0 %v11020
    %11194 = vmatpush.msra.mxu0 %v11019
    %11195 = vmatpush.msra.mxu0 %v11018
    %11196 = vmatpush.msra.mxu0 %v11017
    %11197 = vmatpush.msra.mxu0 %v11016
    %11198 = vmatpush.msra.mxu0 %v11015
    %11199 = vmatpush.msra.mxu0 %v11014
    %11200 = vmatpush.msra.mxu0 %v11013
    %11201 = vmatpush.msra.mxu0 %v11012
    %11202 = vmatpush.msra.mxu0 %v11011
    %11203 = vmatpush.msra.mxu0 %v11010
    %11204 = vmatpush.msra.mxu0 %v11009
    %11205 = vmatmul.f32.gmra.mxu0 %v11022
    %v11206 = vpop.f32.mrf.mxu0
    %v11207 = vadd.f32 0.0, %v11206
    %11208 = vmatmul.f32.gmra.mxu0 %v11025
    %v11209 = vpop.f32.mrf.mxu0
    %v11210 = vadd.f32 0.0, %v11209
    %11211 = vmatmul.f32.gmra.mxu0 %v11028
    %v11212 = vpop.f32.mrf.mxu0
    %v11213 = vadd.f32 0.0, %v11212
    %11214 = vmatmul.f32.gmra.mxu0 %v11031
    %v11215 = vpop.f32.mrf.mxu0
    %v11216 = vadd.f32 0.0, %v11215
    %11217 = vmatmul.f32.gmra.mxu0 %v11034
    %v11218 = vpop.f32.mrf.mxu0
    %v11219 = vadd.f32 0.0, %v11218
    %11220 = vmatmul.f32.gmra.mxu0 %v11037
    %v11221 = vpop.f32.mrf.mxu0
    %v11222 = vadd.f32 0.0, %v11221
    %11223 = vmatmul.f32.gmra.mxu0 %v11040
    %v11224 = vpop.f32.mrf.mxu0
    %v11225 = vadd.f32 0.0, %v11224
    %11226 = vmatmul.f32.gmra.mxu0 %v11043
    %v11227 = vpop.f32.mrf.mxu0
    %v11228 = vadd.f32 0.0, %v11227
    %11229 = vmatmul.f32.gmra.mxu0 %v11046
    %v11230 = vpop.f32.mrf.mxu0
    %v11231 = vadd.f32 0.0, %v11230
    %11232 = vmatmul.f32.gmra.mxu0 %v11049
    %v11233 = vpop.f32.mrf.mxu0
    %v11234 = vadd.f32 0.0, %v11233
    %11235 = vmatmul.f32.gmra.mxu0 %v11052
    %v11236 = vpop.f32.mrf.mxu0
    %v11237 = vadd.f32 0.0, %v11236
    %11238 = vmatmul.f32.gmra.mxu0 %v11055
    %v11239 = vpop.f32.mrf.mxu0
    %v11240 = vadd.f32 0.0, %v11239
    %11241 = vmatmul.f32.gmra.mxu0 %v11058
    %v11242 = vpop.f32.mrf.mxu0
    %v11243 = vadd.f32 0.0, %v11242
    %11244 = vmatmul.f32.gmra.mxu0 %v11061
    %v11245 = vpop.f32.mrf.mxu0
    %v11246 = vadd.f32 0.0, %v11245
    %11247 = vmatmul.f32.gmra.mxu0 %v11064
    %v11248 = vpop.f32.mrf.mxu0
    %v11249 = vadd.f32 0.0, %v11248
    %11250 = vmatmul.f32.gmra.mxu0 %v11067
    %v11251 = vpop.f32.mrf.mxu0
    %v11252 = vadd.f32 0.0, %v11251
    %11253 = vmatmul.f32.gmra.mxu0 %v11070
    %v11254 = vpop.f32.mrf.mxu0
    %v11255 = vadd.f32 0.0, %v11254
    %11256 = vmatmul.f32.gmra.mxu0 %v11073
    %v11257 = vpop.f32.mrf.mxu0
    %v11258 = vadd.f32 0.0, %v11257
    %11259 = vmatmul.f32.gmra.mxu0 %v11076
    %v11260 = vpop.f32.mrf.mxu0
    %v11261 = vadd.f32 0.0, %v11260
    %11262 = vmatmul.f32.gmra.mxu0 %v11079
    %v11263 = vpop.f32.mrf.mxu0
    %v11264 = vadd.f32 0.0, %v11263
    %11265 = vmatmul.f32.gmra.mxu0 %v11082
    %v11266 = vpop.f32.mrf.mxu0
    %v11267 = vadd.f32 0.0, %v11266
    %11268 = vmatmul.f32.gmra.mxu0 %v11085
    %v11269 = vpop.f32.mrf.mxu0
    %v11270 = vadd.f32 0.0, %v11269
    %11271 = vmatmul.f32.gmra.mxu0 %v11088
    %v11272 = vpop.f32.mrf.mxu0
    %v11273 = vadd.f32 0.0, %v11272
    %11274 = vmatmul.f32.gmra.mxu0 %v11091
    %v11275 = vpop.f32.mrf.mxu0
    %v11276 = vadd.f32 0.0, %v11275
    %11277 = vmatmul.f32.gmra.mxu0 %v11094
    %v11278 = vpop.f32.mrf.mxu0
    %v11279 = vadd.f32 0.0, %v11278
    %11280 = vmatmul.f32.gmra.mxu0 %v11097
    %v11281 = vpop.f32.mrf.mxu0
    %v11282 = vadd.f32 0.0, %v11281
    %11283 = vmatmul.f32.gmra.mxu0 %v11100
    %v11284 = vpop.f32.mrf.mxu0
    %v11285 = vadd.f32 0.0, %v11284
    %11286 = vmatmul.f32.gmra.mxu0 %v11103
    %v11287 = vpop.f32.mrf.mxu0
    %v11288 = vadd.f32 0.0, %v11287
    %11289 = vmatmul.f32.gmra.mxu0 %v11106
    %v11290 = vpop.f32.mrf.mxu0
    %v11291 = vadd.f32 0.0, %v11290
    %11292 = vmatmul.f32.gmra.mxu0 %v11109
    %v11293 = vpop.f32.mrf.mxu0
    %v11294 = vadd.f32 0.0, %v11293
    %11295 = vmatmul.f32.gmra.mxu0 %v11112
    %v11296 = vpop.f32.mrf.mxu0
    %v11297 = vadd.f32 0.0, %v11296
    %11298 = vmatmul.f32.gmra.mxu0 %v11115
    %v11299 = vpop.f32.mrf.mxu0
    %v11300 = vadd.f32 0.0, %v11299
    %11301 = vmatmul.f32.gmra.mxu0 %v11118
    %v11302 = vpop.f32.mrf.mxu0
    %v11303 = vadd.f32 0.0, %v11302
    %11304 = vmatmul.f32.gmra.mxu0 %v11121
    %v11305 = vpop.f32.mrf.mxu0
    %v11306 = vadd.f32 0.0, %v11305
    %11307 = vmatmul.f32.gmra.mxu0 %v11124
    %v11308 = vpop.f32.mrf.mxu0
    %v11309 = vadd.f32 0.0, %v11308
    %11310 = vmatmul.f32.gmra.mxu0 %v11127
    %v11311 = vpop.f32.mrf.mxu0
    %v11312 = vadd.f32 0.0, %v11311
    %11313 = vmatmul.f32.gmra.mxu0 %v11130
    %v11314 = vpop.f32.mrf.mxu0
    %v11315 = vadd.f32 0.0, %v11314
    %11316 = vmatmul.f32.gmra.mxu0 %v11133
    %v11317 = vpop.f32.mrf.mxu0
    %v11318 = vadd.f32 0.0, %v11317
    %11319 = vmatmul.f32.gmra.mxu0 %v11136
    %v11320 = vpop.f32.mrf.mxu0
    %v11321 = vadd.f32 0.0, %v11320
    %11322 = vmatmul.f32.gmra.mxu0 %v11139
    %v11323 = vpop.f32.mrf.mxu0
    %v11324 = vadd.f32 0.0, %v11323
    %11325 = vmatmul.f32.gmra.mxu0 %v11142
    %v11326 = vpop.f32.mrf.mxu0
    %v11327 = vadd.f32 0.0, %v11326
    %11328 = vmatmul.f32.gmra.mxu0 %v11145
    %v11329 = vpop.f32.mrf.mxu0
    %v11330 = vadd.f32 0.0, %v11329
    %11331 = vmatmul.f32.gmra.mxu0 %v11148
    %v11332 = vpop.f32.mrf.mxu0
    %v11333 = vadd.f32 0.0, %v11332
    %11334 = vmatmul.f32.gmra.mxu0 %v11151
    %v11335 = vpop.f32.mrf.mxu0
    %v11336 = vadd.f32 0.0, %v11335
    %11337 = vmatmul.f32.gmra.mxu0 %v11154
    %v11338 = vpop.f32.mrf.mxu0
    %v11339 = vadd.f32 0.0, %v11338
    %11340 = vmatmul.f32.gmra.mxu0 %v11157
    %v11341 = vpop.f32.mrf.mxu0
    %v11342 = vadd.f32 0.0, %v11341
    %11343 = vmatmul.f32.gmra.mxu0 %v11160
    %v11344 = vpop.f32.mrf.mxu0
    %v11345 = vadd.f32 0.0, %v11344
    %11346 = vmatmul.f32.gmra.mxu0 %v11163
    %v11347 = vpop.f32.mrf.mxu0
    %v11348 = vadd.f32 0.0, %v11347
    %11349 = vmatmul.f32.gmra.mxu0 %v11166
    %v11350 = vpop.f32.mrf.mxu0
    %v11351 = vadd.f32 0.0, %v11350
    %11352 = vmatmul.f32.gmra.mxu0 %v11169
    %v11353 = vpop.f32.mrf.mxu0
    %v11354 = vadd.f32 0.0, %v11353
    %11355 = vmatmul.f32.gmra.mxu0 %v11172
    %v11356 = vpop.f32.mrf.mxu0
    %v11357 = vadd.f32 0.0, %v11356
    %11358 = vmatmul.f32.gmra.mxu0 %v11175
    %v11359 = vpop.f32.mrf.mxu0
    %v11360 = vadd.f32 0.0, %v11359
    %11361 = vmatmul.f32.gmra.mxu0 %v11178
    %v11362 = vpop.f32.mrf.mxu0
    %v11363 = vadd.f32 0.0, %v11362
    %11364 = vmatmul.f32.gmra.mxu0 %v11181
    %v11365 = vpop.f32.mrf.mxu0
    %v11366 = vadd.f32 0.0, %v11365
    %11367 = vmatmul.f32.gmra.mxu0 %v11184
    %v11368 = vpop.f32.mrf.mxu0
    %v11369 = vadd.f32 0.0, %v11368
    %11370 = vmatmul.f32.gmra.mxu0 %v11187
    %v11371 = vpop.f32.mrf.mxu0
    %v11372 = vadd.f32 0.0, %v11371
    %11373 = vdwg.mxu0
    %v11374 = vadd.f32 %v10897, %v11207
    %v11375 = vadd.f32 %v10898, %v11210
    %v11376 = vadd.f32 %v10899, %v11213
    %v11377 = vadd.f32 %v10900, %v11216
    %v11378 = vadd.f32 %v10901, %v11219
    %v11379 = vadd.f32 %v10902, %v11222
    %v11380 = vadd.f32 %v10903, %v11225
    %v11381 = vadd.f32 %v10904, %v11228
    %v11382 = vadd.f32 %v10905, %v11231
    %v11383 = vadd.f32 %v10906, %v11234
    %v11384 = vadd.f32 %v10907, %v11237
    %v11385 = vadd.f32 %v10908, %v11240
    %v11386 = vadd.f32 %v10909, %v11243
    %v11387 = vadd.f32 %v10910, %v11246
    %v11388 = vadd.f32 %v10911, %v11249
    %v11389 = vadd.f32 %v10912, %v11252
    %v11390 = vadd.f32 %v10913, %v11255
    %v11391 = vadd.f32 %v10914, %v11258
    %v11392 = vadd.f32 %v10915, %v11261
    %v11393 = vadd.f32 %v10916, %v11264
    %v11394 = vadd.f32 %v10917, %v11267
    %v11395 = vadd.f32 %v10918, %v11270
    %v11396 = vadd.f32 %v10919, %v11273
    %v11397 = vadd.f32 %v10920, %v11276
    %v11398 = vadd.f32 %v10921, %v11279
    %v11399 = vadd.f32 %v10922, %v11282
    %v11400 = vadd.f32 %v10923, %v11285
    %v11401 = vadd.f32 %v10924, %v11288
    %v11402 = vadd.f32 %v10925, %v11291
    %v11403 = vadd.f32 %v10926, %v11294
    %v11404 = vadd.f32 %v10927, %v11297
    %v11405 = vadd.f32 %v10928, %v11300
    %v11406 = vadd.f32 %v10929, %v11303
    %v11407 = vadd.f32 %v10930, %v11306
    %v11408 = vadd.f32 %v10931, %v11309
    %v11409 = vadd.f32 %v10932, %v11312
    %v11410 = vadd.f32 %v10933, %v11315
    %v11411 = vadd.f32 %v10934, %v11318
    %v11412 = vadd.f32 %v10935, %v11321
    %v11413 = vadd.f32 %v10936, %v11324
    %v11414 = vadd.f32 %v10937, %v11327
    %v11415 = vadd.f32 %v10938, %v11330
    %v11416 = vadd.f32 %v10939, %v11333
    %v11417 = vadd.f32 %v10940, %v11336
    %v11418 = vadd.f32 %v10941, %v11339
    %v11419 = vadd.f32 %v10942, %v11342
    %v11420 = vadd.f32 %v10943, %v11345
    %v11421 = vadd.f32 %v10944, %v11348
    %v11422 = vadd.f32 %v10945, %v11351
    %v11423 = vadd.f32 %v10946, %v11354
    %v11424 = vadd.f32 %v10947, %v11357
    %v11425 = vadd.f32 %v10948, %v11360
    %v11426 = vadd.f32 %v10949, %v11363
    %v11427 = vadd.f32 %v10950, %v11366
    %v11428 = vadd.f32 %v10951, %v11369
    %v11429 = vadd.f32 %v10952, %v11372
    %v11430 = vld [vmem:[#allocation4 + $0xe] sm:$0xff]
    %v11431 = vld [vmem:[#allocation4 + $0x16] sm:$0xff]
    %v11432 = vld [vmem:[#allocation4 + $0x1e] sm:$0xff]
    %v11433 = vld [vmem:[#allocation4 + $0x26] sm:$0xff]
    %v11434 = vld [vmem:[#allocation4 + $0x2e] sm:$0xff]
    %v11435 = vld [vmem:[#allocation4 + $0x36] sm:$0xff]
    %v11436 = vld [vmem:[#allocation4 + $0x3e] sm:$0xff]
    %v11437 = vld [vmem:[#allocation4 + $0x46] sm:$0xff]
    %v11438 = vld [vmem:[#allocation4 + $0x4e] sm:$0xff]
    %v11439 = vld [vmem:[#allocation4 + $0x56] sm:$0xff]
    %v11440 = vld [vmem:[#allocation4 + $0x5e] sm:$0xff]
    %v11441 = vld [vmem:[#allocation4 + $0x66] sm:$0xff]
    %v11442 = vld [vmem:[#allocation4 + $0x6e] sm:$0xff]
    %v11443 = vld [vmem:[#allocation4 + $0x76] sm:$0xff]
    %v11444 = vld [vmem:[#allocation4 + $0x7e] sm:$0xff]
    %v11445 = vld [vmem:[#allocation4 + $0x86] sm:$0xff]
    %v11446 = vld [vmem:[#allocation4 + $0x8e] sm:$0xff]
    %v11447 = vld [vmem:[#allocation4 + $0x96] sm:$0xff]
    %v11448 = vld [vmem:[#allocation4 + $0x9e] sm:$0xff]
    %v11449 = vld [vmem:[#allocation4 + $0xa6] sm:$0xff]
    %v11450 = vld [vmem:[#allocation4 + $0xae] sm:$0xff]
    %v11451 = vld [vmem:[#allocation4 + $0xb6] sm:$0xff]
    %v11452 = vld [vmem:[#allocation4 + $0xbe] sm:$0xff]
    %v11453 = vld [vmem:[#allocation4 + $0xc6] sm:$0xff]
    %v11454 = vld [vmem:[#allocation4 + $0xce] sm:$0xff]
    %v11455 = vld [vmem:[#allocation4 + $0xd6] sm:$0xff]
    %v11456 = vld [vmem:[#allocation4 + $0xde] sm:$0xff]
    %v11457 = vld [vmem:[#allocation4 + $0xe6] sm:$0xff]
    %v11458 = vld [vmem:[#allocation4 + $0xee] sm:$0xff]
    %v11459 = vld [vmem:[#allocation4 + $0xf6] sm:$0xff]
    %v11460 = vld [vmem:[#allocation4 + $0xfe] sm:$0xff]
    %v11461 = vld [vmem:[#allocation4 + $0x106] sm:$0xff]
    %v11462 = vld [vmem:[#allocation4 + $0x10e] sm:$0xff]
    %v11463 = vld [vmem:[#allocation4 + $0x116] sm:$0xff]
    %v11464 = vld [vmem:[#allocation4 + $0x11e] sm:$0xff]
    %v11465 = vld [vmem:[#allocation4 + $0x126] sm:$0xff]
    %v11466 = vld [vmem:[#allocation4 + $0x12e] sm:$0xff]
    %v11467 = vld [vmem:[#allocation4 + $0x136] sm:$0xff]
    %v11468 = vld [vmem:[#allocation4 + $0x13e] sm:$0xff]
    %v11469 = vld [vmem:[#allocation4 + $0x146] sm:$0xff]
    %v11470 = vld [vmem:[#allocation4 + $0x14e] sm:$0xff]
    %v11471 = vld [vmem:[#allocation4 + $0x156] sm:$0xff]
    %v11472 = vld [vmem:[#allocation4 + $0x15e] sm:$0xff]
    %v11473 = vld [vmem:[#allocation4 + $0x166] sm:$0xff]
    %v11474 = vld [vmem:[#allocation4 + $0x16e] sm:$0xff]
    %v11475 = vld [vmem:[#allocation4 + $0x176] sm:$0xff]
    %v11476 = vld [vmem:[#allocation4 + $0x17e] sm:$0xff]
    %v11477 = vld [vmem:[#allocation4 + $0x186] sm:$0xff]
    %v11478 = vld [vmem:[#allocation4 + $0x18e] sm:$0xff]
    %v11479 = vld [vmem:[#allocation4 + $0x196] sm:$0xff]
    %v11480 = vld [vmem:[#allocation4 + $0x19e] sm:$0xff]
    %v11481 = vld [vmem:[#allocation4 + $0x1a6] sm:$0xff]
    %v11482 = vld [vmem:[#allocation4 + $0x1ae] sm:$0xff]
    %v11483 = vld [vmem:[#allocation4 + $0x1b6] sm:$0xff]
    %v11484 = vld [vmem:[#allocation4 + $0x1be] sm:$0xff]
    %v11485 = vld [vmem:[#allocation4 + $0x1c6] sm:$0xff]
    %v11486 = vld [vmem:[%s6 + $0x180] sm:$0xff]
    %v11487 = vld [vmem:[%s6 + $0x188] sm:$0xff]
    %v11488 = vld [vmem:[%s6 + $0x190] sm:$0xff]
    %v11489 = vld [vmem:[%s6 + $0x198] sm:$0xff]
    %v11490 = vld [vmem:[%s6 + $0x1a0] sm:$0xff]
    %v11491 = vld [vmem:[%s6 + $0x1a8] sm:$0xff]
    %v11492 = vld [vmem:[%s6 + $0x1b0] sm:$0xff]
    %v11493 = vld [vmem:[%s6 + $0x1b8] sm:$0xff]
    %v11494 = vld [vmem:[%s6 + $0x1c0] sm:$0xff]
    %v11495 = vld [vmem:[%s6 + $0x1c8] sm:$0xff]
    %v11496 = vld [vmem:[%s6 + $0x1d0] sm:$0xff]
    %v11497 = vld [vmem:[%s6 + $0x1d8] sm:$0xff]
    %v11499 = vsel %vm137, %v11430, 0
    %v11502 = vsel %vm137, %v11431, 0
    %v11505 = vsel %vm137, %v11432, 0
    %v11508 = vsel %vm137, %v11433, 0
    %v11511 = vsel %vm137, %v11434, 0
    %v11514 = vsel %vm137, %v11435, 0
    %v11517 = vsel %vm137, %v11436, 0
    %v11520 = vsel %vm137, %v11437, 0
    %v11523 = vsel %vm137, %v11438, 0
    %v11526 = vsel %vm137, %v11439, 0
    %v11529 = vsel %vm137, %v11440, 0
    %v11532 = vsel %vm137, %v11441, 0
    %v11535 = vsel %vm137, %v11442, 0
    %v11538 = vsel %vm137, %v11443, 0
    %v11541 = vsel %vm137, %v11444, 0
    %v11544 = vsel %vm137, %v11445, 0
    %v11547 = vsel %vm137, %v11446, 0
    %v11550 = vsel %vm137, %v11447, 0
    %v11553 = vsel %vm137, %v11448, 0
    %v11556 = vsel %vm137, %v11449, 0
    %v11559 = vsel %vm137, %v11450, 0
    %v11562 = vsel %vm137, %v11451, 0
    %v11565 = vsel %vm137, %v11452, 0
    %v11568 = vsel %vm137, %v11453, 0
    %v11571 = vsel %vm137, %v11454, 0
    %v11574 = vsel %vm137, %v11455, 0
    %v11577 = vsel %vm137, %v11456, 0
    %v11580 = vsel %vm137, %v11457, 0
    %v11583 = vsel %vm137, %v11458, 0
    %v11586 = vsel %vm137, %v11459, 0
    %v11589 = vsel %vm137, %v11460, 0
    %v11592 = vsel %vm137, %v11461, 0
    %v11595 = vsel %vm137, %v11462, 0
    %v11598 = vsel %vm137, %v11463, 0
    %v11601 = vsel %vm137, %v11464, 0
    %v11604 = vsel %vm137, %v11465, 0
    %v11607 = vsel %vm137, %v11466, 0
    %v11610 = vsel %vm137, %v11467, 0
    %v11613 = vsel %vm137, %v11468, 0
    %v11616 = vsel %vm137, %v11469, 0
    %v11619 = vsel %vm137, %v11470, 0
    %v11622 = vsel %vm137, %v11471, 0
    %v11625 = vsel %vm137, %v11472, 0
    %v11628 = vsel %vm137, %v11473, 0
    %v11631 = vsel %vm137, %v11474, 0
    %v11634 = vsel %vm137, %v11475, 0
    %v11637 = vsel %vm137, %v11476, 0
    %v11640 = vsel %vm137, %v11477, 0
    %v11643 = vsel %vm137, %v11478, 0
    %v11646 = vsel %vm137, %v11479, 0
    %v11649 = vsel %vm137, %v11480, 0
    %v11652 = vsel %vm137, %v11481, 0
    %v11655 = vsel %vm137, %v11482, 0
    %v11658 = vsel %vm137, %v11483, 0
    %v11661 = vsel %vm137, %v11484, 0
    %v11664 = vsel %vm137, %v11485, 0
    %11666 = vmatpush.msra.mxu0 0.0
    %11667 = vmatpush.msra.mxu0 0.0
    %11668 = vmatpush.msra.mxu0 0.0
    %11669 = vmatpush.msra.mxu0 0.0
    %11670 = vmatpush.msra.mxu0 %v11497
    %11671 = vmatpush.msra.mxu0 %v11496
    %11672 = vmatpush.msra.mxu0 %v11495
    %11673 = vmatpush.msra.mxu0 %v11494
    %11674 = vmatpush.msra.mxu0 %v11493
    %11675 = vmatpush.msra.mxu0 %v11492
    %11676 = vmatpush.msra.mxu0 %v11491
    %11677 = vmatpush.msra.mxu0 %v11490
    %11678 = vmatpush.msra.mxu0 %v11489
    %11679 = vmatpush.msra.mxu0 %v11488
    %11680 = vmatpush.msra.mxu0 %v11487
    %11681 = vmatpush.msra.mxu0 %v11486
    %11682 = vmatmul.f32.gmra.mxu0 %v11499
    %v11683 = vpop.f32.mrf.mxu0
    %v11684 = vadd.f32 0.0, %v11683
    %11685 = vmatmul.f32.gmra.mxu0 %v11502
    %v11686 = vpop.f32.mrf.mxu0
    %v11687 = vadd.f32 0.0, %v11686
    %11688 = vmatmul.f32.gmra.mxu0 %v11505
    %v11689 = vpop.f32.mrf.mxu0
    %v11690 = vadd.f32 0.0, %v11689
    %11691 = vmatmul.f32.gmra.mxu0 %v11508
    %v11692 = vpop.f32.mrf.mxu0
    %v11693 = vadd.f32 0.0, %v11692
    %11694 = vmatmul.f32.gmra.mxu0 %v11511
    %v11695 = vpop.f32.mrf.mxu0
    %v11696 = vadd.f32 0.0, %v11695
    %11697 = vmatmul.f32.gmra.mxu0 %v11514
    %v11698 = vpop.f32.mrf.mxu0
    %v11699 = vadd.f32 0.0, %v11698
    %11700 = vmatmul.f32.gmra.mxu0 %v11517
    %v11701 = vpop.f32.mrf.mxu0
    %v11702 = vadd.f32 0.0, %v11701
    %11703 = vmatmul.f32.gmra.mxu0 %v11520
    %v11704 = vpop.f32.mrf.mxu0
    %v11705 = vadd.f32 0.0, %v11704
    %11706 = vmatmul.f32.gmra.mxu0 %v11523
    %v11707 = vpop.f32.mrf.mxu0
    %v11708 = vadd.f32 0.0, %v11707
    %11709 = vmatmul.f32.gmra.mxu0 %v11526
    %v11710 = vpop.f32.mrf.mxu0
    %v11711 = vadd.f32 0.0, %v11710
    %11712 = vmatmul.f32.gmra.mxu0 %v11529
    %v11713 = vpop.f32.mrf.mxu0
    %v11714 = vadd.f32 0.0, %v11713
    %11715 = vmatmul.f32.gmra.mxu0 %v11532
    %v11716 = vpop.f32.mrf.mxu0
    %v11717 = vadd.f32 0.0, %v11716
    %11718 = vmatmul.f32.gmra.mxu0 %v11535
    %v11719 = vpop.f32.mrf.mxu0
    %v11720 = vadd.f32 0.0, %v11719
    %11721 = vmatmul.f32.gmra.mxu0 %v11538
    %v11722 = vpop.f32.mrf.mxu0
    %v11723 = vadd.f32 0.0, %v11722
    %11724 = vmatmul.f32.gmra.mxu0 %v11541
    %v11725 = vpop.f32.mrf.mxu0
    %v11726 = vadd.f32 0.0, %v11725
    %11727 = vmatmul.f32.gmra.mxu0 %v11544
    %v11728 = vpop.f32.mrf.mxu0
    %v11729 = vadd.f32 0.0, %v11728
    %11730 = vmatmul.f32.gmra.mxu0 %v11547
    %v11731 = vpop.f32.mrf.mxu0
    %v11732 = vadd.f32 0.0, %v11731
    %11733 = vmatmul.f32.gmra.mxu0 %v11550
    %v11734 = vpop.f32.mrf.mxu0
    %v11735 = vadd.f32 0.0, %v11734
    %11736 = vmatmul.f32.gmra.mxu0 %v11553
    %v11737 = vpop.f32.mrf.mxu0
    %v11738 = vadd.f32 0.0, %v11737
    %11739 = vmatmul.f32.gmra.mxu0 %v11556
    %v11740 = vpop.f32.mrf.mxu0
    %v11741 = vadd.f32 0.0, %v11740
    %11742 = vmatmul.f32.gmra.mxu0 %v11559
    %v11743 = vpop.f32.mrf.mxu0
    %v11744 = vadd.f32 0.0, %v11743
    %11745 = vmatmul.f32.gmra.mxu0 %v11562
    %v11746 = vpop.f32.mrf.mxu0
    %v11747 = vadd.f32 0.0, %v11746
    %11748 = vmatmul.f32.gmra.mxu0 %v11565
    %v11749 = vpop.f32.mrf.mxu0
    %v11750 = vadd.f32 0.0, %v11749
    %11751 = vmatmul.f32.gmra.mxu0 %v11568
    %v11752 = vpop.f32.mrf.mxu0
    %v11753 = vadd.f32 0.0, %v11752
    %11754 = vmatmul.f32.gmra.mxu0 %v11571
    %v11755 = vpop.f32.mrf.mxu0
    %v11756 = vadd.f32 0.0, %v11755
    %11757 = vmatmul.f32.gmra.mxu0 %v11574
    %v11758 = vpop.f32.mrf.mxu0
    %v11759 = vadd.f32 0.0, %v11758
    %11760 = vmatmul.f32.gmra.mxu0 %v11577
    %v11761 = vpop.f32.mrf.mxu0
    %v11762 = vadd.f32 0.0, %v11761
    %11763 = vmatmul.f32.gmra.mxu0 %v11580
    %v11764 = vpop.f32.mrf.mxu0
    %v11765 = vadd.f32 0.0, %v11764
    %11766 = vmatmul.f32.gmra.mxu0 %v11583
    %v11767 = vpop.f32.mrf.mxu0
    %v11768 = vadd.f32 0.0, %v11767
    %11769 = vmatmul.f32.gmra.mxu0 %v11586
    %v11770 = vpop.f32.mrf.mxu0
    %v11771 = vadd.f32 0.0, %v11770
    %11772 = vmatmul.f32.gmra.mxu0 %v11589
    %v11773 = vpop.f32.mrf.mxu0
    %v11774 = vadd.f32 0.0, %v11773
    %11775 = vmatmul.f32.gmra.mxu0 %v11592
    %v11776 = vpop.f32.mrf.mxu0
    %v11777 = vadd.f32 0.0, %v11776
    %11778 = vmatmul.f32.gmra.mxu0 %v11595
    %v11779 = vpop.f32.mrf.mxu0
    %v11780 = vadd.f32 0.0, %v11779
    %11781 = vmatmul.f32.gmra.mxu0 %v11598
    %v11782 = vpop.f32.mrf.mxu0
    %v11783 = vadd.f32 0.0, %v11782
    %11784 = vmatmul.f32.gmra.mxu0 %v11601
    %v11785 = vpop.f32.mrf.mxu0
    %v11786 = vadd.f32 0.0, %v11785
    %11787 = vmatmul.f32.gmra.mxu0 %v11604
    %v11788 = vpop.f32.mrf.mxu0
    %v11789 = vadd.f32 0.0, %v11788
    %11790 = vmatmul.f32.gmra.mxu0 %v11607
    %v11791 = vpop.f32.mrf.mxu0
    %v11792 = vadd.f32 0.0, %v11791
    %11793 = vmatmul.f32.gmra.mxu0 %v11610
    %v11794 = vpop.f32.mrf.mxu0
    %v11795 = vadd.f32 0.0, %v11794
    %11796 = vmatmul.f32.gmra.mxu0 %v11613
    %v11797 = vpop.f32.mrf.mxu0
    %v11798 = vadd.f32 0.0, %v11797
    %11799 = vmatmul.f32.gmra.mxu0 %v11616
    %v11800 = vpop.f32.mrf.mxu0
    %v11801 = vadd.f32 0.0, %v11800
    %11802 = vmatmul.f32.gmra.mxu0 %v11619
    %v11803 = vpop.f32.mrf.mxu0
    %v11804 = vadd.f32 0.0, %v11803
    %11805 = vmatmul.f32.gmra.mxu0 %v11622
    %v11806 = vpop.f32.mrf.mxu0
    %v11807 = vadd.f32 0.0, %v11806
    %11808 = vmatmul.f32.gmra.mxu0 %v11625
    %v11809 = vpop.f32.mrf.mxu0
    %v11810 = vadd.f32 0.0, %v11809
    %11811 = vmatmul.f32.gmra.mxu0 %v11628
    %v11812 = vpop.f32.mrf.mxu0
    %v11813 = vadd.f32 0.0, %v11812
    %11814 = vmatmul.f32.gmra.mxu0 %v11631
    %v11815 = vpop.f32.mrf.mxu0
    %v11816 = vadd.f32 0.0, %v11815
    %11817 = vmatmul.f32.gmra.mxu0 %v11634
    %v11818 = vpop.f32.mrf.mxu0
    %v11819 = vadd.f32 0.0, %v11818
    %11820 = vmatmul.f32.gmra.mxu0 %v11637
    %v11821 = vpop.f32.mrf.mxu0
    %v11822 = vadd.f32 0.0, %v11821
    %11823 = vmatmul.f32.gmra.mxu0 %v11640
    %v11824 = vpop.f32.mrf.mxu0
    %v11825 = vadd.f32 0.0, %v11824
    %11826 = vmatmul.f32.gmra.mxu0 %v11643
    %v11827 = vpop.f32.mrf.mxu0
    %v11828 = vadd.f32 0.0, %v11827
    %11829 = vmatmul.f32.gmra.mxu0 %v11646
    %v11830 = vpop.f32.mrf.mxu0
    %v11831 = vadd.f32 0.0, %v11830
    %11832 = vmatmul.f32.gmra.mxu0 %v11649
    %v11833 = vpop.f32.mrf.mxu0
    %v11834 = vadd.f32 0.0, %v11833
    %11835 = vmatmul.f32.gmra.mxu0 %v11652
    %v11836 = vpop.f32.mrf.mxu0
    %v11837 = vadd.f32 0.0, %v11836
    %11838 = vmatmul.f32.gmra.mxu0 %v11655
    %v11839 = vpop.f32.mrf.mxu0
    %v11840 = vadd.f32 0.0, %v11839
    %11841 = vmatmul.f32.gmra.mxu0 %v11658
    %v11842 = vpop.f32.mrf.mxu0
    %v11843 = vadd.f32 0.0, %v11842
    %11844 = vmatmul.f32.gmra.mxu0 %v11661
    %v11845 = vpop.f32.mrf.mxu0
    %v11846 = vadd.f32 0.0, %v11845
    %11847 = vmatmul.f32.gmra.mxu0 %v11664
    %v11848 = vpop.f32.mrf.mxu0
    %v11849 = vadd.f32 0.0, %v11848
    %11850 = vdwg.mxu0
    %v11851 = vadd.f32 %v11374, %v11684
    %v11852 = vadd.f32 %v11375, %v11687
    %v11853 = vadd.f32 %v11376, %v11690
    %v11854 = vadd.f32 %v11377, %v11693
    %v11855 = vadd.f32 %v11378, %v11696
    %v11856 = vadd.f32 %v11379, %v11699
    %v11857 = vadd.f32 %v11380, %v11702
    %v11858 = vadd.f32 %v11381, %v11705
    %v11859 = vadd.f32 %v11382, %v11708
    %v11860 = vadd.f32 %v11383, %v11711
    %v11861 = vadd.f32 %v11384, %v11714
    %v11862 = vadd.f32 %v11385, %v11717
    %v11863 = vadd.f32 %v11386, %v11720
    %v11864 = vadd.f32 %v11387, %v11723
    %v11865 = vadd.f32 %v11388, %v11726
    %v11866 = vadd.f32 %v11389, %v11729
    %v11867 = vadd.f32 %v11390, %v11732
    %v11868 = vadd.f32 %v11391, %v11735
    %v11869 = vadd.f32 %v11392, %v11738
    %v11870 = vadd.f32 %v11393, %v11741
    %v11871 = vadd.f32 %v11394, %v11744
    %v11872 = vadd.f32 %v11395, %v11747
    %v11873 = vadd.f32 %v11396, %v11750
    %v11874 = vadd.f32 %v11397, %v11753
    %v11875 = vadd.f32 %v11398, %v11756
    %v11876 = vadd.f32 %v11399, %v11759
    %v11877 = vadd.f32 %v11400, %v11762
    %v11878 = vadd.f32 %v11401, %v11765
    %v11879 = vadd.f32 %v11402, %v11768
    %v11880 = vadd.f32 %v11403, %v11771
    %v11881 = vadd.f32 %v11404, %v11774
    %v11882 = vadd.f32 %v11405, %v11777
    %v11883 = vadd.f32 %v11406, %v11780
    %v11884 = vadd.f32 %v11407, %v11783
    %v11885 = vadd.f32 %v11408, %v11786
    %v11886 = vadd.f32 %v11409, %v11789
    %v11887 = vadd.f32 %v11410, %v11792
    %v11888 = vadd.f32 %v11411, %v11795
    %v11889 = vadd.f32 %v11412, %v11798
    %v11890 = vadd.f32 %v11413, %v11801
    %v11891 = vadd.f32 %v11414, %v11804
    %v11892 = vadd.f32 %v11415, %v11807
    %v11893 = vadd.f32 %v11416, %v11810
    %v11894 = vadd.f32 %v11417, %v11813
    %v11895 = vadd.f32 %v11418, %v11816
    %v11896 = vadd.f32 %v11419, %v11819
    %v11897 = vadd.f32 %v11420, %v11822
    %v11898 = vadd.f32 %v11421, %v11825
    %v11899 = vadd.f32 %v11422, %v11828
    %v11900 = vadd.f32 %v11423, %v11831
    %v11901 = vadd.f32 %v11424, %v11834
    %v11902 = vadd.f32 %v11425, %v11837
    %v11903 = vadd.f32 %v11426, %v11840
    %v11904 = vadd.f32 %v11427, %v11843
    %v11905 = vadd.f32 %v11428, %v11846
    %v11906 = vadd.f32 %v11429, %v11849
    %v11907 = vld [vmem:[#allocation4 + $0xf] sm:$0xff]
    %v11908 = vld [vmem:[#allocation4 + $0x17] sm:$0xff]
    %v11909 = vld [vmem:[#allocation4 + $0x1f] sm:$0xff]
    %v11910 = vld [vmem:[#allocation4 + $0x27] sm:$0xff]
    %v11911 = vld [vmem:[#allocation4 + $0x2f] sm:$0xff]
    %v11912 = vld [vmem:[#allocation4 + $0x37] sm:$0xff]
    %v11913 = vld [vmem:[#allocation4 + $0x3f] sm:$0xff]
    %v11914 = vld [vmem:[#allocation4 + $0x47] sm:$0xff]
    %v11915 = vld [vmem:[#allocation4 + $0x4f] sm:$0xff]
    %v11916 = vld [vmem:[#allocation4 + $0x57] sm:$0xff]
    %v11917 = vld [vmem:[#allocation4 + $0x5f] sm:$0xff]
    %v11918 = vld [vmem:[#allocation4 + $0x67] sm:$0xff]
    %v11919 = vld [vmem:[#allocation4 + $0x6f] sm:$0xff]
    %v11920 = vld [vmem:[#allocation4 + $0x77] sm:$0xff]
    %v11921 = vld [vmem:[#allocation4 + $0x7f] sm:$0xff]
    %v11922 = vld [vmem:[#allocation4 + $0x87] sm:$0xff]
    %v11923 = vld [vmem:[#allocation4 + $0x8f] sm:$0xff]
    %v11924 = vld [vmem:[#allocation4 + $0x97] sm:$0xff]
    %v11925 = vld [vmem:[#allocation4 + $0x9f] sm:$0xff]
    %v11926 = vld [vmem:[#allocation4 + $0xa7] sm:$0xff]
    %v11927 = vld [vmem:[#allocation4 + $0xaf] sm:$0xff]
    %v11928 = vld [vmem:[#allocation4 + $0xb7] sm:$0xff]
    %v11929 = vld [vmem:[#allocation4 + $0xbf] sm:$0xff]
    %v11930 = vld [vmem:[#allocation4 + $0xc7] sm:$0xff]
    %v11931 = vld [vmem:[#allocation4 + $0xcf] sm:$0xff]
    %v11932 = vld [vmem:[#allocation4 + $0xd7] sm:$0xff]
    %v11933 = vld [vmem:[#allocation4 + $0xdf] sm:$0xff]
    %v11934 = vld [vmem:[#allocation4 + $0xe7] sm:$0xff]
    %v11935 = vld [vmem:[#allocation4 + $0xef] sm:$0xff]
    %v11936 = vld [vmem:[#allocation4 + $0xf7] sm:$0xff]
    %v11937 = vld [vmem:[#allocation4 + $0xff] sm:$0xff]
    %v11938 = vld [vmem:[#allocation4 + $0x107] sm:$0xff]
    %v11939 = vld [vmem:[#allocation4 + $0x10f] sm:$0xff]
    %v11940 = vld [vmem:[#allocation4 + $0x117] sm:$0xff]
    %v11941 = vld [vmem:[#allocation4 + $0x11f] sm:$0xff]
    %v11942 = vld [vmem:[#allocation4 + $0x127] sm:$0xff]
    %v11943 = vld [vmem:[#allocation4 + $0x12f] sm:$0xff]
    %v11944 = vld [vmem:[#allocation4 + $0x137] sm:$0xff]
    %v11945 = vld [vmem:[#allocation4 + $0x13f] sm:$0xff]
    %v11946 = vld [vmem:[#allocation4 + $0x147] sm:$0xff]
    %v11947 = vld [vmem:[#allocation4 + $0x14f] sm:$0xff]
    %v11948 = vld [vmem:[#allocation4 + $0x157] sm:$0xff]
    %v11949 = vld [vmem:[#allocation4 + $0x15f] sm:$0xff]
    %v11950 = vld [vmem:[#allocation4 + $0x167] sm:$0xff]
    %v11951 = vld [vmem:[#allocation4 + $0x16f] sm:$0xff]
    %v11952 = vld [vmem:[#allocation4 + $0x177] sm:$0xff]
    %v11953 = vld [vmem:[#allocation4 + $0x17f] sm:$0xff]
    %v11954 = vld [vmem:[#allocation4 + $0x187] sm:$0xff]
    %v11955 = vld [vmem:[#allocation4 + $0x18f] sm:$0xff]
    %v11956 = vld [vmem:[#allocation4 + $0x197] sm:$0xff]
    %v11957 = vld [vmem:[#allocation4 + $0x19f] sm:$0xff]
    %v11958 = vld [vmem:[#allocation4 + $0x1a7] sm:$0xff]
    %v11959 = vld [vmem:[#allocation4 + $0x1af] sm:$0xff]
    %v11960 = vld [vmem:[#allocation4 + $0x1b7] sm:$0xff]
    %v11961 = vld [vmem:[#allocation4 + $0x1bf] sm:$0xff]
    %v11962 = vld [vmem:[#allocation4 + $0x1c7] sm:$0xff]
    %v11963 = vld [vmem:[%s6 + $0x1e0] sm:$0xff]
    %v11964 = vld [vmem:[%s6 + $0x1e8] sm:$0xff]
    %v11965 = vld [vmem:[%s6 + $0x1f0] sm:$0xff]
    %v11966 = vld [vmem:[%s6 + $0x1f8] sm:$0xff]
    %v11967 = vld [vmem:[%s6 + $0x200] sm:$0xff]
    %v11968 = vld [vmem:[%s6 + $0x208] sm:$0xff]
    %v11969 = vld [vmem:[%s6 + $0x210] sm:$0xff]
    %v11970 = vld [vmem:[%s6 + $0x218] sm:$0xff]
    %v11971 = vld [vmem:[%s6 + $0x220] sm:$0xff]
    %v11972 = vld [vmem:[%s6 + $0x228] sm:$0xff]
    %v11973 = vld [vmem:[%s6 + $0x230] sm:$0xff]
    %v11974 = vld [vmem:[%s6 + $0x238] sm:$0xff]
    %v11976 = vsel %vm137, %v11907, 0
    %v11979 = vsel %vm137, %v11908, 0
    %v11982 = vsel %vm137, %v11909, 0
    %v11985 = vsel %vm137, %v11910, 0
    %v11988 = vsel %vm137, %v11911, 0
    %v11991 = vsel %vm137, %v11912, 0
    %v11994 = vsel %vm137, %v11913, 0
    %v11997 = vsel %vm137, %v11914, 0
    %v12000 = vsel %vm137, %v11915, 0
    %v12003 = vsel %vm137, %v11916, 0
    %v12006 = vsel %vm137, %v11917, 0
    %v12009 = vsel %vm137, %v11918, 0
    %v12012 = vsel %vm137, %v11919, 0
    %v12015 = vsel %vm137, %v11920, 0
    %v12018 = vsel %vm137, %v11921, 0
    %v12021 = vsel %vm137, %v11922, 0
    %v12024 = vsel %vm137, %v11923, 0
    %v12027 = vsel %vm137, %v11924, 0
    %v12030 = vsel %vm137, %v11925, 0
    %v12033 = vsel %vm137, %v11926, 0
    %v12036 = vsel %vm137, %v11927, 0
    %v12039 = vsel %vm137, %v11928, 0
    %v12042 = vsel %vm137, %v11929, 0
    %v12045 = vsel %vm137, %v11930, 0
    %v12048 = vsel %vm137, %v11931, 0
    %v12051 = vsel %vm137, %v11932, 0
    %v12054 = vsel %vm137, %v11933, 0
    %v12057 = vsel %vm137, %v11934, 0
    %v12060 = vsel %vm137, %v11935, 0
    %v12063 = vsel %vm137, %v11936, 0
    %v12066 = vsel %vm137, %v11937, 0
    %v12069 = vsel %vm137, %v11938, 0
    %v12072 = vsel %vm137, %v11939, 0
    %v12075 = vsel %vm137, %v11940, 0
    %v12078 = vsel %vm137, %v11941, 0
    %v12081 = vsel %vm137, %v11942, 0
    %v12084 = vsel %vm137, %v11943, 0
    %v12087 = vsel %vm137, %v11944, 0
    %v12090 = vsel %vm137, %v11945, 0
    %v12093 = vsel %vm137, %v11946, 0
    %v12096 = vsel %vm137, %v11947, 0
    %v12099 = vsel %vm137, %v11948, 0
    %v12102 = vsel %vm137, %v11949, 0
    %v12105 = vsel %vm137, %v11950, 0
    %v12108 = vsel %vm137, %v11951, 0
    %v12111 = vsel %vm137, %v11952, 0
    %v12114 = vsel %vm137, %v11953, 0
    %v12117 = vsel %vm137, %v11954, 0
    %v12120 = vsel %vm137, %v11955, 0
    %v12123 = vsel %vm137, %v11956, 0
    %v12126 = vsel %vm137, %v11957, 0
    %v12129 = vsel %vm137, %v11958, 0
    %v12132 = vsel %vm137, %v11959, 0
    %v12135 = vsel %vm137, %v11960, 0
    %v12138 = vsel %vm137, %v11961, 0
    %v12141 = vsel %vm137, %v11962, 0
    %12143 = vmatpush.msra.mxu0 0.0
    %12144 = vmatpush.msra.mxu0 0.0
    %12145 = vmatpush.msra.mxu0 0.0
    %12146 = vmatpush.msra.mxu0 0.0
    %12147 = vmatpush.msra.mxu0 %v11974
    %12148 = vmatpush.msra.mxu0 %v11973
    %12149 = vmatpush.msra.mxu0 %v11972
    %12150 = vmatpush.msra.mxu0 %v11971
    %12151 = vmatpush.msra.mxu0 %v11970
    %12152 = vmatpush.msra.mxu0 %v11969
    %12153 = vmatpush.msra.mxu0 %v11968
    %12154 = vmatpush.msra.mxu0 %v11967
    %12155 = vmatpush.msra.mxu0 %v11966
    %12156 = vmatpush.msra.mxu0 %v11965
    %12157 = vmatpush.msra.mxu0 %v11964
    %12158 = vmatpush.msra.mxu0 %v11963
    %12159 = vmatmul.f32.gmra.mxu0 %v11976
    %v12160 = vpop.f32.mrf.mxu0
    %v12161 = vadd.f32 0.0, %v12160
    %12162 = vmatmul.f32.gmra.mxu0 %v11979
    %v12163 = vpop.f32.mrf.mxu0
    %v12164 = vadd.f32 0.0, %v12163
    %12165 = vmatmul.f32.gmra.mxu0 %v11982
    %v12166 = vpop.f32.mrf.mxu0
    %v12167 = vadd.f32 0.0, %v12166
    %12168 = vmatmul.f32.gmra.mxu0 %v11985
    %v12169 = vpop.f32.mrf.mxu0
    %v12170 = vadd.f32 0.0, %v12169
    %12171 = vmatmul.f32.gmra.mxu0 %v11988
    %v12172 = vpop.f32.mrf.mxu0
    %v12173 = vadd.f32 0.0, %v12172
    %12174 = vmatmul.f32.gmra.mxu0 %v11991
    %v12175 = vpop.f32.mrf.mxu0
    %v12176 = vadd.f32 0.0, %v12175
    %12177 = vmatmul.f32.gmra.mxu0 %v11994
    %v12178 = vpop.f32.mrf.mxu0
    %v12179 = vadd.f32 0.0, %v12178
    %12180 = vmatmul.f32.gmra.mxu0 %v11997
    %v12181 = vpop.f32.mrf.mxu0
    %v12182 = vadd.f32 0.0, %v12181
    %12183 = vmatmul.f32.gmra.mxu0 %v12000
    %v12184 = vpop.f32.mrf.mxu0
    %v12185 = vadd.f32 0.0, %v12184
    %12186 = vmatmul.f32.gmra.mxu0 %v12003
    %v12187 = vpop.f32.mrf.mxu0
    %v12188 = vadd.f32 0.0, %v12187
    %12189 = vmatmul.f32.gmra.mxu0 %v12006
    %v12190 = vpop.f32.mrf.mxu0
    %v12191 = vadd.f32 0.0, %v12190
    %12192 = vmatmul.f32.gmra.mxu0 %v12009
    %v12193 = vpop.f32.mrf.mxu0
    %v12194 = vadd.f32 0.0, %v12193
    %12195 = vmatmul.f32.gmra.mxu0 %v12012
    %v12196 = vpop.f32.mrf.mxu0
    %v12197 = vadd.f32 0.0, %v12196
    %12198 = vmatmul.f32.gmra.mxu0 %v12015
    %v12199 = vpop.f32.mrf.mxu0
    %v12200 = vadd.f32 0.0, %v12199
    %12201 = vmatmul.f32.gmra.mxu0 %v12018
    %v12202 = vpop.f32.mrf.mxu0
    %v12203 = vadd.f32 0.0, %v12202
    %12204 = vmatmul.f32.gmra.mxu0 %v12021
    %v12205 = vpop.f32.mrf.mxu0
    %v12206 = vadd.f32 0.0, %v12205
    %12207 = vmatmul.f32.gmra.mxu0 %v12024
    %v12208 = vpop.f32.mrf.mxu0
    %v12209 = vadd.f32 0.0, %v12208
    %12210 = vmatmul.f32.gmra.mxu0 %v12027
    %v12211 = vpop.f32.mrf.mxu0
    %v12212 = vadd.f32 0.0, %v12211
    %12213 = vmatmul.f32.gmra.mxu0 %v12030
    %v12214 = vpop.f32.mrf.mxu0
    %v12215 = vadd.f32 0.0, %v12214
    %12216 = vmatmul.f32.gmra.mxu0 %v12033
    %v12217 = vpop.f32.mrf.mxu0
    %v12218 = vadd.f32 0.0, %v12217
    %12219 = vmatmul.f32.gmra.mxu0 %v12036
    %v12220 = vpop.f32.mrf.mxu0
    %v12221 = vadd.f32 0.0, %v12220
    %12222 = vmatmul.f32.gmra.mxu0 %v12039
    %v12223 = vpop.f32.mrf.mxu0
    %v12224 = vadd.f32 0.0, %v12223
    %12225 = vmatmul.f32.gmra.mxu0 %v12042
    %v12226 = vpop.f32.mrf.mxu0
    %v12227 = vadd.f32 0.0, %v12226
    %12228 = vmatmul.f32.gmra.mxu0 %v12045
    %v12229 = vpop.f32.mrf.mxu0
    %v12230 = vadd.f32 0.0, %v12229
    %12231 = vmatmul.f32.gmra.mxu0 %v12048
    %v12232 = vpop.f32.mrf.mxu0
    %v12233 = vadd.f32 0.0, %v12232
    %12234 = vmatmul.f32.gmra.mxu0 %v12051
    %v12235 = vpop.f32.mrf.mxu0
    %v12236 = vadd.f32 0.0, %v12235
    %12237 = vmatmul.f32.gmra.mxu0 %v12054
    %v12238 = vpop.f32.mrf.mxu0
    %v12239 = vadd.f32 0.0, %v12238
    %12240 = vmatmul.f32.gmra.mxu0 %v12057
    %v12241 = vpop.f32.mrf.mxu0
    %v12242 = vadd.f32 0.0, %v12241
    %12243 = vmatmul.f32.gmra.mxu0 %v12060
    %v12244 = vpop.f32.mrf.mxu0
    %v12245 = vadd.f32 0.0, %v12244
    %12246 = vmatmul.f32.gmra.mxu0 %v12063
    %v12247 = vpop.f32.mrf.mxu0
    %v12248 = vadd.f32 0.0, %v12247
    %12249 = vmatmul.f32.gmra.mxu0 %v12066
    %v12250 = vpop.f32.mrf.mxu0
    %v12251 = vadd.f32 0.0, %v12250
    %12252 = vmatmul.f32.gmra.mxu0 %v12069
    %v12253 = vpop.f32.mrf.mxu0
    %v12254 = vadd.f32 0.0, %v12253
    %12255 = vmatmul.f32.gmra.mxu0 %v12072
    %v12256 = vpop.f32.mrf.mxu0
    %v12257 = vadd.f32 0.0, %v12256
    %12258 = vmatmul.f32.gmra.mxu0 %v12075
    %v12259 = vpop.f32.mrf.mxu0
    %v12260 = vadd.f32 0.0, %v12259
    %12261 = vmatmul.f32.gmra.mxu0 %v12078
    %v12262 = vpop.f32.mrf.mxu0
    %v12263 = vadd.f32 0.0, %v12262
    %12264 = vmatmul.f32.gmra.mxu0 %v12081
    %v12265 = vpop.f32.mrf.mxu0
    %v12266 = vadd.f32 0.0, %v12265
    %12267 = vmatmul.f32.gmra.mxu0 %v12084
    %v12268 = vpop.f32.mrf.mxu0
    %v12269 = vadd.f32 0.0, %v12268
    %12270 = vmatmul.f32.gmra.mxu0 %v12087
    %v12271 = vpop.f32.mrf.mxu0
    %v12272 = vadd.f32 0.0, %v12271
    %12273 = vmatmul.f32.gmra.mxu0 %v12090
    %v12274 = vpop.f32.mrf.mxu0
    %v12275 = vadd.f32 0.0, %v12274
    %12276 = vmatmul.f32.gmra.mxu0 %v12093
    %v12277 = vpop.f32.mrf.mxu0
    %v12278 = vadd.f32 0.0, %v12277
    %12279 = vmatmul.f32.gmra.mxu0 %v12096
    %v12280 = vpop.f32.mrf.mxu0
    %v12281 = vadd.f32 0.0, %v12280
    %12282 = vmatmul.f32.gmra.mxu0 %v12099
    %v12283 = vpop.f32.mrf.mxu0
    %v12284 = vadd.f32 0.0, %v12283
    %12285 = vmatmul.f32.gmra.mxu0 %v12102
    %v12286 = vpop.f32.mrf.mxu0
    %v12287 = vadd.f32 0.0, %v12286
    %12288 = vmatmul.f32.gmra.mxu0 %v12105
    %v12289 = vpop.f32.mrf.mxu0
    %v12290 = vadd.f32 0.0, %v12289
    %12291 = vmatmul.f32.gmra.mxu0 %v12108
    %v12292 = vpop.f32.mrf.mxu0
    %v12293 = vadd.f32 0.0, %v12292
    %12294 = vmatmul.f32.gmra.mxu0 %v12111
    %v12295 = vpop.f32.mrf.mxu0
    %v12296 = vadd.f32 0.0, %v12295
    %12297 = vmatmul.f32.gmra.mxu0 %v12114
    %v12298 = vpop.f32.mrf.mxu0
    %v12299 = vadd.f32 0.0, %v12298
    %12300 = vmatmul.f32.gmra.mxu0 %v12117
    %v12301 = vpop.f32.mrf.mxu0
    %v12302 = vadd.f32 0.0, %v12301
    %12303 = vmatmul.f32.gmra.mxu0 %v12120
    %v12304 = vpop.f32.mrf.mxu0
    %v12305 = vadd.f32 0.0, %v12304
    %12306 = vmatmul.f32.gmra.mxu0 %v12123
    %v12307 = vpop.f32.mrf.mxu0
    %v12308 = vadd.f32 0.0, %v12307
    %12309 = vmatmul.f32.gmra.mxu0 %v12126
    %v12310 = vpop.f32.mrf.mxu0
    %v12311 = vadd.f32 0.0, %v12310
    %12312 = vmatmul.f32.gmra.mxu0 %v12129
    %v12313 = vpop.f32.mrf.mxu0
    %v12314 = vadd.f32 0.0, %v12313
    %12315 = vmatmul.f32.gmra.mxu0 %v12132
    %v12316 = vpop.f32.mrf.mxu0
    %v12317 = vadd.f32 0.0, %v12316
    %12318 = vmatmul.f32.gmra.mxu0 %v12135
    %v12319 = vpop.f32.mrf.mxu0
    %v12320 = vadd.f32 0.0, %v12319
    %12321 = vmatmul.f32.gmra.mxu0 %v12138
    %v12322 = vpop.f32.mrf.mxu0
    %v12323 = vadd.f32 0.0, %v12322
    %12324 = vmatmul.f32.gmra.mxu0 %v12141
    %v12325 = vpop.f32.mrf.mxu0
    %v12326 = vadd.f32 0.0, %v12325
    %12327 = vdwg.mxu0
    %v12328 = vadd.f32 %v11851, %v12161
    %v12329 = vadd.f32 %v11852, %v12164
    %v12330 = vadd.f32 %v11853, %v12167
    %v12331 = vadd.f32 %v11854, %v12170
    %v12332 = vadd.f32 %v11855, %v12173
    %v12333 = vadd.f32 %v11856, %v12176
    %v12334 = vadd.f32 %v11857, %v12179
    %v12335 = vadd.f32 %v11858, %v12182
    %v12336 = vadd.f32 %v11859, %v12185
    %v12337 = vadd.f32 %v11860, %v12188
    %v12338 = vadd.f32 %v11861, %v12191
    %v12339 = vadd.f32 %v11862, %v12194
    %v12340 = vadd.f32 %v11863, %v12197
    %v12341 = vadd.f32 %v11864, %v12200
    %v12342 = vadd.f32 %v11865, %v12203
    %v12343 = vadd.f32 %v11866, %v12206
    %v12344 = vadd.f32 %v11867, %v12209
    %v12345 = vadd.f32 %v11868, %v12212
    %v12346 = vadd.f32 %v11869, %v12215
    %v12347 = vadd.f32 %v11870, %v12218
    %v12348 = vadd.f32 %v11871, %v12221
    %v12349 = vadd.f32 %v11872, %v12224
    %v12350 = vadd.f32 %v11873, %v12227
    %v12351 = vadd.f32 %v11874, %v12230
    %v12352 = vadd.f32 %v11875, %v12233
    %v12353 = vadd.f32 %v11876, %v12236
    %v12354 = vadd.f32 %v11877, %v12239
    %v12355 = vadd.f32 %v11878, %v12242
    %v12356 = vadd.f32 %v11879, %v12245
    %v12357 = vadd.f32 %v11880, %v12248
    %v12358 = vadd.f32 %v11881, %v12251
    %v12359 = vadd.f32 %v11882, %v12254
    %v12360 = vadd.f32 %v11883, %v12257
    %v12361 = vadd.f32 %v11884, %v12260
    %v12362 = vadd.f32 %v11885, %v12263
    %v12363 = vadd.f32 %v11886, %v12266
    %v12364 = vadd.f32 %v11887, %v12269
    %v12365 = vadd.f32 %v11888, %v12272
    %v12366 = vadd.f32 %v11889, %v12275
    %v12367 = vadd.f32 %v11890, %v12278
    %v12368 = vadd.f32 %v11891, %v12281
    %v12369 = vadd.f32 %v11892, %v12284
    %v12370 = vadd.f32 %v11893, %v12287
    %v12371 = vadd.f32 %v11894, %v12290
    %v12372 = vadd.f32 %v11895, %v12293
    %v12373 = vadd.f32 %v11896, %v12296
    %v12374 = vadd.f32 %v11897, %v12299
    %v12375 = vadd.f32 %v11898, %v12302
    %v12376 = vadd.f32 %v11899, %v12305
    %v12377 = vadd.f32 %v11900, %v12308
    %v12378 = vadd.f32 %v11901, %v12311
    %v12379 = vadd.f32 %v11902, %v12314
    %v12380 = vadd.f32 %v11903, %v12317
    %v12381 = vadd.f32 %v11904, %v12320
    %v12382 = vadd.f32 %v11905, %v12323
    %v12383 = vadd.f32 %v11906, %v12326
    %v12384 = vld [vmem:[%s7] sm:$0x1]
    %v12385 = vperm.slane %v12384, 0
    %v12386 = vadd.f32 %v12328, %v12385
    %v12387 = vadd.f32 %v12329, %v12385
    %v12388 = vadd.f32 %v12330, %v12385
    %v12389 = vadd.f32 %v12331, %v12385
    %v12390 = vadd.f32 %v12332, %v12385
    %v12391 = vadd.f32 %v12333, %v12385
    %v12392 = vadd.f32 %v12334, %v12385
    %v12393 = vadd.f32 %v12335, %v12385
    %v12394 = vadd.f32 %v12336, %v12385
    %v12395 = vadd.f32 %v12337, %v12385
    %v12396 = vadd.f32 %v12338, %v12385
    %v12397 = vadd.f32 %v12339, %v12385
    %v12398 = vadd.f32 %v12340, %v12385
    %v12399 = vadd.f32 %v12341, %v12385
    %v12400 = vadd.f32 %v12342, %v12385
    %v12401 = vadd.f32 %v12343, %v12385
    %v12402 = vadd.f32 %v12344, %v12385
    %v12403 = vadd.f32 %v12345, %v12385
    %v12404 = vadd.f32 %v12346, %v12385
    %v12405 = vadd.f32 %v12347, %v12385
    %v12406 = vadd.f32 %v12348, %v12385
    %v12407 = vadd.f32 %v12349, %v12385
    %v12408 = vadd.f32 %v12350, %v12385
    %v12409 = vadd.f32 %v12351, %v12385
    %v12410 = vadd.f32 %v12352, %v12385
    %v12411 = vadd.f32 %v12353, %v12385
    %v12412 = vadd.f32 %v12354, %v12385
    %v12413 = vadd.f32 %v12355, %v12385
    %v12414 = vadd.f32 %v12356, %v12385
    %v12415 = vadd.f32 %v12357, %v12385
    %v12416 = vadd.f32 %v12358, %v12385
    %v12417 = vadd.f32 %v12359, %v12385
    %v12418 = vadd.f32 %v12360, %v12385
    %v12419 = vadd.f32 %v12361, %v12385
    %v12420 = vadd.f32 %v12362, %v12385
    %v12421 = vadd.f32 %v12363, %v12385
    %v12422 = vadd.f32 %v12364, %v12385
    %v12423 = vadd.f32 %v12365, %v12385
    %v12424 = vadd.f32 %v12366, %v12385
    %v12425 = vadd.f32 %v12367, %v12385
    %v12426 = vadd.f32 %v12368, %v12385
    %v12427 = vadd.f32 %v12369, %v12385
    %v12428 = vadd.f32 %v12370, %v12385
    %v12429 = vadd.f32 %v12371, %v12385
    %v12430 = vadd.f32 %v12372, %v12385
    %v12431 = vadd.f32 %v12373, %v12385
    %v12432 = vadd.f32 %v12374, %v12385
    %v12433 = vadd.f32 %v12375, %v12385
    %v12434 = vadd.f32 %v12376, %v12385
    %v12435 = vadd.f32 %v12377, %v12385
    %v12436 = vadd.f32 %v12378, %v12385
    %v12437 = vadd.f32 %v12379, %v12385
    %v12438 = vadd.f32 %v12380, %v12385
    %v12439 = vadd.f32 %v12381, %v12385
    %v12440 = vadd.f32 %v12382, %v12385
    %v12441 = vadd.f32 %v12383, %v12385
    %v12442 = vld [vmem:[%s7 + $0x1] sm:$0x1]
    %vm12443 = vcmp.ge.f32.partialorder %v12386, 0.0
    %vm12444 = vcmp.ge.f32.partialorder %v12387, 0.0
    %vm12445 = vcmp.ge.f32.partialorder %v12388, 0.0
    %vm12446 = vcmp.ge.f32.partialorder %v12389, 0.0
    %vm12447 = vcmp.ge.f32.partialorder %v12390, 0.0
    %vm12448 = vcmp.ge.f32.partialorder %v12391, 0.0
    %vm12449 = vcmp.ge.f32.partialorder %v12392, 0.0
    %vm12450 = vcmp.ge.f32.partialorder %v12393, 0.0
    %vm12451 = vcmp.ge.f32.partialorder %v12394, 0.0
    %vm12452 = vcmp.ge.f32.partialorder %v12395, 0.0
    %vm12453 = vcmp.ge.f32.partialorder %v12396, 0.0
    %vm12454 = vcmp.ge.f32.partialorder %v12397, 0.0
    %vm12455 = vcmp.ge.f32.partialorder %v12398, 0.0
    %vm12456 = vcmp.ge.f32.partialorder %v12399, 0.0
    %vm12457 = vcmp.ge.f32.partialorder %v12400, 0.0
    %vm12458 = vcmp.ge.f32.partialorder %v12401, 0.0
    %vm12459 = vcmp.ge.f32.partialorder %v12402, 0.0
    %vm12460 = vcmp.ge.f32.partialorder %v12403, 0.0
    %vm12461 = vcmp.ge.f32.partialorder %v12404, 0.0
    %vm12462 = vcmp.ge.f32.partialorder %v12405, 0.0
    %vm12463 = vcmp.ge.f32.partialorder %v12406, 0.0
    %vm12464 = vcmp.ge.f32.partialorder %v12407, 0.0
    %vm12465 = vcmp.ge.f32.partialorder %v12408, 0.0
    %vm12466 = vcmp.ge.f32.partialorder %v12409, 0.0
    %vm12467 = vcmp.ge.f32.partialorder %v12410, 0.0
    %vm12468 = vcmp.ge.f32.partialorder %v12411, 0.0
    %vm12469 = vcmp.ge.f32.partialorder %v12412, 0.0
    %vm12470 = vcmp.ge.f32.partialorder %v12413, 0.0
    %vm12471 = vcmp.ge.f32.partialorder %v12414, 0.0
    %vm12472 = vcmp.ge.f32.partialorder %v12415, 0.0
    %vm12473 = vcmp.ge.f32.partialorder %v12416, 0.0
    %vm12474 = vcmp.ge.f32.partialorder %v12417, 0.0
    %vm12475 = vcmp.ge.f32.partialorder %v12418, 0.0
    %vm12476 = vcmp.ge.f32.partialorder %v12419, 0.0
    %vm12477 = vcmp.ge.f32.partialorder %v12420, 0.0
    %vm12478 = vcmp.ge.f32.partialorder %v12421, 0.0
    %vm12479 = vcmp.ge.f32.partialorder %v12422, 0.0
    %vm12480 = vcmp.ge.f32.partialorder %v12423, 0.0
    %vm12481 = vcmp.ge.f32.partialorder %v12424, 0.0
    %vm12482 = vcmp.ge.f32.partialorder %v12425, 0.0
    %vm12483 = vcmp.ge.f32.partialorder %v12426, 0.0
    %vm12484 = vcmp.ge.f32.partialorder %v12427, 0.0
    %vm12485 = vcmp.ge.f32.partialorder %v12428, 0.0
    %vm12486 = vcmp.ge.f32.partialorder %v12429, 0.0
    %vm12487 = vcmp.ge.f32.partialorder %v12430, 0.0
    %vm12488 = vcmp.ge.f32.partialorder %v12431, 0.0
    %vm12489 = vcmp.ge.f32.partialorder %v12432, 0.0
    %vm12490 = vcmp.ge.f32.partialorder %v12433, 0.0
    %vm12491 = vcmp.ge.f32.partialorder %v12434, 0.0
    %vm12492 = vcmp.ge.f32.partialorder %v12435, 0.0
    %vm12493 = vcmp.ge.f32.partialorder %v12436, 0.0
    %vm12494 = vcmp.ge.f32.partialorder %v12437, 0.0
    %vm12495 = vcmp.ge.f32.partialorder %v12438, 0.0
    %vm12496 = vcmp.ge.f32.partialorder %v12439, 0.0
    %vm12497 = vcmp.ge.f32.partialorder %v12440, 0.0
    %vm12498 = vcmp.ge.f32.partialorder %v12441, 0.0
    %v12499 = vperm.slane %v12442, 0
    %v12500 = vmul.f32 %v12499, %v12386
    %v12501 = vmul.f32 %v12499, %v12387
    %v12502 = vmul.f32 %v12499, %v12388
    %v12503 = vmul.f32 %v12499, %v12389
    %v12504 = vmul.f32 %v12499, %v12390
    %v12505 = vmul.f32 %v12499, %v12391
    %v12506 = vmul.f32 %v12499, %v12392
    %v12507 = vmul.f32 %v12499, %v12393
    %v12508 = vmul.f32 %v12499, %v12394
    %v12509 = vmul.f32 %v12499, %v12395
    %v12510 = vmul.f32 %v12499, %v12396
    %v12511 = vmul.f32 %v12499, %v12397
    %v12512 = vmul.f32 %v12499, %v12398
    %v12513 = vmul.f32 %v12499, %v12399
    %v12514 = vmul.f32 %v12499, %v12400
    %v12515 = vmul.f32 %v12499, %v12401
    %v12516 = vmul.f32 %v12499, %v12402
    %v12517 = vmul.f32 %v12499, %v12403
    %v12518 = vmul.f32 %v12499, %v12404
    %v12519 = vmul.f32 %v12499, %v12405
    %v12520 = vmul.f32 %v12499, %v12406
    %v12521 = vmul.f32 %v12499, %v12407
    %v12522 = vmul.f32 %v12499, %v12408
    %v12523 = vmul.f32 %v12499, %v12409
    %v12524 = vmul.f32 %v12499, %v12410
    %v12525 = vmul.f32 %v12499, %v12411
    %v12526 = vmul.f32 %v12499, %v12412
    %v12527 = vmul.f32 %v12499, %v12413
    %v12528 = vmul.f32 %v12499, %v12414
    %v12529 = vmul.f32 %v12499, %v12415
    %v12530 = vmul.f32 %v12499, %v12416
    %v12531 = vmul.f32 %v12499, %v12417
    %v12532 = vmul.f32 %v12499, %v12418
    %v12533 = vmul.f32 %v12499, %v12419
    %v12534 = vmul.f32 %v12499, %v12420
    %v12535 = vmul.f32 %v12499, %v12421
    %v12536 = vmul.f32 %v12499, %v12422
    %v12537 = vmul.f32 %v12499, %v12423
    %v12538 = vmul.f32 %v12499, %v12424
    %v12539 = vmul.f32 %v12499, %v12425
    %v12540 = vmul.f32 %v12499, %v12426
    %v12541 = vmul.f32 %v12499, %v12427
    %v12542 = vmul.f32 %v12499, %v12428
    %v12543 = vmul.f32 %v12499, %v12429
    %v12544 = vmul.f32 %v12499, %v12430
    %v12545 = vmul.f32 %v12499, %v12431
    %v12546 = vmul.f32 %v12499, %v12432
    %v12547 = vmul.f32 %v12499, %v12433
    %v12548 = vmul.f32 %v12499, %v12434
    %v12549 = vmul.f32 %v12499, %v12435
    %v12550 = vmul.f32 %v12499, %v12436
    %v12551 = vmul.f32 %v12499, %v12437
    %v12552 = vmul.f32 %v12499, %v12438
    %v12553 = vmul.f32 %v12499, %v12439
    %v12554 = vmul.f32 %v12499, %v12440
    %v12555 = vmul.f32 %v12499, %v12441
    %v12556 = vsel %vm12443, %v12386, %v12500
    %v12557 = vsel %vm12444, %v12387, %v12501
    %v12558 = vsel %vm12445, %v12388, %v12502
    %v12559 = vsel %vm12446, %v12389, %v12503
    %v12560 = vsel %vm12447, %v12390, %v12504
    %v12561 = vsel %vm12448, %v12391, %v12505
    %v12562 = vsel %vm12449, %v12392, %v12506
    %v12563 = vsel %vm12450, %v12393, %v12507
    %v12564 = vsel %vm12451, %v12394, %v12508
    %v12565 = vsel %vm12452, %v12395, %v12509
    %v12566 = vsel %vm12453, %v12396, %v12510
    %v12567 = vsel %vm12454, %v12397, %v12511
    %v12568 = vsel %vm12455, %v12398, %v12512
    %v12569 = vsel %vm12456, %v12399, %v12513
    %v12570 = vsel %vm12457, %v12400, %v12514
    %v12571 = vsel %vm12458, %v12401, %v12515
    %v12572 = vsel %vm12459, %v12402, %v12516
    %v12573 = vsel %vm12460, %v12403, %v12517
    %v12574 = vsel %vm12461, %v12404, %v12518
    %v12575 = vsel %vm12462, %v12405, %v12519
    %v12576 = vsel %vm12463, %v12406, %v12520
    %v12577 = vsel %vm12464, %v12407, %v12521
    %v12578 = vsel %vm12465, %v12408, %v12522
    %v12579 = vsel %vm12466, %v12409, %v12523
    %v12580 = vsel %vm12467, %v12410, %v12524
    %v12581 = vsel %vm12468, %v12411, %v12525
    %v12582 = vsel %vm12469, %v12412, %v12526
    %v12583 = vsel %vm12470, %v12413, %v12527
    %v12584 = vsel %vm12471, %v12414, %v12528
    %v12585 = vsel %vm12472, %v12415, %v12529
    %v12586 = vsel %vm12473, %v12416, %v12530
    %v12587 = vsel %vm12474, %v12417, %v12531
    %v12588 = vsel %vm12475, %v12418, %v12532
    %v12589 = vsel %vm12476, %v12419, %v12533
    %v12590 = vsel %vm12477, %v12420, %v12534
    %v12591 = vsel %vm12478, %v12421, %v12535
    %v12592 = vsel %vm12479, %v12422, %v12536
    %v12593 = vsel %vm12480, %v12423, %v12537
    %v12594 = vsel %vm12481, %v12424, %v12538
    %v12595 = vsel %vm12482, %v12425, %v12539
    %v12596 = vsel %vm12483, %v12426, %v12540
    %v12597 = vsel %vm12484, %v12427, %v12541
    %v12598 = vsel %vm12485, %v12428, %v12542
    %v12599 = vsel %vm12486, %v12429, %v12543
    %v12600 = vsel %vm12487, %v12430, %v12544
    %v12601 = vsel %vm12488, %v12431, %v12545
    %v12602 = vsel %vm12489, %v12432, %v12546
    %v12603 = vsel %vm12490, %v12433, %v12547
    %v12604 = vsel %vm12491, %v12434, %v12548
    %v12605 = vsel %vm12492, %v12435, %v12549
    %v12606 = vsel %vm12493, %v12436, %v12550
    %v12607 = vsel %vm12494, %v12437, %v12551
    %v12608 = vsel %vm12495, %v12438, %v12552
    %v12609 = vsel %vm12496, %v12439, %v12553
    %v12610 = vsel %vm12497, %v12440, %v12554
    %v12611 = vsel %vm12498, %v12441, %v12555
    %12612 = vst.msk [vmem:[#allocation5] sm:$0xff] %vm137, %v12556
    %12613 = vst.msk [vmem:[#allocation5 + $0x8] sm:$0xff] %vm137, %v12557
    %12614 = vst.msk [vmem:[#allocation5 + $0x10] sm:$0xff] %vm137, %v12558
    %12615 = vst.msk [vmem:[#allocation5 + $0x18] sm:$0xff] %vm137, %v12559
    %12616 = vst.msk [vmem:[#allocation5 + $0x20] sm:$0xff] %vm137, %v12560
    %12617 = vst.msk [vmem:[#allocation5 + $0x28] sm:$0xff] %vm137, %v12561
    %12618 = vst.msk [vmem:[#allocation5 + $0x30] sm:$0xff] %vm137, %v12562
    %12619 = vst.msk [vmem:[#allocation5 + $0x38] sm:$0xff] %vm137, %v12563
    %12620 = vst.msk [vmem:[#allocation5 + $0x40] sm:$0xff] %vm137, %v12564
    %12621 = vst.msk [vmem:[#allocation5 + $0x48] sm:$0xff] %vm137, %v12565
    %12622 = vst.msk [vmem:[#allocation5 + $0x50] sm:$0xff] %vm137, %v12566
    %12623 = vst.msk [vmem:[#allocation5 + $0x58] sm:$0xff] %vm137, %v12567
    %12624 = vst.msk [vmem:[#allocation5 + $0x60] sm:$0xff] %vm137, %v12568
    %12625 = vst.msk [vmem:[#allocation5 + $0x68] sm:$0xff] %vm137, %v12569
    %12626 = vst.msk [vmem:[#allocation5 + $0x70] sm:$0xff] %vm137, %v12570
    %12627 = vst.msk [vmem:[#allocation5 + $0x78] sm:$0xff] %vm137, %v12571
    %12628 = vst.msk [vmem:[#allocation5 + $0x80] sm:$0xff] %vm137, %v12572
    %12629 = vst.msk [vmem:[#allocation5 + $0x88] sm:$0xff] %vm137, %v12573
    %12630 = vst.msk [vmem:[#allocation5 + $0x90] sm:$0xff] %vm137, %v12574
    %12631 = vst.msk [vmem:[#allocation5 + $0x98] sm:$0xff] %vm137, %v12575
    %12632 = vst.msk [vmem:[#allocation5 + $0xa0] sm:$0xff] %vm137, %v12576
    %12633 = vst.msk [vmem:[#allocation5 + $0xa8] sm:$0xff] %vm137, %v12577
    %12634 = vst.msk [vmem:[#allocation5 + $0xb0] sm:$0xff] %vm137, %v12578
    %12635 = vst.msk [vmem:[#allocation5 + $0xb8] sm:$0xff] %vm137, %v12579
    %12636 = vst.msk [vmem:[#allocation5 + $0xc0] sm:$0xff] %vm137, %v12580
    %12637 = vst.msk [vmem:[#allocation5 + $0xc8] sm:$0xff] %vm137, %v12581
    %12638 = vst.msk [vmem:[#allocation5 + $0xd0] sm:$0xff] %vm137, %v12582
    %12639 = vst.msk [vmem:[#allocation5 + $0xd8] sm:$0xff] %vm137, %v12583
    %12640 = vst.msk [vmem:[#allocation5 + $0xe0] sm:$0xff] %vm137, %v12584
    %12641 = vst.msk [vmem:[#allocation5 + $0xe8] sm:$0xff] %vm137, %v12585
    %12642 = vst.msk [vmem:[#allocation5 + $0xf0] sm:$0xff] %vm137, %v12586
    %12643 = vst.msk [vmem:[#allocation5 + $0xf8] sm:$0xff] %vm137, %v12587
    %12644 = vst.msk [vmem:[#allocation5 + $0x100] sm:$0xff] %vm137, %v12588
    %12645 = vst.msk [vmem:[#allocation5 + $0x108] sm:$0xff] %vm137, %v12589
    %12646 = vst.msk [vmem:[#allocation5 + $0x110] sm:$0xff] %vm137, %v12590
    %12647 = vst.msk [vmem:[#allocation5 + $0x118] sm:$0xff] %vm137, %v12591
    %12648 = vst.msk [vmem:[#allocation5 + $0x120] sm:$0xff] %vm137, %v12592
    %12649 = vst.msk [vmem:[#allocation5 + $0x128] sm:$0xff] %vm137, %v12593
    %12650 = vst.msk [vmem:[#allocation5 + $0x130] sm:$0xff] %vm137, %v12594
    %12651 = vst.msk [vmem:[#allocation5 + $0x138] sm:$0xff] %vm137, %v12595
    %12652 = vst.msk [vmem:[#allocation5 + $0x140] sm:$0xff] %vm137, %v12596
    %12653 = vst.msk [vmem:[#allocation5 + $0x148] sm:$0xff] %vm137, %v12597
    %12654 = vst.msk [vmem:[#allocation5 + $0x150] sm:$0xff] %vm137, %v12598
    %12655 = vst.msk [vmem:[#allocation5 + $0x158] sm:$0xff] %vm137, %v12599
    %12656 = vst.msk [vmem:[#allocation5 + $0x160] sm:$0xff] %vm137, %v12600
    %12657 = vst.msk [vmem:[#allocation5 + $0x168] sm:$0xff] %vm137, %v12601
    %12658 = vst.msk [vmem:[#allocation5 + $0x170] sm:$0xff] %vm137, %v12602
    %12659 = vst.msk [vmem:[#allocation5 + $0x178] sm:$0xff] %vm137, %v12603
    %12660 = vst.msk [vmem:[#allocation5 + $0x180] sm:$0xff] %vm137, %v12604
    %12661 = vst.msk [vmem:[#allocation5 + $0x188] sm:$0xff] %vm137, %v12605
    %12662 = vst.msk [vmem:[#allocation5 + $0x190] sm:$0xff] %vm137, %v12606
    %12663 = vst.msk [vmem:[#allocation5 + $0x198] sm:$0xff] %vm137, %v12607
    %12664 = vst.msk [vmem:[#allocation5 + $0x1a0] sm:$0xff] %vm137, %v12608
    %12665 = vst.msk [vmem:[#allocation5 + $0x1a8] sm:$0xff] %vm137, %v12609
    %12666 = vst.msk [vmem:[#allocation5 + $0x1b0] sm:$0xff] %vm137, %v12610
    %12667 = vst.msk [vmem:[#allocation5 + $0x1b8] sm:$0xff] %vm137, %v12611
    %v12668 = vld [vmem:[#allocation5] ss:$56 sm:$0xf]
    %v12669 = vld [vmem:[#allocation5] ss:$56 sm:$0xf0]
    %v12670 = vor.u32 %v12668, %v12669
    %v12671 = vld [vmem:[#allocation10] sm:$0xff]
    %v12672 = vld [vmem:[#allocation10 + $0x8] sm:$0xff]
    %v12673 = vld [vmem:[#allocation10 + $0x10] sm:$0xff]
    %v12674 = vld [vmem:[#allocation10 + $0x18] sm:$0xff]
    %v12675 = vld [vmem:[#allocation10 + $0x20] sm:$0xff]
    %v12676 = vld [vmem:[#allocation10 + $0x28] sm:$0xff]
    %v12677 = vld [vmem:[#allocation10 + $0x30] sm:$0xff]
    %v12678 = vld [vmem:[#allocation10 + $0x38] sm:$0xff]
    %v12679 = vld [vmem:[#allocation10 + $0x40] sm:$0xff]
    %v12680 = vld [vmem:[#allocation10 + $0x48] sm:$0xff]
    %v12681 = vld [vmem:[#allocation10 + $0x50] sm:$0xff]
    %v12682 = vld [vmem:[#allocation10 + $0x58] sm:$0xff]
    %s12683 = scalar_lea.vmem [#allocation5], 1
    %v12684 = vld [vmem:[%s12683] ss:$56 sm:$0xf]
    %v12685 = vld [vmem:[%s12683] ss:$56 sm:$0xf0]
    %v12686 = vor.u32 %v12684, %v12685
    %v12687 = vld [vmem:[#allocation10 + $0x60] sm:$0xff]
    %v12688 = vld [vmem:[#allocation10 + $0x68] sm:$0xff]
    %v12689 = vld [vmem:[#allocation10 + $0x70] sm:$0xff]
    %v12690 = vld [vmem:[#allocation10 + $0x78] sm:$0xff]
    %v12691 = vld [vmem:[#allocation10 + $0x80] sm:$0xff]
    %v12692 = vld [vmem:[#allocation10 + $0x88] sm:$0xff]
    %v12693 = vld [vmem:[#allocation10 + $0x90] sm:$0xff]
    %v12694 = vld [vmem:[#allocation10 + $0x98] sm:$0xff]
    %v12695 = vld [vmem:[#allocation10 + $0xa0] sm:$0xff]
    %v12696 = vld [vmem:[#allocation10 + $0xa8] sm:$0xff]
    %v12697 = vld [vmem:[#allocation10 + $0xb0] sm:$0xff]
    %v12698 = vld [vmem:[#allocation10 + $0xb8] sm:$0xff]
    %v12700 = vsel %vm137, %v12686, 0
    %12702 = vmatpush.msra.mxu0 0.0
    %12703 = vmatpush.msra.mxu0 0.0
    %12704 = vmatpush.msra.mxu0 0.0
    %12705 = vmatpush.msra.mxu0 0.0
    %12706 = vmatpush.msra.mxu0 %v12698
    %12707 = vmatpush.msra.mxu0 %v12697
    %12708 = vmatpush.msra.mxu0 %v12696
    %12709 = vmatpush.msra.mxu0 %v12695
    %12710 = vmatpush.msra.mxu0 %v12694
    %12711 = vmatpush.msra.mxu0 %v12693
    %12712 = vmatpush.msra.mxu0 %v12692
    %12713 = vmatpush.msra.mxu0 %v12691
    %12714 = vmatpush.msra.mxu0 %v12690
    %12715 = vmatpush.msra.mxu0 %v12689
    %12716 = vmatpush.msra.mxu0 %v12688
    %12717 = vmatpush.msra.mxu0 %v12687
    %12718 = vmatmul.f32.gmra.mxu0 %v12700
    %v12719 = vpop.f32.mrf.mxu0
    %v12720 = vadd.f32 0.0, %v12719
    %12721 = vdwg.mxu0
    %v12723 = vsel %vm137, %v12670, 0
    %12725 = vmatpush.msra.mxu0 0.0
    %12726 = vmatpush.msra.mxu0 0.0
    %12727 = vmatpush.msra.mxu0 0.0
    %12728 = vmatpush.msra.mxu0 0.0
    %12729 = vmatpush.msra.mxu0 %v12682
    %12730 = vmatpush.msra.mxu0 %v12681
    %12731 = vmatpush.msra.mxu0 %v12680
    %12732 = vmatpush.msra.mxu0 %v12679
    %12733 = vmatpush.msra.mxu0 %v12678
    %12734 = vmatpush.msra.mxu0 %v12677
    %12735 = vmatpush.msra.mxu0 %v12676
    %12736 = vmatpush.msra.mxu0 %v12675
    %12737 = vmatpush.msra.mxu0 %v12674
    %12738 = vmatpush.msra.mxu0 %v12673
    %12739 = vmatpush.msra.mxu0 %v12672
    %12740 = vmatpush.msra.mxu0 %v12671
    %12741 = vmatmul.f32.gmra.mxu0 %v12723
    %v12742 = vpop.f32.mrf.mxu0
    %v12743 = vadd.f32 %v12720, %v12742
    %12744 = vdwg.mxu0
    %s12745 = scalar_lea.vmem [#allocation5], 7
    %v12746 = vld [vmem:[%s12745] ss:$56 sm:$0xf]
    %v12747 = vld [vmem:[%s12745] ss:$56 sm:$0xf0]
    %v12748 = vor.u32 %v12746, %v12747
    %v12749 = vld [vmem:[#allocation10 + $0xc0] sm:$0xff]
    %v12750 = vld [vmem:[#allocation10 + $0xc8] sm:$0xff]
    %v12751 = vld [vmem:[#allocation10 + $0xd0] sm:$0xff]
    %v12752 = vld [vmem:[#allocation10 + $0xd8] sm:$0xff]
    %v12753 = vld [vmem:[#allocation10 + $0xe0] sm:$0xff]
    %v12754 = vld [vmem:[#allocation10 + $0xe8] sm:$0xff]
    %v12755 = vld [vmem:[#allocation10 + $0xf0] sm:$0xff]
    %v12756 = vld [vmem:[#allocation10 + $0xf8] sm:$0xff]
    %v12757 = vld [vmem:[#allocation10 + $0x100] sm:$0xff]
    %v12758 = vld [vmem:[#allocation10 + $0x108] sm:$0xff]
    %v12759 = vld [vmem:[#allocation10 + $0x110] sm:$0xff]
    %v12760 = vld [vmem:[#allocation10 + $0x118] sm:$0xff]
    %v12762 = vsel %vm137, %v12748, 0
    %12764 = vmatpush.msra.mxu0 0.0
    %12765 = vmatpush.msra.mxu0 0.0
    %12766 = vmatpush.msra.mxu0 0.0
    %12767 = vmatpush.msra.mxu0 0.0
    %12768 = vmatpush.msra.mxu0 %v12760
    %12769 = vmatpush.msra.mxu0 %v12759
    %12770 = vmatpush.msra.mxu0 %v12758
    %12771 = vmatpush.msra.mxu0 %v12757
    %12772 = vmatpush.msra.mxu0 %v12756
    %12773 = vmatpush.msra.mxu0 %v12755
    %12774 = vmatpush.msra.mxu0 %v12754
    %12775 = vmatpush.msra.mxu0 %v12753
    %12776 = vmatpush.msra.mxu0 %v12752
    %12777 = vmatpush.msra.mxu0 %v12751
    %12778 = vmatpush.msra.mxu0 %v12750
    %12779 = vmatpush.msra.mxu0 %v12749
    %12780 = vmatmul.f32.gmra.mxu0 %v12762
    %v12781 = vpop.f32.mrf.mxu0
    %v12782 = vadd.f32 0.0, %v12781
    %12783 = vdwg.mxu0
    %v12784 = vadd.f32 %v12743, %v12782
    %s12785 = scalar_lea.vmem [#allocation5], 8
    %v12786 = vld [vmem:[%s12785] ss:$56 sm:$0xf]
    %v12787 = vld [vmem:[%s12785] ss:$56 sm:$0xf0]
    %v12788 = vor.u32 %v12786, %v12787
    %v12789 = vld [vmem:[#allocation10 + $0x120] sm:$0xff]
    %v12790 = vld [vmem:[#allocation10 + $0x128] sm:$0xff]
    %v12791 = vld [vmem:[#allocation10 + $0x130] sm:$0xff]
    %v12792 = vld [vmem:[#allocation10 + $0x138] sm:$0xff]
    %v12793 = vld [vmem:[#allocation10 + $0x140] sm:$0xff]
    %v12794 = vld [vmem:[#allocation10 + $0x148] sm:$0xff]
    %v12795 = vld [vmem:[#allocation10 + $0x150] sm:$0xff]
    %v12796 = vld [vmem:[#allocation10 + $0x158] sm:$0xff]
    %v12797 = vld [vmem:[#allocation10 + $0x160] sm:$0xff]
    %v12798 = vld [vmem:[#allocation10 + $0x168] sm:$0xff]
    %v12799 = vld [vmem:[#allocation10 + $0x170] sm:$0xff]
    %v12800 = vld [vmem:[#allocation10 + $0x178] sm:$0xff]
    %v12802 = vsel %vm137, %v12788, 0
    %12804 = vmatpush.msra.mxu0 0.0
    %12805 = vmatpush.msra.mxu0 0.0
    %12806 = vmatpush.msra.mxu0 0.0
    %12807 = vmatpush.msra.mxu0 0.0
    %12808 = vmatpush.msra.mxu0 %v12800
    %12809 = vmatpush.msra.mxu0 %v12799
    %12810 = vmatpush.msra.mxu0 %v12798
    %12811 = vmatpush.msra.mxu0 %v12797
    %12812 = vmatpush.msra.mxu0 %v12796
    %12813 = vmatpush.msra.mxu0 %v12795
    %12814 = vmatpush.msra.mxu0 %v12794
    %12815 = vmatpush.msra.mxu0 %v12793
    %12816 = vmatpush.msra.mxu0 %v12792
    %12817 = vmatpush.msra.mxu0 %v12791
    %12818 = vmatpush.msra.mxu0 %v12790
    %12819 = vmatpush.msra.mxu0 %v12789
    %12820 = vmatmul.f32.gmra.mxu0 %v12802
    %v12821 = vpop.f32.mrf.mxu0
    %v12822 = vadd.f32 0.0, %v12821
    %12823 = vdwg.mxu0
    %v12824 = vadd.f32 %v12784, %v12822
    %v12825 = vld [vmem:[%s9] sm:$0x1]
    %v12826 = vperm.slane %v12825, 0
    %v12827 = vadd.f32 %v12824, %v12826
    %v12828 = vld [vmem:[%s9 + $0x1] sm:$0x1]
    %vm12829 = vcmp.ge.f32.partialorder %v12827, 0.0
    %v12830 = vperm.slane %v12828, 0
    %v12831 = vmul.f32 %v12830, %v12827
    %v12832 = vsel %vm12829, %v12827, %v12831
    %v12833 = vld [vmem:[#allocation11] sm:$0xff]
    %v12834 = vld [vmem:[#allocation11 + $0x8] sm:$0xff]
    %v12835 = vld [vmem:[#allocation11 + $0x10] sm:$0xff]
    %v12836 = vld [vmem:[#allocation11 + $0x18] sm:$0xff]
    %v12837 = vld [vmem:[#allocation11 + $0x20] sm:$0xff]
    %v12838 = vld [vmem:[#allocation11 + $0x28] sm:$0xff]
    %v12839 = vld [vmem:[#allocation11 + $0x30] sm:$0xff]
    %v12840 = vld [vmem:[#allocation11 + $0x38] sm:$0xff]
    %v12841 = vld [vmem:[#allocation11 + $0x40] sm:$0xff]
    %v12842 = vld [vmem:[#allocation11 + $0x48] sm:$0xff]
    %v12843 = vld [vmem:[#allocation11 + $0x50] sm:$0xff]
    %v12844 = vld [vmem:[#allocation11 + $0x58] sm:$0xff]
    %v12845 = vld [vmem:[#allocation11 + $0x60] sm:$0xff]
    %v12846 = vld [vmem:[#allocation11 + $0x68] sm:$0xff]
    %v12847 = vld [vmem:[#allocation11 + $0x70] sm:$0xff]
    %v12848 = vld [vmem:[#allocation11 + $0x78] sm:$0xff]
    %v12849 = vld [vmem:[#allocation11 + $0x80] sm:$0xff]
    %v12850 = vld [vmem:[#allocation11 + $0x88] sm:$0xff]
    %v12851 = vld [vmem:[#allocation11 + $0x90] sm:$0xff]
    %v12852 = vld [vmem:[#allocation11 + $0x98] sm:$0xff]
    %v12853 = vld [vmem:[#allocation11 + $0xa0] sm:$0xff]
    %v12854 = vld [vmem:[#allocation11 + $0xa8] sm:$0xff]
    %v12855 = vld [vmem:[#allocation11 + $0xb0] sm:$0xff]
    %v12856 = vld [vmem:[#allocation11 + $0xb8] sm:$0xff]
    %v12857 = vld [vmem:[%s11] ss:$2 sm:$0x3]
    %v12859 = vperm.slane %v12857, 0
    %v12860 = vperm.slane %v12857, 1
    %v12864 = vsel %vm137, %v12832, 0
    %12866 = vmatpush.msra.mxu0 0.0
    %12867 = vmatpush.msra.mxu0 0.0
    %12868 = vmatpush.msra.mxu0 0.0
    %12869 = vmatpush.msra.mxu0 0.0
    %12870 = vmatpush.msra.mxu0 %v12855
    %12871 = vmatpush.msra.mxu0 %v12853
    %12872 = vmatpush.msra.mxu0 %v12851
    %12873 = vmatpush.msra.mxu0 %v12849
    %12874 = vmatpush.msra.mxu0 %v12847
    %12875 = vmatpush.msra.mxu0 %v12845
    %12876 = vmatpush.msra.mxu0 %v12843
    %12877 = vmatpush.msra.mxu0 %v12841
    %12878 = vmatpush.msra.mxu0 %v12839
    %12879 = vmatpush.msra.mxu0 %v12837
    %12880 = vmatpush.msra.mxu0 %v12835
    %12881 = vmatpush.msra.mxu0 %v12833
    %12882 = vmatmul.f32.gmra.mxu0 %v12864
    %v12883 = vpop.f32.mrf.mxu0
    %v12884 = vadd.f32 %v12859, %v12883
    %12885 = vdwg.mxu0
    %12886 = vmatpush.msra.mxu0 0.0
    %12887 = vmatpush.msra.mxu0 0.0
    %12888 = vmatpush.msra.mxu0 0.0
    %12889 = vmatpush.msra.mxu0 0.0
    %12890 = vmatpush.msra.mxu0 %v12856
    %12891 = vmatpush.msra.mxu0 %v12854
    %12892 = vmatpush.msra.mxu0 %v12852
    %12893 = vmatpush.msra.mxu0 %v12850
    %12894 = vmatpush.msra.mxu0 %v12848
    %12895 = vmatpush.msra.mxu0 %v12846
    %12896 = vmatpush.msra.mxu0 %v12844
    %12897 = vmatpush.msra.mxu0 %v12842
    %12898 = vmatpush.msra.mxu0 %v12840
    %12899 = vmatpush.msra.mxu0 %v12838
    %12900 = vmatpush.msra.mxu0 %v12836
    %12901 = vmatpush.msra.mxu0 %v12834
    %12902 = vmatmul.f32.gmra.mxu0 %v12864
    %v12903 = vpop.f32.mrf.mxu0
    %v12904 = vadd.f32 %v12860, %v12903
    %12905 = vdwg.mxu0
    %s12906 = scalar_lea.vmem %s11, 1
    %v12907 = vld [vmem:[%s12906] ss:$2 sm:$0x3]
    %vm12908 = vcmp.ge.f32.partialorder %v12884, 0.0
    %vm12909 = vcmp.ge.f32.partialorder %v12904, 0.0
    %v12911 = vperm.slane %v12907, 0
    %v12912 = vperm.slane %v12907, 1
    %v12915 = vmul.f32 %v12911, %v12884
    %v12916 = vmul.f32 %v12912, %v12904
    %v12917 = vsel %vm12908, %v12884, %v12915
    %v12918 = vsel %vm12909, %v12904, %v12916
    %v12919 = vld [vmem:[%s12] sm:$0xff]
    %v12920 = vld [vmem:[%s12 + $0x8] sm:$0xff]
    %v12921 = vld [vmem:[%s12 + $0x10] sm:$0xff]
    %v12922 = vld [vmem:[%s12 + $0x18] sm:$0xff]
    %v12923 = vld [vmem:[%s12 + $0x20] sm:$0xff]
    %v12924 = vld [vmem:[%s12 + $0x28] sm:$0xff]
    %v12925 = vld [vmem:[%s12 + $0x30] sm:$0xff]
    %v12926 = vld [vmem:[%s12 + $0x38] sm:$0xff]
    %v12927 = vld [vmem:[%s12 + $0x40] sm:$0xff]
    %v12928 = vld [vmem:[%s12 + $0x48] sm:$0xff]
    %v12929 = vld [vmem:[%s12 + $0x50] sm:$0xff]
    %v12930 = vld [vmem:[%s12 + $0x58] sm:$0xff]
    %v12931 = vld [vmem:[%s12 + $0x60] sm:$0xff]
    %v12932 = vld [vmem:[%s12 + $0x68] sm:$0xff]
    %v12933 = vld [vmem:[%s12 + $0x70] sm:$0xff]
    %v12934 = vld [vmem:[%s12 + $0x78] sm:$0xff]
    %v12935 = vld [vmem:[%s12 + $0x80] sm:$0xff]
    %v12936 = vld [vmem:[%s12 + $0x88] sm:$0xff]
    %v12937 = vld [vmem:[%s12 + $0x90] sm:$0xff]
    %v12938 = vld [vmem:[%s12 + $0x98] sm:$0xff]
    %v12939 = vld [vmem:[%s12 + $0xa0] sm:$0xff]
    %v12940 = vld [vmem:[%s12 + $0xa8] sm:$0xff]
    %v12941 = vld [vmem:[%s12 + $0xb0] sm:$0xff]
    %v12942 = vld [vmem:[%s12 + $0xb8] sm:$0xff]
    %v12943 = vld [vmem:[%s12 + $0xc0] sm:$0xff]
    %v12944 = vld [vmem:[%s12 + $0xc8] sm:$0xff]
    %v12945 = vld [vmem:[%s12 + $0xd0] sm:$0xff]
    %v12946 = vld [vmem:[%s12 + $0xd8] sm:$0xff]
    %v12947 = vld [vmem:[%s12 + $0xe0] sm:$0xff]
    %v12948 = vld [vmem:[%s12 + $0xe8] sm:$0xff]
    %v12949 = vld [vmem:[%s12 + $0xf0] sm:$0xff]
    %v12950 = vld [vmem:[%s12 + $0xf8] sm:$0xff]
    %v12951 = vld [vmem:[%s12 + $0x100] sm:$0xff]
    %v12952 = vld [vmem:[%s12 + $0x108] sm:$0xff]
    %v12953 = vld [vmem:[%s12 + $0x110] sm:$0xff]
    %v12954 = vld [vmem:[%s12 + $0x118] sm:$0xff]
    %v12955 = vld [vmem:[%s12 + $0x120] sm:$0xff]
    %v12956 = vld [vmem:[%s12 + $0x128] sm:$0xff]
    %v12957 = vld [vmem:[%s12 + $0x130] sm:$0xff]
    %v12958 = vld [vmem:[%s12 + $0x138] sm:$0xff]
    %v12959 = vld [vmem:[%s12 + $0x140] sm:$0xff]
    %v12960 = vld [vmem:[%s12 + $0x148] sm:$0xff]
    %v12961 = vld [vmem:[%s12 + $0x150] sm:$0xff]
    %v12962 = vld [vmem:[%s12 + $0x158] sm:$0xff]
    %v12963 = vld [vmem:[%s12 + $0x160] sm:$0xff]
    %v12964 = vld [vmem:[%s12 + $0x168] sm:$0xff]
    %v12965 = vld [vmem:[%s12 + $0x170] sm:$0xff]
    %v12966 = vld [vmem:[%s12 + $0x178] sm:$0xff]
    %v12967 = vld [vmem:[%s12 + $0x180] sm:$0xff]
    %v12968 = vld [vmem:[%s12 + $0x188] sm:$0xff]
    %v12969 = vld [vmem:[%s13] ss:$2 sm:$0x3]
    %v12971 = vperm.slane %v12969, 0
    %v12972 = vperm.slane %v12969, 1
    %vm12975 = vcmask 588800
    %v12977 = vsel %vm12975, %v12918, 0
    %12979 = vmatpush.msra.mxu0 %v12949
    %12980 = vmatpush.msra.mxu0 %v12947
    %12981 = vmatpush.msra.mxu0 %v12945
    %12982 = vmatpush.msra.mxu0 %v12943
    %12983 = vmatpush.msra.mxu0 %v12941
    %12984 = vmatpush.msra.mxu0 %v12939
    %12985 = vmatpush.msra.mxu0 %v12937
    %12986 = vmatpush.msra.mxu0 %v12935
    %12987 = vmatpush.msra.mxu0 %v12933
    %12988 = vmatpush.msra.mxu0 %v12931
    %12989 = vmatpush.msra.mxu0 %v12929
    %12990 = vmatpush.msra.mxu0 %v12927
    %12991 = vmatpush.msra.mxu0 %v12925
    %12992 = vmatpush.msra.mxu0 %v12923
    %12993 = vmatpush.msra.mxu0 %v12921
    %12994 = vmatpush.msra.mxu0 %v12919
    %12995 = vmatmul.f32.gmra.mxu0 %v12917
    %v12996 = vpop.f32.mrf.mxu0
    %v12997 = vadd.f32 %v12971, %v12996
    %12998 = vdwg.mxu0
    %12999 = vmatpush.msra.mxu0 0.0
    %13000 = vmatpush.msra.mxu0 0.0
    %13001 = vmatpush.msra.mxu0 0.0
    %13002 = vmatpush.msra.mxu0 0.0
    %13003 = vmatpush.msra.mxu0 0.0
    %13004 = vmatpush.msra.mxu0 0.0
    %13005 = vmatpush.msra.mxu0 0.0
    %13006 = vmatpush.msra.mxu0 %v12967
    %13007 = vmatpush.msra.mxu0 %v12965
    %13008 = vmatpush.msra.mxu0 %v12963
    %13009 = vmatpush.msra.mxu0 %v12961
    %13010 = vmatpush.msra.mxu0 %v12959
    %13011 = vmatpush.msra.mxu0 %v12957
    %13012 = vmatpush.msra.mxu0 %v12955
    %13013 = vmatpush.msra.mxu0 %v12953
    %13014 = vmatpush.msra.mxu0 %v12951
    %13015 = vmatmul.f32.gmra.mxu0 %v12977
    %v13016 = vpop.f32.mrf.mxu0
    %v13017 = vadd.f32 %v12997, %v13016
    %13018 = vdwg.mxu0
    %13019 = vmatpush.msra.mxu0 %v12950
    %13020 = vmatpush.msra.mxu0 %v12948
    %13021 = vmatpush.msra.mxu0 %v12946
    %13022 = vmatpush.msra.mxu0 %v12944
    %13023 = vmatpush.msra.mxu0 %v12942
    %13024 = vmatpush.msra.mxu0 %v12940
    %13025 = vmatpush.msra.mxu0 %v12938
    %13026 = vmatpush.msra.mxu0 %v12936
    %13027 = vmatpush.msra.mxu0 %v12934
    %13028 = vmatpush.msra.mxu0 %v12932
    %13029 = vmatpush.msra.mxu0 %v12930
    %13030 = vmatpush.msra.mxu0 %v12928
    %13031 = vmatpush.msra.mxu0 %v12926
    %13032 = vmatpush.msra.mxu0 %v12924
    %13033 = vmatpush.msra.mxu0 %v12922
    %13034 = vmatpush.msra.mxu0 %v12920
    %13035 = vmatmul.f32.gmra.mxu0 %v12917
    %v13036 = vpop.f32.mrf.mxu0
    %v13037 = vadd.f32 %v12972, %v13036
    %13038 = vdwg.mxu0
    %13039 = vmatpush.msra.mxu0 0.0
    %13040 = vmatpush.msra.mxu0 0.0
    %13041 = vmatpush.msra.mxu0 0.0
    %13042 = vmatpush.msra.mxu0 0.0
    %13043 = vmatpush.msra.mxu0 0.0
    %13044 = vmatpush.msra.mxu0 0.0
    %13045 = vmatpush.msra.mxu0 0.0
    %13046 = vmatpush.msra.mxu0 %v12968
    %13047 = vmatpush.msra.mxu0 %v12966
    %13048 = vmatpush.msra.mxu0 %v12964
    %13049 = vmatpush.msra.mxu0 %v12962
    %13050 = vmatpush.msra.mxu0 %v12960
    %13051 = vmatpush.msra.mxu0 %v12958
    %13052 = vmatpush.msra.mxu0 %v12956
    %13053 = vmatpush.msra.mxu0 %v12954
    %13054 = vmatpush.msra.mxu0 %v12952
    %13055 = vmatmul.f32.gmra.mxu0 %v12977
    %v13056 = vpop.f32.mrf.mxu0
    %v13057 = vadd.f32 %v13037, %v13056
    %13058 = vdwg.mxu0
    %s13059 = scalar_lea.vmem %s13, 1
    %v13060 = vld [vmem:[%s13059] ss:$2 sm:$0x3]
    %vm13061 = vcmp.ge.f32.partialorder %v13017, 0.0
    %vm13062 = vcmp.ge.f32.partialorder %v13057, 0.0
    %v13064 = vperm.slane %v13060, 0
    %v13065 = vperm.slane %v13060, 1
    %v13068 = vmul.f32 %v13064, %v13017
    %v13069 = vmul.f32 %v13065, %v13057
    %v13070 = vsel %vm13061, %v13017, %v13068
    %v13071 = vsel %vm13062, %v13057, %v13069
    %v13072 = vld [vmem:[#allocation13] sm:$0xff]
    %v13073 = vld [vmem:[#allocation13 + $0x8] sm:$0xff]
    %v13074 = vld [vmem:[#allocation13 + $0x10] sm:$0xff]
    %v13075 = vld [vmem:[#allocation13 + $0x18] sm:$0xff]
    %v13076 = vld [vmem:[#allocation13 + $0x20] sm:$0xff]
    %v13077 = vld [vmem:[#allocation13 + $0x28] sm:$0xff]
    %v13078 = vld [vmem:[#allocation13 + $0x30] sm:$0xff]
    %v13079 = vld [vmem:[#allocation13 + $0x38] sm:$0xff]
    %v13080 = vld [vmem:[#allocation13 + $0x40] sm:$0xff]
    %v13081 = vld [vmem:[#allocation13 + $0x48] sm:$0xff]
    %v13082 = vld [vmem:[#allocation13 + $0x50] sm:$0xff]
    %v13083 = vld [vmem:[#allocation13 + $0x58] sm:$0xff]
    %v13084 = vld [vmem:[#allocation13 + $0x60] sm:$0xff]
    %v13085 = vld [vmem:[#allocation13 + $0x68] sm:$0xff]
    %v13086 = vld [vmem:[#allocation13 + $0x70] sm:$0xff]
    %v13087 = vld [vmem:[#allocation13 + $0x78] sm:$0xff]
    %v13088 = vld [vmem:[#allocation13 + $0x80] sm:$0xff]
    %v13089 = vld [vmem:[#allocation13 + $0x88] sm:$0xff]
    %v13090 = vld [vmem:[#allocation13 + $0x90] sm:$0xff]
    %v13091 = vld [vmem:[#allocation13 + $0x98] sm:$0xff]
    %v13092 = vld [vmem:[#allocation13 + $0xa0] sm:$0xff]
    %v13093 = vld [vmem:[#allocation13 + $0xa8] sm:$0xff]
    %v13094 = vld [vmem:[#allocation13 + $0xb0] sm:$0xff]
    %v13095 = vld [vmem:[#allocation13 + $0xb8] sm:$0xff]
    %v13096 = vld [vmem:[#allocation13 + $0xc0] sm:$0xff]
    %v13097 = vld [vmem:[%s15] sm:$0x1]
    %v13099 = vperm.slane %v13097, 0
    %v13102 = vsel %vm12975, %v13071, 0
    %13104 = vmatpush.msra.mxu0 %v13087
    %13105 = vmatpush.msra.mxu0 %v13086
    %13106 = vmatpush.msra.mxu0 %v13085
    %13107 = vmatpush.msra.mxu0 %v13084
    %13108 = vmatpush.msra.mxu0 %v13083
    %13109 = vmatpush.msra.mxu0 %v13082
    %13110 = vmatpush.msra.mxu0 %v13081
    %13111 = vmatpush.msra.mxu0 %v13080
    %13112 = vmatpush.msra.mxu0 %v13079
    %13113 = vmatpush.msra.mxu0 %v13078
    %13114 = vmatpush.msra.mxu0 %v13077
    %13115 = vmatpush.msra.mxu0 %v13076
    %13116 = vmatpush.msra.mxu0 %v13075
    %13117 = vmatpush.msra.mxu0 %v13074
    %13118 = vmatpush.msra.mxu0 %v13073
    %13119 = vmatpush.msra.mxu0 %v13072
    %13120 = vmatmul.f32.gmra.mxu0 %v13070
    %v13121 = vpop.f32.mrf.mxu0
    %v13122 = vadd.f32 %v13099, %v13121
    %13123 = vdwg.mxu0
    %13124 = vmatpush.msra.mxu0 0.0
    %13125 = vmatpush.msra.mxu0 0.0
    %13126 = vmatpush.msra.mxu0 0.0
    %13127 = vmatpush.msra.mxu0 0.0
    %13128 = vmatpush.msra.mxu0 0.0
    %13129 = vmatpush.msra.mxu0 0.0
    %13130 = vmatpush.msra.mxu0 0.0
    %13131 = vmatpush.msra.mxu0 %v13096
    %13132 = vmatpush.msra.mxu0 %v13095
    %13133 = vmatpush.msra.mxu0 %v13094
    %13134 = vmatpush.msra.mxu0 %v13093
    %13135 = vmatpush.msra.mxu0 %v13092
    %13136 = vmatpush.msra.mxu0 %v13091
    %13137 = vmatpush.msra.mxu0 %v13090
    %13138 = vmatpush.msra.mxu0 %v13089
    %13139 = vmatpush.msra.mxu0 %v13088
    %13140 = vmatmul.f32.gmra.mxu0 %v13102
    %v13141 = vpop.f32.mrf.mxu0
    %v13142 = vadd.f32 %v13122, %v13141
    %13143 = vdwg.mxu0
    %13144 = vmax.xlane.f32.xlu0 %v13142
    %v13145 = vpop.xlane.xlu0 %13144
    %v13146 = vsub.f32 %v13142, %v13145
    %v13147 = vmul.f32 %v13146, 1.442695
    %v13148 = vpow.pop %v13147
    %13149 = vadd.xlane.f32.xlu0 %v13148
    %v13150 = vpop.xlane.xlu0 %13149
    %v13151 = vlog2.pop %v13150
    %v13152 = vmul.f32 %v13151, 0.6931472
    %v13153 = vsub.f32 %v13146, %v13152
    %13154 = vst [vmem:[%s16] sm:$0xff] %v13153
    // Predicated region
    $region86: #{_lambda_.1} parent=1 // pred_check
      _
    $region87: #{_lambda_.1} parent=1 // pred_check_branch
      %13156 = sbr.rel (0) target = $region89
    $region88: #{_lambda_.1} parent=1 // pred_region
      _
    $region89: #{_lambda_.1} parent=1 // pred_fallthru
      _
    // Predicated region
    $region90: #{_lambda_.1} parent=1 // pred_check
      _
    $region91: #{_lambda_.1} parent=1 // pred_check_branch
      %13158 = sbr.rel (0) target = $region93
    $region92: #{_lambda_.1} parent=1 // pred_region
      _
    $region93: #{_lambda_.1} parent=1 // pred_fallthru
      _
    %13159 = vsyncpa [#allocation7], 1
    %13160 = vsyncpa [#allocation9], 1
    %13161 = vsyncpa [#allocation12], 1

</llo_original>
